<compile_context>
chip_gen: v6e
topology: v6e:2x2x1
jax: 0.10.0
libtpu: 0.0.40
codegen_flags: <defaults>
</compile_context>

<pallas_src>
import numpy as np
import jax
import jax.numpy as jnp
from jax.experimental import pallas as pl
from jax.experimental.pallas import tpu as pltpu


def make_conv_encoder_kernel(C_in, C_hid, H, W, KH, KW, B):
    ph, pw = KH // 2, KW // 2
    Hpad = H + 2 * ph
    Wpad = W + 2 * pw
    BW = B * Wpad            # batch-in-lanes width (per-sample halos included)
    BW2 = BW + 2 * pw        # + outer halo so every dj shift is a static slice
    C_tot = C_in + C_hid
    NG = 2 * C_hid           # gamma (reset) + beta (update) gate channels
    f32 = jnp.float32

    def kernel(xsl_ref, hsl_ref, wg_ref, bg_ref, wc_ref, bc_ref,
               wo_ref, bo_ref, out_ref, hidd_ref, rh_ref):
        # flat-index helpers into the (KH, KW, O, C)-ordered SMEM weight tables
        def wg_at(o, c, di, dj):
            return wg_ref[((di * KW + dj) * NG + o) * C_tot + c]

        def wc_at(o, c, di, dj):
            return wc_ref[((di * KW + dj) * C_hid + o) * C_tot + c]

        # ---- pass 1: x -> (gates, candidate), h -> gates --------------------
        # Accumulators initialized directly from the bias scalar.
        gate_acc = [jnp.full((H, BW), bg_ref[o], dtype=f32) for o in range(NG)]
        cand_acc = [jnp.full((H, BW), bc_ref[o], dtype=f32) for o in range(C_hid)]

        for c in range(C_in):
            for di in range(KH):
                for dj in range(KW):
                    win = xsl_ref[c, di:di + H, dj:dj + BW]   # load at point of use
                    for o in range(NG):
                        gate_acc[o] = gate_acc[o] + wg_at(o, c, di, dj) * win
                    for o in range(C_hid):
                        cand_acc[o] = cand_acc[o] + wc_at(o, c, di, dj) * win

        for c in range(C_hid):
            for di in range(KH):
                for dj in range(KW):
                    win = hsl_ref[c, di:di + H, dj:dj + BW]
                    for o in range(NG):
                        gate_acc[o] = gate_acc[o] + wg_at(o, C_in + c, di, dj) * win

        reset = [jax.nn.sigmoid(gate_acc[o]) for o in range(C_hid)]
        update = [jax.nn.sigmoid(gate_acc[C_hid + o]) for o in range(C_hid)]

        # ---- reset * h written into a zero-haloed padded scratch slab -------
        # Single invocation (grid=()), so this zero-fill runs exactly once per
        # call; only the halo rows / outer columns strictly need it (the
        # interior rows below are fully overwritten, and per-sample halo
        # columns are zero because h is zero there).
        rh_ref[...] = jnp.zeros(rh_ref.shape, rh_ref.dtype)
        for c in range(C_hid):
            h_rows = hsl_ref[c, ph:ph + H, pw:pw + BW]
            rh_ref[c, ph:ph + H, pw:pw + BW] = reset[c] * h_rows

        # ---- pass 2: reset*h -> candidate ------------------------------------
        for c in range(C_hid):
            for di in range(KH):
                for dj in range(KW):
                    win = rh_ref[c, di:di + H, dj:dj + BW]
                    for o in range(C_hid):
                        cand_acc[o] = cand_acc[o] + wc_at(o, C_in + c, di, dj) * win

        # ---- GRU blend + hidden output ---------------------------------------
        h_next = []
        for o in range(C_hid):
            cnm = jnp.tanh(cand_acc[o])
            h_cur = hsl_ref[o, ph:ph + H, pw:pw + BW]
            hn = (1.0 - update[o]) * h_cur + update[o] * cnm
            h_next.append(hn)
            hidd_ref[o] = hn.astype(hidd_ref.dtype)

        # ---- conv_hid2out (1x1, padding='same') + ReLU -----------------------
        # TODO(synk): for input_dim > 1 the hid2out conv has kernel_size=input_dim
        # ('same' padding, possibly even kernel); only the default 1x1 case is
        # implemented here.
        for o in range(C_in):
            acc = jnp.full((H, BW), bo_ref[o], dtype=f32)
            for c in range(C_hid):
                acc = acc + wo_ref[o * C_hid + c] * h_next[c]
            out_ref[o] = jnp.maximum(acc, 0.0).astype(out_ref.dtype)

    return kernel


def init_params(key, input_dim=1, hidden_dim=4, kernel_size=(3, 3)):
    """Deterministic synthetic parameters with the same shapes as the PyTorch module."""
    C_in, C_hid = input_dim, hidden_dim
    KH, KW = kernel_size
    C_tot = C_in + C_hid
    ks = jax.random.split(key, 6)
    scale = 0.3
    return dict(
        wg=jax.random.normal(ks[0], (2 * C_hid, C_tot, KH, KW), jnp.float32) * scale,
        bg=jax.random.normal(ks[1], (2 * C_hid,), jnp.float32) * 0.1,
        wc=jax.random.normal(ks[2], (C_hid, C_tot, KH, KW), jnp.float32) * scale,
        bc=jax.random.normal(ks[3], (C_hid,), jnp.float32) * 0.1,
        # nn.Conv2d(hidden_dim, input_dim, kernel_size=input_dim, padding='same')
        wo=jax.random.normal(ks[4], (C_in, C_hid, C_in, C_in), jnp.float32) * scale,
        bo=jax.random.normal(ks[5], (C_in,), jnp.float32) * 0.1,
    )


def conv_encoder_forward(params, x, hidden=None):
    """Pallas forward.  x: (B, C_in, H, W) NCHW, like the PyTorch module."""
    B, C_in, H, W = x.shape
    wg, bg, wc, bc, wo, bo = (params[k] for k in ("wg", "bg", "wc", "bc", "wo", "bo"))
    C_hid = wc.shape[0]
    KH, KW = wg.shape[2], wg.shape[3]
    ph, pw = KH // 2, KW // 2
    Hpad, Wpad = H + 2 * ph, W + 2 * pw
    BW, BW2 = B * Wpad, B * Wpad + 2 * pw
    assert wo.shape[2] == 1 and wo.shape[3] == 1, "kernel supports input_dim=1 (1x1 hid2out conv)"

    if hidden is None:
        hidden = jnp.zeros((B, C_hid, H, W), x.dtype)

    def to_slab(v):
        # (B, C, H, W) -> (C, Hpad, B*Wpad + 2*pw): batch packed into the lane
        # axis with per-sample spatial halos plus an outer pw halo so every
        # conv shift inside the kernel is a static in-bounds slice.
        vp = jnp.pad(v, ((0, 0), (0, 0), (ph, ph), (pw, pw)))
        vs = jnp.transpose(vp, (1, 2, 0, 3)).reshape(v.shape[1], Hpad, BW)
        return jnp.pad(vs, ((0, 0), (0, 0), (pw, pw)))

    xsl = to_slab(x)
    hsl = to_slab(hidden)

    # (KH, KW, O, C)-ordered flat weight tables for SMEM scalar reads
    wg_flat = jnp.transpose(wg, (2, 3, 0, 1)).reshape(-1)
    wc_flat = jnp.transpose(wc, (2, 3, 0, 1)).reshape(-1)
    wo_flat = wo.reshape(-1)

    kernel = make_conv_encoder_kernel(C_in, C_hid, H, W, KH, KW, B)
    smem = pl.BlockSpec(memory_space=pltpu.MemorySpace.SMEM)
    vmem = pl.BlockSpec(memory_space=pltpu.MemorySpace.VMEM)

    out_slab, hid_slab = pl.pallas_call(
        kernel,
        out_shape=(jax.ShapeDtypeStruct((C_in, H, BW), x.dtype),
                   jax.ShapeDtypeStruct((C_hid, H, BW), x.dtype)),
        in_specs=[vmem, vmem, smem, smem, smem, smem, smem, smem],
        out_specs=(vmem, vmem),
        scratch_shapes=[pltpu.VMEM((C_hid, Hpad, BW2), jnp.float32)],
    )(xsl, hsl, wg_flat, bg, wc_flat, bc, wo_flat, bo)

    def from_slab(slab, C):
        # (C, H, B*Wpad) -> (B, C, H, W): drop per-sample halo columns (which
        # hold don't-care values) and move batch back to the leading axis.
        t = slab.reshape(C, H, B, Wpad)[:, :, :, pw:pw + W]
        return jnp.transpose(t, (2, 0, 1, 3))

    return from_slab(out_slab, C_in), from_slab(hid_slab, C_hid)


def ref_forward(params, x, hidden=None):
    """Pure-JAX reference mirroring the PyTorch forward exactly."""
    wg, bg, wc, bc, wo, bo = (params[k] for k in ("wg", "bg", "wc", "bc", "wo", "bo"))
    C_hid = wc.shape[0]
    B, C_in, H, W = x.shape
    if hidden is None:
        hidden = jnp.zeros((B, C_hid, H, W), x.dtype)

    def conv_same(v, w, b):
        kh, kw = w.shape[2], w.shape[3]
        o = jax.lax.conv_general_dilated(
            v, w, window_strides=(1, 1),
            padding=((kh // 2, kh // 2), (kw // 2, kw // 2)),
            dimension_numbers=("NCHW", "OIHW", "NCHW"))
        return o + b[None, :, None, None]

    gates = conv_same(jnp.concatenate([x, hidden], axis=1), wg, bg)
    reset = jax.nn.sigmoid(gates[:, :C_hid])
    update = jax.nn.sigmoid(gates[:, C_hid:])
    cnm = jnp.tanh(conv_same(jnp.concatenate([x, reset * hidden], axis=1), wc, bc))
    h_next = (1.0 - update) * hidden + update * cnm
    out = jax.nn.relu(conv_same(h_next, wo, bo))
    return out, h_next


if __name__ == "__main__":
    B, C_in, C_hid, H, W = 2, 1, 4, 16, 16   # input_dim=1 (module default), small spatial
    key = jax.random.PRNGKey(0)
    kp, kx = jax.random.split(key)
    params = init_params(kp, input_dim=C_in, hidden_dim=C_hid, kernel_size=(3, 3))
    x = jax.random.normal(kx, (B, C_in, H, W), jnp.float32)

    out, hidd = jax.block_until_ready(conv_encoder_forward(params, x, hidden=None))

    ref_out, ref_hidd = ref_forward(params, x, hidden=None)
    np.testing.assert_allclose(np.asarray(out), np.asarray(ref_out), rtol=1e-5, atol=1e-5)
    np.testing.assert_allclose(np.asarray(hidd), np.asarray(ref_hidd), rtol=1e-5, atol=1e-5)

    print("KERNEL_OK")
</pallas_src>

<mosaic_0001>
module attributes {stable_mosaic.version = 11 : i64} {
  func.func @kernel(%arg0: memref<1x18x38xf32, #tpu.memory_space<vmem>>, %arg1: memref<4x18x38xf32, #tpu.memory_space<vmem>>, %arg2: memref<360xf32, #tpu.memory_space<smem>>, %arg3: memref<8xf32, #tpu.memory_space<smem>>, %arg4: memref<180xf32, #tpu.memory_space<smem>>, %arg5: memref<4xf32, #tpu.memory_space<smem>>, %arg6: memref<4xf32, #tpu.memory_space<smem>>, %arg7: memref<1xf32, #tpu.memory_space<smem>>, %arg8: memref<1x16x36xf32, #tpu.memory_space<vmem>>, %arg9: memref<4x16x36xf32, #tpu.memory_space<vmem>>, %arg10: memref<4x18x38xf32, #tpu.memory_space<vmem>>) attributes {dimension_semantics = [], scalar_prefetch = 0 : i64, scratch_operands = 1 : i64, tpu.core_type = #tpu.core_type<tc>} {
    %c0 = arith.constant 0 : index
    %0 = memref.load %arg3[%c0] : memref<8xf32, #tpu.memory_space<smem>>
    %1 = vector.broadcast %0 : f32 to vector<16x36xf32>
    %c1 = arith.constant 1 : index
    %2 = memref.load %arg3[%c1] : memref<8xf32, #tpu.memory_space<smem>>
    %3 = vector.broadcast %2 : f32 to vector<16x36xf32>
    %c2 = arith.constant 2 : index
    %4 = memref.load %arg3[%c2] : memref<8xf32, #tpu.memory_space<smem>>
    %5 = vector.broadcast %4 : f32 to vector<16x36xf32>
    %c3 = arith.constant 3 : index
    %6 = memref.load %arg3[%c3] : memref<8xf32, #tpu.memory_space<smem>>
    %7 = vector.broadcast %6 : f32 to vector<16x36xf32>
    %c4 = arith.constant 4 : index
    %8 = memref.load %arg3[%c4] : memref<8xf32, #tpu.memory_space<smem>>
    %9 = vector.broadcast %8 : f32 to vector<16x36xf32>
    %c5 = arith.constant 5 : index
    %10 = memref.load %arg3[%c5] : memref<8xf32, #tpu.memory_space<smem>>
    %11 = vector.broadcast %10 : f32 to vector<16x36xf32>
    %c6 = arith.constant 6 : index
    %12 = memref.load %arg3[%c6] : memref<8xf32, #tpu.memory_space<smem>>
    %13 = vector.broadcast %12 : f32 to vector<16x36xf32>
    %c7 = arith.constant 7 : index
    %14 = memref.load %arg3[%c7] : memref<8xf32, #tpu.memory_space<smem>>
    %15 = vector.broadcast %14 : f32 to vector<16x36xf32>
    %c0_0 = arith.constant 0 : index
    %16 = memref.load %arg5[%c0_0] : memref<4xf32, #tpu.memory_space<smem>>
    %17 = vector.broadcast %16 : f32 to vector<16x36xf32>
    %c1_1 = arith.constant 1 : index
    %18 = memref.load %arg5[%c1_1] : memref<4xf32, #tpu.memory_space<smem>>
    %19 = vector.broadcast %18 : f32 to vector<16x36xf32>
    %c2_2 = arith.constant 2 : index
    %20 = memref.load %arg5[%c2_2] : memref<4xf32, #tpu.memory_space<smem>>
    %21 = vector.broadcast %20 : f32 to vector<16x36xf32>
    %c3_3 = arith.constant 3 : index
    %22 = memref.load %arg5[%c3_3] : memref<4xf32, #tpu.memory_space<smem>>
    %23 = vector.broadcast %22 : f32 to vector<16x36xf32>
    %c0_4 = arith.constant 0 : index
    %c0_5 = arith.constant 0 : index
    %c0_6 = arith.constant 0 : index
    %24 = vector.load %arg0[%c0_4, %c0_5, %c0_6] : memref<1x18x38xf32, #tpu.memory_space<vmem>>, vector<1x16x36xf32>
    %25 = vector.shape_cast %24 : vector<1x16x36xf32> to vector<16x36xf32>
    %c0_7 = arith.constant 0 : index
    %26 = memref.load %arg2[%c0_7] : memref<360xf32, #tpu.memory_space<smem>>
    %27 = vector.broadcast %26 : f32 to vector<16x36xf32>
    %28 = arith.mulf %27, %25 : vector<16x36xf32>
    %29 = arith.addf %1, %28 : vector<16x36xf32>
    %c5_8 = arith.constant 5 : index
    %30 = memref.load %arg2[%c5_8] : memref<360xf32, #tpu.memory_space<smem>>
    %31 = vector.broadcast %30 : f32 to vector<16x36xf32>
    %32 = arith.mulf %31, %25 : vector<16x36xf32>
    %33 = arith.addf %3, %32 : vector<16x36xf32>
    %c10 = arith.constant 10 : index
    %34 = memref.load %arg2[%c10] : memref<360xf32, #tpu.memory_space<smem>>
    %35 = vector.broadcast %34 : f32 to vector<16x36xf32>
    %36 = arith.mulf %35, %25 : vector<16x36xf32>
    %37 = arith.addf %5, %36 : vector<16x36xf32>
    %c15 = arith.constant 15 : index
    %38 = memref.load %arg2[%c15] : memref<360xf32, #tpu.memory_space<smem>>
    %39 = vector.broadcast %38 : f32 to vector<16x36xf32>
    %40 = arith.mulf %39, %25 : vector<16x36xf32>
    %41 = arith.addf %7, %40 : vector<16x36xf32>
    %c20 = arith.constant 20 : index
    %42 = memref.load %arg2[%c20] : memref<360xf32, #tpu.memory_space<smem>>
    %43 = vector.broadcast %42 : f32 to vector<16x36xf32>
    %44 = arith.mulf %43, %25 : vector<16x36xf32>
    %45 = arith.addf %9, %44 : vector<16x36xf32>
    %c25 = arith.constant 25 : index
    %46 = memref.load %arg2[%c25] : memref<360xf32, #tpu.memory_space<smem>>
    %47 = vector.broadcast %46 : f32 to vector<16x36xf32>
    %48 = arith.mulf %47, %25 : vector<16x36xf32>
    %49 = arith.addf %11, %48 : vector<16x36xf32>
    %c30 = arith.constant 30 : index
    %50 = memref.load %arg2[%c30] : memref<360xf32, #tpu.memory_space<smem>>
    %51 = vector.broadcast %50 : f32 to vector<16x36xf32>
    %52 = arith.mulf %51, %25 : vector<16x36xf32>
    %53 = arith.addf %13, %52 : vector<16x36xf32>
    %c35 = arith.constant 35 : index
    %54 = memref.load %arg2[%c35] : memref<360xf32, #tpu.memory_space<smem>>
    %55 = vector.broadcast %54 : f32 to vector<16x36xf32>
    %56 = arith.mulf %55, %25 : vector<16x36xf32>
    %57 = arith.addf %15, %56 : vector<16x36xf32>
    %c0_9 = arith.constant 0 : index
    %58 = memref.load %arg4[%c0_9] : memref<180xf32, #tpu.memory_space<smem>>
    %59 = vector.broadcast %58 : f32 to vector<16x36xf32>
    %60 = arith.mulf %59, %25 : vector<16x36xf32>
    %61 = arith.addf %17, %60 : vector<16x36xf32>
    %c5_10 = arith.constant 5 : index
    %62 = memref.load %arg4[%c5_10] : memref<180xf32, #tpu.memory_space<smem>>
    %63 = vector.broadcast %62 : f32 to vector<16x36xf32>
    %64 = arith.mulf %63, %25 : vector<16x36xf32>
    %65 = arith.addf %19, %64 : vector<16x36xf32>
    %c10_11 = arith.constant 10 : index
    %66 = memref.load %arg4[%c10_11] : memref<180xf32, #tpu.memory_space<smem>>
    %67 = vector.broadcast %66 : f32 to vector<16x36xf32>
    %68 = arith.mulf %67, %25 : vector<16x36xf32>
    %69 = arith.addf %21, %68 : vector<16x36xf32>
    %c15_12 = arith.constant 15 : index
    %70 = memref.load %arg4[%c15_12] : memref<180xf32, #tpu.memory_space<smem>>
    %71 = vector.broadcast %70 : f32 to vector<16x36xf32>
    %72 = arith.mulf %71, %25 : vector<16x36xf32>
    %73 = arith.addf %23, %72 : vector<16x36xf32>
    %c0_13 = arith.constant 0 : index
    %c0_14 = arith.constant 0 : index
    %c1_15 = arith.constant 1 : index
    %74 = vector.load %arg0[%c0_13, %c0_14, %c1_15] : memref<1x18x38xf32, #tpu.memory_space<vmem>>, vector<1x16x36xf32>
    %75 = vector.shape_cast %74 : vector<1x16x36xf32> to vector<16x36xf32>
    %c40 = arith.constant 40 : index
    %76 = memref.load %arg2[%c40] : memref<360xf32, #tpu.memory_space<smem>>
    %77 = vector.broadcast %76 : f32 to vector<16x36xf32>
    %78 = arith.mulf %77, %75 : vector<16x36xf32>
    %79 = arith.addf %29, %78 : vector<16x36xf32>
    %c45 = arith.constant 45 : index
    %80 = memref.load %arg2[%c45] : memref<360xf32, #tpu.memory_space<smem>>
    %81 = vector.broadcast %80 : f32 to vector<16x36xf32>
    %82 = arith.mulf %81, %75 : vector<16x36xf32>
    %83 = arith.addf %33, %82 : vector<16x36xf32>
    %c50 = arith.constant 50 : index
    %84 = memref.load %arg2[%c50] : memref<360xf32, #tpu.memory_space<smem>>
    %85 = vector.broadcast %84 : f32 to vector<16x36xf32>
    %86 = arith.mulf %85, %75 : vector<16x36xf32>
    %87 = arith.addf %37, %86 : vector<16x36xf32>
    %c55 = arith.constant 55 : index
    %88 = memref.load %arg2[%c55] : memref<360xf32, #tpu.memory_space<smem>>
    %89 = vector.broadcast %88 : f32 to vector<16x36xf32>
    %90 = arith.mulf %89, %75 : vector<16x36xf32>
    %91 = arith.addf %41, %90 : vector<16x36xf32>
    %c60 = arith.constant 60 : index
    %92 = memref.load %arg2[%c60] : memref<360xf32, #tpu.memory_space<smem>>
    %93 = vector.broadcast %92 : f32 to vector<16x36xf32>
    %94 = arith.mulf %93, %75 : vector<16x36xf32>
    %95 = arith.addf %45, %94 : vector<16x36xf32>
    %c65 = arith.constant 65 : index
    %96 = memref.load %arg2[%c65] : memref<360xf32, #tpu.memory_space<smem>>
    %97 = vector.broadcast %96 : f32 to vector<16x36xf32>
    %98 = arith.mulf %97, %75 : vector<16x36xf32>
    %99 = arith.addf %49, %98 : vector<16x36xf32>
    %c70 = arith.constant 70 : index
    %100 = memref.load %arg2[%c70] : memref<360xf32, #tpu.memory_space<smem>>
    %101 = vector.broadcast %100 : f32 to vector<16x36xf32>
    %102 = arith.mulf %101, %75 : vector<16x36xf32>
    %103 = arith.addf %53, %102 : vector<16x36xf32>
    %c75 = arith.constant 75 : index
    %104 = memref.load %arg2[%c75] : memref<360xf32, #tpu.memory_space<smem>>
    %105 = vector.broadcast %104 : f32 to vector<16x36xf32>
    %106 = arith.mulf %105, %75 : vector<16x36xf32>
    %107 = arith.addf %57, %106 : vector<16x36xf32>
    %c20_16 = arith.constant 20 : index
    %108 = memref.load %arg4[%c20_16] : memref<180xf32, #tpu.memory_space<smem>>
    %109 = vector.broadcast %108 : f32 to vector<16x36xf32>
    %110 = arith.mulf %109, %75 : vector<16x36xf32>
    %111 = arith.addf %61, %110 : vector<16x36xf32>
    %c25_17 = arith.constant 25 : index
    %112 = memref.load %arg4[%c25_17] : memref<180xf32, #tpu.memory_space<smem>>
    %113 = vector.broadcast %112 : f32 to vector<16x36xf32>
    %114 = arith.mulf %113, %75 : vector<16x36xf32>
    %115 = arith.addf %65, %114 : vector<16x36xf32>
    %c30_18 = arith.constant 30 : index
    %116 = memref.load %arg4[%c30_18] : memref<180xf32, #tpu.memory_space<smem>>
    %117 = vector.broadcast %116 : f32 to vector<16x36xf32>
    %118 = arith.mulf %117, %75 : vector<16x36xf32>
    %119 = arith.addf %69, %118 : vector<16x36xf32>
    %c35_19 = arith.constant 35 : index
    %120 = memref.load %arg4[%c35_19] : memref<180xf32, #tpu.memory_space<smem>>
    %121 = vector.broadcast %120 : f32 to vector<16x36xf32>
    %122 = arith.mulf %121, %75 : vector<16x36xf32>
    %123 = arith.addf %73, %122 : vector<16x36xf32>
    %c0_20 = arith.constant 0 : index
    %c0_21 = arith.constant 0 : index
    %c2_22 = arith.constant 2 : index
    %124 = vector.load %arg0[%c0_20, %c0_21, %c2_22] : memref<1x18x38xf32, #tpu.memory_space<vmem>>, vector<1x16x36xf32>
    %125 = vector.shape_cast %124 : vector<1x16x36xf32> to vector<16x36xf32>
    %c80 = arith.constant 80 : index
    %126 = memref.load %arg2[%c80] : memref<360xf32, #tpu.memory_space<smem>>
    %127 = vector.broadcast %126 : f32 to vector<16x36xf32>
    %128 = arith.mulf %127, %125 : vector<16x36xf32>
    %129 = arith.addf %79, %128 : vector<16x36xf32>
    %c85 = arith.constant 85 : index
    %130 = memref.load %arg2[%c85] : memref<360xf32, #tpu.memory_space<smem>>
    %131 = vector.broadcast %130 : f32 to vector<16x36xf32>
    %132 = arith.mulf %131, %125 : vector<16x36xf32>
    %133 = arith.addf %83, %132 : vector<16x36xf32>
    %c90 = arith.constant 90 : index
    %134 = memref.load %arg2[%c90] : memref<360xf32, #tpu.memory_space<smem>>
    %135 = vector.broadcast %134 : f32 to vector<16x36xf32>
    %136 = arith.mulf %135, %125 : vector<16x36xf32>
    %137 = arith.addf %87, %136 : vector<16x36xf32>
    %c95 = arith.constant 95 : index
    %138 = memref.load %arg2[%c95] : memref<360xf32, #tpu.memory_space<smem>>
    %139 = vector.broadcast %138 : f32 to vector<16x36xf32>
    %140 = arith.mulf %139, %125 : vector<16x36xf32>
    %141 = arith.addf %91, %140 : vector<16x36xf32>
    %c100 = arith.constant 100 : index
    %142 = memref.load %arg2[%c100] : memref<360xf32, #tpu.memory_space<smem>>
    %143 = vector.broadcast %142 : f32 to vector<16x36xf32>
    %144 = arith.mulf %143, %125 : vector<16x36xf32>
    %145 = arith.addf %95, %144 : vector<16x36xf32>
    %c105 = arith.constant 105 : index
    %146 = memref.load %arg2[%c105] : memref<360xf32, #tpu.memory_space<smem>>
    %147 = vector.broadcast %146 : f32 to vector<16x36xf32>
    %148 = arith.mulf %147, %125 : vector<16x36xf32>
    %149 = arith.addf %99, %148 : vector<16x36xf32>
    %c110 = arith.constant 110 : index
    %150 = memref.load %arg2[%c110] : memref<360xf32, #tpu.memory_space<smem>>
    %151 = vector.broadcast %150 : f32 to vector<16x36xf32>
    %152 = arith.mulf %151, %125 : vector<16x36xf32>
    %153 = arith.addf %103, %152 : vector<16x36xf32>
    %c115 = arith.constant 115 : index
    %154 = memref.load %arg2[%c115] : memref<360xf32, #tpu.memory_space<smem>>
    %155 = vector.broadcast %154 : f32 to vector<16x36xf32>
    %156 = arith.mulf %155, %125 : vector<16x36xf32>
    %157 = arith.addf %107, %156 : vector<16x36xf32>
    %c40_23 = arith.constant 40 : index
    %158 = memref.load %arg4[%c40_23] : memref<180xf32, #tpu.memory_space<smem>>
    %159 = vector.broadcast %158 : f32 to vector<16x36xf32>
    %160 = arith.mulf %159, %125 : vector<16x36xf32>
    %161 = arith.addf %111, %160 : vector<16x36xf32>
    %c45_24 = arith.constant 45 : index
    %162 = memref.load %arg4[%c45_24] : memref<180xf32, #tpu.memory_space<smem>>
    %163 = vector.broadcast %162 : f32 to vector<16x36xf32>
    %164 = arith.mulf %163, %125 : vector<16x36xf32>
    %165 = arith.addf %115, %164 : vector<16x36xf32>
    %c50_25 = arith.constant 50 : index
    %166 = memref.load %arg4[%c50_25] : memref<180xf32, #tpu.memory_space<smem>>
    %167 = vector.broadcast %166 : f32 to vector<16x36xf32>
    %168 = arith.mulf %167, %125 : vector<16x36xf32>
    %169 = arith.addf %119, %168 : vector<16x36xf32>
    %c55_26 = arith.constant 55 : index
    %170 = memref.load %arg4[%c55_26] : memref<180xf32, #tpu.memory_space<smem>>
    %171 = vector.broadcast %170 : f32 to vector<16x36xf32>
    %172 = arith.mulf %171, %125 : vector<16x36xf32>
    %173 = arith.addf %123, %172 : vector<16x36xf32>
    %c0_27 = arith.constant 0 : index
    %c1_28 = arith.constant 1 : index
    %c0_29 = arith.constant 0 : index
    %174 = vector.load %arg0[%c0_27, %c1_28, %c0_29] : memref<1x18x38xf32, #tpu.memory_space<vmem>>, vector<1x16x36xf32>
    %175 = vector.shape_cast %174 : vector<1x16x36xf32> to vector<16x36xf32>
    %c120 = arith.constant 120 : index
    %176 = memref.load %arg2[%c120] : memref<360xf32, #tpu.memory_space<smem>>
    %177 = vector.broadcast %176 : f32 to vector<16x36xf32>
    %178 = arith.mulf %177, %175 : vector<16x36xf32>
    %179 = arith.addf %129, %178 : vector<16x36xf32>
    %c125 = arith.constant 125 : index
    %180 = memref.load %arg2[%c125] : memref<360xf32, #tpu.memory_space<smem>>
    %181 = vector.broadcast %180 : f32 to vector<16x36xf32>
    %182 = arith.mulf %181, %175 : vector<16x36xf32>
    %183 = arith.addf %133, %182 : vector<16x36xf32>
    %c130 = arith.constant 130 : index
    %184 = memref.load %arg2[%c130] : memref<360xf32, #tpu.memory_space<smem>>
    %185 = vector.broadcast %184 : f32 to vector<16x36xf32>
    %186 = arith.mulf %185, %175 : vector<16x36xf32>
    %187 = arith.addf %137, %186 : vector<16x36xf32>
    %c135 = arith.constant 135 : index
    %188 = memref.load %arg2[%c135] : memref<360xf32, #tpu.memory_space<smem>>
    %189 = vector.broadcast %188 : f32 to vector<16x36xf32>
    %190 = arith.mulf %189, %175 : vector<16x36xf32>
    %191 = arith.addf %141, %190 : vector<16x36xf32>
    %c140 = arith.constant 140 : index
    %192 = memref.load %arg2[%c140] : memref<360xf32, #tpu.memory_space<smem>>
    %193 = vector.broadcast %192 : f32 to vector<16x36xf32>
    %194 = arith.mulf %193, %175 : vector<16x36xf32>
    %195 = arith.addf %145, %194 : vector<16x36xf32>
    %c145 = arith.constant 145 : index
    %196 = memref.load %arg2[%c145] : memref<360xf32, #tpu.memory_space<smem>>
    %197 = vector.broadcast %196 : f32 to vector<16x36xf32>
    %198 = arith.mulf %197, %175 : vector<16x36xf32>
    %199 = arith.addf %149, %198 : vector<16x36xf32>
    %c150 = arith.constant 150 : index
    %200 = memref.load %arg2[%c150] : memref<360xf32, #tpu.memory_space<smem>>
    %201 = vector.broadcast %200 : f32 to vector<16x36xf32>
    %202 = arith.mulf %201, %175 : vector<16x36xf32>
    %203 = arith.addf %153, %202 : vector<16x36xf32>
    %c155 = arith.constant 155 : index
    %204 = memref.load %arg2[%c155] : memref<360xf32, #tpu.memory_space<smem>>
    %205 = vector.broadcast %204 : f32 to vector<16x36xf32>
    %206 = arith.mulf %205, %175 : vector<16x36xf32>
    %207 = arith.addf %157, %206 : vector<16x36xf32>
    %c60_30 = arith.constant 60 : index
    %208 = memref.load %arg4[%c60_30] : memref<180xf32, #tpu.memory_space<smem>>
    %209 = vector.broadcast %208 : f32 to vector<16x36xf32>
    %210 = arith.mulf %209, %175 : vector<16x36xf32>
    %211 = arith.addf %161, %210 : vector<16x36xf32>
    %c65_31 = arith.constant 65 : index
    %212 = memref.load %arg4[%c65_31] : memref<180xf32, #tpu.memory_space<smem>>
    %213 = vector.broadcast %212 : f32 to vector<16x36xf32>
    %214 = arith.mulf %213, %175 : vector<16x36xf32>
    %215 = arith.addf %165, %214 : vector<16x36xf32>
    %c70_32 = arith.constant 70 : index
    %216 = memref.load %arg4[%c70_32] : memref<180xf32, #tpu.memory_space<smem>>
    %217 = vector.broadcast %216 : f32 to vector<16x36xf32>
    %218 = arith.mulf %217, %175 : vector<16x36xf32>
    %219 = arith.addf %169, %218 : vector<16x36xf32>
    %c75_33 = arith.constant 75 : index
    %220 = memref.load %arg4[%c75_33] : memref<180xf32, #tpu.memory_space<smem>>
    %221 = vector.broadcast %220 : f32 to vector<16x36xf32>
    %222 = arith.mulf %221, %175 : vector<16x36xf32>
    %223 = arith.addf %173, %222 : vector<16x36xf32>
    %c0_34 = arith.constant 0 : index
    %c1_35 = arith.constant 1 : index
    %c1_36 = arith.constant 1 : index
    %224 = vector.load %arg0[%c0_34, %c1_35, %c1_36] : memref<1x18x38xf32, #tpu.memory_space<vmem>>, vector<1x16x36xf32>
    %225 = vector.shape_cast %224 : vector<1x16x36xf32> to vector<16x36xf32>
    %c160 = arith.constant 160 : index
    %226 = memref.load %arg2[%c160] : memref<360xf32, #tpu.memory_space<smem>>
    %227 = vector.broadcast %226 : f32 to vector<16x36xf32>
    %228 = arith.mulf %227, %225 : vector<16x36xf32>
    %229 = arith.addf %179, %228 : vector<16x36xf32>
    %c165 = arith.constant 165 : index
    %230 = memref.load %arg2[%c165] : memref<360xf32, #tpu.memory_space<smem>>
    %231 = vector.broadcast %230 : f32 to vector<16x36xf32>
    %232 = arith.mulf %231, %225 : vector<16x36xf32>
    %233 = arith.addf %183, %232 : vector<16x36xf32>
    %c170 = arith.constant 170 : index
    %234 = memref.load %arg2[%c170] : memref<360xf32, #tpu.memory_space<smem>>
    %235 = vector.broadcast %234 : f32 to vector<16x36xf32>
    %236 = arith.mulf %235, %225 : vector<16x36xf32>
    %237 = arith.addf %187, %236 : vector<16x36xf32>
    %c175 = arith.constant 175 : index
    %238 = memref.load %arg2[%c175] : memref<360xf32, #tpu.memory_space<smem>>
    %239 = vector.broadcast %238 : f32 to vector<16x36xf32>
    %240 = arith.mulf %239, %225 : vector<16x36xf32>
    %241 = arith.addf %191, %240 : vector<16x36xf32>
    %c180 = arith.constant 180 : index
    %242 = memref.load %arg2[%c180] : memref<360xf32, #tpu.memory_space<smem>>
    %243 = vector.broadcast %242 : f32 to vector<16x36xf32>
    %244 = arith.mulf %243, %225 : vector<16x36xf32>
    %245 = arith.addf %195, %244 : vector<16x36xf32>
    %c185 = arith.constant 185 : index
    %246 = memref.load %arg2[%c185] : memref<360xf32, #tpu.memory_space<smem>>
    %247 = vector.broadcast %246 : f32 to vector<16x36xf32>
    %248 = arith.mulf %247, %225 : vector<16x36xf32>
    %249 = arith.addf %199, %248 : vector<16x36xf32>
    %c190 = arith.constant 190 : index
    %250 = memref.load %arg2[%c190] : memref<360xf32, #tpu.memory_space<smem>>
    %251 = vector.broadcast %250 : f32 to vector<16x36xf32>
    %252 = arith.mulf %251, %225 : vector<16x36xf32>
    %253 = arith.addf %203, %252 : vector<16x36xf32>
    %c195 = arith.constant 195 : index
    %254 = memref.load %arg2[%c195] : memref<360xf32, #tpu.memory_space<smem>>
    %255 = vector.broadcast %254 : f32 to vector<16x36xf32>
    %256 = arith.mulf %255, %225 : vector<16x36xf32>
    %257 = arith.addf %207, %256 : vector<16x36xf32>
    %c80_37 = arith.constant 80 : index
    %258 = memref.load %arg4[%c80_37] : memref<180xf32, #tpu.memory_space<smem>>
    %259 = vector.broadcast %258 : f32 to vector<16x36xf32>
    %260 = arith.mulf %259, %225 : vector<16x36xf32>
    %261 = arith.addf %211, %260 : vector<16x36xf32>
    %c85_38 = arith.constant 85 : index
    %262 = memref.load %arg4[%c85_38] : memref<180xf32, #tpu.memory_space<smem>>
    %263 = vector.broadcast %262 : f32 to vector<16x36xf32>
    %264 = arith.mulf %263, %225 : vector<16x36xf32>
    %265 = arith.addf %215, %264 : vector<16x36xf32>
    %c90_39 = arith.constant 90 : index
    %266 = memref.load %arg4[%c90_39] : memref<180xf32, #tpu.memory_space<smem>>
    %267 = vector.broadcast %266 : f32 to vector<16x36xf32>
    %268 = arith.mulf %267, %225 : vector<16x36xf32>
    %269 = arith.addf %219, %268 : vector<16x36xf32>
    %c95_40 = arith.constant 95 : index
    %270 = memref.load %arg4[%c95_40] : memref<180xf32, #tpu.memory_space<smem>>
    %271 = vector.broadcast %270 : f32 to vector<16x36xf32>
    %272 = arith.mulf %271, %225 : vector<16x36xf32>
    %273 = arith.addf %223, %272 : vector<16x36xf32>
    %c0_41 = arith.constant 0 : index
    %c1_42 = arith.constant 1 : index
    %c2_43 = arith.constant 2 : index
    %274 = vector.load %arg0[%c0_41, %c1_42, %c2_43] : memref<1x18x38xf32, #tpu.memory_space<vmem>>, vector<1x16x36xf32>
    %275 = vector.shape_cast %274 : vector<1x16x36xf32> to vector<16x36xf32>
    %c200 = arith.constant 200 : index
    %276 = memref.load %arg2[%c200] : memref<360xf32, #tpu.memory_space<smem>>
    %277 = vector.broadcast %276 : f32 to vector<16x36xf32>
    %278 = arith.mulf %277, %275 : vector<16x36xf32>
    %279 = arith.addf %229, %278 : vector<16x36xf32>
    %c205 = arith.constant 205 : index
    %280 = memref.load %arg2[%c205] : memref<360xf32, #tpu.memory_space<smem>>
    %281 = vector.broadcast %280 : f32 to vector<16x36xf32>
    %282 = arith.mulf %281, %275 : vector<16x36xf32>
    %283 = arith.addf %233, %282 : vector<16x36xf32>
    %c210 = arith.constant 210 : index
    %284 = memref.load %arg2[%c210] : memref<360xf32, #tpu.memory_space<smem>>
    %285 = vector.broadcast %284 : f32 to vector<16x36xf32>
    %286 = arith.mulf %285, %275 : vector<16x36xf32>
    %287 = arith.addf %237, %286 : vector<16x36xf32>
    %c215 = arith.constant 215 : index
    %288 = memref.load %arg2[%c215] : memref<360xf32, #tpu.memory_space<smem>>
    %289 = vector.broadcast %288 : f32 to vector<16x36xf32>
    %290 = arith.mulf %289, %275 : vector<16x36xf32>
    %291 = arith.addf %241, %290 : vector<16x36xf32>
    %c220 = arith.constant 220 : index
    %292 = memref.load %arg2[%c220] : memref<360xf32, #tpu.memory_space<smem>>
    %293 = vector.broadcast %292 : f32 to vector<16x36xf32>
    %294 = arith.mulf %293, %275 : vector<16x36xf32>
    %295 = arith.addf %245, %294 : vector<16x36xf32>
    %c225 = arith.constant 225 : index
    %296 = memref.load %arg2[%c225] : memref<360xf32, #tpu.memory_space<smem>>
    %297 = vector.broadcast %296 : f32 to vector<16x36xf32>
    %298 = arith.mulf %297, %275 : vector<16x36xf32>
    %299 = arith.addf %249, %298 : vector<16x36xf32>
    %c230 = arith.constant 230 : index
    %300 = memref.load %arg2[%c230] : memref<360xf32, #tpu.memory_space<smem>>
    %301 = vector.broadcast %300 : f32 to vector<16x36xf32>
    %302 = arith.mulf %301, %275 : vector<16x36xf32>
    %303 = arith.addf %253, %302 : vector<16x36xf32>
    %c235 = arith.constant 235 : index
    %304 = memref.load %arg2[%c235] : memref<360xf32, #tpu.memory_space<smem>>
    %305 = vector.broadcast %304 : f32 to vector<16x36xf32>
    %306 = arith.mulf %305, %275 : vector<16x36xf32>
    %307 = arith.addf %257, %306 : vector<16x36xf32>
    %c100_44 = arith.constant 100 : index
    %308 = memref.load %arg4[%c100_44] : memref<180xf32, #tpu.memory_space<smem>>
    %309 = vector.broadcast %308 : f32 to vector<16x36xf32>
    %310 = arith.mulf %309, %275 : vector<16x36xf32>
    %311 = arith.addf %261, %310 : vector<16x36xf32>
    %c105_45 = arith.constant 105 : index
    %312 = memref.load %arg4[%c105_45] : memref<180xf32, #tpu.memory_space<smem>>
    %313 = vector.broadcast %312 : f32 to vector<16x36xf32>
    %314 = arith.mulf %313, %275 : vector<16x36xf32>
    %315 = arith.addf %265, %314 : vector<16x36xf32>
    %c110_46 = arith.constant 110 : index
    %316 = memref.load %arg4[%c110_46] : memref<180xf32, #tpu.memory_space<smem>>
    %317 = vector.broadcast %316 : f32 to vector<16x36xf32>
    %318 = arith.mulf %317, %275 : vector<16x36xf32>
    %319 = arith.addf %269, %318 : vector<16x36xf32>
    %c115_47 = arith.constant 115 : index
    %320 = memref.load %arg4[%c115_47] : memref<180xf32, #tpu.memory_space<smem>>
    %321 = vector.broadcast %320 : f32 to vector<16x36xf32>
    %322 = arith.mulf %321, %275 : vector<16x36xf32>
    %323 = arith.addf %273, %322 : vector<16x36xf32>
    %c0_48 = arith.constant 0 : index
    %c2_49 = arith.constant 2 : index
    %c0_50 = arith.constant 0 : index
    %324 = vector.load %arg0[%c0_48, %c2_49, %c0_50] : memref<1x18x38xf32, #tpu.memory_space<vmem>>, vector<1x16x36xf32>
    %325 = vector.shape_cast %324 : vector<1x16x36xf32> to vector<16x36xf32>
    %c240 = arith.constant 240 : index
    %326 = memref.load %arg2[%c240] : memref<360xf32, #tpu.memory_space<smem>>
    %327 = vector.broadcast %326 : f32 to vector<16x36xf32>
    %328 = arith.mulf %327, %325 : vector<16x36xf32>
    %329 = arith.addf %279, %328 : vector<16x36xf32>
    %c245 = arith.constant 245 : index
    %330 = memref.load %arg2[%c245] : memref<360xf32, #tpu.memory_space<smem>>
    %331 = vector.broadcast %330 : f32 to vector<16x36xf32>
    %332 = arith.mulf %331, %325 : vector<16x36xf32>
    %333 = arith.addf %283, %332 : vector<16x36xf32>
    %c250 = arith.constant 250 : index
    %334 = memref.load %arg2[%c250] : memref<360xf32, #tpu.memory_space<smem>>
    %335 = vector.broadcast %334 : f32 to vector<16x36xf32>
    %336 = arith.mulf %335, %325 : vector<16x36xf32>
    %337 = arith.addf %287, %336 : vector<16x36xf32>
    %c255 = arith.constant 255 : index
    %338 = memref.load %arg2[%c255] : memref<360xf32, #tpu.memory_space<smem>>
    %339 = vector.broadcast %338 : f32 to vector<16x36xf32>
    %340 = arith.mulf %339, %325 : vector<16x36xf32>
    %341 = arith.addf %291, %340 : vector<16x36xf32>
    %c260 = arith.constant 260 : index
    %342 = memref.load %arg2[%c260] : memref<360xf32, #tpu.memory_space<smem>>
    %343 = vector.broadcast %342 : f32 to vector<16x36xf32>
    %344 = arith.mulf %343, %325 : vector<16x36xf32>
    %345 = arith.addf %295, %344 : vector<16x36xf32>
    %c265 = arith.constant 265 : index
    %346 = memref.load %arg2[%c265] : memref<360xf32, #tpu.memory_space<smem>>
    %347 = vector.broadcast %346 : f32 to vector<16x36xf32>
    %348 = arith.mulf %347, %325 : vector<16x36xf32>
    %349 = arith.addf %299, %348 : vector<16x36xf32>
    %c270 = arith.constant 270 : index
    %350 = memref.load %arg2[%c270] : memref<360xf32, #tpu.memory_space<smem>>
    %351 = vector.broadcast %350 : f32 to vector<16x36xf32>
    %352 = arith.mulf %351, %325 : vector<16x36xf32>
    %353 = arith.addf %303, %352 : vector<16x36xf32>
    %c275 = arith.constant 275 : index
    %354 = memref.load %arg2[%c275] : memref<360xf32, #tpu.memory_space<smem>>
    %355 = vector.broadcast %354 : f32 to vector<16x36xf32>
    %356 = arith.mulf %355, %325 : vector<16x36xf32>
    %357 = arith.addf %307, %356 : vector<16x36xf32>
    %c120_51 = arith.constant 120 : index
    %358 = memref.load %arg4[%c120_51] : memref<180xf32, #tpu.memory_space<smem>>
    %359 = vector.broadcast %358 : f32 to vector<16x36xf32>
    %360 = arith.mulf %359, %325 : vector<16x36xf32>
    %361 = arith.addf %311, %360 : vector<16x36xf32>
    %c125_52 = arith.constant 125 : index
    %362 = memref.load %arg4[%c125_52] : memref<180xf32, #tpu.memory_space<smem>>
    %363 = vector.broadcast %362 : f32 to vector<16x36xf32>
    %364 = arith.mulf %363, %325 : vector<16x36xf32>
    %365 = arith.addf %315, %364 : vector<16x36xf32>
    %c130_53 = arith.constant 130 : index
    %366 = memref.load %arg4[%c130_53] : memref<180xf32, #tpu.memory_space<smem>>
    %367 = vector.broadcast %366 : f32 to vector<16x36xf32>
    %368 = arith.mulf %367, %325 : vector<16x36xf32>
    %369 = arith.addf %319, %368 : vector<16x36xf32>
    %c135_54 = arith.constant 135 : index
    %370 = memref.load %arg4[%c135_54] : memref<180xf32, #tpu.memory_space<smem>>
    %371 = vector.broadcast %370 : f32 to vector<16x36xf32>
    %372 = arith.mulf %371, %325 : vector<16x36xf32>
    %373 = arith.addf %323, %372 : vector<16x36xf32>
    %c0_55 = arith.constant 0 : index
    %c2_56 = arith.constant 2 : index
    %c1_57 = arith.constant 1 : index
    %374 = vector.load %arg0[%c0_55, %c2_56, %c1_57] : memref<1x18x38xf32, #tpu.memory_space<vmem>>, vector<1x16x36xf32>
    %375 = vector.shape_cast %374 : vector<1x16x36xf32> to vector<16x36xf32>
    %c280 = arith.constant 280 : index
    %376 = memref.load %arg2[%c280] : memref<360xf32, #tpu.memory_space<smem>>
    %377 = vector.broadcast %376 : f32 to vector<16x36xf32>
    %378 = arith.mulf %377, %375 : vector<16x36xf32>
    %379 = arith.addf %329, %378 : vector<16x36xf32>
    %c285 = arith.constant 285 : index
    %380 = memref.load %arg2[%c285] : memref<360xf32, #tpu.memory_space<smem>>
    %381 = vector.broadcast %380 : f32 to vector<16x36xf32>
    %382 = arith.mulf %381, %375 : vector<16x36xf32>
    %383 = arith.addf %333, %382 : vector<16x36xf32>
    %c290 = arith.constant 290 : index
    %384 = memref.load %arg2[%c290] : memref<360xf32, #tpu.memory_space<smem>>
    %385 = vector.broadcast %384 : f32 to vector<16x36xf32>
    %386 = arith.mulf %385, %375 : vector<16x36xf32>
    %387 = arith.addf %337, %386 : vector<16x36xf32>
    %c295 = arith.constant 295 : index
    %388 = memref.load %arg2[%c295] : memref<360xf32, #tpu.memory_space<smem>>
    %389 = vector.broadcast %388 : f32 to vector<16x36xf32>
    %390 = arith.mulf %389, %375 : vector<16x36xf32>
    %391 = arith.addf %341, %390 : vector<16x36xf32>
    %c300 = arith.constant 300 : index
    %392 = memref.load %arg2[%c300] : memref<360xf32, #tpu.memory_space<smem>>
    %393 = vector.broadcast %392 : f32 to vector<16x36xf32>
    %394 = arith.mulf %393, %375 : vector<16x36xf32>
    %395 = arith.addf %345, %394 : vector<16x36xf32>
    %c305 = arith.constant 305 : index
    %396 = memref.load %arg2[%c305] : memref<360xf32, #tpu.memory_space<smem>>
    %397 = vector.broadcast %396 : f32 to vector<16x36xf32>
    %398 = arith.mulf %397, %375 : vector<16x36xf32>
    %399 = arith.addf %349, %398 : vector<16x36xf32>
    %c310 = arith.constant 310 : index
    %400 = memref.load %arg2[%c310] : memref<360xf32, #tpu.memory_space<smem>>
    %401 = vector.broadcast %400 : f32 to vector<16x36xf32>
    %402 = arith.mulf %401, %375 : vector<16x36xf32>
    %403 = arith.addf %353, %402 : vector<16x36xf32>
    %c315 = arith.constant 315 : index
    %404 = memref.load %arg2[%c315] : memref<360xf32, #tpu.memory_space<smem>>
    %405 = vector.broadcast %404 : f32 to vector<16x36xf32>
    %406 = arith.mulf %405, %375 : vector<16x36xf32>
    %407 = arith.addf %357, %406 : vector<16x36xf32>
    %c140_58 = arith.constant 140 : index
    %408 = memref.load %arg4[%c140_58] : memref<180xf32, #tpu.memory_space<smem>>
    %409 = vector.broadcast %408 : f32 to vector<16x36xf32>
    %410 = arith.mulf %409, %375 : vector<16x36xf32>
    %411 = arith.addf %361, %410 : vector<16x36xf32>
    %c145_59 = arith.constant 145 : index
    %412 = memref.load %arg4[%c145_59] : memref<180xf32, #tpu.memory_space<smem>>
    %413 = vector.broadcast %412 : f32 to vector<16x36xf32>
    %414 = arith.mulf %413, %375 : vector<16x36xf32>
    %415 = arith.addf %365, %414 : vector<16x36xf32>
    %c150_60 = arith.constant 150 : index
    %416 = memref.load %arg4[%c150_60] : memref<180xf32, #tpu.memory_space<smem>>
    %417 = vector.broadcast %416 : f32 to vector<16x36xf32>
    %418 = arith.mulf %417, %375 : vector<16x36xf32>
    %419 = arith.addf %369, %418 : vector<16x36xf32>
    %c155_61 = arith.constant 155 : index
    %420 = memref.load %arg4[%c155_61] : memref<180xf32, #tpu.memory_space<smem>>
    %421 = vector.broadcast %420 : f32 to vector<16x36xf32>
    %422 = arith.mulf %421, %375 : vector<16x36xf32>
    %423 = arith.addf %373, %422 : vector<16x36xf32>
    %c0_62 = arith.constant 0 : index
    %c2_63 = arith.constant 2 : index
    %c2_64 = arith.constant 2 : index
    %424 = vector.load %arg0[%c0_62, %c2_63, %c2_64] : memref<1x18x38xf32, #tpu.memory_space<vmem>>, vector<1x16x36xf32>
    %425 = vector.shape_cast %424 : vector<1x16x36xf32> to vector<16x36xf32>
    %c320 = arith.constant 320 : index
    %426 = memref.load %arg2[%c320] : memref<360xf32, #tpu.memory_space<smem>>
    %427 = vector.broadcast %426 : f32 to vector<16x36xf32>
    %428 = arith.mulf %427, %425 : vector<16x36xf32>
    %429 = arith.addf %379, %428 : vector<16x36xf32>
    %c325 = arith.constant 325 : index
    %430 = memref.load %arg2[%c325] : memref<360xf32, #tpu.memory_space<smem>>
    %431 = vector.broadcast %430 : f32 to vector<16x36xf32>
    %432 = arith.mulf %431, %425 : vector<16x36xf32>
    %433 = arith.addf %383, %432 : vector<16x36xf32>
    %c330 = arith.constant 330 : index
    %434 = memref.load %arg2[%c330] : memref<360xf32, #tpu.memory_space<smem>>
    %435 = vector.broadcast %434 : f32 to vector<16x36xf32>
    %436 = arith.mulf %435, %425 : vector<16x36xf32>
    %437 = arith.addf %387, %436 : vector<16x36xf32>
    %c335 = arith.constant 335 : index
    %438 = memref.load %arg2[%c335] : memref<360xf32, #tpu.memory_space<smem>>
    %439 = vector.broadcast %438 : f32 to vector<16x36xf32>
    %440 = arith.mulf %439, %425 : vector<16x36xf32>
    %441 = arith.addf %391, %440 : vector<16x36xf32>
    %c340 = arith.constant 340 : index
    %442 = memref.load %arg2[%c340] : memref<360xf32, #tpu.memory_space<smem>>
    %443 = vector.broadcast %442 : f32 to vector<16x36xf32>
    %444 = arith.mulf %443, %425 : vector<16x36xf32>
    %445 = arith.addf %395, %444 : vector<16x36xf32>
    %c345 = arith.constant 345 : index
    %446 = memref.load %arg2[%c345] : memref<360xf32, #tpu.memory_space<smem>>
    %447 = vector.broadcast %446 : f32 to vector<16x36xf32>
    %448 = arith.mulf %447, %425 : vector<16x36xf32>
    %449 = arith.addf %399, %448 : vector<16x36xf32>
    %c350 = arith.constant 350 : index
    %450 = memref.load %arg2[%c350] : memref<360xf32, #tpu.memory_space<smem>>
    %451 = vector.broadcast %450 : f32 to vector<16x36xf32>
    %452 = arith.mulf %451, %425 : vector<16x36xf32>
    %453 = arith.addf %403, %452 : vector<16x36xf32>
    %c355 = arith.constant 355 : index
    %454 = memref.load %arg2[%c355] : memref<360xf32, #tpu.memory_space<smem>>
    %455 = vector.broadcast %454 : f32 to vector<16x36xf32>
    %456 = arith.mulf %455, %425 : vector<16x36xf32>
    %457 = arith.addf %407, %456 : vector<16x36xf32>
    %c160_65 = arith.constant 160 : index
    %458 = memref.load %arg4[%c160_65] : memref<180xf32, #tpu.memory_space<smem>>
    %459 = vector.broadcast %458 : f32 to vector<16x36xf32>
    %460 = arith.mulf %459, %425 : vector<16x36xf32>
    %461 = arith.addf %411, %460 : vector<16x36xf32>
    %c165_66 = arith.constant 165 : index
    %462 = memref.load %arg4[%c165_66] : memref<180xf32, #tpu.memory_space<smem>>
    %463 = vector.broadcast %462 : f32 to vector<16x36xf32>
    %464 = arith.mulf %463, %425 : vector<16x36xf32>
    %465 = arith.addf %415, %464 : vector<16x36xf32>
    %c170_67 = arith.constant 170 : index
    %466 = memref.load %arg4[%c170_67] : memref<180xf32, #tpu.memory_space<smem>>
    %467 = vector.broadcast %466 : f32 to vector<16x36xf32>
    %468 = arith.mulf %467, %425 : vector<16x36xf32>
    %469 = arith.addf %419, %468 : vector<16x36xf32>
    %c175_68 = arith.constant 175 : index
    %470 = memref.load %arg4[%c175_68] : memref<180xf32, #tpu.memory_space<smem>>
    %471 = vector.broadcast %470 : f32 to vector<16x36xf32>
    %472 = arith.mulf %471, %425 : vector<16x36xf32>
    %473 = arith.addf %423, %472 : vector<16x36xf32>
    %c0_69 = arith.constant 0 : index
    %c0_70 = arith.constant 0 : index
    %c0_71 = arith.constant 0 : index
    %474 = vector.load %arg1[%c0_69, %c0_70, %c0_71] : memref<4x18x38xf32, #tpu.memory_space<vmem>>, vector<1x16x36xf32>
    %475 = vector.shape_cast %474 : vector<1x16x36xf32> to vector<16x36xf32>
    %c1_72 = arith.constant 1 : index
    %476 = memref.load %arg2[%c1_72] : memref<360xf32, #tpu.memory_space<smem>>
    %477 = vector.broadcast %476 : f32 to vector<16x36xf32>
    %478 = arith.mulf %477, %475 : vector<16x36xf32>
    %479 = arith.addf %429, %478 : vector<16x36xf32>
    %c6_73 = arith.constant 6 : index
    %480 = memref.load %arg2[%c6_73] : memref<360xf32, #tpu.memory_space<smem>>
    %481 = vector.broadcast %480 : f32 to vector<16x36xf32>
    %482 = arith.mulf %481, %475 : vector<16x36xf32>
    %483 = arith.addf %433, %482 : vector<16x36xf32>
    %c11 = arith.constant 11 : index
    %484 = memref.load %arg2[%c11] : memref<360xf32, #tpu.memory_space<smem>>
    %485 = vector.broadcast %484 : f32 to vector<16x36xf32>
    %486 = arith.mulf %485, %475 : vector<16x36xf32>
    %487 = arith.addf %437, %486 : vector<16x36xf32>
    %c16 = arith.constant 16 : index
    %488 = memref.load %arg2[%c16] : memref<360xf32, #tpu.memory_space<smem>>
    %489 = vector.broadcast %488 : f32 to vector<16x36xf32>
    %490 = arith.mulf %489, %475 : vector<16x36xf32>
    %491 = arith.addf %441, %490 : vector<16x36xf32>
    %c21 = arith.constant 21 : index
    %492 = memref.load %arg2[%c21] : memref<360xf32, #tpu.memory_space<smem>>
    %493 = vector.broadcast %492 : f32 to vector<16x36xf32>
    %494 = arith.mulf %493, %475 : vector<16x36xf32>
    %495 = arith.addf %445, %494 : vector<16x36xf32>
    %c26 = arith.constant 26 : index
    %496 = memref.load %arg2[%c26] : memref<360xf32, #tpu.memory_space<smem>>
    %497 = vector.broadcast %496 : f32 to vector<16x36xf32>
    %498 = arith.mulf %497, %475 : vector<16x36xf32>
    %499 = arith.addf %449, %498 : vector<16x36xf32>
    %c31 = arith.constant 31 : index
    %500 = memref.load %arg2[%c31] : memref<360xf32, #tpu.memory_space<smem>>
    %501 = vector.broadcast %500 : f32 to vector<16x36xf32>
    %502 = arith.mulf %501, %475 : vector<16x36xf32>
    %503 = arith.addf %453, %502 : vector<16x36xf32>
    %c36 = arith.constant 36 : index
    %504 = memref.load %arg2[%c36] : memref<360xf32, #tpu.memory_space<smem>>
    %505 = vector.broadcast %504 : f32 to vector<16x36xf32>
    %506 = arith.mulf %505, %475 : vector<16x36xf32>
    %507 = arith.addf %457, %506 : vector<16x36xf32>
    %c0_74 = arith.constant 0 : index
    %c0_75 = arith.constant 0 : index
    %c1_76 = arith.constant 1 : index
    %508 = vector.load %arg1[%c0_74, %c0_75, %c1_76] : memref<4x18x38xf32, #tpu.memory_space<vmem>>, vector<1x16x36xf32>
    %509 = vector.shape_cast %508 : vector<1x16x36xf32> to vector<16x36xf32>
    %c41 = arith.constant 41 : index
    %510 = memref.load %arg2[%c41] : memref<360xf32, #tpu.memory_space<smem>>
    %511 = vector.broadcast %510 : f32 to vector<16x36xf32>
    %512 = arith.mulf %511, %509 : vector<16x36xf32>
    %513 = arith.addf %479, %512 : vector<16x36xf32>
    %c46 = arith.constant 46 : index
    %514 = memref.load %arg2[%c46] : memref<360xf32, #tpu.memory_space<smem>>
    %515 = vector.broadcast %514 : f32 to vector<16x36xf32>
    %516 = arith.mulf %515, %509 : vector<16x36xf32>
    %517 = arith.addf %483, %516 : vector<16x36xf32>
    %c51 = arith.constant 51 : index
    %518 = memref.load %arg2[%c51] : memref<360xf32, #tpu.memory_space<smem>>
    %519 = vector.broadcast %518 : f32 to vector<16x36xf32>
    %520 = arith.mulf %519, %509 : vector<16x36xf32>
    %521 = arith.addf %487, %520 : vector<16x36xf32>
    %c56 = arith.constant 56 : index
    %522 = memref.load %arg2[%c56] : memref<360xf32, #tpu.memory_space<smem>>
    %523 = vector.broadcast %522 : f32 to vector<16x36xf32>
    %524 = arith.mulf %523, %509 : vector<16x36xf32>
    %525 = arith.addf %491, %524 : vector<16x36xf32>
    %c61 = arith.constant 61 : index
    %526 = memref.load %arg2[%c61] : memref<360xf32, #tpu.memory_space<smem>>
    %527 = vector.broadcast %526 : f32 to vector<16x36xf32>
    %528 = arith.mulf %527, %509 : vector<16x36xf32>
    %529 = arith.addf %495, %528 : vector<16x36xf32>
    %c66 = arith.constant 66 : index
    %530 = memref.load %arg2[%c66] : memref<360xf32, #tpu.memory_space<smem>>
    %531 = vector.broadcast %530 : f32 to vector<16x36xf32>
    %532 = arith.mulf %531, %509 : vector<16x36xf32>
    %533 = arith.addf %499, %532 : vector<16x36xf32>
    %c71 = arith.constant 71 : index
    %534 = memref.load %arg2[%c71] : memref<360xf32, #tpu.memory_space<smem>>
    %535 = vector.broadcast %534 : f32 to vector<16x36xf32>
    %536 = arith.mulf %535, %509 : vector<16x36xf32>
    %537 = arith.addf %503, %536 : vector<16x36xf32>
    %c76 = arith.constant 76 : index
    %538 = memref.load %arg2[%c76] : memref<360xf32, #tpu.memory_space<smem>>
    %539 = vector.broadcast %538 : f32 to vector<16x36xf32>
    %540 = arith.mulf %539, %509 : vector<16x36xf32>
    %541 = arith.addf %507, %540 : vector<16x36xf32>
    %c0_77 = arith.constant 0 : index
    %c0_78 = arith.constant 0 : index
    %c2_79 = arith.constant 2 : index
    %542 = vector.load %arg1[%c0_77, %c0_78, %c2_79] : memref<4x18x38xf32, #tpu.memory_space<vmem>>, vector<1x16x36xf32>
    %543 = vector.shape_cast %542 : vector<1x16x36xf32> to vector<16x36xf32>
    %c81 = arith.constant 81 : index
    %544 = memref.load %arg2[%c81] : memref<360xf32, #tpu.memory_space<smem>>
    %545 = vector.broadcast %544 : f32 to vector<16x36xf32>
    %546 = arith.mulf %545, %543 : vector<16x36xf32>
    %547 = arith.addf %513, %546 : vector<16x36xf32>
    %c86 = arith.constant 86 : index
    %548 = memref.load %arg2[%c86] : memref<360xf32, #tpu.memory_space<smem>>
    %549 = vector.broadcast %548 : f32 to vector<16x36xf32>
    %550 = arith.mulf %549, %543 : vector<16x36xf32>
    %551 = arith.addf %517, %550 : vector<16x36xf32>
    %c91 = arith.constant 91 : index
    %552 = memref.load %arg2[%c91] : memref<360xf32, #tpu.memory_space<smem>>
    %553 = vector.broadcast %552 : f32 to vector<16x36xf32>
    %554 = arith.mulf %553, %543 : vector<16x36xf32>
    %555 = arith.addf %521, %554 : vector<16x36xf32>
    %c96 = arith.constant 96 : index
    %556 = memref.load %arg2[%c96] : memref<360xf32, #tpu.memory_space<smem>>
    %557 = vector.broadcast %556 : f32 to vector<16x36xf32>
    %558 = arith.mulf %557, %543 : vector<16x36xf32>
    %559 = arith.addf %525, %558 : vector<16x36xf32>
    %c101 = arith.constant 101 : index
    %560 = memref.load %arg2[%c101] : memref<360xf32, #tpu.memory_space<smem>>
    %561 = vector.broadcast %560 : f32 to vector<16x36xf32>
    %562 = arith.mulf %561, %543 : vector<16x36xf32>
    %563 = arith.addf %529, %562 : vector<16x36xf32>
    %c106 = arith.constant 106 : index
    %564 = memref.load %arg2[%c106] : memref<360xf32, #tpu.memory_space<smem>>
    %565 = vector.broadcast %564 : f32 to vector<16x36xf32>
    %566 = arith.mulf %565, %543 : vector<16x36xf32>
    %567 = arith.addf %533, %566 : vector<16x36xf32>
    %c111 = arith.constant 111 : index
    %568 = memref.load %arg2[%c111] : memref<360xf32, #tpu.memory_space<smem>>
    %569 = vector.broadcast %568 : f32 to vector<16x36xf32>
    %570 = arith.mulf %569, %543 : vector<16x36xf32>
    %571 = arith.addf %537, %570 : vector<16x36xf32>
    %c116 = arith.constant 116 : index
    %572 = memref.load %arg2[%c116] : memref<360xf32, #tpu.memory_space<smem>>
    %573 = vector.broadcast %572 : f32 to vector<16x36xf32>
    %574 = arith.mulf %573, %543 : vector<16x36xf32>
    %575 = arith.addf %541, %574 : vector<16x36xf32>
    %c0_80 = arith.constant 0 : index
    %c1_81 = arith.constant 1 : index
    %c0_82 = arith.constant 0 : index
    %576 = vector.load %arg1[%c0_80, %c1_81, %c0_82] : memref<4x18x38xf32, #tpu.memory_space<vmem>>, vector<1x16x36xf32>
    %577 = vector.shape_cast %576 : vector<1x16x36xf32> to vector<16x36xf32>
    %c121 = arith.constant 121 : index
    %578 = memref.load %arg2[%c121] : memref<360xf32, #tpu.memory_space<smem>>
    %579 = vector.broadcast %578 : f32 to vector<16x36xf32>
    %580 = arith.mulf %579, %577 : vector<16x36xf32>
    %581 = arith.addf %547, %580 : vector<16x36xf32>
    %c126 = arith.constant 126 : index
    %582 = memref.load %arg2[%c126] : memref<360xf32, #tpu.memory_space<smem>>
    %583 = vector.broadcast %582 : f32 to vector<16x36xf32>
    %584 = arith.mulf %583, %577 : vector<16x36xf32>
    %585 = arith.addf %551, %584 : vector<16x36xf32>
    %c131 = arith.constant 131 : index
    %586 = memref.load %arg2[%c131] : memref<360xf32, #tpu.memory_space<smem>>
    %587 = vector.broadcast %586 : f32 to vector<16x36xf32>
    %588 = arith.mulf %587, %577 : vector<16x36xf32>
    %589 = arith.addf %555, %588 : vector<16x36xf32>
    %c136 = arith.constant 136 : index
    %590 = memref.load %arg2[%c136] : memref<360xf32, #tpu.memory_space<smem>>
    %591 = vector.broadcast %590 : f32 to vector<16x36xf32>
    %592 = arith.mulf %591, %577 : vector<16x36xf32>
    %593 = arith.addf %559, %592 : vector<16x36xf32>
    %c141 = arith.constant 141 : index
    %594 = memref.load %arg2[%c141] : memref<360xf32, #tpu.memory_space<smem>>
    %595 = vector.broadcast %594 : f32 to vector<16x36xf32>
    %596 = arith.mulf %595, %577 : vector<16x36xf32>
    %597 = arith.addf %563, %596 : vector<16x36xf32>
    %c146 = arith.constant 146 : index
    %598 = memref.load %arg2[%c146] : memref<360xf32, #tpu.memory_space<smem>>
    %599 = vector.broadcast %598 : f32 to vector<16x36xf32>
    %600 = arith.mulf %599, %577 : vector<16x36xf32>
    %601 = arith.addf %567, %600 : vector<16x36xf32>
    %c151 = arith.constant 151 : index
    %602 = memref.load %arg2[%c151] : memref<360xf32, #tpu.memory_space<smem>>
    %603 = vector.broadcast %602 : f32 to vector<16x36xf32>
    %604 = arith.mulf %603, %577 : vector<16x36xf32>
    %605 = arith.addf %571, %604 : vector<16x36xf32>
    %c156 = arith.constant 156 : index
    %606 = memref.load %arg2[%c156] : memref<360xf32, #tpu.memory_space<smem>>
    %607 = vector.broadcast %606 : f32 to vector<16x36xf32>
    %608 = arith.mulf %607, %577 : vector<16x36xf32>
    %609 = arith.addf %575, %608 : vector<16x36xf32>
    %c0_83 = arith.constant 0 : index
    %c1_84 = arith.constant 1 : index
    %c1_85 = arith.constant 1 : index
    %610 = vector.load %arg1[%c0_83, %c1_84, %c1_85] : memref<4x18x38xf32, #tpu.memory_space<vmem>>, vector<1x16x36xf32>
    %611 = vector.shape_cast %610 : vector<1x16x36xf32> to vector<16x36xf32>
    %c161 = arith.constant 161 : index
    %612 = memref.load %arg2[%c161] : memref<360xf32, #tpu.memory_space<smem>>
    %613 = vector.broadcast %612 : f32 to vector<16x36xf32>
    %614 = arith.mulf %613, %611 : vector<16x36xf32>
    %615 = arith.addf %581, %614 : vector<16x36xf32>
    %c166 = arith.constant 166 : index
    %616 = memref.load %arg2[%c166] : memref<360xf32, #tpu.memory_space<smem>>
    %617 = vector.broadcast %616 : f32 to vector<16x36xf32>
    %618 = arith.mulf %617, %611 : vector<16x36xf32>
    %619 = arith.addf %585, %618 : vector<16x36xf32>
    %c171 = arith.constant 171 : index
    %620 = memref.load %arg2[%c171] : memref<360xf32, #tpu.memory_space<smem>>
    %621 = vector.broadcast %620 : f32 to vector<16x36xf32>
    %622 = arith.mulf %621, %611 : vector<16x36xf32>
    %623 = arith.addf %589, %622 : vector<16x36xf32>
    %c176 = arith.constant 176 : index
    %624 = memref.load %arg2[%c176] : memref<360xf32, #tpu.memory_space<smem>>
    %625 = vector.broadcast %624 : f32 to vector<16x36xf32>
    %626 = arith.mulf %625, %611 : vector<16x36xf32>
    %627 = arith.addf %593, %626 : vector<16x36xf32>
    %c181 = arith.constant 181 : index
    %628 = memref.load %arg2[%c181] : memref<360xf32, #tpu.memory_space<smem>>
    %629 = vector.broadcast %628 : f32 to vector<16x36xf32>
    %630 = arith.mulf %629, %611 : vector<16x36xf32>
    %631 = arith.addf %597, %630 : vector<16x36xf32>
    %c186 = arith.constant 186 : index
    %632 = memref.load %arg2[%c186] : memref<360xf32, #tpu.memory_space<smem>>
    %633 = vector.broadcast %632 : f32 to vector<16x36xf32>
    %634 = arith.mulf %633, %611 : vector<16x36xf32>
    %635 = arith.addf %601, %634 : vector<16x36xf32>
    %c191 = arith.constant 191 : index
    %636 = memref.load %arg2[%c191] : memref<360xf32, #tpu.memory_space<smem>>
    %637 = vector.broadcast %636 : f32 to vector<16x36xf32>
    %638 = arith.mulf %637, %611 : vector<16x36xf32>
    %639 = arith.addf %605, %638 : vector<16x36xf32>
    %c196 = arith.constant 196 : index
    %640 = memref.load %arg2[%c196] : memref<360xf32, #tpu.memory_space<smem>>
    %641 = vector.broadcast %640 : f32 to vector<16x36xf32>
    %642 = arith.mulf %641, %611 : vector<16x36xf32>
    %643 = arith.addf %609, %642 : vector<16x36xf32>
    %c0_86 = arith.constant 0 : index
    %c1_87 = arith.constant 1 : index
    %c2_88 = arith.constant 2 : index
    %644 = vector.load %arg1[%c0_86, %c1_87, %c2_88] : memref<4x18x38xf32, #tpu.memory_space<vmem>>, vector<1x16x36xf32>
    %645 = vector.shape_cast %644 : vector<1x16x36xf32> to vector<16x36xf32>
    %c201 = arith.constant 201 : index
    %646 = memref.load %arg2[%c201] : memref<360xf32, #tpu.memory_space<smem>>
    %647 = vector.broadcast %646 : f32 to vector<16x36xf32>
    %648 = arith.mulf %647, %645 : vector<16x36xf32>
    %649 = arith.addf %615, %648 : vector<16x36xf32>
    %c206 = arith.constant 206 : index
    %650 = memref.load %arg2[%c206] : memref<360xf32, #tpu.memory_space<smem>>
    %651 = vector.broadcast %650 : f32 to vector<16x36xf32>
    %652 = arith.mulf %651, %645 : vector<16x36xf32>
    %653 = arith.addf %619, %652 : vector<16x36xf32>
    %c211 = arith.constant 211 : index
    %654 = memref.load %arg2[%c211] : memref<360xf32, #tpu.memory_space<smem>>
    %655 = vector.broadcast %654 : f32 to vector<16x36xf32>
    %656 = arith.mulf %655, %645 : vector<16x36xf32>
    %657 = arith.addf %623, %656 : vector<16x36xf32>
    %c216 = arith.constant 216 : index
    %658 = memref.load %arg2[%c216] : memref<360xf32, #tpu.memory_space<smem>>
    %659 = vector.broadcast %658 : f32 to vector<16x36xf32>
    %660 = arith.mulf %659, %645 : vector<16x36xf32>
    %661 = arith.addf %627, %660 : vector<16x36xf32>
    %c221 = arith.constant 221 : index
    %662 = memref.load %arg2[%c221] : memref<360xf32, #tpu.memory_space<smem>>
    %663 = vector.broadcast %662 : f32 to vector<16x36xf32>
    %664 = arith.mulf %663, %645 : vector<16x36xf32>
    %665 = arith.addf %631, %664 : vector<16x36xf32>
    %c226 = arith.constant 226 : index
    %666 = memref.load %arg2[%c226] : memref<360xf32, #tpu.memory_space<smem>>
    %667 = vector.broadcast %666 : f32 to vector<16x36xf32>
    %668 = arith.mulf %667, %645 : vector<16x36xf32>
    %669 = arith.addf %635, %668 : vector<16x36xf32>
    %c231 = arith.constant 231 : index
    %670 = memref.load %arg2[%c231] : memref<360xf32, #tpu.memory_space<smem>>
    %671 = vector.broadcast %670 : f32 to vector<16x36xf32>
    %672 = arith.mulf %671, %645 : vector<16x36xf32>
    %673 = arith.addf %639, %672 : vector<16x36xf32>
    %c236 = arith.constant 236 : index
    %674 = memref.load %arg2[%c236] : memref<360xf32, #tpu.memory_space<smem>>
    %675 = vector.broadcast %674 : f32 to vector<16x36xf32>
    %676 = arith.mulf %675, %645 : vector<16x36xf32>
    %677 = arith.addf %643, %676 : vector<16x36xf32>
    %c0_89 = arith.constant 0 : index
    %c2_90 = arith.constant 2 : index
    %c0_91 = arith.constant 0 : index
    %678 = vector.load %arg1[%c0_89, %c2_90, %c0_91] : memref<4x18x38xf32, #tpu.memory_space<vmem>>, vector<1x16x36xf32>
    %679 = vector.shape_cast %678 : vector<1x16x36xf32> to vector<16x36xf32>
    %c241 = arith.constant 241 : index
    %680 = memref.load %arg2[%c241] : memref<360xf32, #tpu.memory_space<smem>>
    %681 = vector.broadcast %680 : f32 to vector<16x36xf32>
    %682 = arith.mulf %681, %679 : vector<16x36xf32>
    %683 = arith.addf %649, %682 : vector<16x36xf32>
    %c246 = arith.constant 246 : index
    %684 = memref.load %arg2[%c246] : memref<360xf32, #tpu.memory_space<smem>>
    %685 = vector.broadcast %684 : f32 to vector<16x36xf32>
    %686 = arith.mulf %685, %679 : vector<16x36xf32>
    %687 = arith.addf %653, %686 : vector<16x36xf32>
    %c251 = arith.constant 251 : index
    %688 = memref.load %arg2[%c251] : memref<360xf32, #tpu.memory_space<smem>>
    %689 = vector.broadcast %688 : f32 to vector<16x36xf32>
    %690 = arith.mulf %689, %679 : vector<16x36xf32>
    %691 = arith.addf %657, %690 : vector<16x36xf32>
    %c256 = arith.constant 256 : index
    %692 = memref.load %arg2[%c256] : memref<360xf32, #tpu.memory_space<smem>>
    %693 = vector.broadcast %692 : f32 to vector<16x36xf32>
    %694 = arith.mulf %693, %679 : vector<16x36xf32>
    %695 = arith.addf %661, %694 : vector<16x36xf32>
    %c261 = arith.constant 261 : index
    %696 = memref.load %arg2[%c261] : memref<360xf32, #tpu.memory_space<smem>>
    %697 = vector.broadcast %696 : f32 to vector<16x36xf32>
    %698 = arith.mulf %697, %679 : vector<16x36xf32>
    %699 = arith.addf %665, %698 : vector<16x36xf32>
    %c266 = arith.constant 266 : index
    %700 = memref.load %arg2[%c266] : memref<360xf32, #tpu.memory_space<smem>>
    %701 = vector.broadcast %700 : f32 to vector<16x36xf32>
    %702 = arith.mulf %701, %679 : vector<16x36xf32>
    %703 = arith.addf %669, %702 : vector<16x36xf32>
    %c271 = arith.constant 271 : index
    %704 = memref.load %arg2[%c271] : memref<360xf32, #tpu.memory_space<smem>>
    %705 = vector.broadcast %704 : f32 to vector<16x36xf32>
    %706 = arith.mulf %705, %679 : vector<16x36xf32>
    %707 = arith.addf %673, %706 : vector<16x36xf32>
    %c276 = arith.constant 276 : index
    %708 = memref.load %arg2[%c276] : memref<360xf32, #tpu.memory_space<smem>>
    %709 = vector.broadcast %708 : f32 to vector<16x36xf32>
    %710 = arith.mulf %709, %679 : vector<16x36xf32>
    %711 = arith.addf %677, %710 : vector<16x36xf32>
    %c0_92 = arith.constant 0 : index
    %c2_93 = arith.constant 2 : index
    %c1_94 = arith.constant 1 : index
    %712 = vector.load %arg1[%c0_92, %c2_93, %c1_94] : memref<4x18x38xf32, #tpu.memory_space<vmem>>, vector<1x16x36xf32>
    %713 = vector.shape_cast %712 : vector<1x16x36xf32> to vector<16x36xf32>
    %c281 = arith.constant 281 : index
    %714 = memref.load %arg2[%c281] : memref<360xf32, #tpu.memory_space<smem>>
    %715 = vector.broadcast %714 : f32 to vector<16x36xf32>
    %716 = arith.mulf %715, %713 : vector<16x36xf32>
    %717 = arith.addf %683, %716 : vector<16x36xf32>
    %c286 = arith.constant 286 : index
    %718 = memref.load %arg2[%c286] : memref<360xf32, #tpu.memory_space<smem>>
    %719 = vector.broadcast %718 : f32 to vector<16x36xf32>
    %720 = arith.mulf %719, %713 : vector<16x36xf32>
    %721 = arith.addf %687, %720 : vector<16x36xf32>
    %c291 = arith.constant 291 : index
    %722 = memref.load %arg2[%c291] : memref<360xf32, #tpu.memory_space<smem>>
    %723 = vector.broadcast %722 : f32 to vector<16x36xf32>
    %724 = arith.mulf %723, %713 : vector<16x36xf32>
    %725 = arith.addf %691, %724 : vector<16x36xf32>
    %c296 = arith.constant 296 : index
    %726 = memref.load %arg2[%c296] : memref<360xf32, #tpu.memory_space<smem>>
    %727 = vector.broadcast %726 : f32 to vector<16x36xf32>
    %728 = arith.mulf %727, %713 : vector<16x36xf32>
    %729 = arith.addf %695, %728 : vector<16x36xf32>
    %c301 = arith.constant 301 : index
    %730 = memref.load %arg2[%c301] : memref<360xf32, #tpu.memory_space<smem>>
    %731 = vector.broadcast %730 : f32 to vector<16x36xf32>
    %732 = arith.mulf %731, %713 : vector<16x36xf32>
    %733 = arith.addf %699, %732 : vector<16x36xf32>
    %c306 = arith.constant 306 : index
    %734 = memref.load %arg2[%c306] : memref<360xf32, #tpu.memory_space<smem>>
    %735 = vector.broadcast %734 : f32 to vector<16x36xf32>
    %736 = arith.mulf %735, %713 : vector<16x36xf32>
    %737 = arith.addf %703, %736 : vector<16x36xf32>
    %c311 = arith.constant 311 : index
    %738 = memref.load %arg2[%c311] : memref<360xf32, #tpu.memory_space<smem>>
    %739 = vector.broadcast %738 : f32 to vector<16x36xf32>
    %740 = arith.mulf %739, %713 : vector<16x36xf32>
    %741 = arith.addf %707, %740 : vector<16x36xf32>
    %c316 = arith.constant 316 : index
    %742 = memref.load %arg2[%c316] : memref<360xf32, #tpu.memory_space<smem>>
    %743 = vector.broadcast %742 : f32 to vector<16x36xf32>
    %744 = arith.mulf %743, %713 : vector<16x36xf32>
    %745 = arith.addf %711, %744 : vector<16x36xf32>
    %c0_95 = arith.constant 0 : index
    %c2_96 = arith.constant 2 : index
    %c2_97 = arith.constant 2 : index
    %746 = vector.load %arg1[%c0_95, %c2_96, %c2_97] : memref<4x18x38xf32, #tpu.memory_space<vmem>>, vector<1x16x36xf32>
    %747 = vector.shape_cast %746 : vector<1x16x36xf32> to vector<16x36xf32>
    %c321 = arith.constant 321 : index
    %748 = memref.load %arg2[%c321] : memref<360xf32, #tpu.memory_space<smem>>
    %749 = vector.broadcast %748 : f32 to vector<16x36xf32>
    %750 = arith.mulf %749, %747 : vector<16x36xf32>
    %751 = arith.addf %717, %750 : vector<16x36xf32>
    %c326 = arith.constant 326 : index
    %752 = memref.load %arg2[%c326] : memref<360xf32, #tpu.memory_space<smem>>
    %753 = vector.broadcast %752 : f32 to vector<16x36xf32>
    %754 = arith.mulf %753, %747 : vector<16x36xf32>
    %755 = arith.addf %721, %754 : vector<16x36xf32>
    %c331 = arith.constant 331 : index
    %756 = memref.load %arg2[%c331] : memref<360xf32, #tpu.memory_space<smem>>
    %757 = vector.broadcast %756 : f32 to vector<16x36xf32>
    %758 = arith.mulf %757, %747 : vector<16x36xf32>
    %759 = arith.addf %725, %758 : vector<16x36xf32>
    %c336 = arith.constant 336 : index
    %760 = memref.load %arg2[%c336] : memref<360xf32, #tpu.memory_space<smem>>
    %761 = vector.broadcast %760 : f32 to vector<16x36xf32>
    %762 = arith.mulf %761, %747 : vector<16x36xf32>
    %763 = arith.addf %729, %762 : vector<16x36xf32>
    %c341 = arith.constant 341 : index
    %764 = memref.load %arg2[%c341] : memref<360xf32, #tpu.memory_space<smem>>
    %765 = vector.broadcast %764 : f32 to vector<16x36xf32>
    %766 = arith.mulf %765, %747 : vector<16x36xf32>
    %767 = arith.addf %733, %766 : vector<16x36xf32>
    %c346 = arith.constant 346 : index
    %768 = memref.load %arg2[%c346] : memref<360xf32, #tpu.memory_space<smem>>
    %769 = vector.broadcast %768 : f32 to vector<16x36xf32>
    %770 = arith.mulf %769, %747 : vector<16x36xf32>
    %771 = arith.addf %737, %770 : vector<16x36xf32>
    %c351 = arith.constant 351 : index
    %772 = memref.load %arg2[%c351] : memref<360xf32, #tpu.memory_space<smem>>
    %773 = vector.broadcast %772 : f32 to vector<16x36xf32>
    %774 = arith.mulf %773, %747 : vector<16x36xf32>
    %775 = arith.addf %741, %774 : vector<16x36xf32>
    %c356 = arith.constant 356 : index
    %776 = memref.load %arg2[%c356] : memref<360xf32, #tpu.memory_space<smem>>
    %777 = vector.broadcast %776 : f32 to vector<16x36xf32>
    %778 = arith.mulf %777, %747 : vector<16x36xf32>
    %779 = arith.addf %745, %778 : vector<16x36xf32>
    %c1_98 = arith.constant 1 : index
    %c0_99 = arith.constant 0 : index
    %c0_100 = arith.constant 0 : index
    %780 = vector.load %arg1[%c1_98, %c0_99, %c0_100] : memref<4x18x38xf32, #tpu.memory_space<vmem>>, vector<1x16x36xf32>
    %781 = vector.shape_cast %780 : vector<1x16x36xf32> to vector<16x36xf32>
    %c2_101 = arith.constant 2 : index
    %782 = memref.load %arg2[%c2_101] : memref<360xf32, #tpu.memory_space<smem>>
    %783 = vector.broadcast %782 : f32 to vector<16x36xf32>
    %784 = arith.mulf %783, %781 : vector<16x36xf32>
    %785 = arith.addf %751, %784 : vector<16x36xf32>
    %c7_102 = arith.constant 7 : index
    %786 = memref.load %arg2[%c7_102] : memref<360xf32, #tpu.memory_space<smem>>
    %787 = vector.broadcast %786 : f32 to vector<16x36xf32>
    %788 = arith.mulf %787, %781 : vector<16x36xf32>
    %789 = arith.addf %755, %788 : vector<16x36xf32>
    %c12 = arith.constant 12 : index
    %790 = memref.load %arg2[%c12] : memref<360xf32, #tpu.memory_space<smem>>
    %791 = vector.broadcast %790 : f32 to vector<16x36xf32>
    %792 = arith.mulf %791, %781 : vector<16x36xf32>
    %793 = arith.addf %759, %792 : vector<16x36xf32>
    %c17 = arith.constant 17 : index
    %794 = memref.load %arg2[%c17] : memref<360xf32, #tpu.memory_space<smem>>
    %795 = vector.broadcast %794 : f32 to vector<16x36xf32>
    %796 = arith.mulf %795, %781 : vector<16x36xf32>
    %797 = arith.addf %763, %796 : vector<16x36xf32>
    %c22 = arith.constant 22 : index
    %798 = memref.load %arg2[%c22] : memref<360xf32, #tpu.memory_space<smem>>
    %799 = vector.broadcast %798 : f32 to vector<16x36xf32>
    %800 = arith.mulf %799, %781 : vector<16x36xf32>
    %801 = arith.addf %767, %800 : vector<16x36xf32>
    %c27 = arith.constant 27 : index
    %802 = memref.load %arg2[%c27] : memref<360xf32, #tpu.memory_space<smem>>
    %803 = vector.broadcast %802 : f32 to vector<16x36xf32>
    %804 = arith.mulf %803, %781 : vector<16x36xf32>
    %805 = arith.addf %771, %804 : vector<16x36xf32>
    %c32 = arith.constant 32 : index
    %806 = memref.load %arg2[%c32] : memref<360xf32, #tpu.memory_space<smem>>
    %807 = vector.broadcast %806 : f32 to vector<16x36xf32>
    %808 = arith.mulf %807, %781 : vector<16x36xf32>
    %809 = arith.addf %775, %808 : vector<16x36xf32>
    %c37 = arith.constant 37 : index
    %810 = memref.load %arg2[%c37] : memref<360xf32, #tpu.memory_space<smem>>
    %811 = vector.broadcast %810 : f32 to vector<16x36xf32>
    %812 = arith.mulf %811, %781 : vector<16x36xf32>
    %813 = arith.addf %779, %812 : vector<16x36xf32>
    %c1_103 = arith.constant 1 : index
    %c0_104 = arith.constant 0 : index
    %c1_105 = arith.constant 1 : index
    %814 = vector.load %arg1[%c1_103, %c0_104, %c1_105] : memref<4x18x38xf32, #tpu.memory_space<vmem>>, vector<1x16x36xf32>
    %815 = vector.shape_cast %814 : vector<1x16x36xf32> to vector<16x36xf32>
    %c42 = arith.constant 42 : index
    %816 = memref.load %arg2[%c42] : memref<360xf32, #tpu.memory_space<smem>>
    %817 = vector.broadcast %816 : f32 to vector<16x36xf32>
    %818 = arith.mulf %817, %815 : vector<16x36xf32>
    %819 = arith.addf %785, %818 : vector<16x36xf32>
    %c47 = arith.constant 47 : index
    %820 = memref.load %arg2[%c47] : memref<360xf32, #tpu.memory_space<smem>>
    %821 = vector.broadcast %820 : f32 to vector<16x36xf32>
    %822 = arith.mulf %821, %815 : vector<16x36xf32>
    %823 = arith.addf %789, %822 : vector<16x36xf32>
    %c52 = arith.constant 52 : index
    %824 = memref.load %arg2[%c52] : memref<360xf32, #tpu.memory_space<smem>>
    %825 = vector.broadcast %824 : f32 to vector<16x36xf32>
    %826 = arith.mulf %825, %815 : vector<16x36xf32>
    %827 = arith.addf %793, %826 : vector<16x36xf32>
    %c57 = arith.constant 57 : index
    %828 = memref.load %arg2[%c57] : memref<360xf32, #tpu.memory_space<smem>>
    %829 = vector.broadcast %828 : f32 to vector<16x36xf32>
    %830 = arith.mulf %829, %815 : vector<16x36xf32>
    %831 = arith.addf %797, %830 : vector<16x36xf32>
    %c62 = arith.constant 62 : index
    %832 = memref.load %arg2[%c62] : memref<360xf32, #tpu.memory_space<smem>>
    %833 = vector.broadcast %832 : f32 to vector<16x36xf32>
    %834 = arith.mulf %833, %815 : vector<16x36xf32>
    %835 = arith.addf %801, %834 : vector<16x36xf32>
    %c67 = arith.constant 67 : index
    %836 = memref.load %arg2[%c67] : memref<360xf32, #tpu.memory_space<smem>>
    %837 = vector.broadcast %836 : f32 to vector<16x36xf32>
    %838 = arith.mulf %837, %815 : vector<16x36xf32>
    %839 = arith.addf %805, %838 : vector<16x36xf32>
    %c72 = arith.constant 72 : index
    %840 = memref.load %arg2[%c72] : memref<360xf32, #tpu.memory_space<smem>>
    %841 = vector.broadcast %840 : f32 to vector<16x36xf32>
    %842 = arith.mulf %841, %815 : vector<16x36xf32>
    %843 = arith.addf %809, %842 : vector<16x36xf32>
    %c77 = arith.constant 77 : index
    %844 = memref.load %arg2[%c77] : memref<360xf32, #tpu.memory_space<smem>>
    %845 = vector.broadcast %844 : f32 to vector<16x36xf32>
    %846 = arith.mulf %845, %815 : vector<16x36xf32>
    %847 = arith.addf %813, %846 : vector<16x36xf32>
    %c1_106 = arith.constant 1 : index
    %c0_107 = arith.constant 0 : index
    %c2_108 = arith.constant 2 : index
    %848 = vector.load %arg1[%c1_106, %c0_107, %c2_108] : memref<4x18x38xf32, #tpu.memory_space<vmem>>, vector<1x16x36xf32>
    %849 = vector.shape_cast %848 : vector<1x16x36xf32> to vector<16x36xf32>
    %c82 = arith.constant 82 : index
    %850 = memref.load %arg2[%c82] : memref<360xf32, #tpu.memory_space<smem>>
    %851 = vector.broadcast %850 : f32 to vector<16x36xf32>
    %852 = arith.mulf %851, %849 : vector<16x36xf32>
    %853 = arith.addf %819, %852 : vector<16x36xf32>
    %c87 = arith.constant 87 : index
    %854 = memref.load %arg2[%c87] : memref<360xf32, #tpu.memory_space<smem>>
    %855 = vector.broadcast %854 : f32 to vector<16x36xf32>
    %856 = arith.mulf %855, %849 : vector<16x36xf32>
    %857 = arith.addf %823, %856 : vector<16x36xf32>
    %c92 = arith.constant 92 : index
    %858 = memref.load %arg2[%c92] : memref<360xf32, #tpu.memory_space<smem>>
    %859 = vector.broadcast %858 : f32 to vector<16x36xf32>
    %860 = arith.mulf %859, %849 : vector<16x36xf32>
    %861 = arith.addf %827, %860 : vector<16x36xf32>
    %c97 = arith.constant 97 : index
    %862 = memref.load %arg2[%c97] : memref<360xf32, #tpu.memory_space<smem>>
    %863 = vector.broadcast %862 : f32 to vector<16x36xf32>
    %864 = arith.mulf %863, %849 : vector<16x36xf32>
    %865 = arith.addf %831, %864 : vector<16x36xf32>
    %c102 = arith.constant 102 : index
    %866 = memref.load %arg2[%c102] : memref<360xf32, #tpu.memory_space<smem>>
    %867 = vector.broadcast %866 : f32 to vector<16x36xf32>
    %868 = arith.mulf %867, %849 : vector<16x36xf32>
    %869 = arith.addf %835, %868 : vector<16x36xf32>
    %c107 = arith.constant 107 : index
    %870 = memref.load %arg2[%c107] : memref<360xf32, #tpu.memory_space<smem>>
    %871 = vector.broadcast %870 : f32 to vector<16x36xf32>
    %872 = arith.mulf %871, %849 : vector<16x36xf32>
    %873 = arith.addf %839, %872 : vector<16x36xf32>
    %c112 = arith.constant 112 : index
    %874 = memref.load %arg2[%c112] : memref<360xf32, #tpu.memory_space<smem>>
    %875 = vector.broadcast %874 : f32 to vector<16x36xf32>
    %876 = arith.mulf %875, %849 : vector<16x36xf32>
    %877 = arith.addf %843, %876 : vector<16x36xf32>
    %c117 = arith.constant 117 : index
    %878 = memref.load %arg2[%c117] : memref<360xf32, #tpu.memory_space<smem>>
    %879 = vector.broadcast %878 : f32 to vector<16x36xf32>
    %880 = arith.mulf %879, %849 : vector<16x36xf32>
    %881 = arith.addf %847, %880 : vector<16x36xf32>
    %c1_109 = arith.constant 1 : index
    %c1_110 = arith.constant 1 : index
    %c0_111 = arith.constant 0 : index
    %882 = vector.load %arg1[%c1_109, %c1_110, %c0_111] : memref<4x18x38xf32, #tpu.memory_space<vmem>>, vector<1x16x36xf32>
    %883 = vector.shape_cast %882 : vector<1x16x36xf32> to vector<16x36xf32>
    %c122 = arith.constant 122 : index
    %884 = memref.load %arg2[%c122] : memref<360xf32, #tpu.memory_space<smem>>
    %885 = vector.broadcast %884 : f32 to vector<16x36xf32>
    %886 = arith.mulf %885, %883 : vector<16x36xf32>
    %887 = arith.addf %853, %886 : vector<16x36xf32>
    %c127 = arith.constant 127 : index
    %888 = memref.load %arg2[%c127] : memref<360xf32, #tpu.memory_space<smem>>
    %889 = vector.broadcast %888 : f32 to vector<16x36xf32>
    %890 = arith.mulf %889, %883 : vector<16x36xf32>
    %891 = arith.addf %857, %890 : vector<16x36xf32>
    %c132 = arith.constant 132 : index
    %892 = memref.load %arg2[%c132] : memref<360xf32, #tpu.memory_space<smem>>
    %893 = vector.broadcast %892 : f32 to vector<16x36xf32>
    %894 = arith.mulf %893, %883 : vector<16x36xf32>
    %895 = arith.addf %861, %894 : vector<16x36xf32>
    %c137 = arith.constant 137 : index
    %896 = memref.load %arg2[%c137] : memref<360xf32, #tpu.memory_space<smem>>
    %897 = vector.broadcast %896 : f32 to vector<16x36xf32>
    %898 = arith.mulf %897, %883 : vector<16x36xf32>
    %899 = arith.addf %865, %898 : vector<16x36xf32>
    %c142 = arith.constant 142 : index
    %900 = memref.load %arg2[%c142] : memref<360xf32, #tpu.memory_space<smem>>
    %901 = vector.broadcast %900 : f32 to vector<16x36xf32>
    %902 = arith.mulf %901, %883 : vector<16x36xf32>
    %903 = arith.addf %869, %902 : vector<16x36xf32>
    %c147 = arith.constant 147 : index
    %904 = memref.load %arg2[%c147] : memref<360xf32, #tpu.memory_space<smem>>
    %905 = vector.broadcast %904 : f32 to vector<16x36xf32>
    %906 = arith.mulf %905, %883 : vector<16x36xf32>
    %907 = arith.addf %873, %906 : vector<16x36xf32>
    %c152 = arith.constant 152 : index
    %908 = memref.load %arg2[%c152] : memref<360xf32, #tpu.memory_space<smem>>
    %909 = vector.broadcast %908 : f32 to vector<16x36xf32>
    %910 = arith.mulf %909, %883 : vector<16x36xf32>
    %911 = arith.addf %877, %910 : vector<16x36xf32>
    %c157 = arith.constant 157 : index
    %912 = memref.load %arg2[%c157] : memref<360xf32, #tpu.memory_space<smem>>
    %913 = vector.broadcast %912 : f32 to vector<16x36xf32>
    %914 = arith.mulf %913, %883 : vector<16x36xf32>
    %915 = arith.addf %881, %914 : vector<16x36xf32>
    %c1_112 = arith.constant 1 : index
    %c1_113 = arith.constant 1 : index
    %c1_114 = arith.constant 1 : index
    %916 = vector.load %arg1[%c1_112, %c1_113, %c1_114] : memref<4x18x38xf32, #tpu.memory_space<vmem>>, vector<1x16x36xf32>
    %917 = vector.shape_cast %916 : vector<1x16x36xf32> to vector<16x36xf32>
    %c162 = arith.constant 162 : index
    %918 = memref.load %arg2[%c162] : memref<360xf32, #tpu.memory_space<smem>>
    %919 = vector.broadcast %918 : f32 to vector<16x36xf32>
    %920 = arith.mulf %919, %917 : vector<16x36xf32>
    %921 = arith.addf %887, %920 : vector<16x36xf32>
    %c167 = arith.constant 167 : index
    %922 = memref.load %arg2[%c167] : memref<360xf32, #tpu.memory_space<smem>>
    %923 = vector.broadcast %922 : f32 to vector<16x36xf32>
    %924 = arith.mulf %923, %917 : vector<16x36xf32>
    %925 = arith.addf %891, %924 : vector<16x36xf32>
    %c172 = arith.constant 172 : index
    %926 = memref.load %arg2[%c172] : memref<360xf32, #tpu.memory_space<smem>>
    %927 = vector.broadcast %926 : f32 to vector<16x36xf32>
    %928 = arith.mulf %927, %917 : vector<16x36xf32>
    %929 = arith.addf %895, %928 : vector<16x36xf32>
    %c177 = arith.constant 177 : index
    %930 = memref.load %arg2[%c177] : memref<360xf32, #tpu.memory_space<smem>>
    %931 = vector.broadcast %930 : f32 to vector<16x36xf32>
    %932 = arith.mulf %931, %917 : vector<16x36xf32>
    %933 = arith.addf %899, %932 : vector<16x36xf32>
    %c182 = arith.constant 182 : index
    %934 = memref.load %arg2[%c182] : memref<360xf32, #tpu.memory_space<smem>>
    %935 = vector.broadcast %934 : f32 to vector<16x36xf32>
    %936 = arith.mulf %935, %917 : vector<16x36xf32>
    %937 = arith.addf %903, %936 : vector<16x36xf32>
    %c187 = arith.constant 187 : index
    %938 = memref.load %arg2[%c187] : memref<360xf32, #tpu.memory_space<smem>>
    %939 = vector.broadcast %938 : f32 to vector<16x36xf32>
    %940 = arith.mulf %939, %917 : vector<16x36xf32>
    %941 = arith.addf %907, %940 : vector<16x36xf32>
    %c192 = arith.constant 192 : index
    %942 = memref.load %arg2[%c192] : memref<360xf32, #tpu.memory_space<smem>>
    %943 = vector.broadcast %942 : f32 to vector<16x36xf32>
    %944 = arith.mulf %943, %917 : vector<16x36xf32>
    %945 = arith.addf %911, %944 : vector<16x36xf32>
    %c197 = arith.constant 197 : index
    %946 = memref.load %arg2[%c197] : memref<360xf32, #tpu.memory_space<smem>>
    %947 = vector.broadcast %946 : f32 to vector<16x36xf32>
    %948 = arith.mulf %947, %917 : vector<16x36xf32>
    %949 = arith.addf %915, %948 : vector<16x36xf32>
    %c1_115 = arith.constant 1 : index
    %c1_116 = arith.constant 1 : index
    %c2_117 = arith.constant 2 : index
    %950 = vector.load %arg1[%c1_115, %c1_116, %c2_117] : memref<4x18x38xf32, #tpu.memory_space<vmem>>, vector<1x16x36xf32>
    %951 = vector.shape_cast %950 : vector<1x16x36xf32> to vector<16x36xf32>
    %c202 = arith.constant 202 : index
    %952 = memref.load %arg2[%c202] : memref<360xf32, #tpu.memory_space<smem>>
    %953 = vector.broadcast %952 : f32 to vector<16x36xf32>
    %954 = arith.mulf %953, %951 : vector<16x36xf32>
    %955 = arith.addf %921, %954 : vector<16x36xf32>
    %c207 = arith.constant 207 : index
    %956 = memref.load %arg2[%c207] : memref<360xf32, #tpu.memory_space<smem>>
    %957 = vector.broadcast %956 : f32 to vector<16x36xf32>
    %958 = arith.mulf %957, %951 : vector<16x36xf32>
    %959 = arith.addf %925, %958 : vector<16x36xf32>
    %c212 = arith.constant 212 : index
    %960 = memref.load %arg2[%c212] : memref<360xf32, #tpu.memory_space<smem>>
    %961 = vector.broadcast %960 : f32 to vector<16x36xf32>
    %962 = arith.mulf %961, %951 : vector<16x36xf32>
    %963 = arith.addf %929, %962 : vector<16x36xf32>
    %c217 = arith.constant 217 : index
    %964 = memref.load %arg2[%c217] : memref<360xf32, #tpu.memory_space<smem>>
    %965 = vector.broadcast %964 : f32 to vector<16x36xf32>
    %966 = arith.mulf %965, %951 : vector<16x36xf32>
    %967 = arith.addf %933, %966 : vector<16x36xf32>
    %c222 = arith.constant 222 : index
    %968 = memref.load %arg2[%c222] : memref<360xf32, #tpu.memory_space<smem>>
    %969 = vector.broadcast %968 : f32 to vector<16x36xf32>
    %970 = arith.mulf %969, %951 : vector<16x36xf32>
    %971 = arith.addf %937, %970 : vector<16x36xf32>
    %c227 = arith.constant 227 : index
    %972 = memref.load %arg2[%c227] : memref<360xf32, #tpu.memory_space<smem>>
    %973 = vector.broadcast %972 : f32 to vector<16x36xf32>
    %974 = arith.mulf %973, %951 : vector<16x36xf32>
    %975 = arith.addf %941, %974 : vector<16x36xf32>
    %c232 = arith.constant 232 : index
    %976 = memref.load %arg2[%c232] : memref<360xf32, #tpu.memory_space<smem>>
    %977 = vector.broadcast %976 : f32 to vector<16x36xf32>
    %978 = arith.mulf %977, %951 : vector<16x36xf32>
    %979 = arith.addf %945, %978 : vector<16x36xf32>
    %c237 = arith.constant 237 : index
    %980 = memref.load %arg2[%c237] : memref<360xf32, #tpu.memory_space<smem>>
    %981 = vector.broadcast %980 : f32 to vector<16x36xf32>
    %982 = arith.mulf %981, %951 : vector<16x36xf32>
    %983 = arith.addf %949, %982 : vector<16x36xf32>
    %c1_118 = arith.constant 1 : index
    %c2_119 = arith.constant 2 : index
    %c0_120 = arith.constant 0 : index
    %984 = vector.load %arg1[%c1_118, %c2_119, %c0_120] : memref<4x18x38xf32, #tpu.memory_space<vmem>>, vector<1x16x36xf32>
    %985 = vector.shape_cast %984 : vector<1x16x36xf32> to vector<16x36xf32>
    %c242 = arith.constant 242 : index
    %986 = memref.load %arg2[%c242] : memref<360xf32, #tpu.memory_space<smem>>
    %987 = vector.broadcast %986 : f32 to vector<16x36xf32>
    %988 = arith.mulf %987, %985 : vector<16x36xf32>
    %989 = arith.addf %955, %988 : vector<16x36xf32>
    %c247 = arith.constant 247 : index
    %990 = memref.load %arg2[%c247] : memref<360xf32, #tpu.memory_space<smem>>
    %991 = vector.broadcast %990 : f32 to vector<16x36xf32>
    %992 = arith.mulf %991, %985 : vector<16x36xf32>
    %993 = arith.addf %959, %992 : vector<16x36xf32>
    %c252 = arith.constant 252 : index
    %994 = memref.load %arg2[%c252] : memref<360xf32, #tpu.memory_space<smem>>
    %995 = vector.broadcast %994 : f32 to vector<16x36xf32>
    %996 = arith.mulf %995, %985 : vector<16x36xf32>
    %997 = arith.addf %963, %996 : vector<16x36xf32>
    %c257 = arith.constant 257 : index
    %998 = memref.load %arg2[%c257] : memref<360xf32, #tpu.memory_space<smem>>
    %999 = vector.broadcast %998 : f32 to vector<16x36xf32>
    %1000 = arith.mulf %999, %985 : vector<16x36xf32>
    %1001 = arith.addf %967, %1000 : vector<16x36xf32>
    %c262 = arith.constant 262 : index
    %1002 = memref.load %arg2[%c262] : memref<360xf32, #tpu.memory_space<smem>>
    %1003 = vector.broadcast %1002 : f32 to vector<16x36xf32>
    %1004 = arith.mulf %1003, %985 : vector<16x36xf32>
    %1005 = arith.addf %971, %1004 : vector<16x36xf32>
    %c267 = arith.constant 267 : index
    %1006 = memref.load %arg2[%c267] : memref<360xf32, #tpu.memory_space<smem>>
    %1007 = vector.broadcast %1006 : f32 to vector<16x36xf32>
    %1008 = arith.mulf %1007, %985 : vector<16x36xf32>
    %1009 = arith.addf %975, %1008 : vector<16x36xf32>
    %c272 = arith.constant 272 : index
    %1010 = memref.load %arg2[%c272] : memref<360xf32, #tpu.memory_space<smem>>
    %1011 = vector.broadcast %1010 : f32 to vector<16x36xf32>
    %1012 = arith.mulf %1011, %985 : vector<16x36xf32>
    %1013 = arith.addf %979, %1012 : vector<16x36xf32>
    %c277 = arith.constant 277 : index
    %1014 = memref.load %arg2[%c277] : memref<360xf32, #tpu.memory_space<smem>>
    %1015 = vector.broadcast %1014 : f32 to vector<16x36xf32>
    %1016 = arith.mulf %1015, %985 : vector<16x36xf32>
    %1017 = arith.addf %983, %1016 : vector<16x36xf32>
    %c1_121 = arith.constant 1 : index
    %c2_122 = arith.constant 2 : index
    %c1_123 = arith.constant 1 : index
    %1018 = vector.load %arg1[%c1_121, %c2_122, %c1_123] : memref<4x18x38xf32, #tpu.memory_space<vmem>>, vector<1x16x36xf32>
    %1019 = vector.shape_cast %1018 : vector<1x16x36xf32> to vector<16x36xf32>
    %c282 = arith.constant 282 : index
    %1020 = memref.load %arg2[%c282] : memref<360xf32, #tpu.memory_space<smem>>
    %1021 = vector.broadcast %1020 : f32 to vector<16x36xf32>
    %1022 = arith.mulf %1021, %1019 : vector<16x36xf32>
    %1023 = arith.addf %989, %1022 : vector<16x36xf32>
    %c287 = arith.constant 287 : index
    %1024 = memref.load %arg2[%c287] : memref<360xf32, #tpu.memory_space<smem>>
    %1025 = vector.broadcast %1024 : f32 to vector<16x36xf32>
    %1026 = arith.mulf %1025, %1019 : vector<16x36xf32>
    %1027 = arith.addf %993, %1026 : vector<16x36xf32>
    %c292 = arith.constant 292 : index
    %1028 = memref.load %arg2[%c292] : memref<360xf32, #tpu.memory_space<smem>>
    %1029 = vector.broadcast %1028 : f32 to vector<16x36xf32>
    %1030 = arith.mulf %1029, %1019 : vector<16x36xf32>
    %1031 = arith.addf %997, %1030 : vector<16x36xf32>
    %c297 = arith.constant 297 : index
    %1032 = memref.load %arg2[%c297] : memref<360xf32, #tpu.memory_space<smem>>
    %1033 = vector.broadcast %1032 : f32 to vector<16x36xf32>
    %1034 = arith.mulf %1033, %1019 : vector<16x36xf32>
    %1035 = arith.addf %1001, %1034 : vector<16x36xf32>
    %c302 = arith.constant 302 : index
    %1036 = memref.load %arg2[%c302] : memref<360xf32, #tpu.memory_space<smem>>
    %1037 = vector.broadcast %1036 : f32 to vector<16x36xf32>
    %1038 = arith.mulf %1037, %1019 : vector<16x36xf32>
    %1039 = arith.addf %1005, %1038 : vector<16x36xf32>
    %c307 = arith.constant 307 : index
    %1040 = memref.load %arg2[%c307] : memref<360xf32, #tpu.memory_space<smem>>
    %1041 = vector.broadcast %1040 : f32 to vector<16x36xf32>
    %1042 = arith.mulf %1041, %1019 : vector<16x36xf32>
    %1043 = arith.addf %1009, %1042 : vector<16x36xf32>
    %c312 = arith.constant 312 : index
    %1044 = memref.load %arg2[%c312] : memref<360xf32, #tpu.memory_space<smem>>
    %1045 = vector.broadcast %1044 : f32 to vector<16x36xf32>
    %1046 = arith.mulf %1045, %1019 : vector<16x36xf32>
    %1047 = arith.addf %1013, %1046 : vector<16x36xf32>
    %c317 = arith.constant 317 : index
    %1048 = memref.load %arg2[%c317] : memref<360xf32, #tpu.memory_space<smem>>
    %1049 = vector.broadcast %1048 : f32 to vector<16x36xf32>
    %1050 = arith.mulf %1049, %1019 : vector<16x36xf32>
    %1051 = arith.addf %1017, %1050 : vector<16x36xf32>
    %c1_124 = arith.constant 1 : index
    %c2_125 = arith.constant 2 : index
    %c2_126 = arith.constant 2 : index
    %1052 = vector.load %arg1[%c1_124, %c2_125, %c2_126] : memref<4x18x38xf32, #tpu.memory_space<vmem>>, vector<1x16x36xf32>
    %1053 = vector.shape_cast %1052 : vector<1x16x36xf32> to vector<16x36xf32>
    %c322 = arith.constant 322 : index
    %1054 = memref.load %arg2[%c322] : memref<360xf32, #tpu.memory_space<smem>>
    %1055 = vector.broadcast %1054 : f32 to vector<16x36xf32>
    %1056 = arith.mulf %1055, %1053 : vector<16x36xf32>
    %1057 = arith.addf %1023, %1056 : vector<16x36xf32>
    %c327 = arith.constant 327 : index
    %1058 = memref.load %arg2[%c327] : memref<360xf32, #tpu.memory_space<smem>>
    %1059 = vector.broadcast %1058 : f32 to vector<16x36xf32>
    %1060 = arith.mulf %1059, %1053 : vector<16x36xf32>
    %1061 = arith.addf %1027, %1060 : vector<16x36xf32>
    %c332 = arith.constant 332 : index
    %1062 = memref.load %arg2[%c332] : memref<360xf32, #tpu.memory_space<smem>>
    %1063 = vector.broadcast %1062 : f32 to vector<16x36xf32>
    %1064 = arith.mulf %1063, %1053 : vector<16x36xf32>
    %1065 = arith.addf %1031, %1064 : vector<16x36xf32>
    %c337 = arith.constant 337 : index
    %1066 = memref.load %arg2[%c337] : memref<360xf32, #tpu.memory_space<smem>>
    %1067 = vector.broadcast %1066 : f32 to vector<16x36xf32>
    %1068 = arith.mulf %1067, %1053 : vector<16x36xf32>
    %1069 = arith.addf %1035, %1068 : vector<16x36xf32>
    %c342 = arith.constant 342 : index
    %1070 = memref.load %arg2[%c342] : memref<360xf32, #tpu.memory_space<smem>>
    %1071 = vector.broadcast %1070 : f32 to vector<16x36xf32>
    %1072 = arith.mulf %1071, %1053 : vector<16x36xf32>
    %1073 = arith.addf %1039, %1072 : vector<16x36xf32>
    %c347 = arith.constant 347 : index
    %1074 = memref.load %arg2[%c347] : memref<360xf32, #tpu.memory_space<smem>>
    %1075 = vector.broadcast %1074 : f32 to vector<16x36xf32>
    %1076 = arith.mulf %1075, %1053 : vector<16x36xf32>
    %1077 = arith.addf %1043, %1076 : vector<16x36xf32>
    %c352 = arith.constant 352 : index
    %1078 = memref.load %arg2[%c352] : memref<360xf32, #tpu.memory_space<smem>>
    %1079 = vector.broadcast %1078 : f32 to vector<16x36xf32>
    %1080 = arith.mulf %1079, %1053 : vector<16x36xf32>
    %1081 = arith.addf %1047, %1080 : vector<16x36xf32>
    %c357 = arith.constant 357 : index
    %1082 = memref.load %arg2[%c357] : memref<360xf32, #tpu.memory_space<smem>>
    %1083 = vector.broadcast %1082 : f32 to vector<16x36xf32>
    %1084 = arith.mulf %1083, %1053 : vector<16x36xf32>
    %1085 = arith.addf %1051, %1084 : vector<16x36xf32>
    %c2_127 = arith.constant 2 : index
    %c0_128 = arith.constant 0 : index
    %c0_129 = arith.constant 0 : index
    %1086 = vector.load %arg1[%c2_127, %c0_128, %c0_129] : memref<4x18x38xf32, #tpu.memory_space<vmem>>, vector<1x16x36xf32>
    %1087 = vector.shape_cast %1086 : vector<1x16x36xf32> to vector<16x36xf32>
    %c3_130 = arith.constant 3 : index
    %1088 = memref.load %arg2[%c3_130] : memref<360xf32, #tpu.memory_space<smem>>
    %1089 = vector.broadcast %1088 : f32 to vector<16x36xf32>
    %1090 = arith.mulf %1089, %1087 : vector<16x36xf32>
    %1091 = arith.addf %1057, %1090 : vector<16x36xf32>
    %c8 = arith.constant 8 : index
    %1092 = memref.load %arg2[%c8] : memref<360xf32, #tpu.memory_space<smem>>
    %1093 = vector.broadcast %1092 : f32 to vector<16x36xf32>
    %1094 = arith.mulf %1093, %1087 : vector<16x36xf32>
    %1095 = arith.addf %1061, %1094 : vector<16x36xf32>
    %c13 = arith.constant 13 : index
    %1096 = memref.load %arg2[%c13] : memref<360xf32, #tpu.memory_space<smem>>
    %1097 = vector.broadcast %1096 : f32 to vector<16x36xf32>
    %1098 = arith.mulf %1097, %1087 : vector<16x36xf32>
    %1099 = arith.addf %1065, %1098 : vector<16x36xf32>
    %c18 = arith.constant 18 : index
    %1100 = memref.load %arg2[%c18] : memref<360xf32, #tpu.memory_space<smem>>
    %1101 = vector.broadcast %1100 : f32 to vector<16x36xf32>
    %1102 = arith.mulf %1101, %1087 : vector<16x36xf32>
    %1103 = arith.addf %1069, %1102 : vector<16x36xf32>
    %c23 = arith.constant 23 : index
    %1104 = memref.load %arg2[%c23] : memref<360xf32, #tpu.memory_space<smem>>
    %1105 = vector.broadcast %1104 : f32 to vector<16x36xf32>
    %1106 = arith.mulf %1105, %1087 : vector<16x36xf32>
    %1107 = arith.addf %1073, %1106 : vector<16x36xf32>
    %c28 = arith.constant 28 : index
    %1108 = memref.load %arg2[%c28] : memref<360xf32, #tpu.memory_space<smem>>
    %1109 = vector.broadcast %1108 : f32 to vector<16x36xf32>
    %1110 = arith.mulf %1109, %1087 : vector<16x36xf32>
    %1111 = arith.addf %1077, %1110 : vector<16x36xf32>
    %c33 = arith.constant 33 : index
    %1112 = memref.load %arg2[%c33] : memref<360xf32, #tpu.memory_space<smem>>
    %1113 = vector.broadcast %1112 : f32 to vector<16x36xf32>
    %1114 = arith.mulf %1113, %1087 : vector<16x36xf32>
    %1115 = arith.addf %1081, %1114 : vector<16x36xf32>
    %c38 = arith.constant 38 : index
    %1116 = memref.load %arg2[%c38] : memref<360xf32, #tpu.memory_space<smem>>
    %1117 = vector.broadcast %1116 : f32 to vector<16x36xf32>
    %1118 = arith.mulf %1117, %1087 : vector<16x36xf32>
    %1119 = arith.addf %1085, %1118 : vector<16x36xf32>
    %c2_131 = arith.constant 2 : index
    %c0_132 = arith.constant 0 : index
    %c1_133 = arith.constant 1 : index
    %1120 = vector.load %arg1[%c2_131, %c0_132, %c1_133] : memref<4x18x38xf32, #tpu.memory_space<vmem>>, vector<1x16x36xf32>
    %1121 = vector.shape_cast %1120 : vector<1x16x36xf32> to vector<16x36xf32>
    %c43 = arith.constant 43 : index
    %1122 = memref.load %arg2[%c43] : memref<360xf32, #tpu.memory_space<smem>>
    %1123 = vector.broadcast %1122 : f32 to vector<16x36xf32>
    %1124 = arith.mulf %1123, %1121 : vector<16x36xf32>
    %1125 = arith.addf %1091, %1124 : vector<16x36xf32>
    %c48 = arith.constant 48 : index
    %1126 = memref.load %arg2[%c48] : memref<360xf32, #tpu.memory_space<smem>>
    %1127 = vector.broadcast %1126 : f32 to vector<16x36xf32>
    %1128 = arith.mulf %1127, %1121 : vector<16x36xf32>
    %1129 = arith.addf %1095, %1128 : vector<16x36xf32>
    %c53 = arith.constant 53 : index
    %1130 = memref.load %arg2[%c53] : memref<360xf32, #tpu.memory_space<smem>>
    %1131 = vector.broadcast %1130 : f32 to vector<16x36xf32>
    %1132 = arith.mulf %1131, %1121 : vector<16x36xf32>
    %1133 = arith.addf %1099, %1132 : vector<16x36xf32>
    %c58 = arith.constant 58 : index
    %1134 = memref.load %arg2[%c58] : memref<360xf32, #tpu.memory_space<smem>>
    %1135 = vector.broadcast %1134 : f32 to vector<16x36xf32>
    %1136 = arith.mulf %1135, %1121 : vector<16x36xf32>
    %1137 = arith.addf %1103, %1136 : vector<16x36xf32>
    %c63 = arith.constant 63 : index
    %1138 = memref.load %arg2[%c63] : memref<360xf32, #tpu.memory_space<smem>>
    %1139 = vector.broadcast %1138 : f32 to vector<16x36xf32>
    %1140 = arith.mulf %1139, %1121 : vector<16x36xf32>
    %1141 = arith.addf %1107, %1140 : vector<16x36xf32>
    %c68 = arith.constant 68 : index
    %1142 = memref.load %arg2[%c68] : memref<360xf32, #tpu.memory_space<smem>>
    %1143 = vector.broadcast %1142 : f32 to vector<16x36xf32>
    %1144 = arith.mulf %1143, %1121 : vector<16x36xf32>
    %1145 = arith.addf %1111, %1144 : vector<16x36xf32>
    %c73 = arith.constant 73 : index
    %1146 = memref.load %arg2[%c73] : memref<360xf32, #tpu.memory_space<smem>>
    %1147 = vector.broadcast %1146 : f32 to vector<16x36xf32>
    %1148 = arith.mulf %1147, %1121 : vector<16x36xf32>
    %1149 = arith.addf %1115, %1148 : vector<16x36xf32>
    %c78 = arith.constant 78 : index
    %1150 = memref.load %arg2[%c78] : memref<360xf32, #tpu.memory_space<smem>>
    %1151 = vector.broadcast %1150 : f32 to vector<16x36xf32>
    %1152 = arith.mulf %1151, %1121 : vector<16x36xf32>
    %1153 = arith.addf %1119, %1152 : vector<16x36xf32>
    %c2_134 = arith.constant 2 : index
    %c0_135 = arith.constant 0 : index
    %c2_136 = arith.constant 2 : index
    %1154 = vector.load %arg1[%c2_134, %c0_135, %c2_136] : memref<4x18x38xf32, #tpu.memory_space<vmem>>, vector<1x16x36xf32>
    %1155 = vector.shape_cast %1154 : vector<1x16x36xf32> to vector<16x36xf32>
    %c83 = arith.constant 83 : index
    %1156 = memref.load %arg2[%c83] : memref<360xf32, #tpu.memory_space<smem>>
    %1157 = vector.broadcast %1156 : f32 to vector<16x36xf32>
    %1158 = arith.mulf %1157, %1155 : vector<16x36xf32>
    %1159 = arith.addf %1125, %1158 : vector<16x36xf32>
    %c88 = arith.constant 88 : index
    %1160 = memref.load %arg2[%c88] : memref<360xf32, #tpu.memory_space<smem>>
    %1161 = vector.broadcast %1160 : f32 to vector<16x36xf32>
    %1162 = arith.mulf %1161, %1155 : vector<16x36xf32>
    %1163 = arith.addf %1129, %1162 : vector<16x36xf32>
    %c93 = arith.constant 93 : index
    %1164 = memref.load %arg2[%c93] : memref<360xf32, #tpu.memory_space<smem>>
    %1165 = vector.broadcast %1164 : f32 to vector<16x36xf32>
    %1166 = arith.mulf %1165, %1155 : vector<16x36xf32>
    %1167 = arith.addf %1133, %1166 : vector<16x36xf32>
    %c98 = arith.constant 98 : index
    %1168 = memref.load %arg2[%c98] : memref<360xf32, #tpu.memory_space<smem>>
    %1169 = vector.broadcast %1168 : f32 to vector<16x36xf32>
    %1170 = arith.mulf %1169, %1155 : vector<16x36xf32>
    %1171 = arith.addf %1137, %1170 : vector<16x36xf32>
    %c103 = arith.constant 103 : index
    %1172 = memref.load %arg2[%c103] : memref<360xf32, #tpu.memory_space<smem>>
    %1173 = vector.broadcast %1172 : f32 to vector<16x36xf32>
    %1174 = arith.mulf %1173, %1155 : vector<16x36xf32>
    %1175 = arith.addf %1141, %1174 : vector<16x36xf32>
    %c108 = arith.constant 108 : index
    %1176 = memref.load %arg2[%c108] : memref<360xf32, #tpu.memory_space<smem>>
    %1177 = vector.broadcast %1176 : f32 to vector<16x36xf32>
    %1178 = arith.mulf %1177, %1155 : vector<16x36xf32>
    %1179 = arith.addf %1145, %1178 : vector<16x36xf32>
    %c113 = arith.constant 113 : index
    %1180 = memref.load %arg2[%c113] : memref<360xf32, #tpu.memory_space<smem>>
    %1181 = vector.broadcast %1180 : f32 to vector<16x36xf32>
    %1182 = arith.mulf %1181, %1155 : vector<16x36xf32>
    %1183 = arith.addf %1149, %1182 : vector<16x36xf32>
    %c118 = arith.constant 118 : index
    %1184 = memref.load %arg2[%c118] : memref<360xf32, #tpu.memory_space<smem>>
    %1185 = vector.broadcast %1184 : f32 to vector<16x36xf32>
    %1186 = arith.mulf %1185, %1155 : vector<16x36xf32>
    %1187 = arith.addf %1153, %1186 : vector<16x36xf32>
    %c2_137 = arith.constant 2 : index
    %c1_138 = arith.constant 1 : index
    %c0_139 = arith.constant 0 : index
    %1188 = vector.load %arg1[%c2_137, %c1_138, %c0_139] : memref<4x18x38xf32, #tpu.memory_space<vmem>>, vector<1x16x36xf32>
    %1189 = vector.shape_cast %1188 : vector<1x16x36xf32> to vector<16x36xf32>
    %c123 = arith.constant 123 : index
    %1190 = memref.load %arg2[%c123] : memref<360xf32, #tpu.memory_space<smem>>
    %1191 = vector.broadcast %1190 : f32 to vector<16x36xf32>
    %1192 = arith.mulf %1191, %1189 : vector<16x36xf32>
    %1193 = arith.addf %1159, %1192 : vector<16x36xf32>
    %c128 = arith.constant 128 : index
    %1194 = memref.load %arg2[%c128] : memref<360xf32, #tpu.memory_space<smem>>
    %1195 = vector.broadcast %1194 : f32 to vector<16x36xf32>
    %1196 = arith.mulf %1195, %1189 : vector<16x36xf32>
    %1197 = arith.addf %1163, %1196 : vector<16x36xf32>
    %c133 = arith.constant 133 : index
    %1198 = memref.load %arg2[%c133] : memref<360xf32, #tpu.memory_space<smem>>
    %1199 = vector.broadcast %1198 : f32 to vector<16x36xf32>
    %1200 = arith.mulf %1199, %1189 : vector<16x36xf32>
    %1201 = arith.addf %1167, %1200 : vector<16x36xf32>
    %c138 = arith.constant 138 : index
    %1202 = memref.load %arg2[%c138] : memref<360xf32, #tpu.memory_space<smem>>
    %1203 = vector.broadcast %1202 : f32 to vector<16x36xf32>
    %1204 = arith.mulf %1203, %1189 : vector<16x36xf32>
    %1205 = arith.addf %1171, %1204 : vector<16x36xf32>
    %c143 = arith.constant 143 : index
    %1206 = memref.load %arg2[%c143] : memref<360xf32, #tpu.memory_space<smem>>
    %1207 = vector.broadcast %1206 : f32 to vector<16x36xf32>
    %1208 = arith.mulf %1207, %1189 : vector<16x36xf32>
    %1209 = arith.addf %1175, %1208 : vector<16x36xf32>
    %c148 = arith.constant 148 : index
    %1210 = memref.load %arg2[%c148] : memref<360xf32, #tpu.memory_space<smem>>
    %1211 = vector.broadcast %1210 : f32 to vector<16x36xf32>
    %1212 = arith.mulf %1211, %1189 : vector<16x36xf32>
    %1213 = arith.addf %1179, %1212 : vector<16x36xf32>
    %c153 = arith.constant 153 : index
    %1214 = memref.load %arg2[%c153] : memref<360xf32, #tpu.memory_space<smem>>
    %1215 = vector.broadcast %1214 : f32 to vector<16x36xf32>
    %1216 = arith.mulf %1215, %1189 : vector<16x36xf32>
    %1217 = arith.addf %1183, %1216 : vector<16x36xf32>
    %c158 = arith.constant 158 : index
    %1218 = memref.load %arg2[%c158] : memref<360xf32, #tpu.memory_space<smem>>
    %1219 = vector.broadcast %1218 : f32 to vector<16x36xf32>
    %1220 = arith.mulf %1219, %1189 : vector<16x36xf32>
    %1221 = arith.addf %1187, %1220 : vector<16x36xf32>
    %c2_140 = arith.constant 2 : index
    %c1_141 = arith.constant 1 : index
    %c1_142 = arith.constant 1 : index
    %1222 = vector.load %arg1[%c2_140, %c1_141, %c1_142] : memref<4x18x38xf32, #tpu.memory_space<vmem>>, vector<1x16x36xf32>
    %1223 = vector.shape_cast %1222 : vector<1x16x36xf32> to vector<16x36xf32>
    %c163 = arith.constant 163 : index
    %1224 = memref.load %arg2[%c163] : memref<360xf32, #tpu.memory_space<smem>>
    %1225 = vector.broadcast %1224 : f32 to vector<16x36xf32>
    %1226 = arith.mulf %1225, %1223 : vector<16x36xf32>
    %1227 = arith.addf %1193, %1226 : vector<16x36xf32>
    %c168 = arith.constant 168 : index
    %1228 = memref.load %arg2[%c168] : memref<360xf32, #tpu.memory_space<smem>>
    %1229 = vector.broadcast %1228 : f32 to vector<16x36xf32>
    %1230 = arith.mulf %1229, %1223 : vector<16x36xf32>
    %1231 = arith.addf %1197, %1230 : vector<16x36xf32>
    %c173 = arith.constant 173 : index
    %1232 = memref.load %arg2[%c173] : memref<360xf32, #tpu.memory_space<smem>>
    %1233 = vector.broadcast %1232 : f32 to vector<16x36xf32>
    %1234 = arith.mulf %1233, %1223 : vector<16x36xf32>
    %1235 = arith.addf %1201, %1234 : vector<16x36xf32>
    %c178 = arith.constant 178 : index
    %1236 = memref.load %arg2[%c178] : memref<360xf32, #tpu.memory_space<smem>>
    %1237 = vector.broadcast %1236 : f32 to vector<16x36xf32>
    %1238 = arith.mulf %1237, %1223 : vector<16x36xf32>
    %1239 = arith.addf %1205, %1238 : vector<16x36xf32>
    %c183 = arith.constant 183 : index
    %1240 = memref.load %arg2[%c183] : memref<360xf32, #tpu.memory_space<smem>>
    %1241 = vector.broadcast %1240 : f32 to vector<16x36xf32>
    %1242 = arith.mulf %1241, %1223 : vector<16x36xf32>
    %1243 = arith.addf %1209, %1242 : vector<16x36xf32>
    %c188 = arith.constant 188 : index
    %1244 = memref.load %arg2[%c188] : memref<360xf32, #tpu.memory_space<smem>>
    %1245 = vector.broadcast %1244 : f32 to vector<16x36xf32>
    %1246 = arith.mulf %1245, %1223 : vector<16x36xf32>
    %1247 = arith.addf %1213, %1246 : vector<16x36xf32>
    %c193 = arith.constant 193 : index
    %1248 = memref.load %arg2[%c193] : memref<360xf32, #tpu.memory_space<smem>>
    %1249 = vector.broadcast %1248 : f32 to vector<16x36xf32>
    %1250 = arith.mulf %1249, %1223 : vector<16x36xf32>
    %1251 = arith.addf %1217, %1250 : vector<16x36xf32>
    %c198 = arith.constant 198 : index
    %1252 = memref.load %arg2[%c198] : memref<360xf32, #tpu.memory_space<smem>>
    %1253 = vector.broadcast %1252 : f32 to vector<16x36xf32>
    %1254 = arith.mulf %1253, %1223 : vector<16x36xf32>
    %1255 = arith.addf %1221, %1254 : vector<16x36xf32>
    %c2_143 = arith.constant 2 : index
    %c1_144 = arith.constant 1 : index
    %c2_145 = arith.constant 2 : index
    %1256 = vector.load %arg1[%c2_143, %c1_144, %c2_145] : memref<4x18x38xf32, #tpu.memory_space<vmem>>, vector<1x16x36xf32>
    %1257 = vector.shape_cast %1256 : vector<1x16x36xf32> to vector<16x36xf32>
    %c203 = arith.constant 203 : index
    %1258 = memref.load %arg2[%c203] : memref<360xf32, #tpu.memory_space<smem>>
    %1259 = vector.broadcast %1258 : f32 to vector<16x36xf32>
    %1260 = arith.mulf %1259, %1257 : vector<16x36xf32>
    %1261 = arith.addf %1227, %1260 : vector<16x36xf32>
    %c208 = arith.constant 208 : index
    %1262 = memref.load %arg2[%c208] : memref<360xf32, #tpu.memory_space<smem>>
    %1263 = vector.broadcast %1262 : f32 to vector<16x36xf32>
    %1264 = arith.mulf %1263, %1257 : vector<16x36xf32>
    %1265 = arith.addf %1231, %1264 : vector<16x36xf32>
    %c213 = arith.constant 213 : index
    %1266 = memref.load %arg2[%c213] : memref<360xf32, #tpu.memory_space<smem>>
    %1267 = vector.broadcast %1266 : f32 to vector<16x36xf32>
    %1268 = arith.mulf %1267, %1257 : vector<16x36xf32>
    %1269 = arith.addf %1235, %1268 : vector<16x36xf32>
    %c218 = arith.constant 218 : index
    %1270 = memref.load %arg2[%c218] : memref<360xf32, #tpu.memory_space<smem>>
    %1271 = vector.broadcast %1270 : f32 to vector<16x36xf32>
    %1272 = arith.mulf %1271, %1257 : vector<16x36xf32>
    %1273 = arith.addf %1239, %1272 : vector<16x36xf32>
    %c223 = arith.constant 223 : index
    %1274 = memref.load %arg2[%c223] : memref<360xf32, #tpu.memory_space<smem>>
    %1275 = vector.broadcast %1274 : f32 to vector<16x36xf32>
    %1276 = arith.mulf %1275, %1257 : vector<16x36xf32>
    %1277 = arith.addf %1243, %1276 : vector<16x36xf32>
    %c228 = arith.constant 228 : index
    %1278 = memref.load %arg2[%c228] : memref<360xf32, #tpu.memory_space<smem>>
    %1279 = vector.broadcast %1278 : f32 to vector<16x36xf32>
    %1280 = arith.mulf %1279, %1257 : vector<16x36xf32>
    %1281 = arith.addf %1247, %1280 : vector<16x36xf32>
    %c233 = arith.constant 233 : index
    %1282 = memref.load %arg2[%c233] : memref<360xf32, #tpu.memory_space<smem>>
    %1283 = vector.broadcast %1282 : f32 to vector<16x36xf32>
    %1284 = arith.mulf %1283, %1257 : vector<16x36xf32>
    %1285 = arith.addf %1251, %1284 : vector<16x36xf32>
    %c238 = arith.constant 238 : index
    %1286 = memref.load %arg2[%c238] : memref<360xf32, #tpu.memory_space<smem>>
    %1287 = vector.broadcast %1286 : f32 to vector<16x36xf32>
    %1288 = arith.mulf %1287, %1257 : vector<16x36xf32>
    %1289 = arith.addf %1255, %1288 : vector<16x36xf32>
    %c2_146 = arith.constant 2 : index
    %c2_147 = arith.constant 2 : index
    %c0_148 = arith.constant 0 : index
    %1290 = vector.load %arg1[%c2_146, %c2_147, %c0_148] : memref<4x18x38xf32, #tpu.memory_space<vmem>>, vector<1x16x36xf32>
    %1291 = vector.shape_cast %1290 : vector<1x16x36xf32> to vector<16x36xf32>
    %c243 = arith.constant 243 : index
    %1292 = memref.load %arg2[%c243] : memref<360xf32, #tpu.memory_space<smem>>
    %1293 = vector.broadcast %1292 : f32 to vector<16x36xf32>
    %1294 = arith.mulf %1293, %1291 : vector<16x36xf32>
    %1295 = arith.addf %1261, %1294 : vector<16x36xf32>
    %c248 = arith.constant 248 : index
    %1296 = memref.load %arg2[%c248] : memref<360xf32, #tpu.memory_space<smem>>
    %1297 = vector.broadcast %1296 : f32 to vector<16x36xf32>
    %1298 = arith.mulf %1297, %1291 : vector<16x36xf32>
    %1299 = arith.addf %1265, %1298 : vector<16x36xf32>
    %c253 = arith.constant 253 : index
    %1300 = memref.load %arg2[%c253] : memref<360xf32, #tpu.memory_space<smem>>
    %1301 = vector.broadcast %1300 : f32 to vector<16x36xf32>
    %1302 = arith.mulf %1301, %1291 : vector<16x36xf32>
    %1303 = arith.addf %1269, %1302 : vector<16x36xf32>
    %c258 = arith.constant 258 : index
    %1304 = memref.load %arg2[%c258] : memref<360xf32, #tpu.memory_space<smem>>
    %1305 = vector.broadcast %1304 : f32 to vector<16x36xf32>
    %1306 = arith.mulf %1305, %1291 : vector<16x36xf32>
    %1307 = arith.addf %1273, %1306 : vector<16x36xf32>
    %c263 = arith.constant 263 : index
    %1308 = memref.load %arg2[%c263] : memref<360xf32, #tpu.memory_space<smem>>
    %1309 = vector.broadcast %1308 : f32 to vector<16x36xf32>
    %1310 = arith.mulf %1309, %1291 : vector<16x36xf32>
    %1311 = arith.addf %1277, %1310 : vector<16x36xf32>
    %c268 = arith.constant 268 : index
    %1312 = memref.load %arg2[%c268] : memref<360xf32, #tpu.memory_space<smem>>
    %1313 = vector.broadcast %1312 : f32 to vector<16x36xf32>
    %1314 = arith.mulf %1313, %1291 : vector<16x36xf32>
    %1315 = arith.addf %1281, %1314 : vector<16x36xf32>
    %c273 = arith.constant 273 : index
    %1316 = memref.load %arg2[%c273] : memref<360xf32, #tpu.memory_space<smem>>
    %1317 = vector.broadcast %1316 : f32 to vector<16x36xf32>
    %1318 = arith.mulf %1317, %1291 : vector<16x36xf32>
    %1319 = arith.addf %1285, %1318 : vector<16x36xf32>
    %c278 = arith.constant 278 : index
    %1320 = memref.load %arg2[%c278] : memref<360xf32, #tpu.memory_space<smem>>
    %1321 = vector.broadcast %1320 : f32 to vector<16x36xf32>
    %1322 = arith.mulf %1321, %1291 : vector<16x36xf32>
    %1323 = arith.addf %1289, %1322 : vector<16x36xf32>
    %c2_149 = arith.constant 2 : index
    %c2_150 = arith.constant 2 : index
    %c1_151 = arith.constant 1 : index
    %1324 = vector.load %arg1[%c2_149, %c2_150, %c1_151] : memref<4x18x38xf32, #tpu.memory_space<vmem>>, vector<1x16x36xf32>
    %1325 = vector.shape_cast %1324 : vector<1x16x36xf32> to vector<16x36xf32>
    %c283 = arith.constant 283 : index
    %1326 = memref.load %arg2[%c283] : memref<360xf32, #tpu.memory_space<smem>>
    %1327 = vector.broadcast %1326 : f32 to vector<16x36xf32>
    %1328 = arith.mulf %1327, %1325 : vector<16x36xf32>
    %1329 = arith.addf %1295, %1328 : vector<16x36xf32>
    %c288 = arith.constant 288 : index
    %1330 = memref.load %arg2[%c288] : memref<360xf32, #tpu.memory_space<smem>>
    %1331 = vector.broadcast %1330 : f32 to vector<16x36xf32>
    %1332 = arith.mulf %1331, %1325 : vector<16x36xf32>
    %1333 = arith.addf %1299, %1332 : vector<16x36xf32>
    %c293 = arith.constant 293 : index
    %1334 = memref.load %arg2[%c293] : memref<360xf32, #tpu.memory_space<smem>>
    %1335 = vector.broadcast %1334 : f32 to vector<16x36xf32>
    %1336 = arith.mulf %1335, %1325 : vector<16x36xf32>
    %1337 = arith.addf %1303, %1336 : vector<16x36xf32>
    %c298 = arith.constant 298 : index
    %1338 = memref.load %arg2[%c298] : memref<360xf32, #tpu.memory_space<smem>>
    %1339 = vector.broadcast %1338 : f32 to vector<16x36xf32>
    %1340 = arith.mulf %1339, %1325 : vector<16x36xf32>
    %1341 = arith.addf %1307, %1340 : vector<16x36xf32>
    %c303 = arith.constant 303 : index
    %1342 = memref.load %arg2[%c303] : memref<360xf32, #tpu.memory_space<smem>>
    %1343 = vector.broadcast %1342 : f32 to vector<16x36xf32>
    %1344 = arith.mulf %1343, %1325 : vector<16x36xf32>
    %1345 = arith.addf %1311, %1344 : vector<16x36xf32>
    %c308 = arith.constant 308 : index
    %1346 = memref.load %arg2[%c308] : memref<360xf32, #tpu.memory_space<smem>>
    %1347 = vector.broadcast %1346 : f32 to vector<16x36xf32>
    %1348 = arith.mulf %1347, %1325 : vector<16x36xf32>
    %1349 = arith.addf %1315, %1348 : vector<16x36xf32>
    %c313 = arith.constant 313 : index
    %1350 = memref.load %arg2[%c313] : memref<360xf32, #tpu.memory_space<smem>>
    %1351 = vector.broadcast %1350 : f32 to vector<16x36xf32>
    %1352 = arith.mulf %1351, %1325 : vector<16x36xf32>
    %1353 = arith.addf %1319, %1352 : vector<16x36xf32>
    %c318 = arith.constant 318 : index
    %1354 = memref.load %arg2[%c318] : memref<360xf32, #tpu.memory_space<smem>>
    %1355 = vector.broadcast %1354 : f32 to vector<16x36xf32>
    %1356 = arith.mulf %1355, %1325 : vector<16x36xf32>
    %1357 = arith.addf %1323, %1356 : vector<16x36xf32>
    %c2_152 = arith.constant 2 : index
    %c2_153 = arith.constant 2 : index
    %c2_154 = arith.constant 2 : index
    %1358 = vector.load %arg1[%c2_152, %c2_153, %c2_154] : memref<4x18x38xf32, #tpu.memory_space<vmem>>, vector<1x16x36xf32>
    %1359 = vector.shape_cast %1358 : vector<1x16x36xf32> to vector<16x36xf32>
    %c323 = arith.constant 323 : index
    %1360 = memref.load %arg2[%c323] : memref<360xf32, #tpu.memory_space<smem>>
    %1361 = vector.broadcast %1360 : f32 to vector<16x36xf32>
    %1362 = arith.mulf %1361, %1359 : vector<16x36xf32>
    %1363 = arith.addf %1329, %1362 : vector<16x36xf32>
    %c328 = arith.constant 328 : index
    %1364 = memref.load %arg2[%c328] : memref<360xf32, #tpu.memory_space<smem>>
    %1365 = vector.broadcast %1364 : f32 to vector<16x36xf32>
    %1366 = arith.mulf %1365, %1359 : vector<16x36xf32>
    %1367 = arith.addf %1333, %1366 : vector<16x36xf32>
    %c333 = arith.constant 333 : index
    %1368 = memref.load %arg2[%c333] : memref<360xf32, #tpu.memory_space<smem>>
    %1369 = vector.broadcast %1368 : f32 to vector<16x36xf32>
    %1370 = arith.mulf %1369, %1359 : vector<16x36xf32>
    %1371 = arith.addf %1337, %1370 : vector<16x36xf32>
    %c338 = arith.constant 338 : index
    %1372 = memref.load %arg2[%c338] : memref<360xf32, #tpu.memory_space<smem>>
    %1373 = vector.broadcast %1372 : f32 to vector<16x36xf32>
    %1374 = arith.mulf %1373, %1359 : vector<16x36xf32>
    %1375 = arith.addf %1341, %1374 : vector<16x36xf32>
    %c343 = arith.constant 343 : index
    %1376 = memref.load %arg2[%c343] : memref<360xf32, #tpu.memory_space<smem>>
    %1377 = vector.broadcast %1376 : f32 to vector<16x36xf32>
    %1378 = arith.mulf %1377, %1359 : vector<16x36xf32>
    %1379 = arith.addf %1345, %1378 : vector<16x36xf32>
    %c348 = arith.constant 348 : index
    %1380 = memref.load %arg2[%c348] : memref<360xf32, #tpu.memory_space<smem>>
    %1381 = vector.broadcast %1380 : f32 to vector<16x36xf32>
    %1382 = arith.mulf %1381, %1359 : vector<16x36xf32>
    %1383 = arith.addf %1349, %1382 : vector<16x36xf32>
    %c353 = arith.constant 353 : index
    %1384 = memref.load %arg2[%c353] : memref<360xf32, #tpu.memory_space<smem>>
    %1385 = vector.broadcast %1384 : f32 to vector<16x36xf32>
    %1386 = arith.mulf %1385, %1359 : vector<16x36xf32>
    %1387 = arith.addf %1353, %1386 : vector<16x36xf32>
    %c358 = arith.constant 358 : index
    %1388 = memref.load %arg2[%c358] : memref<360xf32, #tpu.memory_space<smem>>
    %1389 = vector.broadcast %1388 : f32 to vector<16x36xf32>
    %1390 = arith.mulf %1389, %1359 : vector<16x36xf32>
    %1391 = arith.addf %1357, %1390 : vector<16x36xf32>
    %c3_155 = arith.constant 3 : index
    %c0_156 = arith.constant 0 : index
    %c0_157 = arith.constant 0 : index
    %1392 = vector.load %arg1[%c3_155, %c0_156, %c0_157] : memref<4x18x38xf32, #tpu.memory_space<vmem>>, vector<1x16x36xf32>
    %1393 = vector.shape_cast %1392 : vector<1x16x36xf32> to vector<16x36xf32>
    %c4_158 = arith.constant 4 : index
    %1394 = memref.load %arg2[%c4_158] : memref<360xf32, #tpu.memory_space<smem>>
    %1395 = vector.broadcast %1394 : f32 to vector<16x36xf32>
    %1396 = arith.mulf %1395, %1393 : vector<16x36xf32>
    %1397 = arith.addf %1363, %1396 : vector<16x36xf32>
    %c9 = arith.constant 9 : index
    %1398 = memref.load %arg2[%c9] : memref<360xf32, #tpu.memory_space<smem>>
    %1399 = vector.broadcast %1398 : f32 to vector<16x36xf32>
    %1400 = arith.mulf %1399, %1393 : vector<16x36xf32>
    %1401 = arith.addf %1367, %1400 : vector<16x36xf32>
    %c14 = arith.constant 14 : index
    %1402 = memref.load %arg2[%c14] : memref<360xf32, #tpu.memory_space<smem>>
    %1403 = vector.broadcast %1402 : f32 to vector<16x36xf32>
    %1404 = arith.mulf %1403, %1393 : vector<16x36xf32>
    %1405 = arith.addf %1371, %1404 : vector<16x36xf32>
    %c19 = arith.constant 19 : index
    %1406 = memref.load %arg2[%c19] : memref<360xf32, #tpu.memory_space<smem>>
    %1407 = vector.broadcast %1406 : f32 to vector<16x36xf32>
    %1408 = arith.mulf %1407, %1393 : vector<16x36xf32>
    %1409 = arith.addf %1375, %1408 : vector<16x36xf32>
    %c24 = arith.constant 24 : index
    %1410 = memref.load %arg2[%c24] : memref<360xf32, #tpu.memory_space<smem>>
    %1411 = vector.broadcast %1410 : f32 to vector<16x36xf32>
    %1412 = arith.mulf %1411, %1393 : vector<16x36xf32>
    %1413 = arith.addf %1379, %1412 : vector<16x36xf32>
    %c29 = arith.constant 29 : index
    %1414 = memref.load %arg2[%c29] : memref<360xf32, #tpu.memory_space<smem>>
    %1415 = vector.broadcast %1414 : f32 to vector<16x36xf32>
    %1416 = arith.mulf %1415, %1393 : vector<16x36xf32>
    %1417 = arith.addf %1383, %1416 : vector<16x36xf32>
    %c34 = arith.constant 34 : index
    %1418 = memref.load %arg2[%c34] : memref<360xf32, #tpu.memory_space<smem>>
    %1419 = vector.broadcast %1418 : f32 to vector<16x36xf32>
    %1420 = arith.mulf %1419, %1393 : vector<16x36xf32>
    %1421 = arith.addf %1387, %1420 : vector<16x36xf32>
    %c39 = arith.constant 39 : index
    %1422 = memref.load %arg2[%c39] : memref<360xf32, #tpu.memory_space<smem>>
    %1423 = vector.broadcast %1422 : f32 to vector<16x36xf32>
    %1424 = arith.mulf %1423, %1393 : vector<16x36xf32>
    %1425 = arith.addf %1391, %1424 : vector<16x36xf32>
    %c3_159 = arith.constant 3 : index
    %c0_160 = arith.constant 0 : index
    %c1_161 = arith.constant 1 : index
    %1426 = vector.load %arg1[%c3_159, %c0_160, %c1_161] : memref<4x18x38xf32, #tpu.memory_space<vmem>>, vector<1x16x36xf32>
    %1427 = vector.shape_cast %1426 : vector<1x16x36xf32> to vector<16x36xf32>
    %c44 = arith.constant 44 : index
    %1428 = memref.load %arg2[%c44] : memref<360xf32, #tpu.memory_space<smem>>
    %1429 = vector.broadcast %1428 : f32 to vector<16x36xf32>
    %1430 = arith.mulf %1429, %1427 : vector<16x36xf32>
    %1431 = arith.addf %1397, %1430 : vector<16x36xf32>
    %c49 = arith.constant 49 : index
    %1432 = memref.load %arg2[%c49] : memref<360xf32, #tpu.memory_space<smem>>
    %1433 = vector.broadcast %1432 : f32 to vector<16x36xf32>
    %1434 = arith.mulf %1433, %1427 : vector<16x36xf32>
    %1435 = arith.addf %1401, %1434 : vector<16x36xf32>
    %c54 = arith.constant 54 : index
    %1436 = memref.load %arg2[%c54] : memref<360xf32, #tpu.memory_space<smem>>
    %1437 = vector.broadcast %1436 : f32 to vector<16x36xf32>
    %1438 = arith.mulf %1437, %1427 : vector<16x36xf32>
    %1439 = arith.addf %1405, %1438 : vector<16x36xf32>
    %c59 = arith.constant 59 : index
    %1440 = memref.load %arg2[%c59] : memref<360xf32, #tpu.memory_space<smem>>
    %1441 = vector.broadcast %1440 : f32 to vector<16x36xf32>
    %1442 = arith.mulf %1441, %1427 : vector<16x36xf32>
    %1443 = arith.addf %1409, %1442 : vector<16x36xf32>
    %c64 = arith.constant 64 : index
    %1444 = memref.load %arg2[%c64] : memref<360xf32, #tpu.memory_space<smem>>
    %1445 = vector.broadcast %1444 : f32 to vector<16x36xf32>
    %1446 = arith.mulf %1445, %1427 : vector<16x36xf32>
    %1447 = arith.addf %1413, %1446 : vector<16x36xf32>
    %c69 = arith.constant 69 : index
    %1448 = memref.load %arg2[%c69] : memref<360xf32, #tpu.memory_space<smem>>
    %1449 = vector.broadcast %1448 : f32 to vector<16x36xf32>
    %1450 = arith.mulf %1449, %1427 : vector<16x36xf32>
    %1451 = arith.addf %1417, %1450 : vector<16x36xf32>
    %c74 = arith.constant 74 : index
    %1452 = memref.load %arg2[%c74] : memref<360xf32, #tpu.memory_space<smem>>
    %1453 = vector.broadcast %1452 : f32 to vector<16x36xf32>
    %1454 = arith.mulf %1453, %1427 : vector<16x36xf32>
    %1455 = arith.addf %1421, %1454 : vector<16x36xf32>
    %c79 = arith.constant 79 : index
    %1456 = memref.load %arg2[%c79] : memref<360xf32, #tpu.memory_space<smem>>
    %1457 = vector.broadcast %1456 : f32 to vector<16x36xf32>
    %1458 = arith.mulf %1457, %1427 : vector<16x36xf32>
    %1459 = arith.addf %1425, %1458 : vector<16x36xf32>
    %c3_162 = arith.constant 3 : index
    %c0_163 = arith.constant 0 : index
    %c2_164 = arith.constant 2 : index
    %1460 = vector.load %arg1[%c3_162, %c0_163, %c2_164] : memref<4x18x38xf32, #tpu.memory_space<vmem>>, vector<1x16x36xf32>
    %1461 = vector.shape_cast %1460 : vector<1x16x36xf32> to vector<16x36xf32>
    %c84 = arith.constant 84 : index
    %1462 = memref.load %arg2[%c84] : memref<360xf32, #tpu.memory_space<smem>>
    %1463 = vector.broadcast %1462 : f32 to vector<16x36xf32>
    %1464 = arith.mulf %1463, %1461 : vector<16x36xf32>
    %1465 = arith.addf %1431, %1464 : vector<16x36xf32>
    %c89 = arith.constant 89 : index
    %1466 = memref.load %arg2[%c89] : memref<360xf32, #tpu.memory_space<smem>>
    %1467 = vector.broadcast %1466 : f32 to vector<16x36xf32>
    %1468 = arith.mulf %1467, %1461 : vector<16x36xf32>
    %1469 = arith.addf %1435, %1468 : vector<16x36xf32>
    %c94 = arith.constant 94 : index
    %1470 = memref.load %arg2[%c94] : memref<360xf32, #tpu.memory_space<smem>>
    %1471 = vector.broadcast %1470 : f32 to vector<16x36xf32>
    %1472 = arith.mulf %1471, %1461 : vector<16x36xf32>
    %1473 = arith.addf %1439, %1472 : vector<16x36xf32>
    %c99 = arith.constant 99 : index
    %1474 = memref.load %arg2[%c99] : memref<360xf32, #tpu.memory_space<smem>>
    %1475 = vector.broadcast %1474 : f32 to vector<16x36xf32>
    %1476 = arith.mulf %1475, %1461 : vector<16x36xf32>
    %1477 = arith.addf %1443, %1476 : vector<16x36xf32>
    %c104 = arith.constant 104 : index
    %1478 = memref.load %arg2[%c104] : memref<360xf32, #tpu.memory_space<smem>>
    %1479 = vector.broadcast %1478 : f32 to vector<16x36xf32>
    %1480 = arith.mulf %1479, %1461 : vector<16x36xf32>
    %1481 = arith.addf %1447, %1480 : vector<16x36xf32>
    %c109 = arith.constant 109 : index
    %1482 = memref.load %arg2[%c109] : memref<360xf32, #tpu.memory_space<smem>>
    %1483 = vector.broadcast %1482 : f32 to vector<16x36xf32>
    %1484 = arith.mulf %1483, %1461 : vector<16x36xf32>
    %1485 = arith.addf %1451, %1484 : vector<16x36xf32>
    %c114 = arith.constant 114 : index
    %1486 = memref.load %arg2[%c114] : memref<360xf32, #tpu.memory_space<smem>>
    %1487 = vector.broadcast %1486 : f32 to vector<16x36xf32>
    %1488 = arith.mulf %1487, %1461 : vector<16x36xf32>
    %1489 = arith.addf %1455, %1488 : vector<16x36xf32>
    %c119 = arith.constant 119 : index
    %1490 = memref.load %arg2[%c119] : memref<360xf32, #tpu.memory_space<smem>>
    %1491 = vector.broadcast %1490 : f32 to vector<16x36xf32>
    %1492 = arith.mulf %1491, %1461 : vector<16x36xf32>
    %1493 = arith.addf %1459, %1492 : vector<16x36xf32>
    %c3_165 = arith.constant 3 : index
    %c1_166 = arith.constant 1 : index
    %c0_167 = arith.constant 0 : index
    %1494 = vector.load %arg1[%c3_165, %c1_166, %c0_167] : memref<4x18x38xf32, #tpu.memory_space<vmem>>, vector<1x16x36xf32>
    %1495 = vector.shape_cast %1494 : vector<1x16x36xf32> to vector<16x36xf32>
    %c124 = arith.constant 124 : index
    %1496 = memref.load %arg2[%c124] : memref<360xf32, #tpu.memory_space<smem>>
    %1497 = vector.broadcast %1496 : f32 to vector<16x36xf32>
    %1498 = arith.mulf %1497, %1495 : vector<16x36xf32>
    %1499 = arith.addf %1465, %1498 : vector<16x36xf32>
    %c129 = arith.constant 129 : index
    %1500 = memref.load %arg2[%c129] : memref<360xf32, #tpu.memory_space<smem>>
    %1501 = vector.broadcast %1500 : f32 to vector<16x36xf32>
    %1502 = arith.mulf %1501, %1495 : vector<16x36xf32>
    %1503 = arith.addf %1469, %1502 : vector<16x36xf32>
    %c134 = arith.constant 134 : index
    %1504 = memref.load %arg2[%c134] : memref<360xf32, #tpu.memory_space<smem>>
    %1505 = vector.broadcast %1504 : f32 to vector<16x36xf32>
    %1506 = arith.mulf %1505, %1495 : vector<16x36xf32>
    %1507 = arith.addf %1473, %1506 : vector<16x36xf32>
    %c139 = arith.constant 139 : index
    %1508 = memref.load %arg2[%c139] : memref<360xf32, #tpu.memory_space<smem>>
    %1509 = vector.broadcast %1508 : f32 to vector<16x36xf32>
    %1510 = arith.mulf %1509, %1495 : vector<16x36xf32>
    %1511 = arith.addf %1477, %1510 : vector<16x36xf32>
    %c144 = arith.constant 144 : index
    %1512 = memref.load %arg2[%c144] : memref<360xf32, #tpu.memory_space<smem>>
    %1513 = vector.broadcast %1512 : f32 to vector<16x36xf32>
    %1514 = arith.mulf %1513, %1495 : vector<16x36xf32>
    %1515 = arith.addf %1481, %1514 : vector<16x36xf32>
    %c149 = arith.constant 149 : index
    %1516 = memref.load %arg2[%c149] : memref<360xf32, #tpu.memory_space<smem>>
    %1517 = vector.broadcast %1516 : f32 to vector<16x36xf32>
    %1518 = arith.mulf %1517, %1495 : vector<16x36xf32>
    %1519 = arith.addf %1485, %1518 : vector<16x36xf32>
    %c154 = arith.constant 154 : index
    %1520 = memref.load %arg2[%c154] : memref<360xf32, #tpu.memory_space<smem>>
    %1521 = vector.broadcast %1520 : f32 to vector<16x36xf32>
    %1522 = arith.mulf %1521, %1495 : vector<16x36xf32>
    %1523 = arith.addf %1489, %1522 : vector<16x36xf32>
    %c159 = arith.constant 159 : index
    %1524 = memref.load %arg2[%c159] : memref<360xf32, #tpu.memory_space<smem>>
    %1525 = vector.broadcast %1524 : f32 to vector<16x36xf32>
    %1526 = arith.mulf %1525, %1495 : vector<16x36xf32>
    %1527 = arith.addf %1493, %1526 : vector<16x36xf32>
    %c3_168 = arith.constant 3 : index
    %c1_169 = arith.constant 1 : index
    %c1_170 = arith.constant 1 : index
    %1528 = vector.load %arg1[%c3_168, %c1_169, %c1_170] : memref<4x18x38xf32, #tpu.memory_space<vmem>>, vector<1x16x36xf32>
    %1529 = vector.shape_cast %1528 : vector<1x16x36xf32> to vector<16x36xf32>
    %c164 = arith.constant 164 : index
    %1530 = memref.load %arg2[%c164] : memref<360xf32, #tpu.memory_space<smem>>
    %1531 = vector.broadcast %1530 : f32 to vector<16x36xf32>
    %1532 = arith.mulf %1531, %1529 : vector<16x36xf32>
    %1533 = arith.addf %1499, %1532 : vector<16x36xf32>
    %c169 = arith.constant 169 : index
    %1534 = memref.load %arg2[%c169] : memref<360xf32, #tpu.memory_space<smem>>
    %1535 = vector.broadcast %1534 : f32 to vector<16x36xf32>
    %1536 = arith.mulf %1535, %1529 : vector<16x36xf32>
    %1537 = arith.addf %1503, %1536 : vector<16x36xf32>
    %c174 = arith.constant 174 : index
    %1538 = memref.load %arg2[%c174] : memref<360xf32, #tpu.memory_space<smem>>
    %1539 = vector.broadcast %1538 : f32 to vector<16x36xf32>
    %1540 = arith.mulf %1539, %1529 : vector<16x36xf32>
    %1541 = arith.addf %1507, %1540 : vector<16x36xf32>
    %c179 = arith.constant 179 : index
    %1542 = memref.load %arg2[%c179] : memref<360xf32, #tpu.memory_space<smem>>
    %1543 = vector.broadcast %1542 : f32 to vector<16x36xf32>
    %1544 = arith.mulf %1543, %1529 : vector<16x36xf32>
    %1545 = arith.addf %1511, %1544 : vector<16x36xf32>
    %c184 = arith.constant 184 : index
    %1546 = memref.load %arg2[%c184] : memref<360xf32, #tpu.memory_space<smem>>
    %1547 = vector.broadcast %1546 : f32 to vector<16x36xf32>
    %1548 = arith.mulf %1547, %1529 : vector<16x36xf32>
    %1549 = arith.addf %1515, %1548 : vector<16x36xf32>
    %c189 = arith.constant 189 : index
    %1550 = memref.load %arg2[%c189] : memref<360xf32, #tpu.memory_space<smem>>
    %1551 = vector.broadcast %1550 : f32 to vector<16x36xf32>
    %1552 = arith.mulf %1551, %1529 : vector<16x36xf32>
    %1553 = arith.addf %1519, %1552 : vector<16x36xf32>
    %c194 = arith.constant 194 : index
    %1554 = memref.load %arg2[%c194] : memref<360xf32, #tpu.memory_space<smem>>
    %1555 = vector.broadcast %1554 : f32 to vector<16x36xf32>
    %1556 = arith.mulf %1555, %1529 : vector<16x36xf32>
    %1557 = arith.addf %1523, %1556 : vector<16x36xf32>
    %c199 = arith.constant 199 : index
    %1558 = memref.load %arg2[%c199] : memref<360xf32, #tpu.memory_space<smem>>
    %1559 = vector.broadcast %1558 : f32 to vector<16x36xf32>
    %1560 = arith.mulf %1559, %1529 : vector<16x36xf32>
    %1561 = arith.addf %1527, %1560 : vector<16x36xf32>
    %c3_171 = arith.constant 3 : index
    %c1_172 = arith.constant 1 : index
    %c2_173 = arith.constant 2 : index
    %1562 = vector.load %arg1[%c3_171, %c1_172, %c2_173] : memref<4x18x38xf32, #tpu.memory_space<vmem>>, vector<1x16x36xf32>
    %1563 = vector.shape_cast %1562 : vector<1x16x36xf32> to vector<16x36xf32>
    %c204 = arith.constant 204 : index
    %1564 = memref.load %arg2[%c204] : memref<360xf32, #tpu.memory_space<smem>>
    %1565 = vector.broadcast %1564 : f32 to vector<16x36xf32>
    %1566 = arith.mulf %1565, %1563 : vector<16x36xf32>
    %1567 = arith.addf %1533, %1566 : vector<16x36xf32>
    %c209 = arith.constant 209 : index
    %1568 = memref.load %arg2[%c209] : memref<360xf32, #tpu.memory_space<smem>>
    %1569 = vector.broadcast %1568 : f32 to vector<16x36xf32>
    %1570 = arith.mulf %1569, %1563 : vector<16x36xf32>
    %1571 = arith.addf %1537, %1570 : vector<16x36xf32>
    %c214 = arith.constant 214 : index
    %1572 = memref.load %arg2[%c214] : memref<360xf32, #tpu.memory_space<smem>>
    %1573 = vector.broadcast %1572 : f32 to vector<16x36xf32>
    %1574 = arith.mulf %1573, %1563 : vector<16x36xf32>
    %1575 = arith.addf %1541, %1574 : vector<16x36xf32>
    %c219 = arith.constant 219 : index
    %1576 = memref.load %arg2[%c219] : memref<360xf32, #tpu.memory_space<smem>>
    %1577 = vector.broadcast %1576 : f32 to vector<16x36xf32>
    %1578 = arith.mulf %1577, %1563 : vector<16x36xf32>
    %1579 = arith.addf %1545, %1578 : vector<16x36xf32>
    %c224 = arith.constant 224 : index
    %1580 = memref.load %arg2[%c224] : memref<360xf32, #tpu.memory_space<smem>>
    %1581 = vector.broadcast %1580 : f32 to vector<16x36xf32>
    %1582 = arith.mulf %1581, %1563 : vector<16x36xf32>
    %1583 = arith.addf %1549, %1582 : vector<16x36xf32>
    %c229 = arith.constant 229 : index
    %1584 = memref.load %arg2[%c229] : memref<360xf32, #tpu.memory_space<smem>>
    %1585 = vector.broadcast %1584 : f32 to vector<16x36xf32>
    %1586 = arith.mulf %1585, %1563 : vector<16x36xf32>
    %1587 = arith.addf %1553, %1586 : vector<16x36xf32>
    %c234 = arith.constant 234 : index
    %1588 = memref.load %arg2[%c234] : memref<360xf32, #tpu.memory_space<smem>>
    %1589 = vector.broadcast %1588 : f32 to vector<16x36xf32>
    %1590 = arith.mulf %1589, %1563 : vector<16x36xf32>
    %1591 = arith.addf %1557, %1590 : vector<16x36xf32>
    %c239 = arith.constant 239 : index
    %1592 = memref.load %arg2[%c239] : memref<360xf32, #tpu.memory_space<smem>>
    %1593 = vector.broadcast %1592 : f32 to vector<16x36xf32>
    %1594 = arith.mulf %1593, %1563 : vector<16x36xf32>
    %1595 = arith.addf %1561, %1594 : vector<16x36xf32>
    %c3_174 = arith.constant 3 : index
    %c2_175 = arith.constant 2 : index
    %c0_176 = arith.constant 0 : index
    %1596 = vector.load %arg1[%c3_174, %c2_175, %c0_176] : memref<4x18x38xf32, #tpu.memory_space<vmem>>, vector<1x16x36xf32>
    %1597 = vector.shape_cast %1596 : vector<1x16x36xf32> to vector<16x36xf32>
    %c244 = arith.constant 244 : index
    %1598 = memref.load %arg2[%c244] : memref<360xf32, #tpu.memory_space<smem>>
    %1599 = vector.broadcast %1598 : f32 to vector<16x36xf32>
    %1600 = arith.mulf %1599, %1597 : vector<16x36xf32>
    %1601 = arith.addf %1567, %1600 : vector<16x36xf32>
    %c249 = arith.constant 249 : index
    %1602 = memref.load %arg2[%c249] : memref<360xf32, #tpu.memory_space<smem>>
    %1603 = vector.broadcast %1602 : f32 to vector<16x36xf32>
    %1604 = arith.mulf %1603, %1597 : vector<16x36xf32>
    %1605 = arith.addf %1571, %1604 : vector<16x36xf32>
    %c254 = arith.constant 254 : index
    %1606 = memref.load %arg2[%c254] : memref<360xf32, #tpu.memory_space<smem>>
    %1607 = vector.broadcast %1606 : f32 to vector<16x36xf32>
    %1608 = arith.mulf %1607, %1597 : vector<16x36xf32>
    %1609 = arith.addf %1575, %1608 : vector<16x36xf32>
    %c259 = arith.constant 259 : index
    %1610 = memref.load %arg2[%c259] : memref<360xf32, #tpu.memory_space<smem>>
    %1611 = vector.broadcast %1610 : f32 to vector<16x36xf32>
    %1612 = arith.mulf %1611, %1597 : vector<16x36xf32>
    %1613 = arith.addf %1579, %1612 : vector<16x36xf32>
    %c264 = arith.constant 264 : index
    %1614 = memref.load %arg2[%c264] : memref<360xf32, #tpu.memory_space<smem>>
    %1615 = vector.broadcast %1614 : f32 to vector<16x36xf32>
    %1616 = arith.mulf %1615, %1597 : vector<16x36xf32>
    %1617 = arith.addf %1583, %1616 : vector<16x36xf32>
    %c269 = arith.constant 269 : index
    %1618 = memref.load %arg2[%c269] : memref<360xf32, #tpu.memory_space<smem>>
    %1619 = vector.broadcast %1618 : f32 to vector<16x36xf32>
    %1620 = arith.mulf %1619, %1597 : vector<16x36xf32>
    %1621 = arith.addf %1587, %1620 : vector<16x36xf32>
    %c274 = arith.constant 274 : index
    %1622 = memref.load %arg2[%c274] : memref<360xf32, #tpu.memory_space<smem>>
    %1623 = vector.broadcast %1622 : f32 to vector<16x36xf32>
    %1624 = arith.mulf %1623, %1597 : vector<16x36xf32>
    %1625 = arith.addf %1591, %1624 : vector<16x36xf32>
    %c279 = arith.constant 279 : index
    %1626 = memref.load %arg2[%c279] : memref<360xf32, #tpu.memory_space<smem>>
    %1627 = vector.broadcast %1626 : f32 to vector<16x36xf32>
    %1628 = arith.mulf %1627, %1597 : vector<16x36xf32>
    %1629 = arith.addf %1595, %1628 : vector<16x36xf32>
    %c3_177 = arith.constant 3 : index
    %c2_178 = arith.constant 2 : index
    %c1_179 = arith.constant 1 : index
    %1630 = vector.load %arg1[%c3_177, %c2_178, %c1_179] : memref<4x18x38xf32, #tpu.memory_space<vmem>>, vector<1x16x36xf32>
    %1631 = vector.shape_cast %1630 : vector<1x16x36xf32> to vector<16x36xf32>
    %c284 = arith.constant 284 : index
    %1632 = memref.load %arg2[%c284] : memref<360xf32, #tpu.memory_space<smem>>
    %1633 = vector.broadcast %1632 : f32 to vector<16x36xf32>
    %1634 = arith.mulf %1633, %1631 : vector<16x36xf32>
    %1635 = arith.addf %1601, %1634 : vector<16x36xf32>
    %c289 = arith.constant 289 : index
    %1636 = memref.load %arg2[%c289] : memref<360xf32, #tpu.memory_space<smem>>
    %1637 = vector.broadcast %1636 : f32 to vector<16x36xf32>
    %1638 = arith.mulf %1637, %1631 : vector<16x36xf32>
    %1639 = arith.addf %1605, %1638 : vector<16x36xf32>
    %c294 = arith.constant 294 : index
    %1640 = memref.load %arg2[%c294] : memref<360xf32, #tpu.memory_space<smem>>
    %1641 = vector.broadcast %1640 : f32 to vector<16x36xf32>
    %1642 = arith.mulf %1641, %1631 : vector<16x36xf32>
    %1643 = arith.addf %1609, %1642 : vector<16x36xf32>
    %c299 = arith.constant 299 : index
    %1644 = memref.load %arg2[%c299] : memref<360xf32, #tpu.memory_space<smem>>
    %1645 = vector.broadcast %1644 : f32 to vector<16x36xf32>
    %1646 = arith.mulf %1645, %1631 : vector<16x36xf32>
    %1647 = arith.addf %1613, %1646 : vector<16x36xf32>
    %c304 = arith.constant 304 : index
    %1648 = memref.load %arg2[%c304] : memref<360xf32, #tpu.memory_space<smem>>
    %1649 = vector.broadcast %1648 : f32 to vector<16x36xf32>
    %1650 = arith.mulf %1649, %1631 : vector<16x36xf32>
    %1651 = arith.addf %1617, %1650 : vector<16x36xf32>
    %c309 = arith.constant 309 : index
    %1652 = memref.load %arg2[%c309] : memref<360xf32, #tpu.memory_space<smem>>
    %1653 = vector.broadcast %1652 : f32 to vector<16x36xf32>
    %1654 = arith.mulf %1653, %1631 : vector<16x36xf32>
    %1655 = arith.addf %1621, %1654 : vector<16x36xf32>
    %c314 = arith.constant 314 : index
    %1656 = memref.load %arg2[%c314] : memref<360xf32, #tpu.memory_space<smem>>
    %1657 = vector.broadcast %1656 : f32 to vector<16x36xf32>
    %1658 = arith.mulf %1657, %1631 : vector<16x36xf32>
    %1659 = arith.addf %1625, %1658 : vector<16x36xf32>
    %c319 = arith.constant 319 : index
    %1660 = memref.load %arg2[%c319] : memref<360xf32, #tpu.memory_space<smem>>
    %1661 = vector.broadcast %1660 : f32 to vector<16x36xf32>
    %1662 = arith.mulf %1661, %1631 : vector<16x36xf32>
    %1663 = arith.addf %1629, %1662 : vector<16x36xf32>
    %c3_180 = arith.constant 3 : index
    %c2_181 = arith.constant 2 : index
    %c2_182 = arith.constant 2 : index
    %1664 = vector.load %arg1[%c3_180, %c2_181, %c2_182] : memref<4x18x38xf32, #tpu.memory_space<vmem>>, vector<1x16x36xf32>
    %1665 = vector.shape_cast %1664 : vector<1x16x36xf32> to vector<16x36xf32>
    %c324 = arith.constant 324 : index
    %1666 = memref.load %arg2[%c324] : memref<360xf32, #tpu.memory_space<smem>>
    %1667 = vector.broadcast %1666 : f32 to vector<16x36xf32>
    %1668 = arith.mulf %1667, %1665 : vector<16x36xf32>
    %1669 = arith.addf %1635, %1668 : vector<16x36xf32>
    %c329 = arith.constant 329 : index
    %1670 = memref.load %arg2[%c329] : memref<360xf32, #tpu.memory_space<smem>>
    %1671 = vector.broadcast %1670 : f32 to vector<16x36xf32>
    %1672 = arith.mulf %1671, %1665 : vector<16x36xf32>
    %1673 = arith.addf %1639, %1672 : vector<16x36xf32>
    %c334 = arith.constant 334 : index
    %1674 = memref.load %arg2[%c334] : memref<360xf32, #tpu.memory_space<smem>>
    %1675 = vector.broadcast %1674 : f32 to vector<16x36xf32>
    %1676 = arith.mulf %1675, %1665 : vector<16x36xf32>
    %1677 = arith.addf %1643, %1676 : vector<16x36xf32>
    %c339 = arith.constant 339 : index
    %1678 = memref.load %arg2[%c339] : memref<360xf32, #tpu.memory_space<smem>>
    %1679 = vector.broadcast %1678 : f32 to vector<16x36xf32>
    %1680 = arith.mulf %1679, %1665 : vector<16x36xf32>
    %1681 = arith.addf %1647, %1680 : vector<16x36xf32>
    %c344 = arith.constant 344 : index
    %1682 = memref.load %arg2[%c344] : memref<360xf32, #tpu.memory_space<smem>>
    %1683 = vector.broadcast %1682 : f32 to vector<16x36xf32>
    %1684 = arith.mulf %1683, %1665 : vector<16x36xf32>
    %1685 = arith.addf %1651, %1684 : vector<16x36xf32>
    %c349 = arith.constant 349 : index
    %1686 = memref.load %arg2[%c349] : memref<360xf32, #tpu.memory_space<smem>>
    %1687 = vector.broadcast %1686 : f32 to vector<16x36xf32>
    %1688 = arith.mulf %1687, %1665 : vector<16x36xf32>
    %1689 = arith.addf %1655, %1688 : vector<16x36xf32>
    %c354 = arith.constant 354 : index
    %1690 = memref.load %arg2[%c354] : memref<360xf32, #tpu.memory_space<smem>>
    %1691 = vector.broadcast %1690 : f32 to vector<16x36xf32>
    %1692 = arith.mulf %1691, %1665 : vector<16x36xf32>
    %1693 = arith.addf %1659, %1692 : vector<16x36xf32>
    %c359 = arith.constant 359 : index
    %1694 = memref.load %arg2[%c359] : memref<360xf32, #tpu.memory_space<smem>>
    %1695 = vector.broadcast %1694 : f32 to vector<16x36xf32>
    %1696 = arith.mulf %1695, %1665 : vector<16x36xf32>
    %1697 = arith.addf %1663, %1696 : vector<16x36xf32>
    %1698 = arith.negf %1669 : vector<16x36xf32>
    %1699 = math.exp %1698 : vector<16x36xf32>
    %cst = arith.constant 1.000000e+00 : f32
    %1700 = vector.broadcast %cst : f32 to vector<16x36xf32>
    %1701 = arith.addf %1700, %1699 : vector<16x36xf32>
    %1702 = arith.divf %1700, %1701 : vector<16x36xf32>
    %1703 = arith.negf %1673 : vector<16x36xf32>
    %1704 = math.exp %1703 : vector<16x36xf32>
    %cst_183 = arith.constant 1.000000e+00 : f32
    %1705 = vector.broadcast %cst_183 : f32 to vector<16x36xf32>
    %1706 = arith.addf %1705, %1704 : vector<16x36xf32>
    %1707 = arith.divf %1705, %1706 : vector<16x36xf32>
    %1708 = arith.negf %1677 : vector<16x36xf32>
    %1709 = math.exp %1708 : vector<16x36xf32>
    %cst_184 = arith.constant 1.000000e+00 : f32
    %1710 = vector.broadcast %cst_184 : f32 to vector<16x36xf32>
    %1711 = arith.addf %1710, %1709 : vector<16x36xf32>
    %1712 = arith.divf %1710, %1711 : vector<16x36xf32>
    %1713 = arith.negf %1681 : vector<16x36xf32>
    %1714 = math.exp %1713 : vector<16x36xf32>
    %cst_185 = arith.constant 1.000000e+00 : f32
    %1715 = vector.broadcast %cst_185 : f32 to vector<16x36xf32>
    %1716 = arith.addf %1715, %1714 : vector<16x36xf32>
    %1717 = arith.divf %1715, %1716 : vector<16x36xf32>
    %1718 = arith.negf %1685 : vector<16x36xf32>
    %1719 = math.exp %1718 : vector<16x36xf32>
    %cst_186 = arith.constant 1.000000e+00 : f32
    %1720 = vector.broadcast %cst_186 : f32 to vector<16x36xf32>
    %1721 = arith.addf %1720, %1719 : vector<16x36xf32>
    %1722 = arith.divf %1720, %1721 : vector<16x36xf32>
    %1723 = arith.negf %1689 : vector<16x36xf32>
    %1724 = math.exp %1723 : vector<16x36xf32>
    %cst_187 = arith.constant 1.000000e+00 : f32
    %1725 = vector.broadcast %cst_187 : f32 to vector<16x36xf32>
    %1726 = arith.addf %1725, %1724 : vector<16x36xf32>
    %1727 = arith.divf %1725, %1726 : vector<16x36xf32>
    %1728 = arith.negf %1693 : vector<16x36xf32>
    %1729 = math.exp %1728 : vector<16x36xf32>
    %cst_188 = arith.constant 1.000000e+00 : f32
    %1730 = vector.broadcast %cst_188 : f32 to vector<16x36xf32>
    %1731 = arith.addf %1730, %1729 : vector<16x36xf32>
    %1732 = arith.divf %1730, %1731 : vector<16x36xf32>
    %1733 = arith.negf %1697 : vector<16x36xf32>
    %1734 = math.exp %1733 : vector<16x36xf32>
    %cst_189 = arith.constant 1.000000e+00 : f32
    %1735 = vector.broadcast %cst_189 : f32 to vector<16x36xf32>
    %1736 = arith.addf %1735, %1734 : vector<16x36xf32>
    %1737 = arith.divf %1735, %1736 : vector<16x36xf32>
    %cst_190 = arith.constant 0.000000e+00 : f32
    %1738 = vector.broadcast %cst_190 : f32 to vector<4x18x38xf32>
    %c0_191 = arith.constant 0 : index
    %c0_192 = arith.constant 0 : index
    %c0_193 = arith.constant 0 : index
    %1739 = vector.load %arg10[%c0_191, %c0_192, %c0_193] : memref<4x18x38xf32, #tpu.memory_space<vmem>>, vector<4x18x38xf32>
    tpu.vector_store %arg10[%c0_191, %c0_192, %c0_193], %1738 {strides = array<i32>} : memref<4x18x38xf32, #tpu.memory_space<vmem>>, vector<4x18x38xf32>,
    %c0_194 = arith.constant 0 : index
    %c1_195 = arith.constant 1 : index
    %c1_196 = arith.constant 1 : index
    %1740 = vector.load %arg1[%c0_194, %c1_195, %c1_196] : memref<4x18x38xf32, #tpu.memory_space<vmem>>, vector<1x16x36xf32>
    %1741 = vector.shape_cast %1740 : vector<1x16x36xf32> to vector<16x36xf32>
    %1742 = arith.mulf %1702, %1741 : vector<16x36xf32>
    %c0_197 = arith.constant 0 : index
    %c1_198 = arith.constant 1 : index
    %c1_199 = arith.constant 1 : index
    %1743 = vector.load %arg10[%c0_197, %c1_198, %c1_199] : memref<4x18x38xf32, #tpu.memory_space<vmem>>, vector<1x16x36xf32>
    %1744 = vector.shape_cast %1743 : vector<1x16x36xf32> to vector<16x36xf32>
    %1745 = vector.shape_cast %1742 : vector<16x36xf32> to vector<1x16x36xf32>
    tpu.vector_store %arg10[%c0_197, %c1_198, %c1_199], %1745 {strides = array<i32>} : memref<4x18x38xf32, #tpu.memory_space<vmem>>, vector<1x16x36xf32>,
    %c1_200 = arith.constant 1 : index
    %c1_201 = arith.constant 1 : index
    %c1_202 = arith.constant 1 : index
    %1746 = vector.load %arg1[%c1_200, %c1_201, %c1_202] : memref<4x18x38xf32, #tpu.memory_space<vmem>>, vector<1x16x36xf32>
    %1747 = vector.shape_cast %1746 : vector<1x16x36xf32> to vector<16x36xf32>
    %1748 = arith.mulf %1707, %1747 : vector<16x36xf32>
    %c1_203 = arith.constant 1 : index
    %c1_204 = arith.constant 1 : index
    %c1_205 = arith.constant 1 : index
    %1749 = vector.load %arg10[%c1_203, %c1_204, %c1_205] : memref<4x18x38xf32, #tpu.memory_space<vmem>>, vector<1x16x36xf32>
    %1750 = vector.shape_cast %1749 : vector<1x16x36xf32> to vector<16x36xf32>
    %1751 = vector.shape_cast %1748 : vector<16x36xf32> to vector<1x16x36xf32>
    tpu.vector_store %arg10[%c1_203, %c1_204, %c1_205], %1751 {strides = array<i32>} : memref<4x18x38xf32, #tpu.memory_space<vmem>>, vector<1x16x36xf32>,
    %c2_206 = arith.constant 2 : index
    %c1_207 = arith.constant 1 : index
    %c1_208 = arith.constant 1 : index
    %1752 = vector.load %arg1[%c2_206, %c1_207, %c1_208] : memref<4x18x38xf32, #tpu.memory_space<vmem>>, vector<1x16x36xf32>
    %1753 = vector.shape_cast %1752 : vector<1x16x36xf32> to vector<16x36xf32>
    %1754 = arith.mulf %1712, %1753 : vector<16x36xf32>
    %c2_209 = arith.constant 2 : index
    %c1_210 = arith.constant 1 : index
    %c1_211 = arith.constant 1 : index
    %1755 = vector.load %arg10[%c2_209, %c1_210, %c1_211] : memref<4x18x38xf32, #tpu.memory_space<vmem>>, vector<1x16x36xf32>
    %1756 = vector.shape_cast %1755 : vector<1x16x36xf32> to vector<16x36xf32>
    %1757 = vector.shape_cast %1754 : vector<16x36xf32> to vector<1x16x36xf32>
    tpu.vector_store %arg10[%c2_209, %c1_210, %c1_211], %1757 {strides = array<i32>} : memref<4x18x38xf32, #tpu.memory_space<vmem>>, vector<1x16x36xf32>,
    %c3_212 = arith.constant 3 : index
    %c1_213 = arith.constant 1 : index
    %c1_214 = arith.constant 1 : index
    %1758 = vector.load %arg1[%c3_212, %c1_213, %c1_214] : memref<4x18x38xf32, #tpu.memory_space<vmem>>, vector<1x16x36xf32>
    %1759 = vector.shape_cast %1758 : vector<1x16x36xf32> to vector<16x36xf32>
    %1760 = arith.mulf %1717, %1759 : vector<16x36xf32>
    %c3_215 = arith.constant 3 : index
    %c1_216 = arith.constant 1 : index
    %c1_217 = arith.constant 1 : index
    %1761 = vector.load %arg10[%c3_215, %c1_216, %c1_217] : memref<4x18x38xf32, #tpu.memory_space<vmem>>, vector<1x16x36xf32>
    %1762 = vector.shape_cast %1761 : vector<1x16x36xf32> to vector<16x36xf32>
    %1763 = vector.shape_cast %1760 : vector<16x36xf32> to vector<1x16x36xf32>
    tpu.vector_store %arg10[%c3_215, %c1_216, %c1_217], %1763 {strides = array<i32>} : memref<4x18x38xf32, #tpu.memory_space<vmem>>, vector<1x16x36xf32>,
    %c0_218 = arith.constant 0 : index
    %c0_219 = arith.constant 0 : index
    %c0_220 = arith.constant 0 : index
    %1764 = vector.load %arg10[%c0_218, %c0_219, %c0_220] : memref<4x18x38xf32, #tpu.memory_space<vmem>>, vector<1x16x36xf32>
    %1765 = vector.shape_cast %1764 : vector<1x16x36xf32> to vector<16x36xf32>
    %c1_221 = arith.constant 1 : index
    %1766 = memref.load %arg4[%c1_221] : memref<180xf32, #tpu.memory_space<smem>>
    %1767 = vector.broadcast %1766 : f32 to vector<16x36xf32>
    %1768 = arith.mulf %1767, %1765 : vector<16x36xf32>
    %1769 = arith.addf %461, %1768 : vector<16x36xf32>
    %c6_222 = arith.constant 6 : index
    %1770 = memref.load %arg4[%c6_222] : memref<180xf32, #tpu.memory_space<smem>>
    %1771 = vector.broadcast %1770 : f32 to vector<16x36xf32>
    %1772 = arith.mulf %1771, %1765 : vector<16x36xf32>
    %1773 = arith.addf %465, %1772 : vector<16x36xf32>
    %c11_223 = arith.constant 11 : index
    %1774 = memref.load %arg4[%c11_223] : memref<180xf32, #tpu.memory_space<smem>>
    %1775 = vector.broadcast %1774 : f32 to vector<16x36xf32>
    %1776 = arith.mulf %1775, %1765 : vector<16x36xf32>
    %1777 = arith.addf %469, %1776 : vector<16x36xf32>
    %c16_224 = arith.constant 16 : index
    %1778 = memref.load %arg4[%c16_224] : memref<180xf32, #tpu.memory_space<smem>>
    %1779 = vector.broadcast %1778 : f32 to vector<16x36xf32>
    %1780 = arith.mulf %1779, %1765 : vector<16x36xf32>
    %1781 = arith.addf %473, %1780 : vector<16x36xf32>
    %c0_225 = arith.constant 0 : index
    %c0_226 = arith.constant 0 : index
    %c1_227 = arith.constant 1 : index
    %1782 = vector.load %arg10[%c0_225, %c0_226, %c1_227] : memref<4x18x38xf32, #tpu.memory_space<vmem>>, vector<1x16x36xf32>
    %1783 = vector.shape_cast %1782 : vector<1x16x36xf32> to vector<16x36xf32>
    %c21_228 = arith.constant 21 : index
    %1784 = memref.load %arg4[%c21_228] : memref<180xf32, #tpu.memory_space<smem>>
    %1785 = vector.broadcast %1784 : f32 to vector<16x36xf32>
    %1786 = arith.mulf %1785, %1783 : vector<16x36xf32>
    %1787 = arith.addf %1769, %1786 : vector<16x36xf32>
    %c26_229 = arith.constant 26 : index
    %1788 = memref.load %arg4[%c26_229] : memref<180xf32, #tpu.memory_space<smem>>
    %1789 = vector.broadcast %1788 : f32 to vector<16x36xf32>
    %1790 = arith.mulf %1789, %1783 : vector<16x36xf32>
    %1791 = arith.addf %1773, %1790 : vector<16x36xf32>
    %c31_230 = arith.constant 31 : index
    %1792 = memref.load %arg4[%c31_230] : memref<180xf32, #tpu.memory_space<smem>>
    %1793 = vector.broadcast %1792 : f32 to vector<16x36xf32>
    %1794 = arith.mulf %1793, %1783 : vector<16x36xf32>
    %1795 = arith.addf %1777, %1794 : vector<16x36xf32>
    %c36_231 = arith.constant 36 : index
    %1796 = memref.load %arg4[%c36_231] : memref<180xf32, #tpu.memory_space<smem>>
    %1797 = vector.broadcast %1796 : f32 to vector<16x36xf32>
    %1798 = arith.mulf %1797, %1783 : vector<16x36xf32>
    %1799 = arith.addf %1781, %1798 : vector<16x36xf32>
    %c0_232 = arith.constant 0 : index
    %c0_233 = arith.constant 0 : index
    %c2_234 = arith.constant 2 : index
    %1800 = vector.load %arg10[%c0_232, %c0_233, %c2_234] : memref<4x18x38xf32, #tpu.memory_space<vmem>>, vector<1x16x36xf32>
    %1801 = vector.shape_cast %1800 : vector<1x16x36xf32> to vector<16x36xf32>
    %c41_235 = arith.constant 41 : index
    %1802 = memref.load %arg4[%c41_235] : memref<180xf32, #tpu.memory_space<smem>>
    %1803 = vector.broadcast %1802 : f32 to vector<16x36xf32>
    %1804 = arith.mulf %1803, %1801 : vector<16x36xf32>
    %1805 = arith.addf %1787, %1804 : vector<16x36xf32>
    %c46_236 = arith.constant 46 : index
    %1806 = memref.load %arg4[%c46_236] : memref<180xf32, #tpu.memory_space<smem>>
    %1807 = vector.broadcast %1806 : f32 to vector<16x36xf32>
    %1808 = arith.mulf %1807, %1801 : vector<16x36xf32>
    %1809 = arith.addf %1791, %1808 : vector<16x36xf32>
    %c51_237 = arith.constant 51 : index
    %1810 = memref.load %arg4[%c51_237] : memref<180xf32, #tpu.memory_space<smem>>
    %1811 = vector.broadcast %1810 : f32 to vector<16x36xf32>
    %1812 = arith.mulf %1811, %1801 : vector<16x36xf32>
    %1813 = arith.addf %1795, %1812 : vector<16x36xf32>
    %c56_238 = arith.constant 56 : index
    %1814 = memref.load %arg4[%c56_238] : memref<180xf32, #tpu.memory_space<smem>>
    %1815 = vector.broadcast %1814 : f32 to vector<16x36xf32>
    %1816 = arith.mulf %1815, %1801 : vector<16x36xf32>
    %1817 = arith.addf %1799, %1816 : vector<16x36xf32>
    %c0_239 = arith.constant 0 : index
    %c1_240 = arith.constant 1 : index
    %c0_241 = arith.constant 0 : index
    %1818 = vector.load %arg10[%c0_239, %c1_240, %c0_241] : memref<4x18x38xf32, #tpu.memory_space<vmem>>, vector<1x16x36xf32>
    %1819 = vector.shape_cast %1818 : vector<1x16x36xf32> to vector<16x36xf32>
    %c61_242 = arith.constant 61 : index
    %1820 = memref.load %arg4[%c61_242] : memref<180xf32, #tpu.memory_space<smem>>
    %1821 = vector.broadcast %1820 : f32 to vector<16x36xf32>
    %1822 = arith.mulf %1821, %1819 : vector<16x36xf32>
    %1823 = arith.addf %1805, %1822 : vector<16x36xf32>
    %c66_243 = arith.constant 66 : index
    %1824 = memref.load %arg4[%c66_243] : memref<180xf32, #tpu.memory_space<smem>>
    %1825 = vector.broadcast %1824 : f32 to vector<16x36xf32>
    %1826 = arith.mulf %1825, %1819 : vector<16x36xf32>
    %1827 = arith.addf %1809, %1826 : vector<16x36xf32>
    %c71_244 = arith.constant 71 : index
    %1828 = memref.load %arg4[%c71_244] : memref<180xf32, #tpu.memory_space<smem>>
    %1829 = vector.broadcast %1828 : f32 to vector<16x36xf32>
    %1830 = arith.mulf %1829, %1819 : vector<16x36xf32>
    %1831 = arith.addf %1813, %1830 : vector<16x36xf32>
    %c76_245 = arith.constant 76 : index
    %1832 = memref.load %arg4[%c76_245] : memref<180xf32, #tpu.memory_space<smem>>
    %1833 = vector.broadcast %1832 : f32 to vector<16x36xf32>
    %1834 = arith.mulf %1833, %1819 : vector<16x36xf32>
    %1835 = arith.addf %1817, %1834 : vector<16x36xf32>
    %c0_246 = arith.constant 0 : index
    %c1_247 = arith.constant 1 : index
    %c1_248 = arith.constant 1 : index
    %1836 = vector.load %arg10[%c0_246, %c1_247, %c1_248] : memref<4x18x38xf32, #tpu.memory_space<vmem>>, vector<1x16x36xf32>
    %1837 = vector.shape_cast %1836 : vector<1x16x36xf32> to vector<16x36xf32>
    %c81_249 = arith.constant 81 : index
    %1838 = memref.load %arg4[%c81_249] : memref<180xf32, #tpu.memory_space<smem>>
    %1839 = vector.broadcast %1838 : f32 to vector<16x36xf32>
    %1840 = arith.mulf %1839, %1837 : vector<16x36xf32>
    %1841 = arith.addf %1823, %1840 : vector<16x36xf32>
    %c86_250 = arith.constant 86 : index
    %1842 = memref.load %arg4[%c86_250] : memref<180xf32, #tpu.memory_space<smem>>
    %1843 = vector.broadcast %1842 : f32 to vector<16x36xf32>
    %1844 = arith.mulf %1843, %1837 : vector<16x36xf32>
    %1845 = arith.addf %1827, %1844 : vector<16x36xf32>
    %c91_251 = arith.constant 91 : index
    %1846 = memref.load %arg4[%c91_251] : memref<180xf32, #tpu.memory_space<smem>>
    %1847 = vector.broadcast %1846 : f32 to vector<16x36xf32>
    %1848 = arith.mulf %1847, %1837 : vector<16x36xf32>
    %1849 = arith.addf %1831, %1848 : vector<16x36xf32>
    %c96_252 = arith.constant 96 : index
    %1850 = memref.load %arg4[%c96_252] : memref<180xf32, #tpu.memory_space<smem>>
    %1851 = vector.broadcast %1850 : f32 to vector<16x36xf32>
    %1852 = arith.mulf %1851, %1837 : vector<16x36xf32>
    %1853 = arith.addf %1835, %1852 : vector<16x36xf32>
    %c0_253 = arith.constant 0 : index
    %c1_254 = arith.constant 1 : index
    %c2_255 = arith.constant 2 : index
    %1854 = vector.load %arg10[%c0_253, %c1_254, %c2_255] : memref<4x18x38xf32, #tpu.memory_space<vmem>>, vector<1x16x36xf32>
    %1855 = vector.shape_cast %1854 : vector<1x16x36xf32> to vector<16x36xf32>
    %c101_256 = arith.constant 101 : index
    %1856 = memref.load %arg4[%c101_256] : memref<180xf32, #tpu.memory_space<smem>>
    %1857 = vector.broadcast %1856 : f32 to vector<16x36xf32>
    %1858 = arith.mulf %1857, %1855 : vector<16x36xf32>
    %1859 = arith.addf %1841, %1858 : vector<16x36xf32>
    %c106_257 = arith.constant 106 : index
    %1860 = memref.load %arg4[%c106_257] : memref<180xf32, #tpu.memory_space<smem>>
    %1861 = vector.broadcast %1860 : f32 to vector<16x36xf32>
    %1862 = arith.mulf %1861, %1855 : vector<16x36xf32>
    %1863 = arith.addf %1845, %1862 : vector<16x36xf32>
    %c111_258 = arith.constant 111 : index
    %1864 = memref.load %arg4[%c111_258] : memref<180xf32, #tpu.memory_space<smem>>
    %1865 = vector.broadcast %1864 : f32 to vector<16x36xf32>
    %1866 = arith.mulf %1865, %1855 : vector<16x36xf32>
    %1867 = arith.addf %1849, %1866 : vector<16x36xf32>
    %c116_259 = arith.constant 116 : index
    %1868 = memref.load %arg4[%c116_259] : memref<180xf32, #tpu.memory_space<smem>>
    %1869 = vector.broadcast %1868 : f32 to vector<16x36xf32>
    %1870 = arith.mulf %1869, %1855 : vector<16x36xf32>
    %1871 = arith.addf %1853, %1870 : vector<16x36xf32>
    %c0_260 = arith.constant 0 : index
    %c2_261 = arith.constant 2 : index
    %c0_262 = arith.constant 0 : index
    %1872 = vector.load %arg10[%c0_260, %c2_261, %c0_262] : memref<4x18x38xf32, #tpu.memory_space<vmem>>, vector<1x16x36xf32>
    %1873 = vector.shape_cast %1872 : vector<1x16x36xf32> to vector<16x36xf32>
    %c121_263 = arith.constant 121 : index
    %1874 = memref.load %arg4[%c121_263] : memref<180xf32, #tpu.memory_space<smem>>
    %1875 = vector.broadcast %1874 : f32 to vector<16x36xf32>
    %1876 = arith.mulf %1875, %1873 : vector<16x36xf32>
    %1877 = arith.addf %1859, %1876 : vector<16x36xf32>
    %c126_264 = arith.constant 126 : index
    %1878 = memref.load %arg4[%c126_264] : memref<180xf32, #tpu.memory_space<smem>>
    %1879 = vector.broadcast %1878 : f32 to vector<16x36xf32>
    %1880 = arith.mulf %1879, %1873 : vector<16x36xf32>
    %1881 = arith.addf %1863, %1880 : vector<16x36xf32>
    %c131_265 = arith.constant 131 : index
    %1882 = memref.load %arg4[%c131_265] : memref<180xf32, #tpu.memory_space<smem>>
    %1883 = vector.broadcast %1882 : f32 to vector<16x36xf32>
    %1884 = arith.mulf %1883, %1873 : vector<16x36xf32>
    %1885 = arith.addf %1867, %1884 : vector<16x36xf32>
    %c136_266 = arith.constant 136 : index
    %1886 = memref.load %arg4[%c136_266] : memref<180xf32, #tpu.memory_space<smem>>
    %1887 = vector.broadcast %1886 : f32 to vector<16x36xf32>
    %1888 = arith.mulf %1887, %1873 : vector<16x36xf32>
    %1889 = arith.addf %1871, %1888 : vector<16x36xf32>
    %c0_267 = arith.constant 0 : index
    %c2_268 = arith.constant 2 : index
    %c1_269 = arith.constant 1 : index
    %1890 = vector.load %arg10[%c0_267, %c2_268, %c1_269] : memref<4x18x38xf32, #tpu.memory_space<vmem>>, vector<1x16x36xf32>
    %1891 = vector.shape_cast %1890 : vector<1x16x36xf32> to vector<16x36xf32>
    %c141_270 = arith.constant 141 : index
    %1892 = memref.load %arg4[%c141_270] : memref<180xf32, #tpu.memory_space<smem>>
    %1893 = vector.broadcast %1892 : f32 to vector<16x36xf32>
    %1894 = arith.mulf %1893, %1891 : vector<16x36xf32>
    %1895 = arith.addf %1877, %1894 : vector<16x36xf32>
    %c146_271 = arith.constant 146 : index
    %1896 = memref.load %arg4[%c146_271] : memref<180xf32, #tpu.memory_space<smem>>
    %1897 = vector.broadcast %1896 : f32 to vector<16x36xf32>
    %1898 = arith.mulf %1897, %1891 : vector<16x36xf32>
    %1899 = arith.addf %1881, %1898 : vector<16x36xf32>
    %c151_272 = arith.constant 151 : index
    %1900 = memref.load %arg4[%c151_272] : memref<180xf32, #tpu.memory_space<smem>>
    %1901 = vector.broadcast %1900 : f32 to vector<16x36xf32>
    %1902 = arith.mulf %1901, %1891 : vector<16x36xf32>
    %1903 = arith.addf %1885, %1902 : vector<16x36xf32>
    %c156_273 = arith.constant 156 : index
    %1904 = memref.load %arg4[%c156_273] : memref<180xf32, #tpu.memory_space<smem>>
    %1905 = vector.broadcast %1904 : f32 to vector<16x36xf32>
    %1906 = arith.mulf %1905, %1891 : vector<16x36xf32>
    %1907 = arith.addf %1889, %1906 : vector<16x36xf32>
    %c0_274 = arith.constant 0 : index
    %c2_275 = arith.constant 2 : index
    %c2_276 = arith.constant 2 : index
    %1908 = vector.load %arg10[%c0_274, %c2_275, %c2_276] : memref<4x18x38xf32, #tpu.memory_space<vmem>>, vector<1x16x36xf32>
    %1909 = vector.shape_cast %1908 : vector<1x16x36xf32> to vector<16x36xf32>
    %c161_277 = arith.constant 161 : index
    %1910 = memref.load %arg4[%c161_277] : memref<180xf32, #tpu.memory_space<smem>>
    %1911 = vector.broadcast %1910 : f32 to vector<16x36xf32>
    %1912 = arith.mulf %1911, %1909 : vector<16x36xf32>
    %1913 = arith.addf %1895, %1912 : vector<16x36xf32>
    %c166_278 = arith.constant 166 : index
    %1914 = memref.load %arg4[%c166_278] : memref<180xf32, #tpu.memory_space<smem>>
    %1915 = vector.broadcast %1914 : f32 to vector<16x36xf32>
    %1916 = arith.mulf %1915, %1909 : vector<16x36xf32>
    %1917 = arith.addf %1899, %1916 : vector<16x36xf32>
    %c171_279 = arith.constant 171 : index
    %1918 = memref.load %arg4[%c171_279] : memref<180xf32, #tpu.memory_space<smem>>
    %1919 = vector.broadcast %1918 : f32 to vector<16x36xf32>
    %1920 = arith.mulf %1919, %1909 : vector<16x36xf32>
    %1921 = arith.addf %1903, %1920 : vector<16x36xf32>
    %c176_280 = arith.constant 176 : index
    %1922 = memref.load %arg4[%c176_280] : memref<180xf32, #tpu.memory_space<smem>>
    %1923 = vector.broadcast %1922 : f32 to vector<16x36xf32>
    %1924 = arith.mulf %1923, %1909 : vector<16x36xf32>
    %1925 = arith.addf %1907, %1924 : vector<16x36xf32>
    %c1_281 = arith.constant 1 : index
    %c0_282 = arith.constant 0 : index
    %c0_283 = arith.constant 0 : index
    %1926 = vector.load %arg10[%c1_281, %c0_282, %c0_283] : memref<4x18x38xf32, #tpu.memory_space<vmem>>, vector<1x16x36xf32>
    %1927 = vector.shape_cast %1926 : vector<1x16x36xf32> to vector<16x36xf32>
    %c2_284 = arith.constant 2 : index
    %1928 = memref.load %arg4[%c2_284] : memref<180xf32, #tpu.memory_space<smem>>
    %1929 = vector.broadcast %1928 : f32 to vector<16x36xf32>
    %1930 = arith.mulf %1929, %1927 : vector<16x36xf32>
    %1931 = arith.addf %1913, %1930 : vector<16x36xf32>
    %c7_285 = arith.constant 7 : index
    %1932 = memref.load %arg4[%c7_285] : memref<180xf32, #tpu.memory_space<smem>>
    %1933 = vector.broadcast %1932 : f32 to vector<16x36xf32>
    %1934 = arith.mulf %1933, %1927 : vector<16x36xf32>
    %1935 = arith.addf %1917, %1934 : vector<16x36xf32>
    %c12_286 = arith.constant 12 : index
    %1936 = memref.load %arg4[%c12_286] : memref<180xf32, #tpu.memory_space<smem>>
    %1937 = vector.broadcast %1936 : f32 to vector<16x36xf32>
    %1938 = arith.mulf %1937, %1927 : vector<16x36xf32>
    %1939 = arith.addf %1921, %1938 : vector<16x36xf32>
    %c17_287 = arith.constant 17 : index
    %1940 = memref.load %arg4[%c17_287] : memref<180xf32, #tpu.memory_space<smem>>
    %1941 = vector.broadcast %1940 : f32 to vector<16x36xf32>
    %1942 = arith.mulf %1941, %1927 : vector<16x36xf32>
    %1943 = arith.addf %1925, %1942 : vector<16x36xf32>
    %c1_288 = arith.constant 1 : index
    %c0_289 = arith.constant 0 : index
    %c1_290 = arith.constant 1 : index
    %1944 = vector.load %arg10[%c1_288, %c0_289, %c1_290] : memref<4x18x38xf32, #tpu.memory_space<vmem>>, vector<1x16x36xf32>
    %1945 = vector.shape_cast %1944 : vector<1x16x36xf32> to vector<16x36xf32>
    %c22_291 = arith.constant 22 : index
    %1946 = memref.load %arg4[%c22_291] : memref<180xf32, #tpu.memory_space<smem>>
    %1947 = vector.broadcast %1946 : f32 to vector<16x36xf32>
    %1948 = arith.mulf %1947, %1945 : vector<16x36xf32>
    %1949 = arith.addf %1931, %1948 : vector<16x36xf32>
    %c27_292 = arith.constant 27 : index
    %1950 = memref.load %arg4[%c27_292] : memref<180xf32, #tpu.memory_space<smem>>
    %1951 = vector.broadcast %1950 : f32 to vector<16x36xf32>
    %1952 = arith.mulf %1951, %1945 : vector<16x36xf32>
    %1953 = arith.addf %1935, %1952 : vector<16x36xf32>
    %c32_293 = arith.constant 32 : index
    %1954 = memref.load %arg4[%c32_293] : memref<180xf32, #tpu.memory_space<smem>>
    %1955 = vector.broadcast %1954 : f32 to vector<16x36xf32>
    %1956 = arith.mulf %1955, %1945 : vector<16x36xf32>
    %1957 = arith.addf %1939, %1956 : vector<16x36xf32>
    %c37_294 = arith.constant 37 : index
    %1958 = memref.load %arg4[%c37_294] : memref<180xf32, #tpu.memory_space<smem>>
    %1959 = vector.broadcast %1958 : f32 to vector<16x36xf32>
    %1960 = arith.mulf %1959, %1945 : vector<16x36xf32>
    %1961 = arith.addf %1943, %1960 : vector<16x36xf32>
    %c1_295 = arith.constant 1 : index
    %c0_296 = arith.constant 0 : index
    %c2_297 = arith.constant 2 : index
    %1962 = vector.load %arg10[%c1_295, %c0_296, %c2_297] : memref<4x18x38xf32, #tpu.memory_space<vmem>>, vector<1x16x36xf32>
    %1963 = vector.shape_cast %1962 : vector<1x16x36xf32> to vector<16x36xf32>
    %c42_298 = arith.constant 42 : index
    %1964 = memref.load %arg4[%c42_298] : memref<180xf32, #tpu.memory_space<smem>>
    %1965 = vector.broadcast %1964 : f32 to vector<16x36xf32>
    %1966 = arith.mulf %1965, %1963 : vector<16x36xf32>
    %1967 = arith.addf %1949, %1966 : vector<16x36xf32>
    %c47_299 = arith.constant 47 : index
    %1968 = memref.load %arg4[%c47_299] : memref<180xf32, #tpu.memory_space<smem>>
    %1969 = vector.broadcast %1968 : f32 to vector<16x36xf32>
    %1970 = arith.mulf %1969, %1963 : vector<16x36xf32>
    %1971 = arith.addf %1953, %1970 : vector<16x36xf32>
    %c52_300 = arith.constant 52 : index
    %1972 = memref.load %arg4[%c52_300] : memref<180xf32, #tpu.memory_space<smem>>
    %1973 = vector.broadcast %1972 : f32 to vector<16x36xf32>
    %1974 = arith.mulf %1973, %1963 : vector<16x36xf32>
    %1975 = arith.addf %1957, %1974 : vector<16x36xf32>
    %c57_301 = arith.constant 57 : index
    %1976 = memref.load %arg4[%c57_301] : memref<180xf32, #tpu.memory_space<smem>>
    %1977 = vector.broadcast %1976 : f32 to vector<16x36xf32>
    %1978 = arith.mulf %1977, %1963 : vector<16x36xf32>
    %1979 = arith.addf %1961, %1978 : vector<16x36xf32>
    %c1_302 = arith.constant 1 : index
    %c1_303 = arith.constant 1 : index
    %c0_304 = arith.constant 0 : index
    %1980 = vector.load %arg10[%c1_302, %c1_303, %c0_304] : memref<4x18x38xf32, #tpu.memory_space<vmem>>, vector<1x16x36xf32>
    %1981 = vector.shape_cast %1980 : vector<1x16x36xf32> to vector<16x36xf32>
    %c62_305 = arith.constant 62 : index
    %1982 = memref.load %arg4[%c62_305] : memref<180xf32, #tpu.memory_space<smem>>
    %1983 = vector.broadcast %1982 : f32 to vector<16x36xf32>
    %1984 = arith.mulf %1983, %1981 : vector<16x36xf32>
    %1985 = arith.addf %1967, %1984 : vector<16x36xf32>
    %c67_306 = arith.constant 67 : index
    %1986 = memref.load %arg4[%c67_306] : memref<180xf32, #tpu.memory_space<smem>>
    %1987 = vector.broadcast %1986 : f32 to vector<16x36xf32>
    %1988 = arith.mulf %1987, %1981 : vector<16x36xf32>
    %1989 = arith.addf %1971, %1988 : vector<16x36xf32>
    %c72_307 = arith.constant 72 : index
    %1990 = memref.load %arg4[%c72_307] : memref<180xf32, #tpu.memory_space<smem>>
    %1991 = vector.broadcast %1990 : f32 to vector<16x36xf32>
    %1992 = arith.mulf %1991, %1981 : vector<16x36xf32>
    %1993 = arith.addf %1975, %1992 : vector<16x36xf32>
    %c77_308 = arith.constant 77 : index
    %1994 = memref.load %arg4[%c77_308] : memref<180xf32, #tpu.memory_space<smem>>
    %1995 = vector.broadcast %1994 : f32 to vector<16x36xf32>
    %1996 = arith.mulf %1995, %1981 : vector<16x36xf32>
    %1997 = arith.addf %1979, %1996 : vector<16x36xf32>
    %c1_309 = arith.constant 1 : index
    %c1_310 = arith.constant 1 : index
    %c1_311 = arith.constant 1 : index
    %1998 = vector.load %arg10[%c1_309, %c1_310, %c1_311] : memref<4x18x38xf32, #tpu.memory_space<vmem>>, vector<1x16x36xf32>
    %1999 = vector.shape_cast %1998 : vector<1x16x36xf32> to vector<16x36xf32>
    %c82_312 = arith.constant 82 : index
    %2000 = memref.load %arg4[%c82_312] : memref<180xf32, #tpu.memory_space<smem>>
    %2001 = vector.broadcast %2000 : f32 to vector<16x36xf32>
    %2002 = arith.mulf %2001, %1999 : vector<16x36xf32>
    %2003 = arith.addf %1985, %2002 : vector<16x36xf32>
    %c87_313 = arith.constant 87 : index
    %2004 = memref.load %arg4[%c87_313] : memref<180xf32, #tpu.memory_space<smem>>
    %2005 = vector.broadcast %2004 : f32 to vector<16x36xf32>
    %2006 = arith.mulf %2005, %1999 : vector<16x36xf32>
    %2007 = arith.addf %1989, %2006 : vector<16x36xf32>
    %c92_314 = arith.constant 92 : index
    %2008 = memref.load %arg4[%c92_314] : memref<180xf32, #tpu.memory_space<smem>>
    %2009 = vector.broadcast %2008 : f32 to vector<16x36xf32>
    %2010 = arith.mulf %2009, %1999 : vector<16x36xf32>
    %2011 = arith.addf %1993, %2010 : vector<16x36xf32>
    %c97_315 = arith.constant 97 : index
    %2012 = memref.load %arg4[%c97_315] : memref<180xf32, #tpu.memory_space<smem>>
    %2013 = vector.broadcast %2012 : f32 to vector<16x36xf32>
    %2014 = arith.mulf %2013, %1999 : vector<16x36xf32>
    %2015 = arith.addf %1997, %2014 : vector<16x36xf32>
    %c1_316 = arith.constant 1 : index
    %c1_317 = arith.constant 1 : index
    %c2_318 = arith.constant 2 : index
    %2016 = vector.load %arg10[%c1_316, %c1_317, %c2_318] : memref<4x18x38xf32, #tpu.memory_space<vmem>>, vector<1x16x36xf32>
    %2017 = vector.shape_cast %2016 : vector<1x16x36xf32> to vector<16x36xf32>
    %c102_319 = arith.constant 102 : index
    %2018 = memref.load %arg4[%c102_319] : memref<180xf32, #tpu.memory_space<smem>>
    %2019 = vector.broadcast %2018 : f32 to vector<16x36xf32>
    %2020 = arith.mulf %2019, %2017 : vector<16x36xf32>
    %2021 = arith.addf %2003, %2020 : vector<16x36xf32>
    %c107_320 = arith.constant 107 : index
    %2022 = memref.load %arg4[%c107_320] : memref<180xf32, #tpu.memory_space<smem>>
    %2023 = vector.broadcast %2022 : f32 to vector<16x36xf32>
    %2024 = arith.mulf %2023, %2017 : vector<16x36xf32>
    %2025 = arith.addf %2007, %2024 : vector<16x36xf32>
    %c112_321 = arith.constant 112 : index
    %2026 = memref.load %arg4[%c112_321] : memref<180xf32, #tpu.memory_space<smem>>
    %2027 = vector.broadcast %2026 : f32 to vector<16x36xf32>
    %2028 = arith.mulf %2027, %2017 : vector<16x36xf32>
    %2029 = arith.addf %2011, %2028 : vector<16x36xf32>
    %c117_322 = arith.constant 117 : index
    %2030 = memref.load %arg4[%c117_322] : memref<180xf32, #tpu.memory_space<smem>>
    %2031 = vector.broadcast %2030 : f32 to vector<16x36xf32>
    %2032 = arith.mulf %2031, %2017 : vector<16x36xf32>
    %2033 = arith.addf %2015, %2032 : vector<16x36xf32>
    %c1_323 = arith.constant 1 : index
    %c2_324 = arith.constant 2 : index
    %c0_325 = arith.constant 0 : index
    %2034 = vector.load %arg10[%c1_323, %c2_324, %c0_325] : memref<4x18x38xf32, #tpu.memory_space<vmem>>, vector<1x16x36xf32>
    %2035 = vector.shape_cast %2034 : vector<1x16x36xf32> to vector<16x36xf32>
    %c122_326 = arith.constant 122 : index
    %2036 = memref.load %arg4[%c122_326] : memref<180xf32, #tpu.memory_space<smem>>
    %2037 = vector.broadcast %2036 : f32 to vector<16x36xf32>
    %2038 = arith.mulf %2037, %2035 : vector<16x36xf32>
    %2039 = arith.addf %2021, %2038 : vector<16x36xf32>
    %c127_327 = arith.constant 127 : index
    %2040 = memref.load %arg4[%c127_327] : memref<180xf32, #tpu.memory_space<smem>>
    %2041 = vector.broadcast %2040 : f32 to vector<16x36xf32>
    %2042 = arith.mulf %2041, %2035 : vector<16x36xf32>
    %2043 = arith.addf %2025, %2042 : vector<16x36xf32>
    %c132_328 = arith.constant 132 : index
    %2044 = memref.load %arg4[%c132_328] : memref<180xf32, #tpu.memory_space<smem>>
    %2045 = vector.broadcast %2044 : f32 to vector<16x36xf32>
    %2046 = arith.mulf %2045, %2035 : vector<16x36xf32>
    %2047 = arith.addf %2029, %2046 : vector<16x36xf32>
    %c137_329 = arith.constant 137 : index
    %2048 = memref.load %arg4[%c137_329] : memref<180xf32, #tpu.memory_space<smem>>
    %2049 = vector.broadcast %2048 : f32 to vector<16x36xf32>
    %2050 = arith.mulf %2049, %2035 : vector<16x36xf32>
    %2051 = arith.addf %2033, %2050 : vector<16x36xf32>
    %c1_330 = arith.constant 1 : index
    %c2_331 = arith.constant 2 : index
    %c1_332 = arith.constant 1 : index
    %2052 = vector.load %arg10[%c1_330, %c2_331, %c1_332] : memref<4x18x38xf32, #tpu.memory_space<vmem>>, vector<1x16x36xf32>
    %2053 = vector.shape_cast %2052 : vector<1x16x36xf32> to vector<16x36xf32>
    %c142_333 = arith.constant 142 : index
    %2054 = memref.load %arg4[%c142_333] : memref<180xf32, #tpu.memory_space<smem>>
    %2055 = vector.broadcast %2054 : f32 to vector<16x36xf32>
    %2056 = arith.mulf %2055, %2053 : vector<16x36xf32>
    %2057 = arith.addf %2039, %2056 : vector<16x36xf32>
    %c147_334 = arith.constant 147 : index
    %2058 = memref.load %arg4[%c147_334] : memref<180xf32, #tpu.memory_space<smem>>
    %2059 = vector.broadcast %2058 : f32 to vector<16x36xf32>
    %2060 = arith.mulf %2059, %2053 : vector<16x36xf32>
    %2061 = arith.addf %2043, %2060 : vector<16x36xf32>
    %c152_335 = arith.constant 152 : index
    %2062 = memref.load %arg4[%c152_335] : memref<180xf32, #tpu.memory_space<smem>>
    %2063 = vector.broadcast %2062 : f32 to vector<16x36xf32>
    %2064 = arith.mulf %2063, %2053 : vector<16x36xf32>
    %2065 = arith.addf %2047, %2064 : vector<16x36xf32>
    %c157_336 = arith.constant 157 : index
    %2066 = memref.load %arg4[%c157_336] : memref<180xf32, #tpu.memory_space<smem>>
    %2067 = vector.broadcast %2066 : f32 to vector<16x36xf32>
    %2068 = arith.mulf %2067, %2053 : vector<16x36xf32>
    %2069 = arith.addf %2051, %2068 : vector<16x36xf32>
    %c1_337 = arith.constant 1 : index
    %c2_338 = arith.constant 2 : index
    %c2_339 = arith.constant 2 : index
    %2070 = vector.load %arg10[%c1_337, %c2_338, %c2_339] : memref<4x18x38xf32, #tpu.memory_space<vmem>>, vector<1x16x36xf32>
    %2071 = vector.shape_cast %2070 : vector<1x16x36xf32> to vector<16x36xf32>
    %c162_340 = arith.constant 162 : index
    %2072 = memref.load %arg4[%c162_340] : memref<180xf32, #tpu.memory_space<smem>>
    %2073 = vector.broadcast %2072 : f32 to vector<16x36xf32>
    %2074 = arith.mulf %2073, %2071 : vector<16x36xf32>
    %2075 = arith.addf %2057, %2074 : vector<16x36xf32>
    %c167_341 = arith.constant 167 : index
    %2076 = memref.load %arg4[%c167_341] : memref<180xf32, #tpu.memory_space<smem>>
    %2077 = vector.broadcast %2076 : f32 to vector<16x36xf32>
    %2078 = arith.mulf %2077, %2071 : vector<16x36xf32>
    %2079 = arith.addf %2061, %2078 : vector<16x36xf32>
    %c172_342 = arith.constant 172 : index
    %2080 = memref.load %arg4[%c172_342] : memref<180xf32, #tpu.memory_space<smem>>
    %2081 = vector.broadcast %2080 : f32 to vector<16x36xf32>
    %2082 = arith.mulf %2081, %2071 : vector<16x36xf32>
    %2083 = arith.addf %2065, %2082 : vector<16x36xf32>
    %c177_343 = arith.constant 177 : index
    %2084 = memref.load %arg4[%c177_343] : memref<180xf32, #tpu.memory_space<smem>>
    %2085 = vector.broadcast %2084 : f32 to vector<16x36xf32>
    %2086 = arith.mulf %2085, %2071 : vector<16x36xf32>
    %2087 = arith.addf %2069, %2086 : vector<16x36xf32>
    %c2_344 = arith.constant 2 : index
    %c0_345 = arith.constant 0 : index
    %c0_346 = arith.constant 0 : index
    %2088 = vector.load %arg10[%c2_344, %c0_345, %c0_346] : memref<4x18x38xf32, #tpu.memory_space<vmem>>, vector<1x16x36xf32>
    %2089 = vector.shape_cast %2088 : vector<1x16x36xf32> to vector<16x36xf32>
    %c3_347 = arith.constant 3 : index
    %2090 = memref.load %arg4[%c3_347] : memref<180xf32, #tpu.memory_space<smem>>
    %2091 = vector.broadcast %2090 : f32 to vector<16x36xf32>
    %2092 = arith.mulf %2091, %2089 : vector<16x36xf32>
    %2093 = arith.addf %2075, %2092 : vector<16x36xf32>
    %c8_348 = arith.constant 8 : index
    %2094 = memref.load %arg4[%c8_348] : memref<180xf32, #tpu.memory_space<smem>>
    %2095 = vector.broadcast %2094 : f32 to vector<16x36xf32>
    %2096 = arith.mulf %2095, %2089 : vector<16x36xf32>
    %2097 = arith.addf %2079, %2096 : vector<16x36xf32>
    %c13_349 = arith.constant 13 : index
    %2098 = memref.load %arg4[%c13_349] : memref<180xf32, #tpu.memory_space<smem>>
    %2099 = vector.broadcast %2098 : f32 to vector<16x36xf32>
    %2100 = arith.mulf %2099, %2089 : vector<16x36xf32>
    %2101 = arith.addf %2083, %2100 : vector<16x36xf32>
    %c18_350 = arith.constant 18 : index
    %2102 = memref.load %arg4[%c18_350] : memref<180xf32, #tpu.memory_space<smem>>
    %2103 = vector.broadcast %2102 : f32 to vector<16x36xf32>
    %2104 = arith.mulf %2103, %2089 : vector<16x36xf32>
    %2105 = arith.addf %2087, %2104 : vector<16x36xf32>
    %c2_351 = arith.constant 2 : index
    %c0_352 = arith.constant 0 : index
    %c1_353 = arith.constant 1 : index
    %2106 = vector.load %arg10[%c2_351, %c0_352, %c1_353] : memref<4x18x38xf32, #tpu.memory_space<vmem>>, vector<1x16x36xf32>
    %2107 = vector.shape_cast %2106 : vector<1x16x36xf32> to vector<16x36xf32>
    %c23_354 = arith.constant 23 : index
    %2108 = memref.load %arg4[%c23_354] : memref<180xf32, #tpu.memory_space<smem>>
    %2109 = vector.broadcast %2108 : f32 to vector<16x36xf32>
    %2110 = arith.mulf %2109, %2107 : vector<16x36xf32>
    %2111 = arith.addf %2093, %2110 : vector<16x36xf32>
    %c28_355 = arith.constant 28 : index
    %2112 = memref.load %arg4[%c28_355] : memref<180xf32, #tpu.memory_space<smem>>
    %2113 = vector.broadcast %2112 : f32 to vector<16x36xf32>
    %2114 = arith.mulf %2113, %2107 : vector<16x36xf32>
    %2115 = arith.addf %2097, %2114 : vector<16x36xf32>
    %c33_356 = arith.constant 33 : index
    %2116 = memref.load %arg4[%c33_356] : memref<180xf32, #tpu.memory_space<smem>>
    %2117 = vector.broadcast %2116 : f32 to vector<16x36xf32>
    %2118 = arith.mulf %2117, %2107 : vector<16x36xf32>
    %2119 = arith.addf %2101, %2118 : vector<16x36xf32>
    %c38_357 = arith.constant 38 : index
    %2120 = memref.load %arg4[%c38_357] : memref<180xf32, #tpu.memory_space<smem>>
    %2121 = vector.broadcast %2120 : f32 to vector<16x36xf32>
    %2122 = arith.mulf %2121, %2107 : vector<16x36xf32>
    %2123 = arith.addf %2105, %2122 : vector<16x36xf32>
    %c2_358 = arith.constant 2 : index
    %c0_359 = arith.constant 0 : index
    %c2_360 = arith.constant 2 : index
    %2124 = vector.load %arg10[%c2_358, %c0_359, %c2_360] : memref<4x18x38xf32, #tpu.memory_space<vmem>>, vector<1x16x36xf32>
    %2125 = vector.shape_cast %2124 : vector<1x16x36xf32> to vector<16x36xf32>
    %c43_361 = arith.constant 43 : index
    %2126 = memref.load %arg4[%c43_361] : memref<180xf32, #tpu.memory_space<smem>>
    %2127 = vector.broadcast %2126 : f32 to vector<16x36xf32>
    %2128 = arith.mulf %2127, %2125 : vector<16x36xf32>
    %2129 = arith.addf %2111, %2128 : vector<16x36xf32>
    %c48_362 = arith.constant 48 : index
    %2130 = memref.load %arg4[%c48_362] : memref<180xf32, #tpu.memory_space<smem>>
    %2131 = vector.broadcast %2130 : f32 to vector<16x36xf32>
    %2132 = arith.mulf %2131, %2125 : vector<16x36xf32>
    %2133 = arith.addf %2115, %2132 : vector<16x36xf32>
    %c53_363 = arith.constant 53 : index
    %2134 = memref.load %arg4[%c53_363] : memref<180xf32, #tpu.memory_space<smem>>
    %2135 = vector.broadcast %2134 : f32 to vector<16x36xf32>
    %2136 = arith.mulf %2135, %2125 : vector<16x36xf32>
    %2137 = arith.addf %2119, %2136 : vector<16x36xf32>
    %c58_364 = arith.constant 58 : index
    %2138 = memref.load %arg4[%c58_364] : memref<180xf32, #tpu.memory_space<smem>>
    %2139 = vector.broadcast %2138 : f32 to vector<16x36xf32>
    %2140 = arith.mulf %2139, %2125 : vector<16x36xf32>
    %2141 = arith.addf %2123, %2140 : vector<16x36xf32>
    %c2_365 = arith.constant 2 : index
    %c1_366 = arith.constant 1 : index
    %c0_367 = arith.constant 0 : index
    %2142 = vector.load %arg10[%c2_365, %c1_366, %c0_367] : memref<4x18x38xf32, #tpu.memory_space<vmem>>, vector<1x16x36xf32>
    %2143 = vector.shape_cast %2142 : vector<1x16x36xf32> to vector<16x36xf32>
    %c63_368 = arith.constant 63 : index
    %2144 = memref.load %arg4[%c63_368] : memref<180xf32, #tpu.memory_space<smem>>
    %2145 = vector.broadcast %2144 : f32 to vector<16x36xf32>
    %2146 = arith.mulf %2145, %2143 : vector<16x36xf32>
    %2147 = arith.addf %2129, %2146 : vector<16x36xf32>
    %c68_369 = arith.constant 68 : index
    %2148 = memref.load %arg4[%c68_369] : memref<180xf32, #tpu.memory_space<smem>>
    %2149 = vector.broadcast %2148 : f32 to vector<16x36xf32>
    %2150 = arith.mulf %2149, %2143 : vector<16x36xf32>
    %2151 = arith.addf %2133, %2150 : vector<16x36xf32>
    %c73_370 = arith.constant 73 : index
    %2152 = memref.load %arg4[%c73_370] : memref<180xf32, #tpu.memory_space<smem>>
    %2153 = vector.broadcast %2152 : f32 to vector<16x36xf32>
    %2154 = arith.mulf %2153, %2143 : vector<16x36xf32>
    %2155 = arith.addf %2137, %2154 : vector<16x36xf32>
    %c78_371 = arith.constant 78 : index
    %2156 = memref.load %arg4[%c78_371] : memref<180xf32, #tpu.memory_space<smem>>
    %2157 = vector.broadcast %2156 : f32 to vector<16x36xf32>
    %2158 = arith.mulf %2157, %2143 : vector<16x36xf32>
    %2159 = arith.addf %2141, %2158 : vector<16x36xf32>
    %c2_372 = arith.constant 2 : index
    %c1_373 = arith.constant 1 : index
    %c1_374 = arith.constant 1 : index
    %2160 = vector.load %arg10[%c2_372, %c1_373, %c1_374] : memref<4x18x38xf32, #tpu.memory_space<vmem>>, vector<1x16x36xf32>
    %2161 = vector.shape_cast %2160 : vector<1x16x36xf32> to vector<16x36xf32>
    %c83_375 = arith.constant 83 : index
    %2162 = memref.load %arg4[%c83_375] : memref<180xf32, #tpu.memory_space<smem>>
    %2163 = vector.broadcast %2162 : f32 to vector<16x36xf32>
    %2164 = arith.mulf %2163, %2161 : vector<16x36xf32>
    %2165 = arith.addf %2147, %2164 : vector<16x36xf32>
    %c88_376 = arith.constant 88 : index
    %2166 = memref.load %arg4[%c88_376] : memref<180xf32, #tpu.memory_space<smem>>
    %2167 = vector.broadcast %2166 : f32 to vector<16x36xf32>
    %2168 = arith.mulf %2167, %2161 : vector<16x36xf32>
    %2169 = arith.addf %2151, %2168 : vector<16x36xf32>
    %c93_377 = arith.constant 93 : index
    %2170 = memref.load %arg4[%c93_377] : memref<180xf32, #tpu.memory_space<smem>>
    %2171 = vector.broadcast %2170 : f32 to vector<16x36xf32>
    %2172 = arith.mulf %2171, %2161 : vector<16x36xf32>
    %2173 = arith.addf %2155, %2172 : vector<16x36xf32>
    %c98_378 = arith.constant 98 : index
    %2174 = memref.load %arg4[%c98_378] : memref<180xf32, #tpu.memory_space<smem>>
    %2175 = vector.broadcast %2174 : f32 to vector<16x36xf32>
    %2176 = arith.mulf %2175, %2161 : vector<16x36xf32>
    %2177 = arith.addf %2159, %2176 : vector<16x36xf32>
    %c2_379 = arith.constant 2 : index
    %c1_380 = arith.constant 1 : index
    %c2_381 = arith.constant 2 : index
    %2178 = vector.load %arg10[%c2_379, %c1_380, %c2_381] : memref<4x18x38xf32, #tpu.memory_space<vmem>>, vector<1x16x36xf32>
    %2179 = vector.shape_cast %2178 : vector<1x16x36xf32> to vector<16x36xf32>
    %c103_382 = arith.constant 103 : index
    %2180 = memref.load %arg4[%c103_382] : memref<180xf32, #tpu.memory_space<smem>>
    %2181 = vector.broadcast %2180 : f32 to vector<16x36xf32>
    %2182 = arith.mulf %2181, %2179 : vector<16x36xf32>
    %2183 = arith.addf %2165, %2182 : vector<16x36xf32>
    %c108_383 = arith.constant 108 : index
    %2184 = memref.load %arg4[%c108_383] : memref<180xf32, #tpu.memory_space<smem>>
    %2185 = vector.broadcast %2184 : f32 to vector<16x36xf32>
    %2186 = arith.mulf %2185, %2179 : vector<16x36xf32>
    %2187 = arith.addf %2169, %2186 : vector<16x36xf32>
    %c113_384 = arith.constant 113 : index
    %2188 = memref.load %arg4[%c113_384] : memref<180xf32, #tpu.memory_space<smem>>
    %2189 = vector.broadcast %2188 : f32 to vector<16x36xf32>
    %2190 = arith.mulf %2189, %2179 : vector<16x36xf32>
    %2191 = arith.addf %2173, %2190 : vector<16x36xf32>
    %c118_385 = arith.constant 118 : index
    %2192 = memref.load %arg4[%c118_385] : memref<180xf32, #tpu.memory_space<smem>>
    %2193 = vector.broadcast %2192 : f32 to vector<16x36xf32>
    %2194 = arith.mulf %2193, %2179 : vector<16x36xf32>
    %2195 = arith.addf %2177, %2194 : vector<16x36xf32>
    %c2_386 = arith.constant 2 : index
    %c2_387 = arith.constant 2 : index
    %c0_388 = arith.constant 0 : index
    %2196 = vector.load %arg10[%c2_386, %c2_387, %c0_388] : memref<4x18x38xf32, #tpu.memory_space<vmem>>, vector<1x16x36xf32>
    %2197 = vector.shape_cast %2196 : vector<1x16x36xf32> to vector<16x36xf32>
    %c123_389 = arith.constant 123 : index
    %2198 = memref.load %arg4[%c123_389] : memref<180xf32, #tpu.memory_space<smem>>
    %2199 = vector.broadcast %2198 : f32 to vector<16x36xf32>
    %2200 = arith.mulf %2199, %2197 : vector<16x36xf32>
    %2201 = arith.addf %2183, %2200 : vector<16x36xf32>
    %c128_390 = arith.constant 128 : index
    %2202 = memref.load %arg4[%c128_390] : memref<180xf32, #tpu.memory_space<smem>>
    %2203 = vector.broadcast %2202 : f32 to vector<16x36xf32>
    %2204 = arith.mulf %2203, %2197 : vector<16x36xf32>
    %2205 = arith.addf %2187, %2204 : vector<16x36xf32>
    %c133_391 = arith.constant 133 : index
    %2206 = memref.load %arg4[%c133_391] : memref<180xf32, #tpu.memory_space<smem>>
    %2207 = vector.broadcast %2206 : f32 to vector<16x36xf32>
    %2208 = arith.mulf %2207, %2197 : vector<16x36xf32>
    %2209 = arith.addf %2191, %2208 : vector<16x36xf32>
    %c138_392 = arith.constant 138 : index
    %2210 = memref.load %arg4[%c138_392] : memref<180xf32, #tpu.memory_space<smem>>
    %2211 = vector.broadcast %2210 : f32 to vector<16x36xf32>
    %2212 = arith.mulf %2211, %2197 : vector<16x36xf32>
    %2213 = arith.addf %2195, %2212 : vector<16x36xf32>
    %c2_393 = arith.constant 2 : index
    %c2_394 = arith.constant 2 : index
    %c1_395 = arith.constant 1 : index
    %2214 = vector.load %arg10[%c2_393, %c2_394, %c1_395] : memref<4x18x38xf32, #tpu.memory_space<vmem>>, vector<1x16x36xf32>
    %2215 = vector.shape_cast %2214 : vector<1x16x36xf32> to vector<16x36xf32>
    %c143_396 = arith.constant 143 : index
    %2216 = memref.load %arg4[%c143_396] : memref<180xf32, #tpu.memory_space<smem>>
    %2217 = vector.broadcast %2216 : f32 to vector<16x36xf32>
    %2218 = arith.mulf %2217, %2215 : vector<16x36xf32>
    %2219 = arith.addf %2201, %2218 : vector<16x36xf32>
    %c148_397 = arith.constant 148 : index
    %2220 = memref.load %arg4[%c148_397] : memref<180xf32, #tpu.memory_space<smem>>
    %2221 = vector.broadcast %2220 : f32 to vector<16x36xf32>
    %2222 = arith.mulf %2221, %2215 : vector<16x36xf32>
    %2223 = arith.addf %2205, %2222 : vector<16x36xf32>
    %c153_398 = arith.constant 153 : index
    %2224 = memref.load %arg4[%c153_398] : memref<180xf32, #tpu.memory_space<smem>>
    %2225 = vector.broadcast %2224 : f32 to vector<16x36xf32>
    %2226 = arith.mulf %2225, %2215 : vector<16x36xf32>
    %2227 = arith.addf %2209, %2226 : vector<16x36xf32>
    %c158_399 = arith.constant 158 : index
    %2228 = memref.load %arg4[%c158_399] : memref<180xf32, #tpu.memory_space<smem>>
    %2229 = vector.broadcast %2228 : f32 to vector<16x36xf32>
    %2230 = arith.mulf %2229, %2215 : vector<16x36xf32>
    %2231 = arith.addf %2213, %2230 : vector<16x36xf32>
    %c2_400 = arith.constant 2 : index
    %c2_401 = arith.constant 2 : index
    %c2_402 = arith.constant 2 : index
    %2232 = vector.load %arg10[%c2_400, %c2_401, %c2_402] : memref<4x18x38xf32, #tpu.memory_space<vmem>>, vector<1x16x36xf32>
    %2233 = vector.shape_cast %2232 : vector<1x16x36xf32> to vector<16x36xf32>
    %c163_403 = arith.constant 163 : index
    %2234 = memref.load %arg4[%c163_403] : memref<180xf32, #tpu.memory_space<smem>>
    %2235 = vector.broadcast %2234 : f32 to vector<16x36xf32>
    %2236 = arith.mulf %2235, %2233 : vector<16x36xf32>
    %2237 = arith.addf %2219, %2236 : vector<16x36xf32>
    %c168_404 = arith.constant 168 : index
    %2238 = memref.load %arg4[%c168_404] : memref<180xf32, #tpu.memory_space<smem>>
    %2239 = vector.broadcast %2238 : f32 to vector<16x36xf32>
    %2240 = arith.mulf %2239, %2233 : vector<16x36xf32>
    %2241 = arith.addf %2223, %2240 : vector<16x36xf32>
    %c173_405 = arith.constant 173 : index
    %2242 = memref.load %arg4[%c173_405] : memref<180xf32, #tpu.memory_space<smem>>
    %2243 = vector.broadcast %2242 : f32 to vector<16x36xf32>
    %2244 = arith.mulf %2243, %2233 : vector<16x36xf32>
    %2245 = arith.addf %2227, %2244 : vector<16x36xf32>
    %c178_406 = arith.constant 178 : index
    %2246 = memref.load %arg4[%c178_406] : memref<180xf32, #tpu.memory_space<smem>>
    %2247 = vector.broadcast %2246 : f32 to vector<16x36xf32>
    %2248 = arith.mulf %2247, %2233 : vector<16x36xf32>
    %2249 = arith.addf %2231, %2248 : vector<16x36xf32>
    %c3_407 = arith.constant 3 : index
    %c0_408 = arith.constant 0 : index
    %c0_409 = arith.constant 0 : index
    %2250 = vector.load %arg10[%c3_407, %c0_408, %c0_409] : memref<4x18x38xf32, #tpu.memory_space<vmem>>, vector<1x16x36xf32>
    %2251 = vector.shape_cast %2250 : vector<1x16x36xf32> to vector<16x36xf32>
    %c4_410 = arith.constant 4 : index
    %2252 = memref.load %arg4[%c4_410] : memref<180xf32, #tpu.memory_space<smem>>
    %2253 = vector.broadcast %2252 : f32 to vector<16x36xf32>
    %2254 = arith.mulf %2253, %2251 : vector<16x36xf32>
    %2255 = arith.addf %2237, %2254 : vector<16x36xf32>
    %c9_411 = arith.constant 9 : index
    %2256 = memref.load %arg4[%c9_411] : memref<180xf32, #tpu.memory_space<smem>>
    %2257 = vector.broadcast %2256 : f32 to vector<16x36xf32>
    %2258 = arith.mulf %2257, %2251 : vector<16x36xf32>
    %2259 = arith.addf %2241, %2258 : vector<16x36xf32>
    %c14_412 = arith.constant 14 : index
    %2260 = memref.load %arg4[%c14_412] : memref<180xf32, #tpu.memory_space<smem>>
    %2261 = vector.broadcast %2260 : f32 to vector<16x36xf32>
    %2262 = arith.mulf %2261, %2251 : vector<16x36xf32>
    %2263 = arith.addf %2245, %2262 : vector<16x36xf32>
    %c19_413 = arith.constant 19 : index
    %2264 = memref.load %arg4[%c19_413] : memref<180xf32, #tpu.memory_space<smem>>
    %2265 = vector.broadcast %2264 : f32 to vector<16x36xf32>
    %2266 = arith.mulf %2265, %2251 : vector<16x36xf32>
    %2267 = arith.addf %2249, %2266 : vector<16x36xf32>
    %c3_414 = arith.constant 3 : index
    %c0_415 = arith.constant 0 : index
    %c1_416 = arith.constant 1 : index
    %2268 = vector.load %arg10[%c3_414, %c0_415, %c1_416] : memref<4x18x38xf32, #tpu.memory_space<vmem>>, vector<1x16x36xf32>
    %2269 = vector.shape_cast %2268 : vector<1x16x36xf32> to vector<16x36xf32>
    %c24_417 = arith.constant 24 : index
    %2270 = memref.load %arg4[%c24_417] : memref<180xf32, #tpu.memory_space<smem>>
    %2271 = vector.broadcast %2270 : f32 to vector<16x36xf32>
    %2272 = arith.mulf %2271, %2269 : vector<16x36xf32>
    %2273 = arith.addf %2255, %2272 : vector<16x36xf32>
    %c29_418 = arith.constant 29 : index
    %2274 = memref.load %arg4[%c29_418] : memref<180xf32, #tpu.memory_space<smem>>
    %2275 = vector.broadcast %2274 : f32 to vector<16x36xf32>
    %2276 = arith.mulf %2275, %2269 : vector<16x36xf32>
    %2277 = arith.addf %2259, %2276 : vector<16x36xf32>
    %c34_419 = arith.constant 34 : index
    %2278 = memref.load %arg4[%c34_419] : memref<180xf32, #tpu.memory_space<smem>>
    %2279 = vector.broadcast %2278 : f32 to vector<16x36xf32>
    %2280 = arith.mulf %2279, %2269 : vector<16x36xf32>
    %2281 = arith.addf %2263, %2280 : vector<16x36xf32>
    %c39_420 = arith.constant 39 : index
    %2282 = memref.load %arg4[%c39_420] : memref<180xf32, #tpu.memory_space<smem>>
    %2283 = vector.broadcast %2282 : f32 to vector<16x36xf32>
    %2284 = arith.mulf %2283, %2269 : vector<16x36xf32>
    %2285 = arith.addf %2267, %2284 : vector<16x36xf32>
    %c3_421 = arith.constant 3 : index
    %c0_422 = arith.constant 0 : index
    %c2_423 = arith.constant 2 : index
    %2286 = vector.load %arg10[%c3_421, %c0_422, %c2_423] : memref<4x18x38xf32, #tpu.memory_space<vmem>>, vector<1x16x36xf32>
    %2287 = vector.shape_cast %2286 : vector<1x16x36xf32> to vector<16x36xf32>
    %c44_424 = arith.constant 44 : index
    %2288 = memref.load %arg4[%c44_424] : memref<180xf32, #tpu.memory_space<smem>>
    %2289 = vector.broadcast %2288 : f32 to vector<16x36xf32>
    %2290 = arith.mulf %2289, %2287 : vector<16x36xf32>
    %2291 = arith.addf %2273, %2290 : vector<16x36xf32>
    %c49_425 = arith.constant 49 : index
    %2292 = memref.load %arg4[%c49_425] : memref<180xf32, #tpu.memory_space<smem>>
    %2293 = vector.broadcast %2292 : f32 to vector<16x36xf32>
    %2294 = arith.mulf %2293, %2287 : vector<16x36xf32>
    %2295 = arith.addf %2277, %2294 : vector<16x36xf32>
    %c54_426 = arith.constant 54 : index
    %2296 = memref.load %arg4[%c54_426] : memref<180xf32, #tpu.memory_space<smem>>
    %2297 = vector.broadcast %2296 : f32 to vector<16x36xf32>
    %2298 = arith.mulf %2297, %2287 : vector<16x36xf32>
    %2299 = arith.addf %2281, %2298 : vector<16x36xf32>
    %c59_427 = arith.constant 59 : index
    %2300 = memref.load %arg4[%c59_427] : memref<180xf32, #tpu.memory_space<smem>>
    %2301 = vector.broadcast %2300 : f32 to vector<16x36xf32>
    %2302 = arith.mulf %2301, %2287 : vector<16x36xf32>
    %2303 = arith.addf %2285, %2302 : vector<16x36xf32>
    %c3_428 = arith.constant 3 : index
    %c1_429 = arith.constant 1 : index
    %c0_430 = arith.constant 0 : index
    %2304 = vector.load %arg10[%c3_428, %c1_429, %c0_430] : memref<4x18x38xf32, #tpu.memory_space<vmem>>, vector<1x16x36xf32>
    %2305 = vector.shape_cast %2304 : vector<1x16x36xf32> to vector<16x36xf32>
    %c64_431 = arith.constant 64 : index
    %2306 = memref.load %arg4[%c64_431] : memref<180xf32, #tpu.memory_space<smem>>
    %2307 = vector.broadcast %2306 : f32 to vector<16x36xf32>
    %2308 = arith.mulf %2307, %2305 : vector<16x36xf32>
    %2309 = arith.addf %2291, %2308 : vector<16x36xf32>
    %c69_432 = arith.constant 69 : index
    %2310 = memref.load %arg4[%c69_432] : memref<180xf32, #tpu.memory_space<smem>>
    %2311 = vector.broadcast %2310 : f32 to vector<16x36xf32>
    %2312 = arith.mulf %2311, %2305 : vector<16x36xf32>
    %2313 = arith.addf %2295, %2312 : vector<16x36xf32>
    %c74_433 = arith.constant 74 : index
    %2314 = memref.load %arg4[%c74_433] : memref<180xf32, #tpu.memory_space<smem>>
    %2315 = vector.broadcast %2314 : f32 to vector<16x36xf32>
    %2316 = arith.mulf %2315, %2305 : vector<16x36xf32>
    %2317 = arith.addf %2299, %2316 : vector<16x36xf32>
    %c79_434 = arith.constant 79 : index
    %2318 = memref.load %arg4[%c79_434] : memref<180xf32, #tpu.memory_space<smem>>
    %2319 = vector.broadcast %2318 : f32 to vector<16x36xf32>
    %2320 = arith.mulf %2319, %2305 : vector<16x36xf32>
    %2321 = arith.addf %2303, %2320 : vector<16x36xf32>
    %c3_435 = arith.constant 3 : index
    %c1_436 = arith.constant 1 : index
    %c1_437 = arith.constant 1 : index
    %2322 = vector.load %arg10[%c3_435, %c1_436, %c1_437] : memref<4x18x38xf32, #tpu.memory_space<vmem>>, vector<1x16x36xf32>
    %2323 = vector.shape_cast %2322 : vector<1x16x36xf32> to vector<16x36xf32>
    %c84_438 = arith.constant 84 : index
    %2324 = memref.load %arg4[%c84_438] : memref<180xf32, #tpu.memory_space<smem>>
    %2325 = vector.broadcast %2324 : f32 to vector<16x36xf32>
    %2326 = arith.mulf %2325, %2323 : vector<16x36xf32>
    %2327 = arith.addf %2309, %2326 : vector<16x36xf32>
    %c89_439 = arith.constant 89 : index
    %2328 = memref.load %arg4[%c89_439] : memref<180xf32, #tpu.memory_space<smem>>
    %2329 = vector.broadcast %2328 : f32 to vector<16x36xf32>
    %2330 = arith.mulf %2329, %2323 : vector<16x36xf32>
    %2331 = arith.addf %2313, %2330 : vector<16x36xf32>
    %c94_440 = arith.constant 94 : index
    %2332 = memref.load %arg4[%c94_440] : memref<180xf32, #tpu.memory_space<smem>>
    %2333 = vector.broadcast %2332 : f32 to vector<16x36xf32>
    %2334 = arith.mulf %2333, %2323 : vector<16x36xf32>
    %2335 = arith.addf %2317, %2334 : vector<16x36xf32>
    %c99_441 = arith.constant 99 : index
    %2336 = memref.load %arg4[%c99_441] : memref<180xf32, #tpu.memory_space<smem>>
    %2337 = vector.broadcast %2336 : f32 to vector<16x36xf32>
    %2338 = arith.mulf %2337, %2323 : vector<16x36xf32>
    %2339 = arith.addf %2321, %2338 : vector<16x36xf32>
    %c3_442 = arith.constant 3 : index
    %c1_443 = arith.constant 1 : index
    %c2_444 = arith.constant 2 : index
    %2340 = vector.load %arg10[%c3_442, %c1_443, %c2_444] : memref<4x18x38xf32, #tpu.memory_space<vmem>>, vector<1x16x36xf32>
    %2341 = vector.shape_cast %2340 : vector<1x16x36xf32> to vector<16x36xf32>
    %c104_445 = arith.constant 104 : index
    %2342 = memref.load %arg4[%c104_445] : memref<180xf32, #tpu.memory_space<smem>>
    %2343 = vector.broadcast %2342 : f32 to vector<16x36xf32>
    %2344 = arith.mulf %2343, %2341 : vector<16x36xf32>
    %2345 = arith.addf %2327, %2344 : vector<16x36xf32>
    %c109_446 = arith.constant 109 : index
    %2346 = memref.load %arg4[%c109_446] : memref<180xf32, #tpu.memory_space<smem>>
    %2347 = vector.broadcast %2346 : f32 to vector<16x36xf32>
    %2348 = arith.mulf %2347, %2341 : vector<16x36xf32>
    %2349 = arith.addf %2331, %2348 : vector<16x36xf32>
    %c114_447 = arith.constant 114 : index
    %2350 = memref.load %arg4[%c114_447] : memref<180xf32, #tpu.memory_space<smem>>
    %2351 = vector.broadcast %2350 : f32 to vector<16x36xf32>
    %2352 = arith.mulf %2351, %2341 : vector<16x36xf32>
    %2353 = arith.addf %2335, %2352 : vector<16x36xf32>
    %c119_448 = arith.constant 119 : index
    %2354 = memref.load %arg4[%c119_448] : memref<180xf32, #tpu.memory_space<smem>>
    %2355 = vector.broadcast %2354 : f32 to vector<16x36xf32>
    %2356 = arith.mulf %2355, %2341 : vector<16x36xf32>
    %2357 = arith.addf %2339, %2356 : vector<16x36xf32>
    %c3_449 = arith.constant 3 : index
    %c2_450 = arith.constant 2 : index
    %c0_451 = arith.constant 0 : index
    %2358 = vector.load %arg10[%c3_449, %c2_450, %c0_451] : memref<4x18x38xf32, #tpu.memory_space<vmem>>, vector<1x16x36xf32>
    %2359 = vector.shape_cast %2358 : vector<1x16x36xf32> to vector<16x36xf32>
    %c124_452 = arith.constant 124 : index
    %2360 = memref.load %arg4[%c124_452] : memref<180xf32, #tpu.memory_space<smem>>
    %2361 = vector.broadcast %2360 : f32 to vector<16x36xf32>
    %2362 = arith.mulf %2361, %2359 : vector<16x36xf32>
    %2363 = arith.addf %2345, %2362 : vector<16x36xf32>
    %c129_453 = arith.constant 129 : index
    %2364 = memref.load %arg4[%c129_453] : memref<180xf32, #tpu.memory_space<smem>>
    %2365 = vector.broadcast %2364 : f32 to vector<16x36xf32>
    %2366 = arith.mulf %2365, %2359 : vector<16x36xf32>
    %2367 = arith.addf %2349, %2366 : vector<16x36xf32>
    %c134_454 = arith.constant 134 : index
    %2368 = memref.load %arg4[%c134_454] : memref<180xf32, #tpu.memory_space<smem>>
    %2369 = vector.broadcast %2368 : f32 to vector<16x36xf32>
    %2370 = arith.mulf %2369, %2359 : vector<16x36xf32>
    %2371 = arith.addf %2353, %2370 : vector<16x36xf32>
    %c139_455 = arith.constant 139 : index
    %2372 = memref.load %arg4[%c139_455] : memref<180xf32, #tpu.memory_space<smem>>
    %2373 = vector.broadcast %2372 : f32 to vector<16x36xf32>
    %2374 = arith.mulf %2373, %2359 : vector<16x36xf32>
    %2375 = arith.addf %2357, %2374 : vector<16x36xf32>
    %c3_456 = arith.constant 3 : index
    %c2_457 = arith.constant 2 : index
    %c1_458 = arith.constant 1 : index
    %2376 = vector.load %arg10[%c3_456, %c2_457, %c1_458] : memref<4x18x38xf32, #tpu.memory_space<vmem>>, vector<1x16x36xf32>
    %2377 = vector.shape_cast %2376 : vector<1x16x36xf32> to vector<16x36xf32>
    %c144_459 = arith.constant 144 : index
    %2378 = memref.load %arg4[%c144_459] : memref<180xf32, #tpu.memory_space<smem>>
    %2379 = vector.broadcast %2378 : f32 to vector<16x36xf32>
    %2380 = arith.mulf %2379, %2377 : vector<16x36xf32>
    %2381 = arith.addf %2363, %2380 : vector<16x36xf32>
    %c149_460 = arith.constant 149 : index
    %2382 = memref.load %arg4[%c149_460] : memref<180xf32, #tpu.memory_space<smem>>
    %2383 = vector.broadcast %2382 : f32 to vector<16x36xf32>
    %2384 = arith.mulf %2383, %2377 : vector<16x36xf32>
    %2385 = arith.addf %2367, %2384 : vector<16x36xf32>
    %c154_461 = arith.constant 154 : index
    %2386 = memref.load %arg4[%c154_461] : memref<180xf32, #tpu.memory_space<smem>>
    %2387 = vector.broadcast %2386 : f32 to vector<16x36xf32>
    %2388 = arith.mulf %2387, %2377 : vector<16x36xf32>
    %2389 = arith.addf %2371, %2388 : vector<16x36xf32>
    %c159_462 = arith.constant 159 : index
    %2390 = memref.load %arg4[%c159_462] : memref<180xf32, #tpu.memory_space<smem>>
    %2391 = vector.broadcast %2390 : f32 to vector<16x36xf32>
    %2392 = arith.mulf %2391, %2377 : vector<16x36xf32>
    %2393 = arith.addf %2375, %2392 : vector<16x36xf32>
    %c3_463 = arith.constant 3 : index
    %c2_464 = arith.constant 2 : index
    %c2_465 = arith.constant 2 : index
    %2394 = vector.load %arg10[%c3_463, %c2_464, %c2_465] : memref<4x18x38xf32, #tpu.memory_space<vmem>>, vector<1x16x36xf32>
    %2395 = vector.shape_cast %2394 : vector<1x16x36xf32> to vector<16x36xf32>
    %c164_466 = arith.constant 164 : index
    %2396 = memref.load %arg4[%c164_466] : memref<180xf32, #tpu.memory_space<smem>>
    %2397 = vector.broadcast %2396 : f32 to vector<16x36xf32>
    %2398 = arith.mulf %2397, %2395 : vector<16x36xf32>
    %2399 = arith.addf %2381, %2398 : vector<16x36xf32>
    %c169_467 = arith.constant 169 : index
    %2400 = memref.load %arg4[%c169_467] : memref<180xf32, #tpu.memory_space<smem>>
    %2401 = vector.broadcast %2400 : f32 to vector<16x36xf32>
    %2402 = arith.mulf %2401, %2395 : vector<16x36xf32>
    %2403 = arith.addf %2385, %2402 : vector<16x36xf32>
    %c174_468 = arith.constant 174 : index
    %2404 = memref.load %arg4[%c174_468] : memref<180xf32, #tpu.memory_space<smem>>
    %2405 = vector.broadcast %2404 : f32 to vector<16x36xf32>
    %2406 = arith.mulf %2405, %2395 : vector<16x36xf32>
    %2407 = arith.addf %2389, %2406 : vector<16x36xf32>
    %c179_469 = arith.constant 179 : index
    %2408 = memref.load %arg4[%c179_469] : memref<180xf32, #tpu.memory_space<smem>>
    %2409 = vector.broadcast %2408 : f32 to vector<16x36xf32>
    %2410 = arith.mulf %2409, %2395 : vector<16x36xf32>
    %2411 = arith.addf %2393, %2410 : vector<16x36xf32>
    %2412 = math.tanh %2399 : vector<16x36xf32>
    %c0_470 = arith.constant 0 : index
    %c1_471 = arith.constant 1 : index
    %c1_472 = arith.constant 1 : index
    %2413 = vector.load %arg1[%c0_470, %c1_471, %c1_472] : memref<4x18x38xf32, #tpu.memory_space<vmem>>, vector<1x16x36xf32>
    %2414 = vector.shape_cast %2413 : vector<1x16x36xf32> to vector<16x36xf32>
    %cst_473 = arith.constant 1.000000e+00 : f32
    %2415 = vector.broadcast %cst_473 : f32 to vector<16x36xf32>
    %2416 = arith.subf %2415, %1722 : vector<16x36xf32>
    %2417 = arith.mulf %2416, %2414 : vector<16x36xf32>
    %2418 = arith.mulf %1722, %2412 : vector<16x36xf32>
    %2419 = arith.addf %2417, %2418 : vector<16x36xf32>
    %c0_474 = arith.constant 0 : index
    %c0_475 = arith.constant 0 : index
    %c0_476 = arith.constant 0 : index
    %2420 = vector.load %arg9[%c0_474, %c0_475, %c0_476] : memref<4x16x36xf32, #tpu.memory_space<vmem>>, vector<1x16x36xf32>
    %2421 = vector.shape_cast %2420 : vector<1x16x36xf32> to vector<16x36xf32>
    %2422 = vector.shape_cast %2419 : vector<16x36xf32> to vector<1x16x36xf32>
    tpu.vector_store %arg9[%c0_474, %c0_475, %c0_476], %2422 {strides = array<i32>} : memref<4x16x36xf32, #tpu.memory_space<vmem>>, vector<1x16x36xf32>,
    %2423 = math.tanh %2403 : vector<16x36xf32>
    %c1_477 = arith.constant 1 : index
    %c1_478 = arith.constant 1 : index
    %c1_479 = arith.constant 1 : index
    %2424 = vector.load %arg1[%c1_477, %c1_478, %c1_479] : memref<4x18x38xf32, #tpu.memory_space<vmem>>, vector<1x16x36xf32>
    %2425 = vector.shape_cast %2424 : vector<1x16x36xf32> to vector<16x36xf32>
    %cst_480 = arith.constant 1.000000e+00 : f32
    %2426 = vector.broadcast %cst_480 : f32 to vector<16x36xf32>
    %2427 = arith.subf %2426, %1727 : vector<16x36xf32>
    %2428 = arith.mulf %2427, %2425 : vector<16x36xf32>
    %2429 = arith.mulf %1727, %2423 : vector<16x36xf32>
    %2430 = arith.addf %2428, %2429 : vector<16x36xf32>
    %c1_481 = arith.constant 1 : index
    %c0_482 = arith.constant 0 : index
    %c0_483 = arith.constant 0 : index
    %2431 = vector.load %arg9[%c1_481, %c0_482, %c0_483] : memref<4x16x36xf32, #tpu.memory_space<vmem>>, vector<1x16x36xf32>
    %2432 = vector.shape_cast %2431 : vector<1x16x36xf32> to vector<16x36xf32>
    %2433 = vector.shape_cast %2430 : vector<16x36xf32> to vector<1x16x36xf32>
    tpu.vector_store %arg9[%c1_481, %c0_482, %c0_483], %2433 {strides = array<i32>} : memref<4x16x36xf32, #tpu.memory_space<vmem>>, vector<1x16x36xf32>,
    %2434 = math.tanh %2407 : vector<16x36xf32>
    %c2_484 = arith.constant 2 : index
    %c1_485 = arith.constant 1 : index
    %c1_486 = arith.constant 1 : index
    %2435 = vector.load %arg1[%c2_484, %c1_485, %c1_486] : memref<4x18x38xf32, #tpu.memory_space<vmem>>, vector<1x16x36xf32>
    %2436 = vector.shape_cast %2435 : vector<1x16x36xf32> to vector<16x36xf32>
    %cst_487 = arith.constant 1.000000e+00 : f32
    %2437 = vector.broadcast %cst_487 : f32 to vector<16x36xf32>
    %2438 = arith.subf %2437, %1732 : vector<16x36xf32>
    %2439 = arith.mulf %2438, %2436 : vector<16x36xf32>
    %2440 = arith.mulf %1732, %2434 : vector<16x36xf32>
    %2441 = arith.addf %2439, %2440 : vector<16x36xf32>
    %c2_488 = arith.constant 2 : index
    %c0_489 = arith.constant 0 : index
    %c0_490 = arith.constant 0 : index
    %2442 = vector.load %arg9[%c2_488, %c0_489, %c0_490] : memref<4x16x36xf32, #tpu.memory_space<vmem>>, vector<1x16x36xf32>
    %2443 = vector.shape_cast %2442 : vector<1x16x36xf32> to vector<16x36xf32>
    %2444 = vector.shape_cast %2441 : vector<16x36xf32> to vector<1x16x36xf32>
    tpu.vector_store %arg9[%c2_488, %c0_489, %c0_490], %2444 {strides = array<i32>} : memref<4x16x36xf32, #tpu.memory_space<vmem>>, vector<1x16x36xf32>,
    %2445 = math.tanh %2411 : vector<16x36xf32>
    %c3_491 = arith.constant 3 : index
    %c1_492 = arith.constant 1 : index
    %c1_493 = arith.constant 1 : index
    %2446 = vector.load %arg1[%c3_491, %c1_492, %c1_493] : memref<4x18x38xf32, #tpu.memory_space<vmem>>, vector<1x16x36xf32>
    %2447 = vector.shape_cast %2446 : vector<1x16x36xf32> to vector<16x36xf32>
    %cst_494 = arith.constant 1.000000e+00 : f32
    %2448 = vector.broadcast %cst_494 : f32 to vector<16x36xf32>
    %2449 = arith.subf %2448, %1737 : vector<16x36xf32>
    %2450 = arith.mulf %2449, %2447 : vector<16x36xf32>
    %2451 = arith.mulf %1737, %2445 : vector<16x36xf32>
    %2452 = arith.addf %2450, %2451 : vector<16x36xf32>
    %c3_495 = arith.constant 3 : index
    %c0_496 = arith.constant 0 : index
    %c0_497 = arith.constant 0 : index
    %2453 = vector.load %arg9[%c3_495, %c0_496, %c0_497] : memref<4x16x36xf32, #tpu.memory_space<vmem>>, vector<1x16x36xf32>
    %2454 = vector.shape_cast %2453 : vector<1x16x36xf32> to vector<16x36xf32>
    %2455 = vector.shape_cast %2452 : vector<16x36xf32> to vector<1x16x36xf32>
    tpu.vector_store %arg9[%c3_495, %c0_496, %c0_497], %2455 {strides = array<i32>} : memref<4x16x36xf32, #tpu.memory_space<vmem>>, vector<1x16x36xf32>,
    %c0_498 = arith.constant 0 : index
    %2456 = memref.load %arg7[%c0_498] : memref<1xf32, #tpu.memory_space<smem>>
    %2457 = vector.broadcast %2456 : f32 to vector<16x36xf32>
    %c0_499 = arith.constant 0 : index
    %2458 = memref.load %arg6[%c0_499] : memref<4xf32, #tpu.memory_space<smem>>
    %2459 = vector.broadcast %2458 : f32 to vector<16x36xf32>
    %2460 = arith.mulf %2459, %2419 : vector<16x36xf32>
    %2461 = arith.addf %2457, %2460 : vector<16x36xf32>
    %c1_500 = arith.constant 1 : index
    %2462 = memref.load %arg6[%c1_500] : memref<4xf32, #tpu.memory_space<smem>>
    %2463 = vector.broadcast %2462 : f32 to vector<16x36xf32>
    %2464 = arith.mulf %2463, %2430 : vector<16x36xf32>
    %2465 = arith.addf %2461, %2464 : vector<16x36xf32>
    %c2_501 = arith.constant 2 : index
    %2466 = memref.load %arg6[%c2_501] : memref<4xf32, #tpu.memory_space<smem>>
    %2467 = vector.broadcast %2466 : f32 to vector<16x36xf32>
    %2468 = arith.mulf %2467, %2441 : vector<16x36xf32>
    %2469 = arith.addf %2465, %2468 : vector<16x36xf32>
    %c3_502 = arith.constant 3 : index
    %2470 = memref.load %arg6[%c3_502] : memref<4xf32, #tpu.memory_space<smem>>
    %2471 = vector.broadcast %2470 : f32 to vector<16x36xf32>
    %2472 = arith.mulf %2471, %2452 : vector<16x36xf32>
    %2473 = arith.addf %2469, %2472 : vector<16x36xf32>
    %cst_503 = arith.constant 0.000000e+00 : f32
    %2474 = vector.broadcast %cst_503 : f32 to vector<16x36xf32>
    %2475 = arith.maximumf %2473, %2474 : vector<16x36xf32>
    %c0_504 = arith.constant 0 : index
    %c0_505 = arith.constant 0 : index
    %c0_506 = arith.constant 0 : index
    %2476 = vector.load %arg8[%c0_504, %c0_505, %c0_506] : memref<1x16x36xf32, #tpu.memory_space<vmem>>, vector<1x16x36xf32>
    %2477 = vector.shape_cast %2476 : vector<1x16x36xf32> to vector<16x36xf32>
    %2478 = vector.shape_cast %2475 : vector<16x36xf32> to vector<1x16x36xf32>
    tpu.vector_store %arg8[%c0_504, %c0_505, %c0_506], %2478 {strides = array<i32>} : memref<1x16x36xf32, #tpu.memory_space<vmem>>, vector<1x16x36xf32>,
    return
  }
}

</mosaic_0001>

<llo_original>
// kernel: tpu_custom_call.1
$region0: #{tpu_custom_call.1}
  #allocation0 [shape = 'u32[]', space=smem, size = 0x4, offset = 0x4, fixed_abs, tag = 'smem constant byte address 0x4 - core index']
  #allocation1 [shape = 'u32[144,128]{1,0:T(1,128)}', space=vmem, size = 0x12000, scoped, tag = 'internal scratch']
  #allocation2 [shape = 'f32[4,18,38]{2,1,0:T(8,128)}', space=vmem, size = 0xc000, scoped, tag = 'scratch operand']
  #allocation3 [shape = 'f32[1]{0:T(128)S(6)}', space=smem, size = 0x200, scoped, tag = 'scoped memory for tpu_custom_call.1']
  %s0 = inlined_call_operand.vmem [shape: f32[1,18,38], index: 0, kind: input, shape index: {}]
  %s1 = inlined_call_operand.vmem [shape: f32[4,18,38], index: 1, kind: input, shape index: {}]
  %s2 = inlined_call_operand.vmem [shape: f32[360], index: 2, kind: input, shape index: {}]
  %s3 = inlined_call_operand.vmem [shape: f32[8], index: 3, kind: input, shape index: {}]
  %s4 = inlined_call_operand.vmem [shape: f32[180], index: 4, kind: input, shape index: {}]
  %s5 = inlined_call_operand.vmem [shape: f32[4], index: 5, kind: input, shape index: {}]
  %s6 = inlined_call_operand.vmem [shape: f32[4], index: 6, kind: input, shape index: {}]
  %s7 = inlined_call_operand.<no memory space> [shape: f32[1], index: 7, kind: input, shape index: {}]
  %s8 = inlined_call_operand.hbm [shape: f32[1,16,36], index: 8, kind: output, shape index: {0}]
  %s9 = inlined_call_operand.hbm [shape: f32[4,16,36], index: 9, kind: output, shape index: {1}]
  %10 = xla_tuple %s8, %s9
  %s11 = sld [smem:[#allocation0]]
  $region70: #{tpu_custom_call.1} parent=0
    _
  %s13 = ssub.s32 1, %s11
  %s14 = scalar_select 0, %s13, %s11
  %15 = sst [smem:[#allocation3]] %s7
  $region1: #{tpu_custom_call.1} parent=0
    #allocation4 [shape = 'u8[1536]{0}', space=smem, size = 0x600, scoped, tag = 'input window, operand 2, single buffered']
    #allocation5 [shape = 's32[1]{0}', space=sflag, size = 0x4, scoped, tag = 'scoped memory for tpu_custom_call.1']
    #allocation6 [shape = 's32[1]{0}', space=sflag, size = 0x4, scoped, tag = 'scoped memory for tpu_custom_call.1']
    #allocation7 [shape = 'u8[512]{0}', space=smem, size = 0x200, scoped, tag = 'input window, operand 3, single buffered']
    #allocation8 [shape = 's32[1]{0}', space=sflag, size = 0x4, scoped, tag = 'scoped memory for tpu_custom_call.1']
    #allocation9 [shape = 'u8[1024]{0}', space=smem, size = 0x400, scoped, tag = 'input window, operand 4, single buffered']
    #allocation10 [shape = 'u8[512]{0}', space=smem, size = 0x200, scoped, tag = 'input window, operand 5, single buffered']
    #allocation11 [shape = 's32[1]{0}', space=sflag, size = 0x4, scoped, tag = 'scoped memory for tpu_custom_call.1']
    #allocation12 [shape = 'u8[512]{0}', space=smem, size = 0x200, scoped, tag = 'input window, operand 6, single buffered']
    #allocation13 [shape = 'u8[8192]{0}', space=vmem, size = 0x2000, scoped, tag = 'output window, operand 0, single buffered']
    #allocation14 [shape = 'u8[32768]{0}', space=vmem, size = 0x8000, scoped, tag = 'output window, operand 1, single buffered']
    #allocation15 [shape = 's32[1]{0}', space=sflag, size = 0x4, scoped, tag = 'scoped memory for tpu_custom_call.1']
    %16 = vsyncpa [#allocation6], 0
    %17 = vsyncpa [#allocation8], 0
    %18 = vsyncpa [#allocation11], 0
    %19 = vsyncpa [#allocation5], 0
    %20 = vsyncpa [#allocation15], 0
    // Predicated region
    $region2: #{tpu_custom_call.1} parent=1 // pred_check
      _
    $region3: #{tpu_custom_call.1} parent=1 // pred_check_branch
      %22 = sbr.rel (0) target = $region5
    $region4: #{tpu_custom_call.1} parent=1 // pred_region
      _
    $region5: #{tpu_custom_call.1} parent=1 // pred_fallthru
      _
    // Predicated region
    $region6: #{tpu_custom_call.1} parent=1 // pred_check
      _
    $region7: #{tpu_custom_call.1} parent=1 // pred_check_branch
      %24 = sbr.rel (0) target = $region9
    $region8: #{tpu_custom_call.1} parent=1 // pred_region
      _
    $region9: #{tpu_custom_call.1} parent=1 // pred_fallthru
      _
    // Predicated region
    $region10: #{tpu_custom_call.1} parent=1 // pred_check
      _
    $region11: #{tpu_custom_call.1} parent=1 // pred_check_branch
      %26 = sbr.rel (0) target = $region13
    $region12: #{tpu_custom_call.1} parent=1 // pred_region
      %s28 = ssub.s32 48, 48
      %29 = vsyncadd [#allocation6], %s28
      %s31 = sshll.u32 %s2, 4
      %s32 = int_to_ptr.vmem [resolvable:$true] %s31
      %34 = dma.vmem_to_smem %s32, 48, [#allocation4], [#allocation6]
    $region13: #{tpu_custom_call.1} parent=1 // pred_fallthru
      _
    // Predicated region
    $region14: #{tpu_custom_call.1} parent=1 // pred_check
      _
    $region15: #{tpu_custom_call.1} parent=1 // pred_check_branch
      %36 = sbr.rel (0) target = $region17
    $region16: #{tpu_custom_call.1} parent=1 // pred_region
      %s38 = ssub.s32 16, 16
      %39 = vsyncadd [#allocation8], %s38
      %s41 = sshll.u32 %s3, 4
      %s42 = int_to_ptr.vmem [resolvable:$true] %s41
      %44 = dma.vmem_to_smem %s42, 16, [#allocation7], [#allocation8]
    $region17: #{tpu_custom_call.1} parent=1 // pred_fallthru
      _
    // Predicated region
    $region18: #{tpu_custom_call.1} parent=1 // pred_check
      _
    $region19: #{tpu_custom_call.1} parent=1 // pred_check_branch
      %46 = sbr.rel (0) target = $region21
    $region20: #{tpu_custom_call.1} parent=1 // pred_region
      %s48 = ssub.s32 32, 32
      %49 = vsyncadd [#allocation8], %s48
      %s51 = sshll.u32 %s4, 4
      %s52 = int_to_ptr.vmem [resolvable:$true] %s51
      %54 = dma.vmem_to_smem %s52, 32, [#allocation9], [#allocation8]
    $region21: #{tpu_custom_call.1} parent=1 // pred_fallthru
      _
    // Predicated region
    $region22: #{tpu_custom_call.1} parent=1 // pred_check
      _
    $region23: #{tpu_custom_call.1} parent=1 // pred_check_branch
      %56 = sbr.rel (0) target = $region25
    $region24: #{tpu_custom_call.1} parent=1 // pred_region
      %s58 = ssub.s32 16, 16
      %59 = vsyncadd [#allocation11], %s58
      %s61 = sshll.u32 %s5, 4
      %s62 = int_to_ptr.vmem [resolvable:$true] %s61
      %64 = dma.vmem_to_smem %s62, 16, [#allocation10], [#allocation11]
    $region25: #{tpu_custom_call.1} parent=1 // pred_fallthru
      _
    // Predicated region
    $region26: #{tpu_custom_call.1} parent=1 // pred_check
      _
    $region27: #{tpu_custom_call.1} parent=1 // pred_check_branch
      %66 = sbr.rel (0) target = $region29
    $region28: #{tpu_custom_call.1} parent=1 // pred_region
      %s68 = ssub.s32 16, 16
      %69 = vsyncadd [#allocation11], %s68
      %s71 = sshll.u32 %s6, 4
      %s72 = int_to_ptr.vmem [resolvable:$true] %s71
      %74 = dma.vmem_to_smem %s72, 16, [#allocation12], [#allocation11]
    $region29: #{tpu_custom_call.1} parent=1 // pred_fallthru
      _
    // Predicated region
    $region30: #{tpu_custom_call.1} parent=1 // pred_check
      _
    $region31: #{tpu_custom_call.1} parent=1 // pred_check_branch
      %76 = sbr.rel (0) target = $region33
    $region32: #{tpu_custom_call.1} parent=1 // pred_region
      _
    $region33: #{tpu_custom_call.1} parent=1 // pred_fallthru
      _
    // Predicated region
    $region34: #{tpu_custom_call.1} parent=1 // pred_check
      _
    $region35: #{tpu_custom_call.1} parent=1 // pred_check_branch
      %78 = sbr.rel (0) target = $region37
    $region36: #{tpu_custom_call.1} parent=1 // pred_region
      %79 = dma.done [#allocation6], 48
    $region37: #{tpu_custom_call.1} parent=1 // pred_fallthru
      _
    // Predicated region
    $region38: #{tpu_custom_call.1} parent=1 // pred_check
      _
    $region39: #{tpu_custom_call.1} parent=1 // pred_check_branch
      %81 = sbr.rel (0) target = $region41
    $region40: #{tpu_custom_call.1} parent=1 // pred_region
      %82 = dma.done [#allocation8], 16
    $region41: #{tpu_custom_call.1} parent=1 // pred_fallthru
      _
    // Predicated region
    $region42: #{tpu_custom_call.1} parent=1 // pred_check
      _
    $region43: #{tpu_custom_call.1} parent=1 // pred_check_branch
      %84 = sbr.rel (0) target = $region45
    $region44: #{tpu_custom_call.1} parent=1 // pred_region
      %85 = dma.done [#allocation8], 32
    $region45: #{tpu_custom_call.1} parent=1 // pred_fallthru
      _
    // Predicated region
    $region46: #{tpu_custom_call.1} parent=1 // pred_check
      _
    $region47: #{tpu_custom_call.1} parent=1 // pred_check_branch
      %87 = sbr.rel (0) target = $region49
    $region48: #{tpu_custom_call.1} parent=1 // pred_region
      %88 = dma.done [#allocation11], 16
    $region49: #{tpu_custom_call.1} parent=1 // pred_fallthru
      _
    // Predicated region
    $region50: #{tpu_custom_call.1} parent=1 // pred_check
      _
    $region51: #{tpu_custom_call.1} parent=1 // pred_check_branch
      %90 = sbr.rel (0) target = $region53
    $region52: #{tpu_custom_call.1} parent=1 // pred_region
      %91 = dma.done [#allocation11], 16
    $region53: #{tpu_custom_call.1} parent=1 // pred_fallthru
      _
    %92 = sfence
    %s93 = sld [smem:[#allocation7]]
    %v94 = vstv %s93
    %s95 = sld [smem:[#allocation7 + $0x1]]
    %v96 = vstv %s95
    %s97 = sld [smem:[#allocation7 + $0x2]]
    %v98 = vstv %s97
    %s99 = sld [smem:[#allocation7 + $0x3]]
    %v100 = vstv %s99
    %s101 = sld [smem:[#allocation7 + $0x4]]
    %v102 = vstv %s101
    %s103 = sld [smem:[#allocation7 + $0x5]]
    %v104 = vstv %s103
    %s105 = sld [smem:[#allocation7 + $0x6]]
    %v106 = vstv %s105
    %s107 = sld [smem:[#allocation7 + $0x7]]
    %v108 = vstv %s107
    %s109 = sld [smem:[#allocation10]]
    %v110 = vstv %s109
    %s111 = sld [smem:[#allocation10 + $0x1]]
    %v112 = vstv %s111
    %s113 = sld [smem:[#allocation10 + $0x2]]
    %v114 = vstv %s113
    %s115 = sld [smem:[#allocation10 + $0x3]]
    %v116 = vstv %s115
    %v117 = vld [vmem:[%s0] sm:$0xff]
    %v118 = vld [vmem:[%s0 + $0x8] sm:$0xff]
    %s119 = sld [smem:[#allocation4]]
    %v120 = vstv %s119
    %v121 = vmul.f32 %v120, %v117
    %v122 = vmul.f32 %v120, %v118
    %v123 = vadd.f32 %v94, %v121
    %v124 = vadd.f32 %v94, %v122
    %s125 = sld [smem:[#allocation4 + $0x5]]
    %v126 = vstv %s125
    %v127 = vmul.f32 %v126, %v117
    %v128 = vmul.f32 %v126, %v118
    %v129 = vadd.f32 %v96, %v127
    %v130 = vadd.f32 %v96, %v128
    %s131 = sld [smem:[#allocation4 + $0xa]]
    %v132 = vstv %s131
    %v133 = vmul.f32 %v132, %v117
    %v134 = vmul.f32 %v132, %v118
    %v135 = vadd.f32 %v98, %v133
    %v136 = vadd.f32 %v98, %v134
    %s137 = sld [smem:[#allocation4 + $0xf]]
    %v138 = vstv %s137
    %v139 = vmul.f32 %v138, %v117
    %v140 = vmul.f32 %v138, %v118
    %v141 = vadd.f32 %v100, %v139
    %v142 = vadd.f32 %v100, %v140
    %s143 = sld [smem:[#allocation4 + $0x14]]
    %v144 = vstv %s143
    %v145 = vmul.f32 %v144, %v117
    %v146 = vmul.f32 %v144, %v118
    %v147 = vadd.f32 %v102, %v145
    %v148 = vadd.f32 %v102, %v146
    %s149 = sld [smem:[#allocation4 + $0x19]]
    %v150 = vstv %s149
    %v151 = vmul.f32 %v150, %v117
    %v152 = vmul.f32 %v150, %v118
    %v153 = vadd.f32 %v104, %v151
    %v154 = vadd.f32 %v104, %v152
    %s155 = sld [smem:[#allocation4 + $0x1e]]
    %v156 = vstv %s155
    %v157 = vmul.f32 %v156, %v117
    %v158 = vmul.f32 %v156, %v118
    %v159 = vadd.f32 %v106, %v157
    %v160 = vadd.f32 %v106, %v158
    %s161 = sld [smem:[#allocation4 + $0x23]]
    %v162 = vstv %s161
    %v163 = vmul.f32 %v162, %v117
    %v164 = vmul.f32 %v162, %v118
    %v165 = vadd.f32 %v108, %v163
    %v166 = vadd.f32 %v108, %v164
    %s167 = sld [smem:[#allocation9]]
    %v168 = vstv %s167
    %v169 = vmul.f32 %v168, %v117
    %v170 = vmul.f32 %v168, %v118
    %v171 = vadd.f32 %v110, %v169
    %v172 = vadd.f32 %v110, %v170
    %s173 = sld [smem:[#allocation9 + $0x5]]
    %v174 = vstv %s173
    %v175 = vmul.f32 %v174, %v117
    %v176 = vmul.f32 %v174, %v118
    %v177 = vadd.f32 %v112, %v175
    %v178 = vadd.f32 %v112, %v176
    %s179 = sld [smem:[#allocation9 + $0xa]]
    %v180 = vstv %s179
    %v181 = vmul.f32 %v180, %v117
    %v182 = vmul.f32 %v180, %v118
    %v183 = vadd.f32 %v114, %v181
    %v184 = vadd.f32 %v114, %v182
    %s185 = sld [smem:[#allocation9 + $0xf]]
    %v186 = vstv %s185
    %v187 = vmul.f32 %v186, %v117
    %v188 = vmul.f32 %v186, %v118
    %v189 = vadd.f32 %v116, %v187
    %v190 = vadd.f32 %v116, %v188
    %s191 = sld [smem:[#allocation4 + $0x28]]
    %v192 = vstv %s191
    %v193 = vmul.f32 %v192, %v117
    %v194 = vmul.f32 %v192, %v118
    %197 = vrot.lane.b32.xlu0 %v193, 127
    %v198 = vpop.permute.xlu0 %197
    %199 = vrot.lane.b32.xlu0 %v194, 127
    %v200 = vpop.permute.xlu0 %199
    %v203 = vadd.f32 %v123, %v198
    %v204 = vadd.f32 %v124, %v200
    %s205 = sld [smem:[#allocation4 + $0x2d]]
    %v206 = vstv %s205
    %v207 = vmul.f32 %v206, %v117
    %v208 = vmul.f32 %v206, %v118
    %211 = vrot.lane.b32.xlu0 %v207, 127
    %v212 = vpop.permute.xlu0 %211
    %213 = vrot.lane.b32.xlu0 %v208, 127
    %v214 = vpop.permute.xlu0 %213
    %v217 = vadd.f32 %v129, %v212
    %v218 = vadd.f32 %v130, %v214
    %s219 = sld [smem:[#allocation4 + $0x32]]
    %v220 = vstv %s219
    %v221 = vmul.f32 %v220, %v117
    %v222 = vmul.f32 %v220, %v118
    %225 = vrot.lane.b32.xlu0 %v221, 127
    %v226 = vpop.permute.xlu0 %225
    %227 = vrot.lane.b32.xlu0 %v222, 127
    %v228 = vpop.permute.xlu0 %227
    %v231 = vadd.f32 %v135, %v226
    %v232 = vadd.f32 %v136, %v228
    %s233 = sld [smem:[#allocation4 + $0x37]]
    %v234 = vstv %s233
    %v235 = vmul.f32 %v234, %v117
    %v236 = vmul.f32 %v234, %v118
    %239 = vrot.lane.b32.xlu0 %v235, 127
    %v240 = vpop.permute.xlu0 %239
    %241 = vrot.lane.b32.xlu0 %v236, 127
    %v242 = vpop.permute.xlu0 %241
    %v245 = vadd.f32 %v141, %v240
    %v246 = vadd.f32 %v142, %v242
    %s247 = sld [smem:[#allocation4 + $0x3c]]
    %v248 = vstv %s247
    %v249 = vmul.f32 %v248, %v117
    %v250 = vmul.f32 %v248, %v118
    %253 = vrot.lane.b32.xlu0 %v249, 127
    %v254 = vpop.permute.xlu0 %253
    %255 = vrot.lane.b32.xlu0 %v250, 127
    %v256 = vpop.permute.xlu0 %255
    %v259 = vadd.f32 %v147, %v254
    %v260 = vadd.f32 %v148, %v256
    %s261 = sld [smem:[#allocation4 + $0x41]]
    %v262 = vstv %s261
    %v263 = vmul.f32 %v262, %v117
    %v264 = vmul.f32 %v262, %v118
    %267 = vrot.lane.b32.xlu0 %v263, 127
    %v268 = vpop.permute.xlu0 %267
    %269 = vrot.lane.b32.xlu0 %v264, 127
    %v270 = vpop.permute.xlu0 %269
    %v273 = vadd.f32 %v153, %v268
    %v274 = vadd.f32 %v154, %v270
    %s275 = sld [smem:[#allocation4 + $0x46]]
    %v276 = vstv %s275
    %v277 = vmul.f32 %v276, %v117
    %v278 = vmul.f32 %v276, %v118
    %281 = vrot.lane.b32.xlu0 %v277, 127
    %v282 = vpop.permute.xlu0 %281
    %283 = vrot.lane.b32.xlu0 %v278, 127
    %v284 = vpop.permute.xlu0 %283
    %v287 = vadd.f32 %v159, %v282
    %v288 = vadd.f32 %v160, %v284
    %s289 = sld [smem:[#allocation4 + $0x4b]]
    %v290 = vstv %s289
    %v291 = vmul.f32 %v290, %v117
    %v292 = vmul.f32 %v290, %v118
    %295 = vrot.lane.b32.xlu0 %v291, 127
    %v296 = vpop.permute.xlu0 %295
    %297 = vrot.lane.b32.xlu0 %v292, 127
    %v298 = vpop.permute.xlu0 %297
    %v301 = vadd.f32 %v165, %v296
    %v302 = vadd.f32 %v166, %v298
    %s303 = sld [smem:[#allocation9 + $0x14]]
    %v304 = vstv %s303
    %v305 = vmul.f32 %v304, %v117
    %v306 = vmul.f32 %v304, %v118
    %309 = vrot.lane.b32.xlu0 %v305, 127
    %v310 = vpop.permute.xlu0 %309
    %311 = vrot.lane.b32.xlu0 %v306, 127
    %v312 = vpop.permute.xlu0 %311
    %v315 = vadd.f32 %v171, %v310
    %v316 = vadd.f32 %v172, %v312
    %s317 = sld [smem:[#allocation9 + $0x19]]
    %v318 = vstv %s317
    %v319 = vmul.f32 %v318, %v117
    %v320 = vmul.f32 %v318, %v118
    %323 = vrot.lane.b32.xlu0 %v319, 127
    %v324 = vpop.permute.xlu0 %323
    %325 = vrot.lane.b32.xlu0 %v320, 127
    %v326 = vpop.permute.xlu0 %325
    %v329 = vadd.f32 %v177, %v324
    %v330 = vadd.f32 %v178, %v326
    %s331 = sld [smem:[#allocation9 + $0x1e]]
    %v332 = vstv %s331
    %v333 = vmul.f32 %v332, %v117
    %v334 = vmul.f32 %v332, %v118
    %337 = vrot.lane.b32.xlu0 %v333, 127
    %v338 = vpop.permute.xlu0 %337
    %339 = vrot.lane.b32.xlu0 %v334, 127
    %v340 = vpop.permute.xlu0 %339
    %v343 = vadd.f32 %v183, %v338
    %v344 = vadd.f32 %v184, %v340
    %s345 = sld [smem:[#allocation9 + $0x23]]
    %v346 = vstv %s345
    %v347 = vmul.f32 %v346, %v117
    %v348 = vmul.f32 %v346, %v118
    %351 = vrot.lane.b32.xlu0 %v347, 127
    %v352 = vpop.permute.xlu0 %351
    %353 = vrot.lane.b32.xlu0 %v348, 127
    %v354 = vpop.permute.xlu0 %353
    %v357 = vadd.f32 %v189, %v352
    %v358 = vadd.f32 %v190, %v354
    %s359 = sld [smem:[#allocation4 + $0x50]]
    %v360 = vstv %s359
    %v361 = vmul.f32 %v360, %v117
    %v362 = vmul.f32 %v360, %v118
    %365 = vrot.lane.b32.xlu0 %v361, 126
    %v366 = vpop.permute.xlu0 %365
    %367 = vrot.lane.b32.xlu0 %v362, 126
    %v368 = vpop.permute.xlu0 %367
    %v371 = vadd.f32 %v203, %v366
    %v372 = vadd.f32 %v204, %v368
    %s373 = sld [smem:[#allocation4 + $0x55]]
    %v374 = vstv %s373
    %v375 = vmul.f32 %v374, %v117
    %v376 = vmul.f32 %v374, %v118
    %379 = vrot.lane.b32.xlu0 %v375, 126
    %v380 = vpop.permute.xlu0 %379
    %381 = vrot.lane.b32.xlu0 %v376, 126
    %v382 = vpop.permute.xlu0 %381
    %v385 = vadd.f32 %v217, %v380
    %v386 = vadd.f32 %v218, %v382
    %s387 = sld [smem:[#allocation4 + $0x5a]]
    %v388 = vstv %s387
    %v389 = vmul.f32 %v388, %v117
    %v390 = vmul.f32 %v388, %v118
    %393 = vrot.lane.b32.xlu0 %v389, 126
    %v394 = vpop.permute.xlu0 %393
    %395 = vrot.lane.b32.xlu0 %v390, 126
    %v396 = vpop.permute.xlu0 %395
    %v399 = vadd.f32 %v231, %v394
    %v400 = vadd.f32 %v232, %v396
    %s401 = sld [smem:[#allocation4 + $0x5f]]
    %v402 = vstv %s401
    %v403 = vmul.f32 %v402, %v117
    %v404 = vmul.f32 %v402, %v118
    %407 = vrot.lane.b32.xlu0 %v403, 126
    %v408 = vpop.permute.xlu0 %407
    %409 = vrot.lane.b32.xlu0 %v404, 126
    %v410 = vpop.permute.xlu0 %409
    %v413 = vadd.f32 %v245, %v408
    %v414 = vadd.f32 %v246, %v410
    %s415 = sld [smem:[#allocation4 + $0x64]]
    %v416 = vstv %s415
    %v417 = vmul.f32 %v416, %v117
    %v418 = vmul.f32 %v416, %v118
    %421 = vrot.lane.b32.xlu0 %v417, 126
    %v422 = vpop.permute.xlu0 %421
    %423 = vrot.lane.b32.xlu0 %v418, 126
    %v424 = vpop.permute.xlu0 %423
    %v427 = vadd.f32 %v259, %v422
    %v428 = vadd.f32 %v260, %v424
    %s429 = sld [smem:[#allocation4 + $0x69]]
    %v430 = vstv %s429
    %v431 = vmul.f32 %v430, %v117
    %v432 = vmul.f32 %v430, %v118
    %435 = vrot.lane.b32.xlu0 %v431, 126
    %v436 = vpop.permute.xlu0 %435
    %437 = vrot.lane.b32.xlu0 %v432, 126
    %v438 = vpop.permute.xlu0 %437
    %v441 = vadd.f32 %v273, %v436
    %v442 = vadd.f32 %v274, %v438
    %s443 = sld [smem:[#allocation4 + $0x6e]]
    %v444 = vstv %s443
    %v445 = vmul.f32 %v444, %v117
    %v446 = vmul.f32 %v444, %v118
    %449 = vrot.lane.b32.xlu0 %v445, 126
    %v450 = vpop.permute.xlu0 %449
    %451 = vrot.lane.b32.xlu0 %v446, 126
    %v452 = vpop.permute.xlu0 %451
    %v455 = vadd.f32 %v287, %v450
    %v456 = vadd.f32 %v288, %v452
    %s457 = sld [smem:[#allocation4 + $0x73]]
    %v458 = vstv %s457
    %v459 = vmul.f32 %v458, %v117
    %v460 = vmul.f32 %v458, %v118
    %463 = vrot.lane.b32.xlu0 %v459, 126
    %v464 = vpop.permute.xlu0 %463
    %465 = vrot.lane.b32.xlu0 %v460, 126
    %v466 = vpop.permute.xlu0 %465
    %v469 = vadd.f32 %v301, %v464
    %v470 = vadd.f32 %v302, %v466
    %s471 = sld [smem:[#allocation9 + $0x28]]
    %v472 = vstv %s471
    %v473 = vmul.f32 %v472, %v117
    %v474 = vmul.f32 %v472, %v118
    %477 = vrot.lane.b32.xlu0 %v473, 126
    %v478 = vpop.permute.xlu0 %477
    %479 = vrot.lane.b32.xlu0 %v474, 126
    %v480 = vpop.permute.xlu0 %479
    %v483 = vadd.f32 %v315, %v478
    %v484 = vadd.f32 %v316, %v480
    %s485 = sld [smem:[#allocation9 + $0x2d]]
    %v486 = vstv %s485
    %v487 = vmul.f32 %v486, %v117
    %v488 = vmul.f32 %v486, %v118
    %491 = vrot.lane.b32.xlu0 %v487, 126
    %v492 = vpop.permute.xlu0 %491
    %493 = vrot.lane.b32.xlu0 %v488, 126
    %v494 = vpop.permute.xlu0 %493
    %v497 = vadd.f32 %v329, %v492
    %v498 = vadd.f32 %v330, %v494
    %s499 = sld [smem:[#allocation9 + $0x32]]
    %v500 = vstv %s499
    %v501 = vmul.f32 %v500, %v117
    %v502 = vmul.f32 %v500, %v118
    %505 = vrot.lane.b32.xlu0 %v501, 126
    %v506 = vpop.permute.xlu0 %505
    %507 = vrot.lane.b32.xlu0 %v502, 126
    %v508 = vpop.permute.xlu0 %507
    %v511 = vadd.f32 %v343, %v506
    %v512 = vadd.f32 %v344, %v508
    %s513 = sld [smem:[#allocation9 + $0x37]]
    %v514 = vstv %s513
    %v515 = vmul.f32 %v514, %v117
    %v516 = vmul.f32 %v514, %v118
    %519 = vrot.lane.b32.xlu0 %v515, 126
    %v520 = vpop.permute.xlu0 %519
    %521 = vrot.lane.b32.xlu0 %v516, 126
    %v522 = vpop.permute.xlu0 %521
    %v525 = vadd.f32 %v357, %v520
    %v526 = vadd.f32 %v358, %v522
    %v527 = vld [vmem:[%s0 + $0x1] sm:$0xff]
    %v528 = vld [vmem:[%s0 + $0x9] sm:$0xff]
    %s529 = sld [smem:[#allocation4 + $0x78]]
    %v530 = vstv %s529
    %v531 = vmul.f32 %v530, %v527
    %v532 = vmul.f32 %v530, %v528
    %v533 = vadd.f32 %v371, %v531
    %v534 = vadd.f32 %v372, %v532
    %s535 = sld [smem:[#allocation4 + $0x7d]]
    %v536 = vstv %s535
    %v537 = vmul.f32 %v536, %v527
    %v538 = vmul.f32 %v536, %v528
    %v539 = vadd.f32 %v385, %v537
    %v540 = vadd.f32 %v386, %v538
    %s541 = sld [smem:[#allocation4 + $0x82]]
    %v542 = vstv %s541
    %v543 = vmul.f32 %v542, %v527
    %v544 = vmul.f32 %v542, %v528
    %v545 = vadd.f32 %v399, %v543
    %v546 = vadd.f32 %v400, %v544
    %s547 = sld [smem:[#allocation4 + $0x87]]
    %v548 = vstv %s547
    %v549 = vmul.f32 %v548, %v527
    %v550 = vmul.f32 %v548, %v528
    %v551 = vadd.f32 %v413, %v549
    %v552 = vadd.f32 %v414, %v550
    %s553 = sld [smem:[#allocation4 + $0x8c]]
    %v554 = vstv %s553
    %v555 = vmul.f32 %v554, %v527
    %v556 = vmul.f32 %v554, %v528
    %v557 = vadd.f32 %v427, %v555
    %v558 = vadd.f32 %v428, %v556
    %s559 = sld [smem:[#allocation4 + $0x91]]
    %v560 = vstv %s559
    %v561 = vmul.f32 %v560, %v527
    %v562 = vmul.f32 %v560, %v528
    %v563 = vadd.f32 %v441, %v561
    %v564 = vadd.f32 %v442, %v562
    %s565 = sld [smem:[#allocation4 + $0x96]]
    %v566 = vstv %s565
    %v567 = vmul.f32 %v566, %v527
    %v568 = vmul.f32 %v566, %v528
    %v569 = vadd.f32 %v455, %v567
    %v570 = vadd.f32 %v456, %v568
    %s571 = sld [smem:[#allocation4 + $0x9b]]
    %v572 = vstv %s571
    %v573 = vmul.f32 %v572, %v527
    %v574 = vmul.f32 %v572, %v528
    %v575 = vadd.f32 %v469, %v573
    %v576 = vadd.f32 %v470, %v574
    %s577 = sld [smem:[#allocation9 + $0x3c]]
    %v578 = vstv %s577
    %v579 = vmul.f32 %v578, %v527
    %v580 = vmul.f32 %v578, %v528
    %v581 = vadd.f32 %v483, %v579
    %v582 = vadd.f32 %v484, %v580
    %s583 = sld [smem:[#allocation9 + $0x41]]
    %v584 = vstv %s583
    %v585 = vmul.f32 %v584, %v527
    %v586 = vmul.f32 %v584, %v528
    %v587 = vadd.f32 %v497, %v585
    %v588 = vadd.f32 %v498, %v586
    %s589 = sld [smem:[#allocation9 + $0x46]]
    %v590 = vstv %s589
    %v591 = vmul.f32 %v590, %v527
    %v592 = vmul.f32 %v590, %v528
    %v593 = vadd.f32 %v511, %v591
    %v594 = vadd.f32 %v512, %v592
    %s595 = sld [smem:[#allocation9 + $0x4b]]
    %v596 = vstv %s595
    %v597 = vmul.f32 %v596, %v527
    %v598 = vmul.f32 %v596, %v528
    %v599 = vadd.f32 %v525, %v597
    %v600 = vadd.f32 %v526, %v598
    %s601 = sld [smem:[#allocation4 + $0xa0]]
    %v602 = vstv %s601
    %v603 = vmul.f32 %v602, %v527
    %v604 = vmul.f32 %v602, %v528
    %607 = vrot.lane.b32.xlu0 %v603, 127
    %v608 = vpop.permute.xlu0 %607
    %609 = vrot.lane.b32.xlu0 %v604, 127
    %v610 = vpop.permute.xlu0 %609
    %v613 = vadd.f32 %v533, %v608
    %v614 = vadd.f32 %v534, %v610
    %s615 = sld [smem:[#allocation4 + $0xa5]]
    %v616 = vstv %s615
    %v617 = vmul.f32 %v616, %v527
    %v618 = vmul.f32 %v616, %v528
    %621 = vrot.lane.b32.xlu0 %v617, 127
    %v622 = vpop.permute.xlu0 %621
    %623 = vrot.lane.b32.xlu0 %v618, 127
    %v624 = vpop.permute.xlu0 %623
    %v627 = vadd.f32 %v539, %v622
    %v628 = vadd.f32 %v540, %v624
    %s629 = sld [smem:[#allocation4 + $0xaa]]
    %v630 = vstv %s629
    %v631 = vmul.f32 %v630, %v527
    %v632 = vmul.f32 %v630, %v528
    %635 = vrot.lane.b32.xlu0 %v631, 127
    %v636 = vpop.permute.xlu0 %635
    %637 = vrot.lane.b32.xlu0 %v632, 127
    %v638 = vpop.permute.xlu0 %637
    %v641 = vadd.f32 %v545, %v636
    %v642 = vadd.f32 %v546, %v638
    %s643 = sld [smem:[#allocation4 + $0xaf]]
    %v644 = vstv %s643
    %v645 = vmul.f32 %v644, %v527
    %v646 = vmul.f32 %v644, %v528
    %649 = vrot.lane.b32.xlu0 %v645, 127
    %v650 = vpop.permute.xlu0 %649
    %651 = vrot.lane.b32.xlu0 %v646, 127
    %v652 = vpop.permute.xlu0 %651
    %v655 = vadd.f32 %v551, %v650
    %v656 = vadd.f32 %v552, %v652
    %s657 = sld [smem:[#allocation4 + $0xb4]]
    %v658 = vstv %s657
    %v659 = vmul.f32 %v658, %v527
    %v660 = vmul.f32 %v658, %v528
    %663 = vrot.lane.b32.xlu0 %v659, 127
    %v664 = vpop.permute.xlu0 %663
    %665 = vrot.lane.b32.xlu0 %v660, 127
    %v666 = vpop.permute.xlu0 %665
    %v669 = vadd.f32 %v557, %v664
    %v670 = vadd.f32 %v558, %v666
    %s671 = sld [smem:[#allocation4 + $0xb9]]
    %v672 = vstv %s671
    %v673 = vmul.f32 %v672, %v527
    %v674 = vmul.f32 %v672, %v528
    %677 = vrot.lane.b32.xlu0 %v673, 127
    %v678 = vpop.permute.xlu0 %677
    %679 = vrot.lane.b32.xlu0 %v674, 127
    %v680 = vpop.permute.xlu0 %679
    %v683 = vadd.f32 %v563, %v678
    %v684 = vadd.f32 %v564, %v680
    %s685 = sld [smem:[#allocation4 + $0xbe]]
    %v686 = vstv %s685
    %v687 = vmul.f32 %v686, %v527
    %v688 = vmul.f32 %v686, %v528
    %691 = vrot.lane.b32.xlu0 %v687, 127
    %v692 = vpop.permute.xlu0 %691
    %693 = vrot.lane.b32.xlu0 %v688, 127
    %v694 = vpop.permute.xlu0 %693
    %v697 = vadd.f32 %v569, %v692
    %v698 = vadd.f32 %v570, %v694
    %s699 = sld [smem:[#allocation4 + $0xc3]]
    %v700 = vstv %s699
    %v701 = vmul.f32 %v700, %v527
    %v702 = vmul.f32 %v700, %v528
    %705 = vrot.lane.b32.xlu0 %v701, 127
    %v706 = vpop.permute.xlu0 %705
    %707 = vrot.lane.b32.xlu0 %v702, 127
    %v708 = vpop.permute.xlu0 %707
    %v711 = vadd.f32 %v575, %v706
    %v712 = vadd.f32 %v576, %v708
    %s713 = sld [smem:[#allocation9 + $0x50]]
    %v714 = vstv %s713
    %v715 = vmul.f32 %v714, %v527
    %v716 = vmul.f32 %v714, %v528
    %719 = vrot.lane.b32.xlu0 %v715, 127
    %v720 = vpop.permute.xlu0 %719
    %721 = vrot.lane.b32.xlu0 %v716, 127
    %v722 = vpop.permute.xlu0 %721
    %v725 = vadd.f32 %v581, %v720
    %v726 = vadd.f32 %v582, %v722
    %s727 = sld [smem:[#allocation9 + $0x55]]
    %v728 = vstv %s727
    %v729 = vmul.f32 %v728, %v527
    %v730 = vmul.f32 %v728, %v528
    %733 = vrot.lane.b32.xlu0 %v729, 127
    %v734 = vpop.permute.xlu0 %733
    %735 = vrot.lane.b32.xlu0 %v730, 127
    %v736 = vpop.permute.xlu0 %735
    %v739 = vadd.f32 %v587, %v734
    %v740 = vadd.f32 %v588, %v736
    %s741 = sld [smem:[#allocation9 + $0x5a]]
    %v742 = vstv %s741
    %v743 = vmul.f32 %v742, %v527
    %v744 = vmul.f32 %v742, %v528
    %747 = vrot.lane.b32.xlu0 %v743, 127
    %v748 = vpop.permute.xlu0 %747
    %749 = vrot.lane.b32.xlu0 %v744, 127
    %v750 = vpop.permute.xlu0 %749
    %v753 = vadd.f32 %v593, %v748
    %v754 = vadd.f32 %v594, %v750
    %s755 = sld [smem:[#allocation9 + $0x5f]]
    %v756 = vstv %s755
    %v757 = vmul.f32 %v756, %v527
    %v758 = vmul.f32 %v756, %v528
    %761 = vrot.lane.b32.xlu0 %v757, 127
    %v762 = vpop.permute.xlu0 %761
    %763 = vrot.lane.b32.xlu0 %v758, 127
    %v764 = vpop.permute.xlu0 %763
    %v767 = vadd.f32 %v599, %v762
    %v768 = vadd.f32 %v600, %v764
    %s769 = sld [smem:[#allocation4 + $0xc8]]
    %v770 = vstv %s769
    %v771 = vmul.f32 %v770, %v527
    %v772 = vmul.f32 %v770, %v528
    %775 = vrot.lane.b32.xlu0 %v771, 126
    %v776 = vpop.permute.xlu0 %775
    %777 = vrot.lane.b32.xlu0 %v772, 126
    %v778 = vpop.permute.xlu0 %777
    %v781 = vadd.f32 %v613, %v776
    %v782 = vadd.f32 %v614, %v778
    %s783 = sld [smem:[#allocation4 + $0xcd]]
    %v784 = vstv %s783
    %v785 = vmul.f32 %v784, %v527
    %v786 = vmul.f32 %v784, %v528
    %789 = vrot.lane.b32.xlu0 %v785, 126
    %v790 = vpop.permute.xlu0 %789
    %791 = vrot.lane.b32.xlu0 %v786, 126
    %v792 = vpop.permute.xlu0 %791
    %v795 = vadd.f32 %v627, %v790
    %v796 = vadd.f32 %v628, %v792
    %s797 = sld [smem:[#allocation4 + $0xd2]]
    %v798 = vstv %s797
    %v799 = vmul.f32 %v798, %v527
    %v800 = vmul.f32 %v798, %v528
    %803 = vrot.lane.b32.xlu0 %v799, 126
    %v804 = vpop.permute.xlu0 %803
    %805 = vrot.lane.b32.xlu0 %v800, 126
    %v806 = vpop.permute.xlu0 %805
    %v809 = vadd.f32 %v641, %v804
    %v810 = vadd.f32 %v642, %v806
    %s811 = sld [smem:[#allocation4 + $0xd7]]
    %v812 = vstv %s811
    %v813 = vmul.f32 %v812, %v527
    %v814 = vmul.f32 %v812, %v528
    %817 = vrot.lane.b32.xlu0 %v813, 126
    %v818 = vpop.permute.xlu0 %817
    %819 = vrot.lane.b32.xlu0 %v814, 126
    %v820 = vpop.permute.xlu0 %819
    %v823 = vadd.f32 %v655, %v818
    %v824 = vadd.f32 %v656, %v820
    %s825 = sld [smem:[#allocation4 + $0xdc]]
    %v826 = vstv %s825
    %v827 = vmul.f32 %v826, %v527
    %v828 = vmul.f32 %v826, %v528
    %831 = vrot.lane.b32.xlu0 %v827, 126
    %v832 = vpop.permute.xlu0 %831
    %833 = vrot.lane.b32.xlu0 %v828, 126
    %v834 = vpop.permute.xlu0 %833
    %v837 = vadd.f32 %v669, %v832
    %v838 = vadd.f32 %v670, %v834
    %s839 = sld [smem:[#allocation4 + $0xe1]]
    %v840 = vstv %s839
    %v841 = vmul.f32 %v840, %v527
    %v842 = vmul.f32 %v840, %v528
    %845 = vrot.lane.b32.xlu0 %v841, 126
    %v846 = vpop.permute.xlu0 %845
    %847 = vrot.lane.b32.xlu0 %v842, 126
    %v848 = vpop.permute.xlu0 %847
    %v851 = vadd.f32 %v683, %v846
    %v852 = vadd.f32 %v684, %v848
    %s853 = sld [smem:[#allocation4 + $0xe6]]
    %v854 = vstv %s853
    %v855 = vmul.f32 %v854, %v527
    %v856 = vmul.f32 %v854, %v528
    %859 = vrot.lane.b32.xlu0 %v855, 126
    %v860 = vpop.permute.xlu0 %859
    %861 = vrot.lane.b32.xlu0 %v856, 126
    %v862 = vpop.permute.xlu0 %861
    %v865 = vadd.f32 %v697, %v860
    %v866 = vadd.f32 %v698, %v862
    %s867 = sld [smem:[#allocation4 + $0xeb]]
    %v868 = vstv %s867
    %v869 = vmul.f32 %v868, %v527
    %v870 = vmul.f32 %v868, %v528
    %873 = vrot.lane.b32.xlu0 %v869, 126
    %v874 = vpop.permute.xlu0 %873
    %875 = vrot.lane.b32.xlu0 %v870, 126
    %v876 = vpop.permute.xlu0 %875
    %v879 = vadd.f32 %v711, %v874
    %v880 = vadd.f32 %v712, %v876
    %s881 = sld [smem:[#allocation9 + $0x64]]
    %v882 = vstv %s881
    %v883 = vmul.f32 %v882, %v527
    %v884 = vmul.f32 %v882, %v528
    %887 = vrot.lane.b32.xlu0 %v883, 126
    %v888 = vpop.permute.xlu0 %887
    %889 = vrot.lane.b32.xlu0 %v884, 126
    %v890 = vpop.permute.xlu0 %889
    %v893 = vadd.f32 %v725, %v888
    %v894 = vadd.f32 %v726, %v890
    %s895 = sld [smem:[#allocation9 + $0x69]]
    %v896 = vstv %s895
    %v897 = vmul.f32 %v896, %v527
    %v898 = vmul.f32 %v896, %v528
    %901 = vrot.lane.b32.xlu0 %v897, 126
    %v902 = vpop.permute.xlu0 %901
    %903 = vrot.lane.b32.xlu0 %v898, 126
    %v904 = vpop.permute.xlu0 %903
    %v907 = vadd.f32 %v739, %v902
    %v908 = vadd.f32 %v740, %v904
    %s909 = sld [smem:[#allocation9 + $0x6e]]
    %v910 = vstv %s909
    %v911 = vmul.f32 %v910, %v527
    %v912 = vmul.f32 %v910, %v528
    %915 = vrot.lane.b32.xlu0 %v911, 126
    %v916 = vpop.permute.xlu0 %915
    %917 = vrot.lane.b32.xlu0 %v912, 126
    %v918 = vpop.permute.xlu0 %917
    %v921 = vadd.f32 %v753, %v916
    %v922 = vadd.f32 %v754, %v918
    %s923 = sld [smem:[#allocation9 + $0x73]]
    %v924 = vstv %s923
    %v925 = vmul.f32 %v924, %v527
    %v926 = vmul.f32 %v924, %v528
    %929 = vrot.lane.b32.xlu0 %v925, 126
    %v930 = vpop.permute.xlu0 %929
    %931 = vrot.lane.b32.xlu0 %v926, 126
    %v932 = vpop.permute.xlu0 %931
    %v935 = vadd.f32 %v767, %v930
    %v936 = vadd.f32 %v768, %v932
    %v937 = vld [vmem:[%s0 + $0x2] sm:$0xff]
    %v938 = vld [vmem:[%s0 + $0xa] sm:$0xff]
    %s939 = sld [smem:[#allocation4 + $0xf0]]
    %v940 = vstv %s939
    %v941 = vmul.f32 %v940, %v937
    %v942 = vmul.f32 %v940, %v938
    %v943 = vadd.f32 %v781, %v941
    %v944 = vadd.f32 %v782, %v942
    %s945 = sld [smem:[#allocation4 + $0xf5]]
    %v946 = vstv %s945
    %v947 = vmul.f32 %v946, %v937
    %v948 = vmul.f32 %v946, %v938
    %v949 = vadd.f32 %v795, %v947
    %v950 = vadd.f32 %v796, %v948
    %s951 = sld [smem:[#allocation4 + $0xfa]]
    %v952 = vstv %s951
    %v953 = vmul.f32 %v952, %v937
    %v954 = vmul.f32 %v952, %v938
    %v955 = vadd.f32 %v809, %v953
    %v956 = vadd.f32 %v810, %v954
    %s957 = sld [smem:[#allocation4 + $0xff]]
    %v958 = vstv %s957
    %v959 = vmul.f32 %v958, %v937
    %v960 = vmul.f32 %v958, %v938
    %v961 = vadd.f32 %v823, %v959
    %v962 = vadd.f32 %v824, %v960
    %s963 = sld [smem:[#allocation4 + $0x104]]
    %v964 = vstv %s963
    %v965 = vmul.f32 %v964, %v937
    %v966 = vmul.f32 %v964, %v938
    %v967 = vadd.f32 %v837, %v965
    %v968 = vadd.f32 %v838, %v966
    %s969 = sld [smem:[#allocation4 + $0x109]]
    %v970 = vstv %s969
    %v971 = vmul.f32 %v970, %v937
    %v972 = vmul.f32 %v970, %v938
    %v973 = vadd.f32 %v851, %v971
    %v974 = vadd.f32 %v852, %v972
    %s975 = sld [smem:[#allocation4 + $0x10e]]
    %v976 = vstv %s975
    %v977 = vmul.f32 %v976, %v937
    %v978 = vmul.f32 %v976, %v938
    %v979 = vadd.f32 %v865, %v977
    %v980 = vadd.f32 %v866, %v978
    %s981 = sld [smem:[#allocation4 + $0x113]]
    %v982 = vstv %s981
    %v983 = vmul.f32 %v982, %v937
    %v984 = vmul.f32 %v982, %v938
    %v985 = vadd.f32 %v879, %v983
    %v986 = vadd.f32 %v880, %v984
    %s987 = sld [smem:[#allocation9 + $0x78]]
    %v988 = vstv %s987
    %v989 = vmul.f32 %v988, %v937
    %v990 = vmul.f32 %v988, %v938
    %v991 = vadd.f32 %v893, %v989
    %v992 = vadd.f32 %v894, %v990
    %s993 = sld [smem:[#allocation9 + $0x7d]]
    %v994 = vstv %s993
    %v995 = vmul.f32 %v994, %v937
    %v996 = vmul.f32 %v994, %v938
    %v997 = vadd.f32 %v907, %v995
    %v998 = vadd.f32 %v908, %v996
    %s999 = sld [smem:[#allocation9 + $0x82]]
    %v1000 = vstv %s999
    %v1001 = vmul.f32 %v1000, %v937
    %v1002 = vmul.f32 %v1000, %v938
    %v1003 = vadd.f32 %v921, %v1001
    %v1004 = vadd.f32 %v922, %v1002
    %s1005 = sld [smem:[#allocation9 + $0x87]]
    %v1006 = vstv %s1005
    %v1007 = vmul.f32 %v1006, %v937
    %v1008 = vmul.f32 %v1006, %v938
    %v1009 = vadd.f32 %v935, %v1007
    %v1010 = vadd.f32 %v936, %v1008
    %s1011 = sld [smem:[#allocation4 + $0x118]]
    %v1012 = vstv %s1011
    %v1013 = vmul.f32 %v1012, %v937
    %v1014 = vmul.f32 %v1012, %v938
    %1017 = vrot.lane.b32.xlu0 %v1013, 127
    %v1018 = vpop.permute.xlu0 %1017
    %1019 = vrot.lane.b32.xlu0 %v1014, 127
    %v1020 = vpop.permute.xlu0 %1019
    %v1023 = vadd.f32 %v943, %v1018
    %v1024 = vadd.f32 %v944, %v1020
    %s1025 = sld [smem:[#allocation4 + $0x11d]]
    %v1026 = vstv %s1025
    %v1027 = vmul.f32 %v1026, %v937
    %v1028 = vmul.f32 %v1026, %v938
    %1031 = vrot.lane.b32.xlu0 %v1027, 127
    %v1032 = vpop.permute.xlu0 %1031
    %1033 = vrot.lane.b32.xlu0 %v1028, 127
    %v1034 = vpop.permute.xlu0 %1033
    %v1037 = vadd.f32 %v949, %v1032
    %v1038 = vadd.f32 %v950, %v1034
    %s1039 = sld [smem:[#allocation4 + $0x122]]
    %v1040 = vstv %s1039
    %v1041 = vmul.f32 %v1040, %v937
    %v1042 = vmul.f32 %v1040, %v938
    %1045 = vrot.lane.b32.xlu0 %v1041, 127
    %v1046 = vpop.permute.xlu0 %1045
    %1047 = vrot.lane.b32.xlu0 %v1042, 127
    %v1048 = vpop.permute.xlu0 %1047
    %v1051 = vadd.f32 %v955, %v1046
    %v1052 = vadd.f32 %v956, %v1048
    %s1053 = sld [smem:[#allocation4 + $0x127]]
    %v1054 = vstv %s1053
    %v1055 = vmul.f32 %v1054, %v937
    %v1056 = vmul.f32 %v1054, %v938
    %1059 = vrot.lane.b32.xlu0 %v1055, 127
    %v1060 = vpop.permute.xlu0 %1059
    %1061 = vrot.lane.b32.xlu0 %v1056, 127
    %v1062 = vpop.permute.xlu0 %1061
    %v1065 = vadd.f32 %v961, %v1060
    %v1066 = vadd.f32 %v962, %v1062
    %s1067 = sld [smem:[#allocation4 + $0x12c]]
    %v1068 = vstv %s1067
    %v1069 = vmul.f32 %v1068, %v937
    %v1070 = vmul.f32 %v1068, %v938
    %1073 = vrot.lane.b32.xlu0 %v1069, 127
    %v1074 = vpop.permute.xlu0 %1073
    %1075 = vrot.lane.b32.xlu0 %v1070, 127
    %v1076 = vpop.permute.xlu0 %1075
    %v1079 = vadd.f32 %v967, %v1074
    %v1080 = vadd.f32 %v968, %v1076
    %s1081 = sld [smem:[#allocation4 + $0x131]]
    %v1082 = vstv %s1081
    %v1083 = vmul.f32 %v1082, %v937
    %v1084 = vmul.f32 %v1082, %v938
    %1087 = vrot.lane.b32.xlu0 %v1083, 127
    %v1088 = vpop.permute.xlu0 %1087
    %1089 = vrot.lane.b32.xlu0 %v1084, 127
    %v1090 = vpop.permute.xlu0 %1089
    %v1093 = vadd.f32 %v973, %v1088
    %v1094 = vadd.f32 %v974, %v1090
    %s1095 = sld [smem:[#allocation4 + $0x136]]
    %v1096 = vstv %s1095
    %v1097 = vmul.f32 %v1096, %v937
    %v1098 = vmul.f32 %v1096, %v938
    %1101 = vrot.lane.b32.xlu0 %v1097, 127
    %v1102 = vpop.permute.xlu0 %1101
    %1103 = vrot.lane.b32.xlu0 %v1098, 127
    %v1104 = vpop.permute.xlu0 %1103
    %v1107 = vadd.f32 %v979, %v1102
    %v1108 = vadd.f32 %v980, %v1104
    %s1109 = sld [smem:[#allocation4 + $0x13b]]
    %v1110 = vstv %s1109
    %v1111 = vmul.f32 %v1110, %v937
    %v1112 = vmul.f32 %v1110, %v938
    %1115 = vrot.lane.b32.xlu0 %v1111, 127
    %v1116 = vpop.permute.xlu0 %1115
    %1117 = vrot.lane.b32.xlu0 %v1112, 127
    %v1118 = vpop.permute.xlu0 %1117
    %v1121 = vadd.f32 %v985, %v1116
    %v1122 = vadd.f32 %v986, %v1118
    %s1123 = sld [smem:[#allocation9 + $0x8c]]
    %v1124 = vstv %s1123
    %v1125 = vmul.f32 %v1124, %v937
    %v1126 = vmul.f32 %v1124, %v938
    %1129 = vrot.lane.b32.xlu0 %v1125, 127
    %v1130 = vpop.permute.xlu0 %1129
    %1131 = vrot.lane.b32.xlu0 %v1126, 127
    %v1132 = vpop.permute.xlu0 %1131
    %v1135 = vadd.f32 %v991, %v1130
    %v1136 = vadd.f32 %v992, %v1132
    %s1137 = sld [smem:[#allocation9 + $0x91]]
    %v1138 = vstv %s1137
    %v1139 = vmul.f32 %v1138, %v937
    %v1140 = vmul.f32 %v1138, %v938
    %1143 = vrot.lane.b32.xlu0 %v1139, 127
    %v1144 = vpop.permute.xlu0 %1143
    %1145 = vrot.lane.b32.xlu0 %v1140, 127
    %v1146 = vpop.permute.xlu0 %1145
    %v1149 = vadd.f32 %v997, %v1144
    %v1150 = vadd.f32 %v998, %v1146
    %s1151 = sld [smem:[#allocation9 + $0x96]]
    %v1152 = vstv %s1151
    %v1153 = vmul.f32 %v1152, %v937
    %v1154 = vmul.f32 %v1152, %v938
    %1157 = vrot.lane.b32.xlu0 %v1153, 127
    %v1158 = vpop.permute.xlu0 %1157
    %1159 = vrot.lane.b32.xlu0 %v1154, 127
    %v1160 = vpop.permute.xlu0 %1159
    %v1163 = vadd.f32 %v1003, %v1158
    %v1164 = vadd.f32 %v1004, %v1160
    %s1165 = sld [smem:[#allocation9 + $0x9b]]
    %v1166 = vstv %s1165
    %v1167 = vmul.f32 %v1166, %v937
    %v1168 = vmul.f32 %v1166, %v938
    %1171 = vrot.lane.b32.xlu0 %v1167, 127
    %v1172 = vpop.permute.xlu0 %1171
    %1173 = vrot.lane.b32.xlu0 %v1168, 127
    %v1174 = vpop.permute.xlu0 %1173
    %v1177 = vadd.f32 %v1009, %v1172
    %v1178 = vadd.f32 %v1010, %v1174
    %s1179 = sld [smem:[#allocation4 + $0x140]]
    %v1180 = vstv %s1179
    %v1181 = vmul.f32 %v1180, %v937
    %v1182 = vmul.f32 %v1180, %v938
    %1185 = vrot.lane.b32.xlu0 %v1181, 126
    %v1186 = vpop.permute.xlu0 %1185
    %1187 = vrot.lane.b32.xlu0 %v1182, 126
    %v1188 = vpop.permute.xlu0 %1187
    %v1191 = vadd.f32 %v1023, %v1186
    %v1192 = vadd.f32 %v1024, %v1188
    %s1193 = sld [smem:[#allocation4 + $0x145]]
    %v1194 = vstv %s1193
    %v1195 = vmul.f32 %v1194, %v937
    %v1196 = vmul.f32 %v1194, %v938
    %1199 = vrot.lane.b32.xlu0 %v1195, 126
    %v1200 = vpop.permute.xlu0 %1199
    %1201 = vrot.lane.b32.xlu0 %v1196, 126
    %v1202 = vpop.permute.xlu0 %1201
    %v1205 = vadd.f32 %v1037, %v1200
    %v1206 = vadd.f32 %v1038, %v1202
    %s1207 = sld [smem:[#allocation4 + $0x14a]]
    %v1208 = vstv %s1207
    %v1209 = vmul.f32 %v1208, %v937
    %v1210 = vmul.f32 %v1208, %v938
    %1213 = vrot.lane.b32.xlu0 %v1209, 126
    %v1214 = vpop.permute.xlu0 %1213
    %1215 = vrot.lane.b32.xlu0 %v1210, 126
    %v1216 = vpop.permute.xlu0 %1215
    %v1219 = vadd.f32 %v1051, %v1214
    %v1220 = vadd.f32 %v1052, %v1216
    %s1221 = sld [smem:[#allocation4 + $0x14f]]
    %v1222 = vstv %s1221
    %v1223 = vmul.f32 %v1222, %v937
    %v1224 = vmul.f32 %v1222, %v938
    %1227 = vrot.lane.b32.xlu0 %v1223, 126
    %v1228 = vpop.permute.xlu0 %1227
    %1229 = vrot.lane.b32.xlu0 %v1224, 126
    %v1230 = vpop.permute.xlu0 %1229
    %v1233 = vadd.f32 %v1065, %v1228
    %v1234 = vadd.f32 %v1066, %v1230
    %s1235 = sld [smem:[#allocation4 + $0x154]]
    %v1236 = vstv %s1235
    %v1237 = vmul.f32 %v1236, %v937
    %v1238 = vmul.f32 %v1236, %v938
    %1241 = vrot.lane.b32.xlu0 %v1237, 126
    %v1242 = vpop.permute.xlu0 %1241
    %1243 = vrot.lane.b32.xlu0 %v1238, 126
    %v1244 = vpop.permute.xlu0 %1243
    %v1247 = vadd.f32 %v1079, %v1242
    %v1248 = vadd.f32 %v1080, %v1244
    %s1249 = sld [smem:[#allocation4 + $0x159]]
    %v1250 = vstv %s1249
    %v1251 = vmul.f32 %v1250, %v937
    %v1252 = vmul.f32 %v1250, %v938
    %1255 = vrot.lane.b32.xlu0 %v1251, 126
    %v1256 = vpop.permute.xlu0 %1255
    %1257 = vrot.lane.b32.xlu0 %v1252, 126
    %v1258 = vpop.permute.xlu0 %1257
    %v1261 = vadd.f32 %v1093, %v1256
    %v1262 = vadd.f32 %v1094, %v1258
    %s1263 = sld [smem:[#allocation4 + $0x15e]]
    %v1264 = vstv %s1263
    %v1265 = vmul.f32 %v1264, %v937
    %v1266 = vmul.f32 %v1264, %v938
    %1269 = vrot.lane.b32.xlu0 %v1265, 126
    %v1270 = vpop.permute.xlu0 %1269
    %1271 = vrot.lane.b32.xlu0 %v1266, 126
    %v1272 = vpop.permute.xlu0 %1271
    %v1275 = vadd.f32 %v1107, %v1270
    %v1276 = vadd.f32 %v1108, %v1272
    %s1277 = sld [smem:[#allocation4 + $0x163]]
    %v1278 = vstv %s1277
    %v1279 = vmul.f32 %v1278, %v937
    %v1280 = vmul.f32 %v1278, %v938
    %1283 = vrot.lane.b32.xlu0 %v1279, 126
    %v1284 = vpop.permute.xlu0 %1283
    %1285 = vrot.lane.b32.xlu0 %v1280, 126
    %v1286 = vpop.permute.xlu0 %1285
    %v1289 = vadd.f32 %v1121, %v1284
    %v1290 = vadd.f32 %v1122, %v1286
    %s1291 = sld [smem:[#allocation9 + $0xa0]]
    %v1292 = vstv %s1291
    %v1293 = vmul.f32 %v1292, %v937
    %v1294 = vmul.f32 %v1292, %v938
    %1297 = vrot.lane.b32.xlu0 %v1293, 126
    %v1298 = vpop.permute.xlu0 %1297
    %1299 = vrot.lane.b32.xlu0 %v1294, 126
    %v1300 = vpop.permute.xlu0 %1299
    %v1303 = vadd.f32 %v1135, %v1298
    %v1304 = vadd.f32 %v1136, %v1300
    %s1305 = sld [smem:[#allocation9 + $0xa5]]
    %v1306 = vstv %s1305
    %v1307 = vmul.f32 %v1306, %v937
    %v1308 = vmul.f32 %v1306, %v938
    %1311 = vrot.lane.b32.xlu0 %v1307, 126
    %v1312 = vpop.permute.xlu0 %1311
    %1313 = vrot.lane.b32.xlu0 %v1308, 126
    %v1314 = vpop.permute.xlu0 %1313
    %v1317 = vadd.f32 %v1149, %v1312
    %v1318 = vadd.f32 %v1150, %v1314
    %s1319 = sld [smem:[#allocation9 + $0xaa]]
    %v1320 = vstv %s1319
    %v1321 = vmul.f32 %v1320, %v937
    %v1322 = vmul.f32 %v1320, %v938
    %1325 = vrot.lane.b32.xlu0 %v1321, 126
    %v1326 = vpop.permute.xlu0 %1325
    %1327 = vrot.lane.b32.xlu0 %v1322, 126
    %v1328 = vpop.permute.xlu0 %1327
    %v1331 = vadd.f32 %v1163, %v1326
    %v1332 = vadd.f32 %v1164, %v1328
    %s1333 = sld [smem:[#allocation9 + $0xaf]]
    %v1334 = vstv %s1333
    %v1335 = vmul.f32 %v1334, %v937
    %v1336 = vmul.f32 %v1334, %v938
    %1339 = vrot.lane.b32.xlu0 %v1335, 126
    %v1340 = vpop.permute.xlu0 %1339
    %1341 = vrot.lane.b32.xlu0 %v1336, 126
    %v1342 = vpop.permute.xlu0 %1341
    %v1345 = vadd.f32 %v1177, %v1340
    %v1346 = vadd.f32 %v1178, %v1342
    %v1347 = vld [vmem:[%s1] sm:$0xff]
    %v1348 = vld [vmem:[%s1 + $0x8] sm:$0xff]
    %s1349 = sld [smem:[#allocation4 + $0x1]]
    %v1350 = vstv %s1349
    %v1351 = vmul.f32 %v1350, %v1347
    %v1352 = vmul.f32 %v1350, %v1348
    %v1353 = vadd.f32 %v1191, %v1351
    %v1354 = vadd.f32 %v1192, %v1352
    %s1355 = sld [smem:[#allocation4 + $0x6]]
    %v1356 = vstv %s1355
    %v1357 = vmul.f32 %v1356, %v1347
    %v1358 = vmul.f32 %v1356, %v1348
    %v1359 = vadd.f32 %v1205, %v1357
    %v1360 = vadd.f32 %v1206, %v1358
    %s1361 = sld [smem:[#allocation4 + $0xb]]
    %v1362 = vstv %s1361
    %v1363 = vmul.f32 %v1362, %v1347
    %v1364 = vmul.f32 %v1362, %v1348
    %v1365 = vadd.f32 %v1219, %v1363
    %v1366 = vadd.f32 %v1220, %v1364
    %s1367 = sld [smem:[#allocation4 + $0x10]]
    %v1368 = vstv %s1367
    %v1369 = vmul.f32 %v1368, %v1347
    %v1370 = vmul.f32 %v1368, %v1348
    %v1371 = vadd.f32 %v1233, %v1369
    %v1372 = vadd.f32 %v1234, %v1370
    %s1373 = sld [smem:[#allocation4 + $0x15]]
    %v1374 = vstv %s1373
    %v1375 = vmul.f32 %v1374, %v1347
    %v1376 = vmul.f32 %v1374, %v1348
    %v1377 = vadd.f32 %v1247, %v1375
    %v1378 = vadd.f32 %v1248, %v1376
    %s1379 = sld [smem:[#allocation4 + $0x1a]]
    %v1380 = vstv %s1379
    %v1381 = vmul.f32 %v1380, %v1347
    %v1382 = vmul.f32 %v1380, %v1348
    %v1383 = vadd.f32 %v1261, %v1381
    %v1384 = vadd.f32 %v1262, %v1382
    %s1385 = sld [smem:[#allocation4 + $0x1f]]
    %v1386 = vstv %s1385
    %v1387 = vmul.f32 %v1386, %v1347
    %v1388 = vmul.f32 %v1386, %v1348
    %v1389 = vadd.f32 %v1275, %v1387
    %v1390 = vadd.f32 %v1276, %v1388
    %s1391 = sld [smem:[#allocation4 + $0x24]]
    %v1392 = vstv %s1391
    %v1393 = vmul.f32 %v1392, %v1347
    %v1394 = vmul.f32 %v1392, %v1348
    %v1395 = vadd.f32 %v1289, %v1393
    %v1396 = vadd.f32 %v1290, %v1394
    %s1397 = sld [smem:[#allocation4 + $0x29]]
    %v1398 = vstv %s1397
    %v1399 = vmul.f32 %v1398, %v1347
    %v1400 = vmul.f32 %v1398, %v1348
    %1403 = vrot.lane.b32.xlu0 %v1399, 127
    %v1404 = vpop.permute.xlu0 %1403
    %1405 = vrot.lane.b32.xlu0 %v1400, 127
    %v1406 = vpop.permute.xlu0 %1405
    %v1409 = vadd.f32 %v1353, %v1404
    %v1410 = vadd.f32 %v1354, %v1406
    %s1411 = sld [smem:[#allocation4 + $0x2e]]
    %v1412 = vstv %s1411
    %v1413 = vmul.f32 %v1412, %v1347
    %v1414 = vmul.f32 %v1412, %v1348
    %1417 = vrot.lane.b32.xlu0 %v1413, 127
    %v1418 = vpop.permute.xlu0 %1417
    %1419 = vrot.lane.b32.xlu0 %v1414, 127
    %v1420 = vpop.permute.xlu0 %1419
    %v1423 = vadd.f32 %v1359, %v1418
    %v1424 = vadd.f32 %v1360, %v1420
    %s1425 = sld [smem:[#allocation4 + $0x33]]
    %v1426 = vstv %s1425
    %v1427 = vmul.f32 %v1426, %v1347
    %v1428 = vmul.f32 %v1426, %v1348
    %1431 = vrot.lane.b32.xlu0 %v1427, 127
    %v1432 = vpop.permute.xlu0 %1431
    %1433 = vrot.lane.b32.xlu0 %v1428, 127
    %v1434 = vpop.permute.xlu0 %1433
    %v1437 = vadd.f32 %v1365, %v1432
    %v1438 = vadd.f32 %v1366, %v1434
    %s1439 = sld [smem:[#allocation4 + $0x38]]
    %v1440 = vstv %s1439
    %v1441 = vmul.f32 %v1440, %v1347
    %v1442 = vmul.f32 %v1440, %v1348
    %1445 = vrot.lane.b32.xlu0 %v1441, 127
    %v1446 = vpop.permute.xlu0 %1445
    %1447 = vrot.lane.b32.xlu0 %v1442, 127
    %v1448 = vpop.permute.xlu0 %1447
    %v1451 = vadd.f32 %v1371, %v1446
    %v1452 = vadd.f32 %v1372, %v1448
    %s1453 = sld [smem:[#allocation4 + $0x3d]]
    %v1454 = vstv %s1453
    %v1455 = vmul.f32 %v1454, %v1347
    %v1456 = vmul.f32 %v1454, %v1348
    %1459 = vrot.lane.b32.xlu0 %v1455, 127
    %v1460 = vpop.permute.xlu0 %1459
    %1461 = vrot.lane.b32.xlu0 %v1456, 127
    %v1462 = vpop.permute.xlu0 %1461
    %v1465 = vadd.f32 %v1377, %v1460
    %v1466 = vadd.f32 %v1378, %v1462
    %s1467 = sld [smem:[#allocation4 + $0x42]]
    %v1468 = vstv %s1467
    %v1469 = vmul.f32 %v1468, %v1347
    %v1470 = vmul.f32 %v1468, %v1348
    %1473 = vrot.lane.b32.xlu0 %v1469, 127
    %v1474 = vpop.permute.xlu0 %1473
    %1475 = vrot.lane.b32.xlu0 %v1470, 127
    %v1476 = vpop.permute.xlu0 %1475
    %v1479 = vadd.f32 %v1383, %v1474
    %v1480 = vadd.f32 %v1384, %v1476
    %s1481 = sld [smem:[#allocation4 + $0x47]]
    %v1482 = vstv %s1481
    %v1483 = vmul.f32 %v1482, %v1347
    %v1484 = vmul.f32 %v1482, %v1348
    %1487 = vrot.lane.b32.xlu0 %v1483, 127
    %v1488 = vpop.permute.xlu0 %1487
    %1489 = vrot.lane.b32.xlu0 %v1484, 127
    %v1490 = vpop.permute.xlu0 %1489
    %v1493 = vadd.f32 %v1389, %v1488
    %v1494 = vadd.f32 %v1390, %v1490
    %s1495 = sld [smem:[#allocation4 + $0x4c]]
    %v1496 = vstv %s1495
    %v1497 = vmul.f32 %v1496, %v1347
    %v1498 = vmul.f32 %v1496, %v1348
    %1501 = vrot.lane.b32.xlu0 %v1497, 127
    %v1502 = vpop.permute.xlu0 %1501
    %1503 = vrot.lane.b32.xlu0 %v1498, 127
    %v1504 = vpop.permute.xlu0 %1503
    %v1507 = vadd.f32 %v1395, %v1502
    %v1508 = vadd.f32 %v1396, %v1504
    %s1509 = sld [smem:[#allocation4 + $0x51]]
    %v1510 = vstv %s1509
    %v1511 = vmul.f32 %v1510, %v1347
    %v1512 = vmul.f32 %v1510, %v1348
    %1515 = vrot.lane.b32.xlu0 %v1511, 126
    %v1516 = vpop.permute.xlu0 %1515
    %1517 = vrot.lane.b32.xlu0 %v1512, 126
    %v1518 = vpop.permute.xlu0 %1517
    %v1521 = vadd.f32 %v1409, %v1516
    %v1522 = vadd.f32 %v1410, %v1518
    %s1523 = sld [smem:[#allocation4 + $0x56]]
    %v1524 = vstv %s1523
    %v1525 = vmul.f32 %v1524, %v1347
    %v1526 = vmul.f32 %v1524, %v1348
    %1529 = vrot.lane.b32.xlu0 %v1525, 126
    %v1530 = vpop.permute.xlu0 %1529
    %1531 = vrot.lane.b32.xlu0 %v1526, 126
    %v1532 = vpop.permute.xlu0 %1531
    %v1535 = vadd.f32 %v1423, %v1530
    %v1536 = vadd.f32 %v1424, %v1532
    %s1537 = sld [smem:[#allocation4 + $0x5b]]
    %v1538 = vstv %s1537
    %v1539 = vmul.f32 %v1538, %v1347
    %v1540 = vmul.f32 %v1538, %v1348
    %1543 = vrot.lane.b32.xlu0 %v1539, 126
    %v1544 = vpop.permute.xlu0 %1543
    %1545 = vrot.lane.b32.xlu0 %v1540, 126
    %v1546 = vpop.permute.xlu0 %1545
    %v1549 = vadd.f32 %v1437, %v1544
    %v1550 = vadd.f32 %v1438, %v1546
    %s1551 = sld [smem:[#allocation4 + $0x60]]
    %v1552 = vstv %s1551
    %v1553 = vmul.f32 %v1552, %v1347
    %v1554 = vmul.f32 %v1552, %v1348
    %1557 = vrot.lane.b32.xlu0 %v1553, 126
    %v1558 = vpop.permute.xlu0 %1557
    %1559 = vrot.lane.b32.xlu0 %v1554, 126
    %v1560 = vpop.permute.xlu0 %1559
    %v1563 = vadd.f32 %v1451, %v1558
    %v1564 = vadd.f32 %v1452, %v1560
    %s1565 = sld [smem:[#allocation4 + $0x65]]
    %v1566 = vstv %s1565
    %v1567 = vmul.f32 %v1566, %v1347
    %v1568 = vmul.f32 %v1566, %v1348
    %1571 = vrot.lane.b32.xlu0 %v1567, 126
    %v1572 = vpop.permute.xlu0 %1571
    %1573 = vrot.lane.b32.xlu0 %v1568, 126
    %v1574 = vpop.permute.xlu0 %1573
    %v1577 = vadd.f32 %v1465, %v1572
    %v1578 = vadd.f32 %v1466, %v1574
    %s1579 = sld [smem:[#allocation4 + $0x6a]]
    %v1580 = vstv %s1579
    %v1581 = vmul.f32 %v1580, %v1347
    %v1582 = vmul.f32 %v1580, %v1348
    %1585 = vrot.lane.b32.xlu0 %v1581, 126
    %v1586 = vpop.permute.xlu0 %1585
    %1587 = vrot.lane.b32.xlu0 %v1582, 126
    %v1588 = vpop.permute.xlu0 %1587
    %v1591 = vadd.f32 %v1479, %v1586
    %v1592 = vadd.f32 %v1480, %v1588
    %s1593 = sld [smem:[#allocation4 + $0x6f]]
    %v1594 = vstv %s1593
    %v1595 = vmul.f32 %v1594, %v1347
    %v1596 = vmul.f32 %v1594, %v1348
    %1599 = vrot.lane.b32.xlu0 %v1595, 126
    %v1600 = vpop.permute.xlu0 %1599
    %1601 = vrot.lane.b32.xlu0 %v1596, 126
    %v1602 = vpop.permute.xlu0 %1601
    %v1605 = vadd.f32 %v1493, %v1600
    %v1606 = vadd.f32 %v1494, %v1602
    %s1607 = sld [smem:[#allocation4 + $0x74]]
    %v1608 = vstv %s1607
    %v1609 = vmul.f32 %v1608, %v1347
    %v1610 = vmul.f32 %v1608, %v1348
    %1613 = vrot.lane.b32.xlu0 %v1609, 126
    %v1614 = vpop.permute.xlu0 %1613
    %1615 = vrot.lane.b32.xlu0 %v1610, 126
    %v1616 = vpop.permute.xlu0 %1615
    %v1619 = vadd.f32 %v1507, %v1614
    %v1620 = vadd.f32 %v1508, %v1616
    %v1621 = vld [vmem:[%s1 + $0x1] sm:$0xff]
    %v1622 = vld [vmem:[%s1 + $0x9] sm:$0xff]
    %s1623 = sld [smem:[#allocation4 + $0x79]]
    %v1624 = vstv %s1623
    %v1625 = vmul.f32 %v1624, %v1621
    %v1626 = vmul.f32 %v1624, %v1622
    %v1627 = vadd.f32 %v1521, %v1625
    %v1628 = vadd.f32 %v1522, %v1626
    %s1629 = sld [smem:[#allocation4 + $0x7e]]
    %v1630 = vstv %s1629
    %v1631 = vmul.f32 %v1630, %v1621
    %v1632 = vmul.f32 %v1630, %v1622
    %v1633 = vadd.f32 %v1535, %v1631
    %v1634 = vadd.f32 %v1536, %v1632
    %s1635 = sld [smem:[#allocation4 + $0x83]]
    %v1636 = vstv %s1635
    %v1637 = vmul.f32 %v1636, %v1621
    %v1638 = vmul.f32 %v1636, %v1622
    %v1639 = vadd.f32 %v1549, %v1637
    %v1640 = vadd.f32 %v1550, %v1638
    %s1641 = sld [smem:[#allocation4 + $0x88]]
    %v1642 = vstv %s1641
    %v1643 = vmul.f32 %v1642, %v1621
    %v1644 = vmul.f32 %v1642, %v1622
    %v1645 = vadd.f32 %v1563, %v1643
    %v1646 = vadd.f32 %v1564, %v1644
    %s1647 = sld [smem:[#allocation4 + $0x8d]]
    %v1648 = vstv %s1647
    %v1649 = vmul.f32 %v1648, %v1621
    %v1650 = vmul.f32 %v1648, %v1622
    %v1651 = vadd.f32 %v1577, %v1649
    %v1652 = vadd.f32 %v1578, %v1650
    %s1653 = sld [smem:[#allocation4 + $0x92]]
    %v1654 = vstv %s1653
    %v1655 = vmul.f32 %v1654, %v1621
    %v1656 = vmul.f32 %v1654, %v1622
    %v1657 = vadd.f32 %v1591, %v1655
    %v1658 = vadd.f32 %v1592, %v1656
    %s1659 = sld [smem:[#allocation4 + $0x97]]
    %v1660 = vstv %s1659
    %v1661 = vmul.f32 %v1660, %v1621
    %v1662 = vmul.f32 %v1660, %v1622
    %v1663 = vadd.f32 %v1605, %v1661
    %v1664 = vadd.f32 %v1606, %v1662
    %s1665 = sld [smem:[#allocation4 + $0x9c]]
    %v1666 = vstv %s1665
    %v1667 = vmul.f32 %v1666, %v1621
    %v1668 = vmul.f32 %v1666, %v1622
    %v1669 = vadd.f32 %v1619, %v1667
    %v1670 = vadd.f32 %v1620, %v1668
    %s1671 = sld [smem:[#allocation4 + $0xa1]]
    %v1672 = vstv %s1671
    %v1673 = vmul.f32 %v1672, %v1621
    %v1674 = vmul.f32 %v1672, %v1622
    %1677 = vrot.lane.b32.xlu0 %v1673, 127
    %v1678 = vpop.permute.xlu0 %1677
    %1679 = vrot.lane.b32.xlu0 %v1674, 127
    %v1680 = vpop.permute.xlu0 %1679
    %v1683 = vadd.f32 %v1627, %v1678
    %v1684 = vadd.f32 %v1628, %v1680
    %s1685 = sld [smem:[#allocation4 + $0xa6]]
    %v1686 = vstv %s1685
    %v1687 = vmul.f32 %v1686, %v1621
    %v1688 = vmul.f32 %v1686, %v1622
    %1691 = vrot.lane.b32.xlu0 %v1687, 127
    %v1692 = vpop.permute.xlu0 %1691
    %1693 = vrot.lane.b32.xlu0 %v1688, 127
    %v1694 = vpop.permute.xlu0 %1693
    %v1697 = vadd.f32 %v1633, %v1692
    %v1698 = vadd.f32 %v1634, %v1694
    %s1699 = sld [smem:[#allocation4 + $0xab]]
    %v1700 = vstv %s1699
    %v1701 = vmul.f32 %v1700, %v1621
    %v1702 = vmul.f32 %v1700, %v1622
    %1705 = vrot.lane.b32.xlu0 %v1701, 127
    %v1706 = vpop.permute.xlu0 %1705
    %1707 = vrot.lane.b32.xlu0 %v1702, 127
    %v1708 = vpop.permute.xlu0 %1707
    %v1711 = vadd.f32 %v1639, %v1706
    %v1712 = vadd.f32 %v1640, %v1708
    %s1713 = sld [smem:[#allocation4 + $0xb0]]
    %v1714 = vstv %s1713
    %v1715 = vmul.f32 %v1714, %v1621
    %v1716 = vmul.f32 %v1714, %v1622
    %1719 = vrot.lane.b32.xlu0 %v1715, 127
    %v1720 = vpop.permute.xlu0 %1719
    %1721 = vrot.lane.b32.xlu0 %v1716, 127
    %v1722 = vpop.permute.xlu0 %1721
    %v1725 = vadd.f32 %v1645, %v1720
    %v1726 = vadd.f32 %v1646, %v1722
    %s1727 = sld [smem:[#allocation4 + $0xb5]]
    %v1728 = vstv %s1727
    %v1729 = vmul.f32 %v1728, %v1621
    %v1730 = vmul.f32 %v1728, %v1622
    %1733 = vrot.lane.b32.xlu0 %v1729, 127
    %v1734 = vpop.permute.xlu0 %1733
    %1735 = vrot.lane.b32.xlu0 %v1730, 127
    %v1736 = vpop.permute.xlu0 %1735
    %v1739 = vadd.f32 %v1651, %v1734
    %v1740 = vadd.f32 %v1652, %v1736
    %s1741 = sld [smem:[#allocation4 + $0xba]]
    %v1742 = vstv %s1741
    %v1743 = vmul.f32 %v1742, %v1621
    %v1744 = vmul.f32 %v1742, %v1622
    %1747 = vrot.lane.b32.xlu0 %v1743, 127
    %v1748 = vpop.permute.xlu0 %1747
    %1749 = vrot.lane.b32.xlu0 %v1744, 127
    %v1750 = vpop.permute.xlu0 %1749
    %v1753 = vadd.f32 %v1657, %v1748
    %v1754 = vadd.f32 %v1658, %v1750
    %s1755 = sld [smem:[#allocation4 + $0xbf]]
    %v1756 = vstv %s1755
    %v1757 = vmul.f32 %v1756, %v1621
    %v1758 = vmul.f32 %v1756, %v1622
    %1761 = vrot.lane.b32.xlu0 %v1757, 127
    %v1762 = vpop.permute.xlu0 %1761
    %1763 = vrot.lane.b32.xlu0 %v1758, 127
    %v1764 = vpop.permute.xlu0 %1763
    %v1767 = vadd.f32 %v1663, %v1762
    %v1768 = vadd.f32 %v1664, %v1764
    %s1769 = sld [smem:[#allocation4 + $0xc4]]
    %v1770 = vstv %s1769
    %v1771 = vmul.f32 %v1770, %v1621
    %v1772 = vmul.f32 %v1770, %v1622
    %1775 = vrot.lane.b32.xlu0 %v1771, 127
    %v1776 = vpop.permute.xlu0 %1775
    %1777 = vrot.lane.b32.xlu0 %v1772, 127
    %v1778 = vpop.permute.xlu0 %1777
    %v1781 = vadd.f32 %v1669, %v1776
    %v1782 = vadd.f32 %v1670, %v1778
    %s1783 = sld [smem:[#allocation4 + $0xc9]]
    %v1784 = vstv %s1783
    %v1785 = vmul.f32 %v1784, %v1621
    %v1786 = vmul.f32 %v1784, %v1622
    %1789 = vrot.lane.b32.xlu0 %v1785, 126
    %v1790 = vpop.permute.xlu0 %1789
    %1791 = vrot.lane.b32.xlu0 %v1786, 126
    %v1792 = vpop.permute.xlu0 %1791
    %v1795 = vadd.f32 %v1683, %v1790
    %v1796 = vadd.f32 %v1684, %v1792
    %s1797 = sld [smem:[#allocation4 + $0xce]]
    %v1798 = vstv %s1797
    %v1799 = vmul.f32 %v1798, %v1621
    %v1800 = vmul.f32 %v1798, %v1622
    %1803 = vrot.lane.b32.xlu0 %v1799, 126
    %v1804 = vpop.permute.xlu0 %1803
    %1805 = vrot.lane.b32.xlu0 %v1800, 126
    %v1806 = vpop.permute.xlu0 %1805
    %v1809 = vadd.f32 %v1697, %v1804
    %v1810 = vadd.f32 %v1698, %v1806
    %s1811 = sld [smem:[#allocation4 + $0xd3]]
    %v1812 = vstv %s1811
    %v1813 = vmul.f32 %v1812, %v1621
    %v1814 = vmul.f32 %v1812, %v1622
    %1817 = vrot.lane.b32.xlu0 %v1813, 126
    %v1818 = vpop.permute.xlu0 %1817
    %1819 = vrot.lane.b32.xlu0 %v1814, 126
    %v1820 = vpop.permute.xlu0 %1819
    %v1823 = vadd.f32 %v1711, %v1818
    %v1824 = vadd.f32 %v1712, %v1820
    %s1825 = sld [smem:[#allocation4 + $0xd8]]
    %v1826 = vstv %s1825
    %v1827 = vmul.f32 %v1826, %v1621
    %v1828 = vmul.f32 %v1826, %v1622
    %1831 = vrot.lane.b32.xlu0 %v1827, 126
    %v1832 = vpop.permute.xlu0 %1831
    %1833 = vrot.lane.b32.xlu0 %v1828, 126
    %v1834 = vpop.permute.xlu0 %1833
    %v1837 = vadd.f32 %v1725, %v1832
    %v1838 = vadd.f32 %v1726, %v1834
    %s1839 = sld [smem:[#allocation4 + $0xdd]]
    %v1840 = vstv %s1839
    %v1841 = vmul.f32 %v1840, %v1621
    %v1842 = vmul.f32 %v1840, %v1622
    %1845 = vrot.lane.b32.xlu0 %v1841, 126
    %v1846 = vpop.permute.xlu0 %1845
    %1847 = vrot.lane.b32.xlu0 %v1842, 126
    %v1848 = vpop.permute.xlu0 %1847
    %v1851 = vadd.f32 %v1739, %v1846
    %v1852 = vadd.f32 %v1740, %v1848
    %s1853 = sld [smem:[#allocation4 + $0xe2]]
    %v1854 = vstv %s1853
    %v1855 = vmul.f32 %v1854, %v1621
    %v1856 = vmul.f32 %v1854, %v1622
    %1859 = vrot.lane.b32.xlu0 %v1855, 126
    %v1860 = vpop.permute.xlu0 %1859
    %1861 = vrot.lane.b32.xlu0 %v1856, 126
    %v1862 = vpop.permute.xlu0 %1861
    %v1865 = vadd.f32 %v1753, %v1860
    %v1866 = vadd.f32 %v1754, %v1862
    %s1867 = sld [smem:[#allocation4 + $0xe7]]
    %v1868 = vstv %s1867
    %v1869 = vmul.f32 %v1868, %v1621
    %v1870 = vmul.f32 %v1868, %v1622
    %1873 = vrot.lane.b32.xlu0 %v1869, 126
    %v1874 = vpop.permute.xlu0 %1873
    %1875 = vrot.lane.b32.xlu0 %v1870, 126
    %v1876 = vpop.permute.xlu0 %1875
    %v1879 = vadd.f32 %v1767, %v1874
    %v1880 = vadd.f32 %v1768, %v1876
    %s1881 = sld [smem:[#allocation4 + $0xec]]
    %v1882 = vstv %s1881
    %v1883 = vmul.f32 %v1882, %v1621
    %v1884 = vmul.f32 %v1882, %v1622
    %1887 = vrot.lane.b32.xlu0 %v1883, 126
    %v1888 = vpop.permute.xlu0 %1887
    %1889 = vrot.lane.b32.xlu0 %v1884, 126
    %v1890 = vpop.permute.xlu0 %1889
    %v1893 = vadd.f32 %v1781, %v1888
    %v1894 = vadd.f32 %v1782, %v1890
    %v1895 = vld [vmem:[%s1 + $0x2] sm:$0xff]
    %v1896 = vld [vmem:[%s1 + $0xa] sm:$0xff]
    %s1897 = sld [smem:[#allocation4 + $0xf1]]
    %v1898 = vstv %s1897
    %v1899 = vmul.f32 %v1898, %v1895
    %v1900 = vmul.f32 %v1898, %v1896
    %v1901 = vadd.f32 %v1795, %v1899
    %v1902 = vadd.f32 %v1796, %v1900
    %s1903 = sld [smem:[#allocation4 + $0xf6]]
    %v1904 = vstv %s1903
    %v1905 = vmul.f32 %v1904, %v1895
    %v1906 = vmul.f32 %v1904, %v1896
    %v1907 = vadd.f32 %v1809, %v1905
    %v1908 = vadd.f32 %v1810, %v1906
    %s1909 = sld [smem:[#allocation4 + $0xfb]]
    %v1910 = vstv %s1909
    %v1911 = vmul.f32 %v1910, %v1895
    %v1912 = vmul.f32 %v1910, %v1896
    %v1913 = vadd.f32 %v1823, %v1911
    %v1914 = vadd.f32 %v1824, %v1912
    %s1915 = sld [smem:[#allocation4 + $0x100]]
    %v1916 = vstv %s1915
    %v1917 = vmul.f32 %v1916, %v1895
    %v1918 = vmul.f32 %v1916, %v1896
    %v1919 = vadd.f32 %v1837, %v1917
    %v1920 = vadd.f32 %v1838, %v1918
    %s1921 = sld [smem:[#allocation4 + $0x105]]
    %v1922 = vstv %s1921
    %v1923 = vmul.f32 %v1922, %v1895
    %v1924 = vmul.f32 %v1922, %v1896
    %v1925 = vadd.f32 %v1851, %v1923
    %v1926 = vadd.f32 %v1852, %v1924
    %s1927 = sld [smem:[#allocation4 + $0x10a]]
    %v1928 = vstv %s1927
    %v1929 = vmul.f32 %v1928, %v1895
    %v1930 = vmul.f32 %v1928, %v1896
    %v1931 = vadd.f32 %v1865, %v1929
    %v1932 = vadd.f32 %v1866, %v1930
    %s1933 = sld [smem:[#allocation4 + $0x10f]]
    %v1934 = vstv %s1933
    %v1935 = vmul.f32 %v1934, %v1895
    %v1936 = vmul.f32 %v1934, %v1896
    %v1937 = vadd.f32 %v1879, %v1935
    %v1938 = vadd.f32 %v1880, %v1936
    %s1939 = sld [smem:[#allocation4 + $0x114]]
    %v1940 = vstv %s1939
    %v1941 = vmul.f32 %v1940, %v1895
    %v1942 = vmul.f32 %v1940, %v1896
    %v1943 = vadd.f32 %v1893, %v1941
    %v1944 = vadd.f32 %v1894, %v1942
    %s1945 = sld [smem:[#allocation4 + $0x119]]
    %v1946 = vstv %s1945
    %v1947 = vmul.f32 %v1946, %v1895
    %v1948 = vmul.f32 %v1946, %v1896
    %1951 = vrot.lane.b32.xlu0 %v1947, 127
    %v1952 = vpop.permute.xlu0 %1951
    %1953 = vrot.lane.b32.xlu0 %v1948, 127
    %v1954 = vpop.permute.xlu0 %1953
    %v1957 = vadd.f32 %v1901, %v1952
    %v1958 = vadd.f32 %v1902, %v1954
    %s1959 = sld [smem:[#allocation4 + $0x11e]]
    %v1960 = vstv %s1959
    %v1961 = vmul.f32 %v1960, %v1895
    %v1962 = vmul.f32 %v1960, %v1896
    %1965 = vrot.lane.b32.xlu0 %v1961, 127
    %v1966 = vpop.permute.xlu0 %1965
    %1967 = vrot.lane.b32.xlu0 %v1962, 127
    %v1968 = vpop.permute.xlu0 %1967
    %v1971 = vadd.f32 %v1907, %v1966
    %v1972 = vadd.f32 %v1908, %v1968
    %s1973 = sld [smem:[#allocation4 + $0x123]]
    %v1974 = vstv %s1973
    %v1975 = vmul.f32 %v1974, %v1895
    %v1976 = vmul.f32 %v1974, %v1896
    %1979 = vrot.lane.b32.xlu0 %v1975, 127
    %v1980 = vpop.permute.xlu0 %1979
    %1981 = vrot.lane.b32.xlu0 %v1976, 127
    %v1982 = vpop.permute.xlu0 %1981
    %v1985 = vadd.f32 %v1913, %v1980
    %v1986 = vadd.f32 %v1914, %v1982
    %s1987 = sld [smem:[#allocation4 + $0x128]]
    %v1988 = vstv %s1987
    %v1989 = vmul.f32 %v1988, %v1895
    %v1990 = vmul.f32 %v1988, %v1896
    %1993 = vrot.lane.b32.xlu0 %v1989, 127
    %v1994 = vpop.permute.xlu0 %1993
    %1995 = vrot.lane.b32.xlu0 %v1990, 127
    %v1996 = vpop.permute.xlu0 %1995
    %v1999 = vadd.f32 %v1919, %v1994
    %v2000 = vadd.f32 %v1920, %v1996
    %s2001 = sld [smem:[#allocation4 + $0x12d]]
    %v2002 = vstv %s2001
    %v2003 = vmul.f32 %v2002, %v1895
    %v2004 = vmul.f32 %v2002, %v1896
    %2007 = vrot.lane.b32.xlu0 %v2003, 127
    %v2008 = vpop.permute.xlu0 %2007
    %2009 = vrot.lane.b32.xlu0 %v2004, 127
    %v2010 = vpop.permute.xlu0 %2009
    %v2013 = vadd.f32 %v1925, %v2008
    %v2014 = vadd.f32 %v1926, %v2010
    %s2015 = sld [smem:[#allocation4 + $0x132]]
    %v2016 = vstv %s2015
    %v2017 = vmul.f32 %v2016, %v1895
    %v2018 = vmul.f32 %v2016, %v1896
    %2021 = vrot.lane.b32.xlu0 %v2017, 127
    %v2022 = vpop.permute.xlu0 %2021
    %2023 = vrot.lane.b32.xlu0 %v2018, 127
    %v2024 = vpop.permute.xlu0 %2023
    %v2027 = vadd.f32 %v1931, %v2022
    %v2028 = vadd.f32 %v1932, %v2024
    %s2029 = sld [smem:[#allocation4 + $0x137]]
    %v2030 = vstv %s2029
    %v2031 = vmul.f32 %v2030, %v1895
    %v2032 = vmul.f32 %v2030, %v1896
    %2035 = vrot.lane.b32.xlu0 %v2031, 127
    %v2036 = vpop.permute.xlu0 %2035
    %2037 = vrot.lane.b32.xlu0 %v2032, 127
    %v2038 = vpop.permute.xlu0 %2037
    %v2041 = vadd.f32 %v1937, %v2036
    %v2042 = vadd.f32 %v1938, %v2038
    %s2043 = sld [smem:[#allocation4 + $0x13c]]
    %v2044 = vstv %s2043
    %v2045 = vmul.f32 %v2044, %v1895
    %v2046 = vmul.f32 %v2044, %v1896
    %2049 = vrot.lane.b32.xlu0 %v2045, 127
    %v2050 = vpop.permute.xlu0 %2049
    %2051 = vrot.lane.b32.xlu0 %v2046, 127
    %v2052 = vpop.permute.xlu0 %2051
    %v2055 = vadd.f32 %v1943, %v2050
    %v2056 = vadd.f32 %v1944, %v2052
    %s2057 = sld [smem:[#allocation4 + $0x141]]
    %v2058 = vstv %s2057
    %v2059 = vmul.f32 %v2058, %v1895
    %v2060 = vmul.f32 %v2058, %v1896
    %2063 = vrot.lane.b32.xlu0 %v2059, 126
    %v2064 = vpop.permute.xlu0 %2063
    %2065 = vrot.lane.b32.xlu0 %v2060, 126
    %v2066 = vpop.permute.xlu0 %2065
    %v2069 = vadd.f32 %v1957, %v2064
    %v2070 = vadd.f32 %v1958, %v2066
    %s2071 = sld [smem:[#allocation4 + $0x146]]
    %v2072 = vstv %s2071
    %v2073 = vmul.f32 %v2072, %v1895
    %v2074 = vmul.f32 %v2072, %v1896
    %2077 = vrot.lane.b32.xlu0 %v2073, 126
    %v2078 = vpop.permute.xlu0 %2077
    %2079 = vrot.lane.b32.xlu0 %v2074, 126
    %v2080 = vpop.permute.xlu0 %2079
    %v2083 = vadd.f32 %v1971, %v2078
    %v2084 = vadd.f32 %v1972, %v2080
    %s2085 = sld [smem:[#allocation4 + $0x14b]]
    %v2086 = vstv %s2085
    %v2087 = vmul.f32 %v2086, %v1895
    %v2088 = vmul.f32 %v2086, %v1896
    %2091 = vrot.lane.b32.xlu0 %v2087, 126
    %v2092 = vpop.permute.xlu0 %2091
    %2093 = vrot.lane.b32.xlu0 %v2088, 126
    %v2094 = vpop.permute.xlu0 %2093
    %v2097 = vadd.f32 %v1985, %v2092
    %v2098 = vadd.f32 %v1986, %v2094
    %s2099 = sld [smem:[#allocation4 + $0x150]]
    %v2100 = vstv %s2099
    %v2101 = vmul.f32 %v2100, %v1895
    %v2102 = vmul.f32 %v2100, %v1896
    %2105 = vrot.lane.b32.xlu0 %v2101, 126
    %v2106 = vpop.permute.xlu0 %2105
    %2107 = vrot.lane.b32.xlu0 %v2102, 126
    %v2108 = vpop.permute.xlu0 %2107
    %v2111 = vadd.f32 %v1999, %v2106
    %v2112 = vadd.f32 %v2000, %v2108
    %s2113 = sld [smem:[#allocation4 + $0x155]]
    %v2114 = vstv %s2113
    %v2115 = vmul.f32 %v2114, %v1895
    %v2116 = vmul.f32 %v2114, %v1896
    %2119 = vrot.lane.b32.xlu0 %v2115, 126
    %v2120 = vpop.permute.xlu0 %2119
    %2121 = vrot.lane.b32.xlu0 %v2116, 126
    %v2122 = vpop.permute.xlu0 %2121
    %v2125 = vadd.f32 %v2013, %v2120
    %v2126 = vadd.f32 %v2014, %v2122
    %s2127 = sld [smem:[#allocation4 + $0x15a]]
    %v2128 = vstv %s2127
    %v2129 = vmul.f32 %v2128, %v1895
    %v2130 = vmul.f32 %v2128, %v1896
    %2133 = vrot.lane.b32.xlu0 %v2129, 126
    %v2134 = vpop.permute.xlu0 %2133
    %2135 = vrot.lane.b32.xlu0 %v2130, 126
    %v2136 = vpop.permute.xlu0 %2135
    %v2139 = vadd.f32 %v2027, %v2134
    %v2140 = vadd.f32 %v2028, %v2136
    %s2141 = sld [smem:[#allocation4 + $0x15f]]
    %v2142 = vstv %s2141
    %v2143 = vmul.f32 %v2142, %v1895
    %v2144 = vmul.f32 %v2142, %v1896
    %2147 = vrot.lane.b32.xlu0 %v2143, 126
    %v2148 = vpop.permute.xlu0 %2147
    %2149 = vrot.lane.b32.xlu0 %v2144, 126
    %v2150 = vpop.permute.xlu0 %2149
    %v2153 = vadd.f32 %v2041, %v2148
    %v2154 = vadd.f32 %v2042, %v2150
    %s2155 = sld [smem:[#allocation4 + $0x164]]
    %v2156 = vstv %s2155
    %v2157 = vmul.f32 %v2156, %v1895
    %v2158 = vmul.f32 %v2156, %v1896
    %2161 = vrot.lane.b32.xlu0 %v2157, 126
    %v2162 = vpop.permute.xlu0 %2161
    %2163 = vrot.lane.b32.xlu0 %v2158, 126
    %v2164 = vpop.permute.xlu0 %2163
    %v2167 = vadd.f32 %v2055, %v2162
    %v2168 = vadd.f32 %v2056, %v2164
    %s2169 = scalar_lea.vmem %s1, 24
    %v2170 = vld [vmem:[%s2169] sm:$0xff]
    %v2171 = vld [vmem:[%s2169 + $0x8] sm:$0xff]
    %s2172 = sld [smem:[#allocation4 + $0x2]]
    %v2173 = vstv %s2172
    %v2174 = vmul.f32 %v2173, %v2170
    %v2175 = vmul.f32 %v2173, %v2171
    %v2176 = vadd.f32 %v2069, %v2174
    %v2177 = vadd.f32 %v2070, %v2175
    %s2178 = sld [smem:[#allocation4 + $0x7]]
    %v2179 = vstv %s2178
    %v2180 = vmul.f32 %v2179, %v2170
    %v2181 = vmul.f32 %v2179, %v2171
    %v2182 = vadd.f32 %v2083, %v2180
    %v2183 = vadd.f32 %v2084, %v2181
    %s2184 = sld [smem:[#allocation4 + $0xc]]
    %v2185 = vstv %s2184
    %v2186 = vmul.f32 %v2185, %v2170
    %v2187 = vmul.f32 %v2185, %v2171
    %v2188 = vadd.f32 %v2097, %v2186
    %v2189 = vadd.f32 %v2098, %v2187
    %s2190 = sld [smem:[#allocation4 + $0x11]]
    %v2191 = vstv %s2190
    %v2192 = vmul.f32 %v2191, %v2170
    %v2193 = vmul.f32 %v2191, %v2171
    %v2194 = vadd.f32 %v2111, %v2192
    %v2195 = vadd.f32 %v2112, %v2193
    %s2196 = sld [smem:[#allocation4 + $0x16]]
    %v2197 = vstv %s2196
    %v2198 = vmul.f32 %v2197, %v2170
    %v2199 = vmul.f32 %v2197, %v2171
    %v2200 = vadd.f32 %v2125, %v2198
    %v2201 = vadd.f32 %v2126, %v2199
    %s2202 = sld [smem:[#allocation4 + $0x1b]]
    %v2203 = vstv %s2202
    %v2204 = vmul.f32 %v2203, %v2170
    %v2205 = vmul.f32 %v2203, %v2171
    %v2206 = vadd.f32 %v2139, %v2204
    %v2207 = vadd.f32 %v2140, %v2205
    %s2208 = sld [smem:[#allocation4 + $0x20]]
    %v2209 = vstv %s2208
    %v2210 = vmul.f32 %v2209, %v2170
    %v2211 = vmul.f32 %v2209, %v2171
    %v2212 = vadd.f32 %v2153, %v2210
    %v2213 = vadd.f32 %v2154, %v2211
    %s2214 = sld [smem:[#allocation4 + $0x25]]
    %v2215 = vstv %s2214
    %v2216 = vmul.f32 %v2215, %v2170
    %v2217 = vmul.f32 %v2215, %v2171
    %v2218 = vadd.f32 %v2167, %v2216
    %v2219 = vadd.f32 %v2168, %v2217
    %s2220 = sld [smem:[#allocation4 + $0x2a]]
    %v2221 = vstv %s2220
    %v2222 = vmul.f32 %v2221, %v2170
    %v2223 = vmul.f32 %v2221, %v2171
    %2226 = vrot.lane.b32.xlu0 %v2222, 127
    %v2227 = vpop.permute.xlu0 %2226
    %2228 = vrot.lane.b32.xlu0 %v2223, 127
    %v2229 = vpop.permute.xlu0 %2228
    %v2232 = vadd.f32 %v2176, %v2227
    %v2233 = vadd.f32 %v2177, %v2229
    %s2234 = sld [smem:[#allocation4 + $0x2f]]
    %v2235 = vstv %s2234
    %v2236 = vmul.f32 %v2235, %v2170
    %v2237 = vmul.f32 %v2235, %v2171
    %2240 = vrot.lane.b32.xlu0 %v2236, 127
    %v2241 = vpop.permute.xlu0 %2240
    %2242 = vrot.lane.b32.xlu0 %v2237, 127
    %v2243 = vpop.permute.xlu0 %2242
    %v2246 = vadd.f32 %v2182, %v2241
    %v2247 = vadd.f32 %v2183, %v2243
    %s2248 = sld [smem:[#allocation4 + $0x34]]
    %v2249 = vstv %s2248
    %v2250 = vmul.f32 %v2249, %v2170
    %v2251 = vmul.f32 %v2249, %v2171
    %2254 = vrot.lane.b32.xlu0 %v2250, 127
    %v2255 = vpop.permute.xlu0 %2254
    %2256 = vrot.lane.b32.xlu0 %v2251, 127
    %v2257 = vpop.permute.xlu0 %2256
    %v2260 = vadd.f32 %v2188, %v2255
    %v2261 = vadd.f32 %v2189, %v2257
    %s2262 = sld [smem:[#allocation4 + $0x39]]
    %v2263 = vstv %s2262
    %v2264 = vmul.f32 %v2263, %v2170
    %v2265 = vmul.f32 %v2263, %v2171
    %2268 = vrot.lane.b32.xlu0 %v2264, 127
    %v2269 = vpop.permute.xlu0 %2268
    %2270 = vrot.lane.b32.xlu0 %v2265, 127
    %v2271 = vpop.permute.xlu0 %2270
    %v2274 = vadd.f32 %v2194, %v2269
    %v2275 = vadd.f32 %v2195, %v2271
    %s2276 = sld [smem:[#allocation4 + $0x3e]]
    %v2277 = vstv %s2276
    %v2278 = vmul.f32 %v2277, %v2170
    %v2279 = vmul.f32 %v2277, %v2171
    %2282 = vrot.lane.b32.xlu0 %v2278, 127
    %v2283 = vpop.permute.xlu0 %2282
    %2284 = vrot.lane.b32.xlu0 %v2279, 127
    %v2285 = vpop.permute.xlu0 %2284
    %v2288 = vadd.f32 %v2200, %v2283
    %v2289 = vadd.f32 %v2201, %v2285
    %s2290 = sld [smem:[#allocation4 + $0x43]]
    %v2291 = vstv %s2290
    %v2292 = vmul.f32 %v2291, %v2170
    %v2293 = vmul.f32 %v2291, %v2171
    %2296 = vrot.lane.b32.xlu0 %v2292, 127
    %v2297 = vpop.permute.xlu0 %2296
    %2298 = vrot.lane.b32.xlu0 %v2293, 127
    %v2299 = vpop.permute.xlu0 %2298
    %v2302 = vadd.f32 %v2206, %v2297
    %v2303 = vadd.f32 %v2207, %v2299
    %s2304 = sld [smem:[#allocation4 + $0x48]]
    %v2305 = vstv %s2304
    %v2306 = vmul.f32 %v2305, %v2170
    %v2307 = vmul.f32 %v2305, %v2171
    %2310 = vrot.lane.b32.xlu0 %v2306, 127
    %v2311 = vpop.permute.xlu0 %2310
    %2312 = vrot.lane.b32.xlu0 %v2307, 127
    %v2313 = vpop.permute.xlu0 %2312
    %v2316 = vadd.f32 %v2212, %v2311
    %v2317 = vadd.f32 %v2213, %v2313
    %s2318 = sld [smem:[#allocation4 + $0x4d]]
    %v2319 = vstv %s2318
    %v2320 = vmul.f32 %v2319, %v2170
    %v2321 = vmul.f32 %v2319, %v2171
    %2324 = vrot.lane.b32.xlu0 %v2320, 127
    %v2325 = vpop.permute.xlu0 %2324
    %2326 = vrot.lane.b32.xlu0 %v2321, 127
    %v2327 = vpop.permute.xlu0 %2326
    %v2330 = vadd.f32 %v2218, %v2325
    %v2331 = vadd.f32 %v2219, %v2327
    %s2332 = sld [smem:[#allocation4 + $0x52]]
    %v2333 = vstv %s2332
    %v2334 = vmul.f32 %v2333, %v2170
    %v2335 = vmul.f32 %v2333, %v2171
    %2338 = vrot.lane.b32.xlu0 %v2334, 126
    %v2339 = vpop.permute.xlu0 %2338
    %2340 = vrot.lane.b32.xlu0 %v2335, 126
    %v2341 = vpop.permute.xlu0 %2340
    %v2344 = vadd.f32 %v2232, %v2339
    %v2345 = vadd.f32 %v2233, %v2341
    %s2346 = sld [smem:[#allocation4 + $0x57]]
    %v2347 = vstv %s2346
    %v2348 = vmul.f32 %v2347, %v2170
    %v2349 = vmul.f32 %v2347, %v2171
    %2352 = vrot.lane.b32.xlu0 %v2348, 126
    %v2353 = vpop.permute.xlu0 %2352
    %2354 = vrot.lane.b32.xlu0 %v2349, 126
    %v2355 = vpop.permute.xlu0 %2354
    %v2358 = vadd.f32 %v2246, %v2353
    %v2359 = vadd.f32 %v2247, %v2355
    %s2360 = sld [smem:[#allocation4 + $0x5c]]
    %v2361 = vstv %s2360
    %v2362 = vmul.f32 %v2361, %v2170
    %v2363 = vmul.f32 %v2361, %v2171
    %2366 = vrot.lane.b32.xlu0 %v2362, 126
    %v2367 = vpop.permute.xlu0 %2366
    %2368 = vrot.lane.b32.xlu0 %v2363, 126
    %v2369 = vpop.permute.xlu0 %2368
    %v2372 = vadd.f32 %v2260, %v2367
    %v2373 = vadd.f32 %v2261, %v2369
    %s2374 = sld [smem:[#allocation4 + $0x61]]
    %v2375 = vstv %s2374
    %v2376 = vmul.f32 %v2375, %v2170
    %v2377 = vmul.f32 %v2375, %v2171
    %2380 = vrot.lane.b32.xlu0 %v2376, 126
    %v2381 = vpop.permute.xlu0 %2380
    %2382 = vrot.lane.b32.xlu0 %v2377, 126
    %v2383 = vpop.permute.xlu0 %2382
    %v2386 = vadd.f32 %v2274, %v2381
    %v2387 = vadd.f32 %v2275, %v2383
    %s2388 = sld [smem:[#allocation4 + $0x66]]
    %v2389 = vstv %s2388
    %v2390 = vmul.f32 %v2389, %v2170
    %v2391 = vmul.f32 %v2389, %v2171
    %2394 = vrot.lane.b32.xlu0 %v2390, 126
    %v2395 = vpop.permute.xlu0 %2394
    %2396 = vrot.lane.b32.xlu0 %v2391, 126
    %v2397 = vpop.permute.xlu0 %2396
    %v2400 = vadd.f32 %v2288, %v2395
    %v2401 = vadd.f32 %v2289, %v2397
    %s2402 = sld [smem:[#allocation4 + $0x6b]]
    %v2403 = vstv %s2402
    %v2404 = vmul.f32 %v2403, %v2170
    %v2405 = vmul.f32 %v2403, %v2171
    %2408 = vrot.lane.b32.xlu0 %v2404, 126
    %v2409 = vpop.permute.xlu0 %2408
    %2410 = vrot.lane.b32.xlu0 %v2405, 126
    %v2411 = vpop.permute.xlu0 %2410
    %v2414 = vadd.f32 %v2302, %v2409
    %v2415 = vadd.f32 %v2303, %v2411
    %s2416 = sld [smem:[#allocation4 + $0x70]]
    %v2417 = vstv %s2416
    %v2418 = vmul.f32 %v2417, %v2170
    %v2419 = vmul.f32 %v2417, %v2171
    %2422 = vrot.lane.b32.xlu0 %v2418, 126
    %v2423 = vpop.permute.xlu0 %2422
    %2424 = vrot.lane.b32.xlu0 %v2419, 126
    %v2425 = vpop.permute.xlu0 %2424
    %v2428 = vadd.f32 %v2316, %v2423
    %v2429 = vadd.f32 %v2317, %v2425
    %s2430 = sld [smem:[#allocation4 + $0x75]]
    %v2431 = vstv %s2430
    %v2432 = vmul.f32 %v2431, %v2170
    %v2433 = vmul.f32 %v2431, %v2171
    %2436 = vrot.lane.b32.xlu0 %v2432, 126
    %v2437 = vpop.permute.xlu0 %2436
    %2438 = vrot.lane.b32.xlu0 %v2433, 126
    %v2439 = vpop.permute.xlu0 %2438
    %v2442 = vadd.f32 %v2330, %v2437
    %v2443 = vadd.f32 %v2331, %v2439
    %v2444 = vld [vmem:[%s2169 + $0x1] sm:$0xff]
    %v2445 = vld [vmem:[%s2169 + $0x9] sm:$0xff]
    %s2446 = sld [smem:[#allocation4 + $0x7a]]
    %v2447 = vstv %s2446
    %v2448 = vmul.f32 %v2447, %v2444
    %v2449 = vmul.f32 %v2447, %v2445
    %v2450 = vadd.f32 %v2344, %v2448
    %v2451 = vadd.f32 %v2345, %v2449
    %s2452 = sld [smem:[#allocation4 + $0x7f]]
    %v2453 = vstv %s2452
    %v2454 = vmul.f32 %v2453, %v2444
    %v2455 = vmul.f32 %v2453, %v2445
    %v2456 = vadd.f32 %v2358, %v2454
    %v2457 = vadd.f32 %v2359, %v2455
    %s2458 = sld [smem:[#allocation4 + $0x84]]
    %v2459 = vstv %s2458
    %v2460 = vmul.f32 %v2459, %v2444
    %v2461 = vmul.f32 %v2459, %v2445
    %v2462 = vadd.f32 %v2372, %v2460
    %v2463 = vadd.f32 %v2373, %v2461
    %s2464 = sld [smem:[#allocation4 + $0x89]]
    %v2465 = vstv %s2464
    %v2466 = vmul.f32 %v2465, %v2444
    %v2467 = vmul.f32 %v2465, %v2445
    %v2468 = vadd.f32 %v2386, %v2466
    %v2469 = vadd.f32 %v2387, %v2467
    %s2470 = sld [smem:[#allocation4 + $0x8e]]
    %v2471 = vstv %s2470
    %v2472 = vmul.f32 %v2471, %v2444
    %v2473 = vmul.f32 %v2471, %v2445
    %v2474 = vadd.f32 %v2400, %v2472
    %v2475 = vadd.f32 %v2401, %v2473
    %s2476 = sld [smem:[#allocation4 + $0x93]]
    %v2477 = vstv %s2476
    %v2478 = vmul.f32 %v2477, %v2444
    %v2479 = vmul.f32 %v2477, %v2445
    %v2480 = vadd.f32 %v2414, %v2478
    %v2481 = vadd.f32 %v2415, %v2479
    %s2482 = sld [smem:[#allocation4 + $0x98]]
    %v2483 = vstv %s2482
    %v2484 = vmul.f32 %v2483, %v2444
    %v2485 = vmul.f32 %v2483, %v2445
    %v2486 = vadd.f32 %v2428, %v2484
    %v2487 = vadd.f32 %v2429, %v2485
    %s2488 = sld [smem:[#allocation4 + $0x9d]]
    %v2489 = vstv %s2488
    %v2490 = vmul.f32 %v2489, %v2444
    %v2491 = vmul.f32 %v2489, %v2445
    %v2492 = vadd.f32 %v2442, %v2490
    %v2493 = vadd.f32 %v2443, %v2491
    %s2494 = sld [smem:[#allocation4 + $0xa2]]
    %v2495 = vstv %s2494
    %v2496 = vmul.f32 %v2495, %v2444
    %v2497 = vmul.f32 %v2495, %v2445
    %2500 = vrot.lane.b32.xlu0 %v2496, 127
    %v2501 = vpop.permute.xlu0 %2500
    %2502 = vrot.lane.b32.xlu0 %v2497, 127
    %v2503 = vpop.permute.xlu0 %2502
    %v2506 = vadd.f32 %v2450, %v2501
    %v2507 = vadd.f32 %v2451, %v2503
    %s2508 = sld [smem:[#allocation4 + $0xa7]]
    %v2509 = vstv %s2508
    %v2510 = vmul.f32 %v2509, %v2444
    %v2511 = vmul.f32 %v2509, %v2445
    %2514 = vrot.lane.b32.xlu0 %v2510, 127
    %v2515 = vpop.permute.xlu0 %2514
    %2516 = vrot.lane.b32.xlu0 %v2511, 127
    %v2517 = vpop.permute.xlu0 %2516
    %v2520 = vadd.f32 %v2456, %v2515
    %v2521 = vadd.f32 %v2457, %v2517
    %s2522 = sld [smem:[#allocation4 + $0xac]]
    %v2523 = vstv %s2522
    %v2524 = vmul.f32 %v2523, %v2444
    %v2525 = vmul.f32 %v2523, %v2445
    %2528 = vrot.lane.b32.xlu0 %v2524, 127
    %v2529 = vpop.permute.xlu0 %2528
    %2530 = vrot.lane.b32.xlu0 %v2525, 127
    %v2531 = vpop.permute.xlu0 %2530
    %v2534 = vadd.f32 %v2462, %v2529
    %v2535 = vadd.f32 %v2463, %v2531
    %s2536 = sld [smem:[#allocation4 + $0xb1]]
    %v2537 = vstv %s2536
    %v2538 = vmul.f32 %v2537, %v2444
    %v2539 = vmul.f32 %v2537, %v2445
    %2542 = vrot.lane.b32.xlu0 %v2538, 127
    %v2543 = vpop.permute.xlu0 %2542
    %2544 = vrot.lane.b32.xlu0 %v2539, 127
    %v2545 = vpop.permute.xlu0 %2544
    %v2548 = vadd.f32 %v2468, %v2543
    %v2549 = vadd.f32 %v2469, %v2545
    %s2550 = sld [smem:[#allocation4 + $0xb6]]
    %v2551 = vstv %s2550
    %v2552 = vmul.f32 %v2551, %v2444
    %v2553 = vmul.f32 %v2551, %v2445
    %2556 = vrot.lane.b32.xlu0 %v2552, 127
    %v2557 = vpop.permute.xlu0 %2556
    %2558 = vrot.lane.b32.xlu0 %v2553, 127
    %v2559 = vpop.permute.xlu0 %2558
    %v2562 = vadd.f32 %v2474, %v2557
    %v2563 = vadd.f32 %v2475, %v2559
    %s2564 = sld [smem:[#allocation4 + $0xbb]]
    %v2565 = vstv %s2564
    %v2566 = vmul.f32 %v2565, %v2444
    %v2567 = vmul.f32 %v2565, %v2445
    %2570 = vrot.lane.b32.xlu0 %v2566, 127
    %v2571 = vpop.permute.xlu0 %2570
    %2572 = vrot.lane.b32.xlu0 %v2567, 127
    %v2573 = vpop.permute.xlu0 %2572
    %v2576 = vadd.f32 %v2480, %v2571
    %v2577 = vadd.f32 %v2481, %v2573
    %s2578 = sld [smem:[#allocation4 + $0xc0]]
    %v2579 = vstv %s2578
    %v2580 = vmul.f32 %v2579, %v2444
    %v2581 = vmul.f32 %v2579, %v2445
    %2584 = vrot.lane.b32.xlu0 %v2580, 127
    %v2585 = vpop.permute.xlu0 %2584
    %2586 = vrot.lane.b32.xlu0 %v2581, 127
    %v2587 = vpop.permute.xlu0 %2586
    %v2590 = vadd.f32 %v2486, %v2585
    %v2591 = vadd.f32 %v2487, %v2587
    %s2592 = sld [smem:[#allocation4 + $0xc5]]
    %v2593 = vstv %s2592
    %v2594 = vmul.f32 %v2593, %v2444
    %v2595 = vmul.f32 %v2593, %v2445
    %2598 = vrot.lane.b32.xlu0 %v2594, 127
    %v2599 = vpop.permute.xlu0 %2598
    %2600 = vrot.lane.b32.xlu0 %v2595, 127
    %v2601 = vpop.permute.xlu0 %2600
    %v2604 = vadd.f32 %v2492, %v2599
    %v2605 = vadd.f32 %v2493, %v2601
    %s2606 = sld [smem:[#allocation4 + $0xca]]
    %v2607 = vstv %s2606
    %v2608 = vmul.f32 %v2607, %v2444
    %v2609 = vmul.f32 %v2607, %v2445
    %2612 = vrot.lane.b32.xlu0 %v2608, 126
    %v2613 = vpop.permute.xlu0 %2612
    %2614 = vrot.lane.b32.xlu0 %v2609, 126
    %v2615 = vpop.permute.xlu0 %2614
    %v2618 = vadd.f32 %v2506, %v2613
    %v2619 = vadd.f32 %v2507, %v2615
    %s2620 = sld [smem:[#allocation4 + $0xcf]]
    %v2621 = vstv %s2620
    %v2622 = vmul.f32 %v2621, %v2444
    %v2623 = vmul.f32 %v2621, %v2445
    %2626 = vrot.lane.b32.xlu0 %v2622, 126
    %v2627 = vpop.permute.xlu0 %2626
    %2628 = vrot.lane.b32.xlu0 %v2623, 126
    %v2629 = vpop.permute.xlu0 %2628
    %v2632 = vadd.f32 %v2520, %v2627
    %v2633 = vadd.f32 %v2521, %v2629
    %s2634 = sld [smem:[#allocation4 + $0xd4]]
    %v2635 = vstv %s2634
    %v2636 = vmul.f32 %v2635, %v2444
    %v2637 = vmul.f32 %v2635, %v2445
    %2640 = vrot.lane.b32.xlu0 %v2636, 126
    %v2641 = vpop.permute.xlu0 %2640
    %2642 = vrot.lane.b32.xlu0 %v2637, 126
    %v2643 = vpop.permute.xlu0 %2642
    %v2646 = vadd.f32 %v2534, %v2641
    %v2647 = vadd.f32 %v2535, %v2643
    %s2648 = sld [smem:[#allocation4 + $0xd9]]
    %v2649 = vstv %s2648
    %v2650 = vmul.f32 %v2649, %v2444
    %v2651 = vmul.f32 %v2649, %v2445
    %2654 = vrot.lane.b32.xlu0 %v2650, 126
    %v2655 = vpop.permute.xlu0 %2654
    %2656 = vrot.lane.b32.xlu0 %v2651, 126
    %v2657 = vpop.permute.xlu0 %2656
    %v2660 = vadd.f32 %v2548, %v2655
    %v2661 = vadd.f32 %v2549, %v2657
    %s2662 = sld [smem:[#allocation4 + $0xde]]
    %v2663 = vstv %s2662
    %v2664 = vmul.f32 %v2663, %v2444
    %v2665 = vmul.f32 %v2663, %v2445
    %2668 = vrot.lane.b32.xlu0 %v2664, 126
    %v2669 = vpop.permute.xlu0 %2668
    %2670 = vrot.lane.b32.xlu0 %v2665, 126
    %v2671 = vpop.permute.xlu0 %2670
    %v2674 = vadd.f32 %v2562, %v2669
    %v2675 = vadd.f32 %v2563, %v2671
    %s2676 = sld [smem:[#allocation4 + $0xe3]]
    %v2677 = vstv %s2676
    %v2678 = vmul.f32 %v2677, %v2444
    %v2679 = vmul.f32 %v2677, %v2445
    %2682 = vrot.lane.b32.xlu0 %v2678, 126
    %v2683 = vpop.permute.xlu0 %2682
    %2684 = vrot.lane.b32.xlu0 %v2679, 126
    %v2685 = vpop.permute.xlu0 %2684
    %v2688 = vadd.f32 %v2576, %v2683
    %v2689 = vadd.f32 %v2577, %v2685
    %s2690 = sld [smem:[#allocation4 + $0xe8]]
    %v2691 = vstv %s2690
    %v2692 = vmul.f32 %v2691, %v2444
    %v2693 = vmul.f32 %v2691, %v2445
    %2696 = vrot.lane.b32.xlu0 %v2692, 126
    %v2697 = vpop.permute.xlu0 %2696
    %2698 = vrot.lane.b32.xlu0 %v2693, 126
    %v2699 = vpop.permute.xlu0 %2698
    %v2702 = vadd.f32 %v2590, %v2697
    %v2703 = vadd.f32 %v2591, %v2699
    %s2704 = sld [smem:[#allocation4 + $0xed]]
    %v2705 = vstv %s2704
    %v2706 = vmul.f32 %v2705, %v2444
    %v2707 = vmul.f32 %v2705, %v2445
    %2710 = vrot.lane.b32.xlu0 %v2706, 126
    %v2711 = vpop.permute.xlu0 %2710
    %2712 = vrot.lane.b32.xlu0 %v2707, 126
    %v2713 = vpop.permute.xlu0 %2712
    %v2716 = vadd.f32 %v2604, %v2711
    %v2717 = vadd.f32 %v2605, %v2713
    %v2718 = vld [vmem:[%s2169 + $0x2] sm:$0xff]
    %v2719 = vld [vmem:[%s2169 + $0xa] sm:$0xff]
    %s2720 = sld [smem:[#allocation4 + $0xf2]]
    %v2721 = vstv %s2720
    %v2722 = vmul.f32 %v2721, %v2718
    %v2723 = vmul.f32 %v2721, %v2719
    %v2724 = vadd.f32 %v2618, %v2722
    %v2725 = vadd.f32 %v2619, %v2723
    %s2726 = sld [smem:[#allocation4 + $0xf7]]
    %v2727 = vstv %s2726
    %v2728 = vmul.f32 %v2727, %v2718
    %v2729 = vmul.f32 %v2727, %v2719
    %v2730 = vadd.f32 %v2632, %v2728
    %v2731 = vadd.f32 %v2633, %v2729
    %s2732 = sld [smem:[#allocation4 + $0xfc]]
    %v2733 = vstv %s2732
    %v2734 = vmul.f32 %v2733, %v2718
    %v2735 = vmul.f32 %v2733, %v2719
    %v2736 = vadd.f32 %v2646, %v2734
    %v2737 = vadd.f32 %v2647, %v2735
    %s2738 = sld [smem:[#allocation4 + $0x101]]
    %v2739 = vstv %s2738
    %v2740 = vmul.f32 %v2739, %v2718
    %v2741 = vmul.f32 %v2739, %v2719
    %v2742 = vadd.f32 %v2660, %v2740
    %v2743 = vadd.f32 %v2661, %v2741
    %s2744 = sld [smem:[#allocation4 + $0x106]]
    %v2745 = vstv %s2744
    %v2746 = vmul.f32 %v2745, %v2718
    %v2747 = vmul.f32 %v2745, %v2719
    %v2748 = vadd.f32 %v2674, %v2746
    %v2749 = vadd.f32 %v2675, %v2747
    %s2750 = sld [smem:[#allocation4 + $0x10b]]
    %v2751 = vstv %s2750
    %v2752 = vmul.f32 %v2751, %v2718
    %v2753 = vmul.f32 %v2751, %v2719
    %v2754 = vadd.f32 %v2688, %v2752
    %v2755 = vadd.f32 %v2689, %v2753
    %s2756 = sld [smem:[#allocation4 + $0x110]]
    %v2757 = vstv %s2756
    %v2758 = vmul.f32 %v2757, %v2718
    %v2759 = vmul.f32 %v2757, %v2719
    %v2760 = vadd.f32 %v2702, %v2758
    %v2761 = vadd.f32 %v2703, %v2759
    %s2762 = sld [smem:[#allocation4 + $0x115]]
    %v2763 = vstv %s2762
    %v2764 = vmul.f32 %v2763, %v2718
    %v2765 = vmul.f32 %v2763, %v2719
    %v2766 = vadd.f32 %v2716, %v2764
    %v2767 = vadd.f32 %v2717, %v2765
    %s2768 = sld [smem:[#allocation4 + $0x11a]]
    %v2769 = vstv %s2768
    %v2770 = vmul.f32 %v2769, %v2718
    %v2771 = vmul.f32 %v2769, %v2719
    %2774 = vrot.lane.b32.xlu0 %v2770, 127
    %v2775 = vpop.permute.xlu0 %2774
    %2776 = vrot.lane.b32.xlu0 %v2771, 127
    %v2777 = vpop.permute.xlu0 %2776
    %v2780 = vadd.f32 %v2724, %v2775
    %v2781 = vadd.f32 %v2725, %v2777
    %s2782 = sld [smem:[#allocation4 + $0x11f]]
    %v2783 = vstv %s2782
    %v2784 = vmul.f32 %v2783, %v2718
    %v2785 = vmul.f32 %v2783, %v2719
    %2788 = vrot.lane.b32.xlu0 %v2784, 127
    %v2789 = vpop.permute.xlu0 %2788
    %2790 = vrot.lane.b32.xlu0 %v2785, 127
    %v2791 = vpop.permute.xlu0 %2790
    %v2794 = vadd.f32 %v2730, %v2789
    %v2795 = vadd.f32 %v2731, %v2791
    %s2796 = sld [smem:[#allocation4 + $0x124]]
    %v2797 = vstv %s2796
    %v2798 = vmul.f32 %v2797, %v2718
    %v2799 = vmul.f32 %v2797, %v2719
    %2802 = vrot.lane.b32.xlu0 %v2798, 127
    %v2803 = vpop.permute.xlu0 %2802
    %2804 = vrot.lane.b32.xlu0 %v2799, 127
    %v2805 = vpop.permute.xlu0 %2804
    %v2808 = vadd.f32 %v2736, %v2803
    %v2809 = vadd.f32 %v2737, %v2805
    %s2810 = sld [smem:[#allocation4 + $0x129]]
    %v2811 = vstv %s2810
    %v2812 = vmul.f32 %v2811, %v2718
    %v2813 = vmul.f32 %v2811, %v2719
    %2816 = vrot.lane.b32.xlu0 %v2812, 127
    %v2817 = vpop.permute.xlu0 %2816
    %2818 = vrot.lane.b32.xlu0 %v2813, 127
    %v2819 = vpop.permute.xlu0 %2818
    %v2822 = vadd.f32 %v2742, %v2817
    %v2823 = vadd.f32 %v2743, %v2819
    %s2824 = sld [smem:[#allocation4 + $0x12e]]
    %v2825 = vstv %s2824
    %v2826 = vmul.f32 %v2825, %v2718
    %v2827 = vmul.f32 %v2825, %v2719
    %2830 = vrot.lane.b32.xlu0 %v2826, 127
    %v2831 = vpop.permute.xlu0 %2830
    %2832 = vrot.lane.b32.xlu0 %v2827, 127
    %v2833 = vpop.permute.xlu0 %2832
    %v2836 = vadd.f32 %v2748, %v2831
    %v2837 = vadd.f32 %v2749, %v2833
    %s2838 = sld [smem:[#allocation4 + $0x133]]
    %v2839 = vstv %s2838
    %v2840 = vmul.f32 %v2839, %v2718
    %v2841 = vmul.f32 %v2839, %v2719
    %2844 = vrot.lane.b32.xlu0 %v2840, 127
    %v2845 = vpop.permute.xlu0 %2844
    %2846 = vrot.lane.b32.xlu0 %v2841, 127
    %v2847 = vpop.permute.xlu0 %2846
    %v2850 = vadd.f32 %v2754, %v2845
    %v2851 = vadd.f32 %v2755, %v2847
    %s2852 = sld [smem:[#allocation4 + $0x138]]
    %v2853 = vstv %s2852
    %v2854 = vmul.f32 %v2853, %v2718
    %v2855 = vmul.f32 %v2853, %v2719
    %2858 = vrot.lane.b32.xlu0 %v2854, 127
    %v2859 = vpop.permute.xlu0 %2858
    %2860 = vrot.lane.b32.xlu0 %v2855, 127
    %v2861 = vpop.permute.xlu0 %2860
    %v2864 = vadd.f32 %v2760, %v2859
    %v2865 = vadd.f32 %v2761, %v2861
    %s2866 = sld [smem:[#allocation4 + $0x13d]]
    %v2867 = vstv %s2866
    %v2868 = vmul.f32 %v2867, %v2718
    %v2869 = vmul.f32 %v2867, %v2719
    %2872 = vrot.lane.b32.xlu0 %v2868, 127
    %v2873 = vpop.permute.xlu0 %2872
    %2874 = vrot.lane.b32.xlu0 %v2869, 127
    %v2875 = vpop.permute.xlu0 %2874
    %v2878 = vadd.f32 %v2766, %v2873
    %v2879 = vadd.f32 %v2767, %v2875
    %s2880 = sld [smem:[#allocation4 + $0x142]]
    %v2881 = vstv %s2880
    %v2882 = vmul.f32 %v2881, %v2718
    %v2883 = vmul.f32 %v2881, %v2719
    %2886 = vrot.lane.b32.xlu0 %v2882, 126
    %v2887 = vpop.permute.xlu0 %2886
    %2888 = vrot.lane.b32.xlu0 %v2883, 126
    %v2889 = vpop.permute.xlu0 %2888
    %v2892 = vadd.f32 %v2780, %v2887
    %v2893 = vadd.f32 %v2781, %v2889
    %s2894 = sld [smem:[#allocation4 + $0x147]]
    %v2895 = vstv %s2894
    %v2896 = vmul.f32 %v2895, %v2718
    %v2897 = vmul.f32 %v2895, %v2719
    %2900 = vrot.lane.b32.xlu0 %v2896, 126
    %v2901 = vpop.permute.xlu0 %2900
    %2902 = vrot.lane.b32.xlu0 %v2897, 126
    %v2903 = vpop.permute.xlu0 %2902
    %v2906 = vadd.f32 %v2794, %v2901
    %v2907 = vadd.f32 %v2795, %v2903
    %s2908 = sld [smem:[#allocation4 + $0x14c]]
    %v2909 = vstv %s2908
    %v2910 = vmul.f32 %v2909, %v2718
    %v2911 = vmul.f32 %v2909, %v2719
    %2914 = vrot.lane.b32.xlu0 %v2910, 126
    %v2915 = vpop.permute.xlu0 %2914
    %2916 = vrot.lane.b32.xlu0 %v2911, 126
    %v2917 = vpop.permute.xlu0 %2916
    %v2920 = vadd.f32 %v2808, %v2915
    %v2921 = vadd.f32 %v2809, %v2917
    %s2922 = sld [smem:[#allocation4 + $0x151]]
    %v2923 = vstv %s2922
    %v2924 = vmul.f32 %v2923, %v2718
    %v2925 = vmul.f32 %v2923, %v2719
    %2928 = vrot.lane.b32.xlu0 %v2924, 126
    %v2929 = vpop.permute.xlu0 %2928
    %2930 = vrot.lane.b32.xlu0 %v2925, 126
    %v2931 = vpop.permute.xlu0 %2930
    %v2934 = vadd.f32 %v2822, %v2929
    %v2935 = vadd.f32 %v2823, %v2931
    %s2936 = sld [smem:[#allocation4 + $0x156]]
    %v2937 = vstv %s2936
    %v2938 = vmul.f32 %v2937, %v2718
    %v2939 = vmul.f32 %v2937, %v2719
    %2942 = vrot.lane.b32.xlu0 %v2938, 126
    %v2943 = vpop.permute.xlu0 %2942
    %2944 = vrot.lane.b32.xlu0 %v2939, 126
    %v2945 = vpop.permute.xlu0 %2944
    %v2948 = vadd.f32 %v2836, %v2943
    %v2949 = vadd.f32 %v2837, %v2945
    %s2950 = sld [smem:[#allocation4 + $0x15b]]
    %v2951 = vstv %s2950
    %v2952 = vmul.f32 %v2951, %v2718
    %v2953 = vmul.f32 %v2951, %v2719
    %2956 = vrot.lane.b32.xlu0 %v2952, 126
    %v2957 = vpop.permute.xlu0 %2956
    %2958 = vrot.lane.b32.xlu0 %v2953, 126
    %v2959 = vpop.permute.xlu0 %2958
    %v2962 = vadd.f32 %v2850, %v2957
    %v2963 = vadd.f32 %v2851, %v2959
    %s2964 = sld [smem:[#allocation4 + $0x160]]
    %v2965 = vstv %s2964
    %v2966 = vmul.f32 %v2965, %v2718
    %v2967 = vmul.f32 %v2965, %v2719
    %2970 = vrot.lane.b32.xlu0 %v2966, 126
    %v2971 = vpop.permute.xlu0 %2970
    %2972 = vrot.lane.b32.xlu0 %v2967, 126
    %v2973 = vpop.permute.xlu0 %2972
    %v2976 = vadd.f32 %v2864, %v2971
    %v2977 = vadd.f32 %v2865, %v2973
    %s2978 = sld [smem:[#allocation4 + $0x165]]
    %v2979 = vstv %s2978
    %v2980 = vmul.f32 %v2979, %v2718
    %v2981 = vmul.f32 %v2979, %v2719
    %2984 = vrot.lane.b32.xlu0 %v2980, 126
    %v2985 = vpop.permute.xlu0 %2984
    %2986 = vrot.lane.b32.xlu0 %v2981, 126
    %v2987 = vpop.permute.xlu0 %2986
    %v2990 = vadd.f32 %v2878, %v2985
    %v2991 = vadd.f32 %v2879, %v2987
    %s2992 = scalar_lea.vmem %s1, 48
    %v2993 = vld [vmem:[%s2992] sm:$0xff]
    %v2994 = vld [vmem:[%s2992 + $0x8] sm:$0xff]
    %s2995 = sld [smem:[#allocation4 + $0x3]]
    %v2996 = vstv %s2995
    %v2997 = vmul.f32 %v2996, %v2993
    %v2998 = vmul.f32 %v2996, %v2994
    %v2999 = vadd.f32 %v2892, %v2997
    %v3000 = vadd.f32 %v2893, %v2998
    %s3001 = sld [smem:[#allocation4 + $0x8]]
    %v3002 = vstv %s3001
    %v3003 = vmul.f32 %v3002, %v2993
    %v3004 = vmul.f32 %v3002, %v2994
    %v3005 = vadd.f32 %v2906, %v3003
    %v3006 = vadd.f32 %v2907, %v3004
    %s3007 = sld [smem:[#allocation4 + $0xd]]
    %v3008 = vstv %s3007
    %v3009 = vmul.f32 %v3008, %v2993
    %v3010 = vmul.f32 %v3008, %v2994
    %v3011 = vadd.f32 %v2920, %v3009
    %v3012 = vadd.f32 %v2921, %v3010
    %s3013 = sld [smem:[#allocation4 + $0x12]]
    %v3014 = vstv %s3013
    %v3015 = vmul.f32 %v3014, %v2993
    %v3016 = vmul.f32 %v3014, %v2994
    %v3017 = vadd.f32 %v2934, %v3015
    %v3018 = vadd.f32 %v2935, %v3016
    %s3019 = sld [smem:[#allocation4 + $0x17]]
    %v3020 = vstv %s3019
    %v3021 = vmul.f32 %v3020, %v2993
    %v3022 = vmul.f32 %v3020, %v2994
    %v3023 = vadd.f32 %v2948, %v3021
    %v3024 = vadd.f32 %v2949, %v3022
    %s3025 = sld [smem:[#allocation4 + $0x1c]]
    %v3026 = vstv %s3025
    %v3027 = vmul.f32 %v3026, %v2993
    %v3028 = vmul.f32 %v3026, %v2994
    %v3029 = vadd.f32 %v2962, %v3027
    %v3030 = vadd.f32 %v2963, %v3028
    %s3031 = sld [smem:[#allocation4 + $0x21]]
    %v3032 = vstv %s3031
    %v3033 = vmul.f32 %v3032, %v2993
    %v3034 = vmul.f32 %v3032, %v2994
    %v3035 = vadd.f32 %v2976, %v3033
    %v3036 = vadd.f32 %v2977, %v3034
    %s3037 = sld [smem:[#allocation4 + $0x26]]
    %v3038 = vstv %s3037
    %v3039 = vmul.f32 %v3038, %v2993
    %v3040 = vmul.f32 %v3038, %v2994
    %v3041 = vadd.f32 %v2990, %v3039
    %v3042 = vadd.f32 %v2991, %v3040
    %s3043 = sld [smem:[#allocation4 + $0x2b]]
    %v3044 = vstv %s3043
    %v3045 = vmul.f32 %v3044, %v2993
    %v3046 = vmul.f32 %v3044, %v2994
    %3049 = vrot.lane.b32.xlu0 %v3045, 127
    %v3050 = vpop.permute.xlu0 %3049
    %3051 = vrot.lane.b32.xlu0 %v3046, 127
    %v3052 = vpop.permute.xlu0 %3051
    %v3055 = vadd.f32 %v2999, %v3050
    %v3056 = vadd.f32 %v3000, %v3052
    %s3057 = sld [smem:[#allocation4 + $0x30]]
    %v3058 = vstv %s3057
    %v3059 = vmul.f32 %v3058, %v2993
    %v3060 = vmul.f32 %v3058, %v2994
    %3063 = vrot.lane.b32.xlu0 %v3059, 127
    %v3064 = vpop.permute.xlu0 %3063
    %3065 = vrot.lane.b32.xlu0 %v3060, 127
    %v3066 = vpop.permute.xlu0 %3065
    %v3069 = vadd.f32 %v3005, %v3064
    %v3070 = vadd.f32 %v3006, %v3066
    %s3071 = sld [smem:[#allocation4 + $0x35]]
    %v3072 = vstv %s3071
    %v3073 = vmul.f32 %v3072, %v2993
    %v3074 = vmul.f32 %v3072, %v2994
    %3077 = vrot.lane.b32.xlu0 %v3073, 127
    %v3078 = vpop.permute.xlu0 %3077
    %3079 = vrot.lane.b32.xlu0 %v3074, 127
    %v3080 = vpop.permute.xlu0 %3079
    %v3083 = vadd.f32 %v3011, %v3078
    %v3084 = vadd.f32 %v3012, %v3080
    %s3085 = sld [smem:[#allocation4 + $0x3a]]
    %v3086 = vstv %s3085
    %v3087 = vmul.f32 %v3086, %v2993
    %v3088 = vmul.f32 %v3086, %v2994
    %3091 = vrot.lane.b32.xlu0 %v3087, 127
    %v3092 = vpop.permute.xlu0 %3091
    %3093 = vrot.lane.b32.xlu0 %v3088, 127
    %v3094 = vpop.permute.xlu0 %3093
    %v3097 = vadd.f32 %v3017, %v3092
    %v3098 = vadd.f32 %v3018, %v3094
    %s3099 = sld [smem:[#allocation4 + $0x3f]]
    %v3100 = vstv %s3099
    %v3101 = vmul.f32 %v3100, %v2993
    %v3102 = vmul.f32 %v3100, %v2994
    %3105 = vrot.lane.b32.xlu0 %v3101, 127
    %v3106 = vpop.permute.xlu0 %3105
    %3107 = vrot.lane.b32.xlu0 %v3102, 127
    %v3108 = vpop.permute.xlu0 %3107
    %v3111 = vadd.f32 %v3023, %v3106
    %v3112 = vadd.f32 %v3024, %v3108
    %s3113 = sld [smem:[#allocation4 + $0x44]]
    %v3114 = vstv %s3113
    %v3115 = vmul.f32 %v3114, %v2993
    %v3116 = vmul.f32 %v3114, %v2994
    %3119 = vrot.lane.b32.xlu0 %v3115, 127
    %v3120 = vpop.permute.xlu0 %3119
    %3121 = vrot.lane.b32.xlu0 %v3116, 127
    %v3122 = vpop.permute.xlu0 %3121
    %v3125 = vadd.f32 %v3029, %v3120
    %v3126 = vadd.f32 %v3030, %v3122
    %s3127 = sld [smem:[#allocation4 + $0x49]]
    %v3128 = vstv %s3127
    %v3129 = vmul.f32 %v3128, %v2993
    %v3130 = vmul.f32 %v3128, %v2994
    %3133 = vrot.lane.b32.xlu0 %v3129, 127
    %v3134 = vpop.permute.xlu0 %3133
    %3135 = vrot.lane.b32.xlu0 %v3130, 127
    %v3136 = vpop.permute.xlu0 %3135
    %v3139 = vadd.f32 %v3035, %v3134
    %v3140 = vadd.f32 %v3036, %v3136
    %s3141 = sld [smem:[#allocation4 + $0x4e]]
    %v3142 = vstv %s3141
    %v3143 = vmul.f32 %v3142, %v2993
    %v3144 = vmul.f32 %v3142, %v2994
    %3147 = vrot.lane.b32.xlu0 %v3143, 127
    %v3148 = vpop.permute.xlu0 %3147
    %3149 = vrot.lane.b32.xlu0 %v3144, 127
    %v3150 = vpop.permute.xlu0 %3149
    %v3153 = vadd.f32 %v3041, %v3148
    %v3154 = vadd.f32 %v3042, %v3150
    %s3155 = sld [smem:[#allocation4 + $0x53]]
    %v3156 = vstv %s3155
    %v3157 = vmul.f32 %v3156, %v2993
    %v3158 = vmul.f32 %v3156, %v2994
    %3161 = vrot.lane.b32.xlu0 %v3157, 126
    %v3162 = vpop.permute.xlu0 %3161
    %3163 = vrot.lane.b32.xlu0 %v3158, 126
    %v3164 = vpop.permute.xlu0 %3163
    %v3167 = vadd.f32 %v3055, %v3162
    %v3168 = vadd.f32 %v3056, %v3164
    %s3169 = sld [smem:[#allocation4 + $0x58]]
    %v3170 = vstv %s3169
    %v3171 = vmul.f32 %v3170, %v2993
    %v3172 = vmul.f32 %v3170, %v2994
    %3175 = vrot.lane.b32.xlu0 %v3171, 126
    %v3176 = vpop.permute.xlu0 %3175
    %3177 = vrot.lane.b32.xlu0 %v3172, 126
    %v3178 = vpop.permute.xlu0 %3177
    %v3181 = vadd.f32 %v3069, %v3176
    %v3182 = vadd.f32 %v3070, %v3178
    %s3183 = sld [smem:[#allocation4 + $0x5d]]
    %v3184 = vstv %s3183
    %v3185 = vmul.f32 %v3184, %v2993
    %v3186 = vmul.f32 %v3184, %v2994
    %3189 = vrot.lane.b32.xlu0 %v3185, 126
    %v3190 = vpop.permute.xlu0 %3189
    %3191 = vrot.lane.b32.xlu0 %v3186, 126
    %v3192 = vpop.permute.xlu0 %3191
    %v3195 = vadd.f32 %v3083, %v3190
    %v3196 = vadd.f32 %v3084, %v3192
    %s3197 = sld [smem:[#allocation4 + $0x62]]
    %v3198 = vstv %s3197
    %v3199 = vmul.f32 %v3198, %v2993
    %v3200 = vmul.f32 %v3198, %v2994
    %3203 = vrot.lane.b32.xlu0 %v3199, 126
    %v3204 = vpop.permute.xlu0 %3203
    %3205 = vrot.lane.b32.xlu0 %v3200, 126
    %v3206 = vpop.permute.xlu0 %3205
    %v3209 = vadd.f32 %v3097, %v3204
    %v3210 = vadd.f32 %v3098, %v3206
    %s3211 = sld [smem:[#allocation4 + $0x67]]
    %v3212 = vstv %s3211
    %v3213 = vmul.f32 %v3212, %v2993
    %v3214 = vmul.f32 %v3212, %v2994
    %3217 = vrot.lane.b32.xlu0 %v3213, 126
    %v3218 = vpop.permute.xlu0 %3217
    %3219 = vrot.lane.b32.xlu0 %v3214, 126
    %v3220 = vpop.permute.xlu0 %3219
    %v3223 = vadd.f32 %v3111, %v3218
    %v3224 = vadd.f32 %v3112, %v3220
    %s3225 = sld [smem:[#allocation4 + $0x6c]]
    %v3226 = vstv %s3225
    %v3227 = vmul.f32 %v3226, %v2993
    %v3228 = vmul.f32 %v3226, %v2994
    %3231 = vrot.lane.b32.xlu0 %v3227, 126
    %v3232 = vpop.permute.xlu0 %3231
    %3233 = vrot.lane.b32.xlu0 %v3228, 126
    %v3234 = vpop.permute.xlu0 %3233
    %v3237 = vadd.f32 %v3125, %v3232
    %v3238 = vadd.f32 %v3126, %v3234
    %s3239 = sld [smem:[#allocation4 + $0x71]]
    %v3240 = vstv %s3239
    %v3241 = vmul.f32 %v3240, %v2993
    %v3242 = vmul.f32 %v3240, %v2994
    %3245 = vrot.lane.b32.xlu0 %v3241, 126
    %v3246 = vpop.permute.xlu0 %3245
    %3247 = vrot.lane.b32.xlu0 %v3242, 126
    %v3248 = vpop.permute.xlu0 %3247
    %v3251 = vadd.f32 %v3139, %v3246
    %v3252 = vadd.f32 %v3140, %v3248
    %s3253 = sld [smem:[#allocation4 + $0x76]]
    %v3254 = vstv %s3253
    %v3255 = vmul.f32 %v3254, %v2993
    %v3256 = vmul.f32 %v3254, %v2994
    %3259 = vrot.lane.b32.xlu0 %v3255, 126
    %v3260 = vpop.permute.xlu0 %3259
    %3261 = vrot.lane.b32.xlu0 %v3256, 126
    %v3262 = vpop.permute.xlu0 %3261
    %v3265 = vadd.f32 %v3153, %v3260
    %v3266 = vadd.f32 %v3154, %v3262
    %v3267 = vld [vmem:[%s2992 + $0x1] sm:$0xff]
    %v3268 = vld [vmem:[%s2992 + $0x9] sm:$0xff]
    %s3269 = sld [smem:[#allocation4 + $0x7b]]
    %v3270 = vstv %s3269
    %v3271 = vmul.f32 %v3270, %v3267
    %v3272 = vmul.f32 %v3270, %v3268
    %v3273 = vadd.f32 %v3167, %v3271
    %v3274 = vadd.f32 %v3168, %v3272
    %s3275 = sld [smem:[#allocation4 + $0x80]]
    %v3276 = vstv %s3275
    %v3277 = vmul.f32 %v3276, %v3267
    %v3278 = vmul.f32 %v3276, %v3268
    %v3279 = vadd.f32 %v3181, %v3277
    %v3280 = vadd.f32 %v3182, %v3278
    %s3281 = sld [smem:[#allocation4 + $0x85]]
    %v3282 = vstv %s3281
    %v3283 = vmul.f32 %v3282, %v3267
    %v3284 = vmul.f32 %v3282, %v3268
    %v3285 = vadd.f32 %v3195, %v3283
    %v3286 = vadd.f32 %v3196, %v3284
    %s3287 = sld [smem:[#allocation4 + $0x8a]]
    %v3288 = vstv %s3287
    %v3289 = vmul.f32 %v3288, %v3267
    %v3290 = vmul.f32 %v3288, %v3268
    %v3291 = vadd.f32 %v3209, %v3289
    %v3292 = vadd.f32 %v3210, %v3290
    %s3293 = sld [smem:[#allocation4 + $0x8f]]
    %v3294 = vstv %s3293
    %v3295 = vmul.f32 %v3294, %v3267
    %v3296 = vmul.f32 %v3294, %v3268
    %v3297 = vadd.f32 %v3223, %v3295
    %v3298 = vadd.f32 %v3224, %v3296
    %s3299 = sld [smem:[#allocation4 + $0x94]]
    %v3300 = vstv %s3299
    %v3301 = vmul.f32 %v3300, %v3267
    %v3302 = vmul.f32 %v3300, %v3268
    %v3303 = vadd.f32 %v3237, %v3301
    %v3304 = vadd.f32 %v3238, %v3302
    %s3305 = sld [smem:[#allocation4 + $0x99]]
    %v3306 = vstv %s3305
    %v3307 = vmul.f32 %v3306, %v3267
    %v3308 = vmul.f32 %v3306, %v3268
    %v3309 = vadd.f32 %v3251, %v3307
    %v3310 = vadd.f32 %v3252, %v3308
    %s3311 = sld [smem:[#allocation4 + $0x9e]]
    %v3312 = vstv %s3311
    %v3313 = vmul.f32 %v3312, %v3267
    %v3314 = vmul.f32 %v3312, %v3268
    %v3315 = vadd.f32 %v3265, %v3313
    %v3316 = vadd.f32 %v3266, %v3314
    %s3317 = sld [smem:[#allocation4 + $0xa3]]
    %v3318 = vstv %s3317
    %v3319 = vmul.f32 %v3318, %v3267
    %v3320 = vmul.f32 %v3318, %v3268
    %3323 = vrot.lane.b32.xlu0 %v3319, 127
    %v3324 = vpop.permute.xlu0 %3323
    %3325 = vrot.lane.b32.xlu0 %v3320, 127
    %v3326 = vpop.permute.xlu0 %3325
    %v3329 = vadd.f32 %v3273, %v3324
    %v3330 = vadd.f32 %v3274, %v3326
    %s3331 = sld [smem:[#allocation4 + $0xa8]]
    %v3332 = vstv %s3331
    %v3333 = vmul.f32 %v3332, %v3267
    %v3334 = vmul.f32 %v3332, %v3268
    %3337 = vrot.lane.b32.xlu0 %v3333, 127
    %v3338 = vpop.permute.xlu0 %3337
    %3339 = vrot.lane.b32.xlu0 %v3334, 127
    %v3340 = vpop.permute.xlu0 %3339
    %v3343 = vadd.f32 %v3279, %v3338
    %v3344 = vadd.f32 %v3280, %v3340
    %s3345 = sld [smem:[#allocation4 + $0xad]]
    %v3346 = vstv %s3345
    %v3347 = vmul.f32 %v3346, %v3267
    %v3348 = vmul.f32 %v3346, %v3268
    %3351 = vrot.lane.b32.xlu0 %v3347, 127
    %v3352 = vpop.permute.xlu0 %3351
    %3353 = vrot.lane.b32.xlu0 %v3348, 127
    %v3354 = vpop.permute.xlu0 %3353
    %v3357 = vadd.f32 %v3285, %v3352
    %v3358 = vadd.f32 %v3286, %v3354
    %s3359 = sld [smem:[#allocation4 + $0xb2]]
    %v3360 = vstv %s3359
    %v3361 = vmul.f32 %v3360, %v3267
    %v3362 = vmul.f32 %v3360, %v3268
    %3365 = vrot.lane.b32.xlu0 %v3361, 127
    %v3366 = vpop.permute.xlu0 %3365
    %3367 = vrot.lane.b32.xlu0 %v3362, 127
    %v3368 = vpop.permute.xlu0 %3367
    %v3371 = vadd.f32 %v3291, %v3366
    %v3372 = vadd.f32 %v3292, %v3368
    %s3373 = sld [smem:[#allocation4 + $0xb7]]
    %v3374 = vstv %s3373
    %v3375 = vmul.f32 %v3374, %v3267
    %v3376 = vmul.f32 %v3374, %v3268
    %3379 = vrot.lane.b32.xlu0 %v3375, 127
    %v3380 = vpop.permute.xlu0 %3379
    %3381 = vrot.lane.b32.xlu0 %v3376, 127
    %v3382 = vpop.permute.xlu0 %3381
    %v3385 = vadd.f32 %v3297, %v3380
    %v3386 = vadd.f32 %v3298, %v3382
    %s3387 = sld [smem:[#allocation4 + $0xbc]]
    %v3388 = vstv %s3387
    %v3389 = vmul.f32 %v3388, %v3267
    %v3390 = vmul.f32 %v3388, %v3268
    %3393 = vrot.lane.b32.xlu0 %v3389, 127
    %v3394 = vpop.permute.xlu0 %3393
    %3395 = vrot.lane.b32.xlu0 %v3390, 127
    %v3396 = vpop.permute.xlu0 %3395
    %v3399 = vadd.f32 %v3303, %v3394
    %v3400 = vadd.f32 %v3304, %v3396
    %s3401 = sld [smem:[#allocation4 + $0xc1]]
    %v3402 = vstv %s3401
    %v3403 = vmul.f32 %v3402, %v3267
    %v3404 = vmul.f32 %v3402, %v3268
    %3407 = vrot.lane.b32.xlu0 %v3403, 127
    %v3408 = vpop.permute.xlu0 %3407
    %3409 = vrot.lane.b32.xlu0 %v3404, 127
    %v3410 = vpop.permute.xlu0 %3409
    %v3413 = vadd.f32 %v3309, %v3408
    %v3414 = vadd.f32 %v3310, %v3410
    %s3415 = sld [smem:[#allocation4 + $0xc6]]
    %v3416 = vstv %s3415
    %v3417 = vmul.f32 %v3416, %v3267
    %v3418 = vmul.f32 %v3416, %v3268
    %3421 = vrot.lane.b32.xlu0 %v3417, 127
    %v3422 = vpop.permute.xlu0 %3421
    %3423 = vrot.lane.b32.xlu0 %v3418, 127
    %v3424 = vpop.permute.xlu0 %3423
    %v3427 = vadd.f32 %v3315, %v3422
    %v3428 = vadd.f32 %v3316, %v3424
    %s3429 = sld [smem:[#allocation4 + $0xcb]]
    %v3430 = vstv %s3429
    %v3431 = vmul.f32 %v3430, %v3267
    %v3432 = vmul.f32 %v3430, %v3268
    %3435 = vrot.lane.b32.xlu0 %v3431, 126
    %v3436 = vpop.permute.xlu0 %3435
    %3437 = vrot.lane.b32.xlu0 %v3432, 126
    %v3438 = vpop.permute.xlu0 %3437
    %v3441 = vadd.f32 %v3329, %v3436
    %v3442 = vadd.f32 %v3330, %v3438
    %s3443 = sld [smem:[#allocation4 + $0xd0]]
    %v3444 = vstv %s3443
    %v3445 = vmul.f32 %v3444, %v3267
    %v3446 = vmul.f32 %v3444, %v3268
    %3449 = vrot.lane.b32.xlu0 %v3445, 126
    %v3450 = vpop.permute.xlu0 %3449
    %3451 = vrot.lane.b32.xlu0 %v3446, 126
    %v3452 = vpop.permute.xlu0 %3451
    %v3455 = vadd.f32 %v3343, %v3450
    %v3456 = vadd.f32 %v3344, %v3452
    %s3457 = sld [smem:[#allocation4 + $0xd5]]
    %v3458 = vstv %s3457
    %v3459 = vmul.f32 %v3458, %v3267
    %v3460 = vmul.f32 %v3458, %v3268
    %3463 = vrot.lane.b32.xlu0 %v3459, 126
    %v3464 = vpop.permute.xlu0 %3463
    %3465 = vrot.lane.b32.xlu0 %v3460, 126
    %v3466 = vpop.permute.xlu0 %3465
    %v3469 = vadd.f32 %v3357, %v3464
    %v3470 = vadd.f32 %v3358, %v3466
    %s3471 = sld [smem:[#allocation4 + $0xda]]
    %v3472 = vstv %s3471
    %v3473 = vmul.f32 %v3472, %v3267
    %v3474 = vmul.f32 %v3472, %v3268
    %3477 = vrot.lane.b32.xlu0 %v3473, 126
    %v3478 = vpop.permute.xlu0 %3477
    %3479 = vrot.lane.b32.xlu0 %v3474, 126
    %v3480 = vpop.permute.xlu0 %3479
    %v3483 = vadd.f32 %v3371, %v3478
    %v3484 = vadd.f32 %v3372, %v3480
    %s3485 = sld [smem:[#allocation4 + $0xdf]]
    %v3486 = vstv %s3485
    %v3487 = vmul.f32 %v3486, %v3267
    %v3488 = vmul.f32 %v3486, %v3268
    %3491 = vrot.lane.b32.xlu0 %v3487, 126
    %v3492 = vpop.permute.xlu0 %3491
    %3493 = vrot.lane.b32.xlu0 %v3488, 126
    %v3494 = vpop.permute.xlu0 %3493
    %v3497 = vadd.f32 %v3385, %v3492
    %v3498 = vadd.f32 %v3386, %v3494
    %s3499 = sld [smem:[#allocation4 + $0xe4]]
    %v3500 = vstv %s3499
    %v3501 = vmul.f32 %v3500, %v3267
    %v3502 = vmul.f32 %v3500, %v3268
    %3505 = vrot.lane.b32.xlu0 %v3501, 126
    %v3506 = vpop.permute.xlu0 %3505
    %3507 = vrot.lane.b32.xlu0 %v3502, 126
    %v3508 = vpop.permute.xlu0 %3507
    %v3511 = vadd.f32 %v3399, %v3506
    %v3512 = vadd.f32 %v3400, %v3508
    %s3513 = sld [smem:[#allocation4 + $0xe9]]
    %v3514 = vstv %s3513
    %v3515 = vmul.f32 %v3514, %v3267
    %v3516 = vmul.f32 %v3514, %v3268
    %3519 = vrot.lane.b32.xlu0 %v3515, 126
    %v3520 = vpop.permute.xlu0 %3519
    %3521 = vrot.lane.b32.xlu0 %v3516, 126
    %v3522 = vpop.permute.xlu0 %3521
    %v3525 = vadd.f32 %v3413, %v3520
    %v3526 = vadd.f32 %v3414, %v3522
    %s3527 = sld [smem:[#allocation4 + $0xee]]
    %v3528 = vstv %s3527
    %v3529 = vmul.f32 %v3528, %v3267
    %v3530 = vmul.f32 %v3528, %v3268
    %3533 = vrot.lane.b32.xlu0 %v3529, 126
    %v3534 = vpop.permute.xlu0 %3533
    %3535 = vrot.lane.b32.xlu0 %v3530, 126
    %v3536 = vpop.permute.xlu0 %3535
    %v3539 = vadd.f32 %v3427, %v3534
    %v3540 = vadd.f32 %v3428, %v3536
    %v3541 = vld [vmem:[%s2992 + $0x2] sm:$0xff]
    %v3542 = vld [vmem:[%s2992 + $0xa] sm:$0xff]
    %s3543 = sld [smem:[#allocation4 + $0xf3]]
    %v3544 = vstv %s3543
    %v3545 = vmul.f32 %v3544, %v3541
    %v3546 = vmul.f32 %v3544, %v3542
    %v3547 = vadd.f32 %v3441, %v3545
    %v3548 = vadd.f32 %v3442, %v3546
    %s3549 = sld [smem:[#allocation4 + $0xf8]]
    %v3550 = vstv %s3549
    %v3551 = vmul.f32 %v3550, %v3541
    %v3552 = vmul.f32 %v3550, %v3542
    %v3553 = vadd.f32 %v3455, %v3551
    %v3554 = vadd.f32 %v3456, %v3552
    %s3555 = sld [smem:[#allocation4 + $0xfd]]
    %v3556 = vstv %s3555
    %v3557 = vmul.f32 %v3556, %v3541
    %v3558 = vmul.f32 %v3556, %v3542
    %v3559 = vadd.f32 %v3469, %v3557
    %v3560 = vadd.f32 %v3470, %v3558
    %s3561 = sld [smem:[#allocation4 + $0x102]]
    %v3562 = vstv %s3561
    %v3563 = vmul.f32 %v3562, %v3541
    %v3564 = vmul.f32 %v3562, %v3542
    %v3565 = vadd.f32 %v3483, %v3563
    %v3566 = vadd.f32 %v3484, %v3564
    %s3567 = sld [smem:[#allocation4 + $0x107]]
    %v3568 = vstv %s3567
    %v3569 = vmul.f32 %v3568, %v3541
    %v3570 = vmul.f32 %v3568, %v3542
    %v3571 = vadd.f32 %v3497, %v3569
    %v3572 = vadd.f32 %v3498, %v3570
    %s3573 = sld [smem:[#allocation4 + $0x10c]]
    %v3574 = vstv %s3573
    %v3575 = vmul.f32 %v3574, %v3541
    %v3576 = vmul.f32 %v3574, %v3542
    %v3577 = vadd.f32 %v3511, %v3575
    %v3578 = vadd.f32 %v3512, %v3576
    %s3579 = sld [smem:[#allocation4 + $0x111]]
    %v3580 = vstv %s3579
    %v3581 = vmul.f32 %v3580, %v3541
    %v3582 = vmul.f32 %v3580, %v3542
    %v3583 = vadd.f32 %v3525, %v3581
    %v3584 = vadd.f32 %v3526, %v3582
    %s3585 = sld [smem:[#allocation4 + $0x116]]
    %v3586 = vstv %s3585
    %v3587 = vmul.f32 %v3586, %v3541
    %v3588 = vmul.f32 %v3586, %v3542
    %v3589 = vadd.f32 %v3539, %v3587
    %v3590 = vadd.f32 %v3540, %v3588
    %s3591 = sld [smem:[#allocation4 + $0x11b]]
    %v3592 = vstv %s3591
    %v3593 = vmul.f32 %v3592, %v3541
    %v3594 = vmul.f32 %v3592, %v3542
    %3597 = vrot.lane.b32.xlu0 %v3593, 127
    %v3598 = vpop.permute.xlu0 %3597
    %3599 = vrot.lane.b32.xlu0 %v3594, 127
    %v3600 = vpop.permute.xlu0 %3599
    %v3603 = vadd.f32 %v3547, %v3598
    %v3604 = vadd.f32 %v3548, %v3600
    %s3605 = sld [smem:[#allocation4 + $0x120]]
    %v3606 = vstv %s3605
    %v3607 = vmul.f32 %v3606, %v3541
    %v3608 = vmul.f32 %v3606, %v3542
    %3611 = vrot.lane.b32.xlu0 %v3607, 127
    %v3612 = vpop.permute.xlu0 %3611
    %3613 = vrot.lane.b32.xlu0 %v3608, 127
    %v3614 = vpop.permute.xlu0 %3613
    %v3617 = vadd.f32 %v3553, %v3612
    %v3618 = vadd.f32 %v3554, %v3614
    %s3619 = sld [smem:[#allocation4 + $0x125]]
    %v3620 = vstv %s3619
    %v3621 = vmul.f32 %v3620, %v3541
    %v3622 = vmul.f32 %v3620, %v3542
    %3625 = vrot.lane.b32.xlu0 %v3621, 127
    %v3626 = vpop.permute.xlu0 %3625
    %3627 = vrot.lane.b32.xlu0 %v3622, 127
    %v3628 = vpop.permute.xlu0 %3627
    %v3631 = vadd.f32 %v3559, %v3626
    %v3632 = vadd.f32 %v3560, %v3628
    %s3633 = sld [smem:[#allocation4 + $0x12a]]
    %v3634 = vstv %s3633
    %v3635 = vmul.f32 %v3634, %v3541
    %v3636 = vmul.f32 %v3634, %v3542
    %3639 = vrot.lane.b32.xlu0 %v3635, 127
    %v3640 = vpop.permute.xlu0 %3639
    %3641 = vrot.lane.b32.xlu0 %v3636, 127
    %v3642 = vpop.permute.xlu0 %3641
    %v3645 = vadd.f32 %v3565, %v3640
    %v3646 = vadd.f32 %v3566, %v3642
    %s3647 = sld [smem:[#allocation4 + $0x12f]]
    %v3648 = vstv %s3647
    %v3649 = vmul.f32 %v3648, %v3541
    %v3650 = vmul.f32 %v3648, %v3542
    %3653 = vrot.lane.b32.xlu0 %v3649, 127
    %v3654 = vpop.permute.xlu0 %3653
    %3655 = vrot.lane.b32.xlu0 %v3650, 127
    %v3656 = vpop.permute.xlu0 %3655
    %v3659 = vadd.f32 %v3571, %v3654
    %v3660 = vadd.f32 %v3572, %v3656
    %s3661 = sld [smem:[#allocation4 + $0x134]]
    %v3662 = vstv %s3661
    %v3663 = vmul.f32 %v3662, %v3541
    %v3664 = vmul.f32 %v3662, %v3542
    %3667 = vrot.lane.b32.xlu0 %v3663, 127
    %v3668 = vpop.permute.xlu0 %3667
    %3669 = vrot.lane.b32.xlu0 %v3664, 127
    %v3670 = vpop.permute.xlu0 %3669
    %v3673 = vadd.f32 %v3577, %v3668
    %v3674 = vadd.f32 %v3578, %v3670
    %s3675 = sld [smem:[#allocation4 + $0x139]]
    %v3676 = vstv %s3675
    %v3677 = vmul.f32 %v3676, %v3541
    %v3678 = vmul.f32 %v3676, %v3542
    %3681 = vrot.lane.b32.xlu0 %v3677, 127
    %v3682 = vpop.permute.xlu0 %3681
    %3683 = vrot.lane.b32.xlu0 %v3678, 127
    %v3684 = vpop.permute.xlu0 %3683
    %v3687 = vadd.f32 %v3583, %v3682
    %v3688 = vadd.f32 %v3584, %v3684
    %s3689 = sld [smem:[#allocation4 + $0x13e]]
    %v3690 = vstv %s3689
    %v3691 = vmul.f32 %v3690, %v3541
    %v3692 = vmul.f32 %v3690, %v3542
    %3695 = vrot.lane.b32.xlu0 %v3691, 127
    %v3696 = vpop.permute.xlu0 %3695
    %3697 = vrot.lane.b32.xlu0 %v3692, 127
    %v3698 = vpop.permute.xlu0 %3697
    %v3701 = vadd.f32 %v3589, %v3696
    %v3702 = vadd.f32 %v3590, %v3698
    %s3703 = sld [smem:[#allocation4 + $0x143]]
    %v3704 = vstv %s3703
    %v3705 = vmul.f32 %v3704, %v3541
    %v3706 = vmul.f32 %v3704, %v3542
    %3709 = vrot.lane.b32.xlu0 %v3705, 126
    %v3710 = vpop.permute.xlu0 %3709
    %3711 = vrot.lane.b32.xlu0 %v3706, 126
    %v3712 = vpop.permute.xlu0 %3711
    %v3715 = vadd.f32 %v3603, %v3710
    %v3716 = vadd.f32 %v3604, %v3712
    %s3717 = sld [smem:[#allocation4 + $0x148]]
    %v3718 = vstv %s3717
    %v3719 = vmul.f32 %v3718, %v3541
    %v3720 = vmul.f32 %v3718, %v3542
    %3723 = vrot.lane.b32.xlu0 %v3719, 126
    %v3724 = vpop.permute.xlu0 %3723
    %3725 = vrot.lane.b32.xlu0 %v3720, 126
    %v3726 = vpop.permute.xlu0 %3725
    %v3729 = vadd.f32 %v3617, %v3724
    %v3730 = vadd.f32 %v3618, %v3726
    %s3731 = sld [smem:[#allocation4 + $0x14d]]
    %v3732 = vstv %s3731
    %v3733 = vmul.f32 %v3732, %v3541
    %v3734 = vmul.f32 %v3732, %v3542
    %3737 = vrot.lane.b32.xlu0 %v3733, 126
    %v3738 = vpop.permute.xlu0 %3737
    %3739 = vrot.lane.b32.xlu0 %v3734, 126
    %v3740 = vpop.permute.xlu0 %3739
    %v3743 = vadd.f32 %v3631, %v3738
    %v3744 = vadd.f32 %v3632, %v3740
    %s3745 = sld [smem:[#allocation4 + $0x152]]
    %v3746 = vstv %s3745
    %v3747 = vmul.f32 %v3746, %v3541
    %v3748 = vmul.f32 %v3746, %v3542
    %3751 = vrot.lane.b32.xlu0 %v3747, 126
    %v3752 = vpop.permute.xlu0 %3751
    %3753 = vrot.lane.b32.xlu0 %v3748, 126
    %v3754 = vpop.permute.xlu0 %3753
    %v3757 = vadd.f32 %v3645, %v3752
    %v3758 = vadd.f32 %v3646, %v3754
    %s3759 = sld [smem:[#allocation4 + $0x157]]
    %v3760 = vstv %s3759
    %v3761 = vmul.f32 %v3760, %v3541
    %v3762 = vmul.f32 %v3760, %v3542
    %3765 = vrot.lane.b32.xlu0 %v3761, 126
    %v3766 = vpop.permute.xlu0 %3765
    %3767 = vrot.lane.b32.xlu0 %v3762, 126
    %v3768 = vpop.permute.xlu0 %3767
    %v3771 = vadd.f32 %v3659, %v3766
    %v3772 = vadd.f32 %v3660, %v3768
    %s3773 = sld [smem:[#allocation4 + $0x15c]]
    %v3774 = vstv %s3773
    %v3775 = vmul.f32 %v3774, %v3541
    %v3776 = vmul.f32 %v3774, %v3542
    %3779 = vrot.lane.b32.xlu0 %v3775, 126
    %v3780 = vpop.permute.xlu0 %3779
    %3781 = vrot.lane.b32.xlu0 %v3776, 126
    %v3782 = vpop.permute.xlu0 %3781
    %v3785 = vadd.f32 %v3673, %v3780
    %v3786 = vadd.f32 %v3674, %v3782
    %s3787 = sld [smem:[#allocation4 + $0x161]]
    %v3788 = vstv %s3787
    %v3789 = vmul.f32 %v3788, %v3541
    %v3790 = vmul.f32 %v3788, %v3542
    %3793 = vrot.lane.b32.xlu0 %v3789, 126
    %v3794 = vpop.permute.xlu0 %3793
    %3795 = vrot.lane.b32.xlu0 %v3790, 126
    %v3796 = vpop.permute.xlu0 %3795
    %v3799 = vadd.f32 %v3687, %v3794
    %v3800 = vadd.f32 %v3688, %v3796
    %s3801 = sld [smem:[#allocation4 + $0x166]]
    %v3802 = vstv %s3801
    %v3803 = vmul.f32 %v3802, %v3541
    %v3804 = vmul.f32 %v3802, %v3542
    %3807 = vrot.lane.b32.xlu0 %v3803, 126
    %v3808 = vpop.permute.xlu0 %3807
    %3809 = vrot.lane.b32.xlu0 %v3804, 126
    %v3810 = vpop.permute.xlu0 %3809
    %v3813 = vadd.f32 %v3701, %v3808
    %v3814 = vadd.f32 %v3702, %v3810
    %s3815 = scalar_lea.vmem %s1, 72
    %v3816 = vld [vmem:[%s3815] sm:$0xff]
    %v3817 = vld [vmem:[%s3815 + $0x8] sm:$0xff]
    %s3818 = sld [smem:[#allocation4 + $0x4]]
    %v3819 = vstv %s3818
    %v3820 = vmul.f32 %v3819, %v3816
    %v3821 = vmul.f32 %v3819, %v3817
    %v3822 = vadd.f32 %v3715, %v3820
    %v3823 = vadd.f32 %v3716, %v3821
    %s3824 = sld [smem:[#allocation4 + $0x9]]
    %v3825 = vstv %s3824
    %v3826 = vmul.f32 %v3825, %v3816
    %v3827 = vmul.f32 %v3825, %v3817
    %v3828 = vadd.f32 %v3729, %v3826
    %v3829 = vadd.f32 %v3730, %v3827
    %s3830 = sld [smem:[#allocation4 + $0xe]]
    %v3831 = vstv %s3830
    %v3832 = vmul.f32 %v3831, %v3816
    %v3833 = vmul.f32 %v3831, %v3817
    %v3834 = vadd.f32 %v3743, %v3832
    %v3835 = vadd.f32 %v3744, %v3833
    %s3836 = sld [smem:[#allocation4 + $0x13]]
    %v3837 = vstv %s3836
    %v3838 = vmul.f32 %v3837, %v3816
    %v3839 = vmul.f32 %v3837, %v3817
    %v3840 = vadd.f32 %v3757, %v3838
    %v3841 = vadd.f32 %v3758, %v3839
    %s3842 = sld [smem:[#allocation4 + $0x18]]
    %v3843 = vstv %s3842
    %v3844 = vmul.f32 %v3843, %v3816
    %v3845 = vmul.f32 %v3843, %v3817
    %v3846 = vadd.f32 %v3771, %v3844
    %v3847 = vadd.f32 %v3772, %v3845
    %s3848 = sld [smem:[#allocation4 + $0x1d]]
    %v3849 = vstv %s3848
    %v3850 = vmul.f32 %v3849, %v3816
    %v3851 = vmul.f32 %v3849, %v3817
    %v3852 = vadd.f32 %v3785, %v3850
    %v3853 = vadd.f32 %v3786, %v3851
    %s3854 = sld [smem:[#allocation4 + $0x22]]
    %v3855 = vstv %s3854
    %v3856 = vmul.f32 %v3855, %v3816
    %v3857 = vmul.f32 %v3855, %v3817
    %v3858 = vadd.f32 %v3799, %v3856
    %v3859 = vadd.f32 %v3800, %v3857
    %s3860 = sld [smem:[#allocation4 + $0x27]]
    %v3861 = vstv %s3860
    %v3862 = vmul.f32 %v3861, %v3816
    %v3863 = vmul.f32 %v3861, %v3817
    %v3864 = vadd.f32 %v3813, %v3862
    %v3865 = vadd.f32 %v3814, %v3863
    %s3866 = sld [smem:[#allocation4 + $0x2c]]
    %v3867 = vstv %s3866
    %v3868 = vmul.f32 %v3867, %v3816
    %v3869 = vmul.f32 %v3867, %v3817
    %3872 = vrot.lane.b32.xlu0 %v3868, 127
    %v3873 = vpop.permute.xlu0 %3872
    %3874 = vrot.lane.b32.xlu0 %v3869, 127
    %v3875 = vpop.permute.xlu0 %3874
    %v3878 = vadd.f32 %v3822, %v3873
    %v3879 = vadd.f32 %v3823, %v3875
    %s3880 = sld [smem:[#allocation4 + $0x31]]
    %v3881 = vstv %s3880
    %v3882 = vmul.f32 %v3881, %v3816
    %v3883 = vmul.f32 %v3881, %v3817
    %3886 = vrot.lane.b32.xlu0 %v3882, 127
    %v3887 = vpop.permute.xlu0 %3886
    %3888 = vrot.lane.b32.xlu0 %v3883, 127
    %v3889 = vpop.permute.xlu0 %3888
    %v3892 = vadd.f32 %v3828, %v3887
    %v3893 = vadd.f32 %v3829, %v3889
    %s3894 = sld [smem:[#allocation4 + $0x36]]
    %v3895 = vstv %s3894
    %v3896 = vmul.f32 %v3895, %v3816
    %v3897 = vmul.f32 %v3895, %v3817
    %3900 = vrot.lane.b32.xlu0 %v3896, 127
    %v3901 = vpop.permute.xlu0 %3900
    %3902 = vrot.lane.b32.xlu0 %v3897, 127
    %v3903 = vpop.permute.xlu0 %3902
    %v3906 = vadd.f32 %v3834, %v3901
    %v3907 = vadd.f32 %v3835, %v3903
    %s3908 = sld [smem:[#allocation4 + $0x3b]]
    %v3909 = vstv %s3908
    %v3910 = vmul.f32 %v3909, %v3816
    %v3911 = vmul.f32 %v3909, %v3817
    %3914 = vrot.lane.b32.xlu0 %v3910, 127
    %v3915 = vpop.permute.xlu0 %3914
    %3916 = vrot.lane.b32.xlu0 %v3911, 127
    %v3917 = vpop.permute.xlu0 %3916
    %v3920 = vadd.f32 %v3840, %v3915
    %v3921 = vadd.f32 %v3841, %v3917
    %s3922 = sld [smem:[#allocation4 + $0x40]]
    %v3923 = vstv %s3922
    %v3924 = vmul.f32 %v3923, %v3816
    %v3925 = vmul.f32 %v3923, %v3817
    %3928 = vrot.lane.b32.xlu0 %v3924, 127
    %v3929 = vpop.permute.xlu0 %3928
    %3930 = vrot.lane.b32.xlu0 %v3925, 127
    %v3931 = vpop.permute.xlu0 %3930
    %v3934 = vadd.f32 %v3846, %v3929
    %v3935 = vadd.f32 %v3847, %v3931
    %s3936 = sld [smem:[#allocation4 + $0x45]]
    %v3937 = vstv %s3936
    %v3938 = vmul.f32 %v3937, %v3816
    %v3939 = vmul.f32 %v3937, %v3817
    %3942 = vrot.lane.b32.xlu0 %v3938, 127
    %v3943 = vpop.permute.xlu0 %3942
    %3944 = vrot.lane.b32.xlu0 %v3939, 127
    %v3945 = vpop.permute.xlu0 %3944
    %v3948 = vadd.f32 %v3852, %v3943
    %v3949 = vadd.f32 %v3853, %v3945
    %s3950 = sld [smem:[#allocation4 + $0x4a]]
    %v3951 = vstv %s3950
    %v3952 = vmul.f32 %v3951, %v3816
    %v3953 = vmul.f32 %v3951, %v3817
    %3956 = vrot.lane.b32.xlu0 %v3952, 127
    %v3957 = vpop.permute.xlu0 %3956
    %3958 = vrot.lane.b32.xlu0 %v3953, 127
    %v3959 = vpop.permute.xlu0 %3958
    %v3962 = vadd.f32 %v3858, %v3957
    %v3963 = vadd.f32 %v3859, %v3959
    %s3964 = sld [smem:[#allocation4 + $0x4f]]
    %v3965 = vstv %s3964
    %v3966 = vmul.f32 %v3965, %v3816
    %v3967 = vmul.f32 %v3965, %v3817
    %3970 = vrot.lane.b32.xlu0 %v3966, 127
    %v3971 = vpop.permute.xlu0 %3970
    %3972 = vrot.lane.b32.xlu0 %v3967, 127
    %v3973 = vpop.permute.xlu0 %3972
    %v3976 = vadd.f32 %v3864, %v3971
    %v3977 = vadd.f32 %v3865, %v3973
    %s3978 = sld [smem:[#allocation4 + $0x54]]
    %v3979 = vstv %s3978
    %v3980 = vmul.f32 %v3979, %v3816
    %v3981 = vmul.f32 %v3979, %v3817
    %3984 = vrot.lane.b32.xlu0 %v3980, 126
    %v3985 = vpop.permute.xlu0 %3984
    %3986 = vrot.lane.b32.xlu0 %v3981, 126
    %v3987 = vpop.permute.xlu0 %3986
    %v3990 = vadd.f32 %v3878, %v3985
    %v3991 = vadd.f32 %v3879, %v3987
    %s3992 = sld [smem:[#allocation4 + $0x59]]
    %v3993 = vstv %s3992
    %v3994 = vmul.f32 %v3993, %v3816
    %v3995 = vmul.f32 %v3993, %v3817
    %3998 = vrot.lane.b32.xlu0 %v3994, 126
    %v3999 = vpop.permute.xlu0 %3998
    %4000 = vrot.lane.b32.xlu0 %v3995, 126
    %v4001 = vpop.permute.xlu0 %4000
    %v4004 = vadd.f32 %v3892, %v3999
    %v4005 = vadd.f32 %v3893, %v4001
    %s4006 = sld [smem:[#allocation4 + $0x5e]]
    %v4007 = vstv %s4006
    %v4008 = vmul.f32 %v4007, %v3816
    %v4009 = vmul.f32 %v4007, %v3817
    %4012 = vrot.lane.b32.xlu0 %v4008, 126
    %v4013 = vpop.permute.xlu0 %4012
    %4014 = vrot.lane.b32.xlu0 %v4009, 126
    %v4015 = vpop.permute.xlu0 %4014
    %v4018 = vadd.f32 %v3906, %v4013
    %v4019 = vadd.f32 %v3907, %v4015
    %s4020 = sld [smem:[#allocation4 + $0x63]]
    %v4021 = vstv %s4020
    %v4022 = vmul.f32 %v4021, %v3816
    %v4023 = vmul.f32 %v4021, %v3817
    %4026 = vrot.lane.b32.xlu0 %v4022, 126
    %v4027 = vpop.permute.xlu0 %4026
    %4028 = vrot.lane.b32.xlu0 %v4023, 126
    %v4029 = vpop.permute.xlu0 %4028
    %v4032 = vadd.f32 %v3920, %v4027
    %v4033 = vadd.f32 %v3921, %v4029
    %s4034 = sld [smem:[#allocation4 + $0x68]]
    %v4035 = vstv %s4034
    %v4036 = vmul.f32 %v4035, %v3816
    %v4037 = vmul.f32 %v4035, %v3817
    %4040 = vrot.lane.b32.xlu0 %v4036, 126
    %v4041 = vpop.permute.xlu0 %4040
    %4042 = vrot.lane.b32.xlu0 %v4037, 126
    %v4043 = vpop.permute.xlu0 %4042
    %v4046 = vadd.f32 %v3934, %v4041
    %v4047 = vadd.f32 %v3935, %v4043
    %s4048 = sld [smem:[#allocation4 + $0x6d]]
    %v4049 = vstv %s4048
    %v4050 = vmul.f32 %v4049, %v3816
    %v4051 = vmul.f32 %v4049, %v3817
    %4054 = vrot.lane.b32.xlu0 %v4050, 126
    %v4055 = vpop.permute.xlu0 %4054
    %4056 = vrot.lane.b32.xlu0 %v4051, 126
    %v4057 = vpop.permute.xlu0 %4056
    %v4060 = vadd.f32 %v3948, %v4055
    %v4061 = vadd.f32 %v3949, %v4057
    %s4062 = sld [smem:[#allocation4 + $0x72]]
    %v4063 = vstv %s4062
    %v4064 = vmul.f32 %v4063, %v3816
    %v4065 = vmul.f32 %v4063, %v3817
    %4068 = vrot.lane.b32.xlu0 %v4064, 126
    %v4069 = vpop.permute.xlu0 %4068
    %4070 = vrot.lane.b32.xlu0 %v4065, 126
    %v4071 = vpop.permute.xlu0 %4070
    %v4074 = vadd.f32 %v3962, %v4069
    %v4075 = vadd.f32 %v3963, %v4071
    %s4076 = sld [smem:[#allocation4 + $0x77]]
    %v4077 = vstv %s4076
    %v4078 = vmul.f32 %v4077, %v3816
    %v4079 = vmul.f32 %v4077, %v3817
    %4082 = vrot.lane.b32.xlu0 %v4078, 126
    %v4083 = vpop.permute.xlu0 %4082
    %4084 = vrot.lane.b32.xlu0 %v4079, 126
    %v4085 = vpop.permute.xlu0 %4084
    %v4088 = vadd.f32 %v3976, %v4083
    %v4089 = vadd.f32 %v3977, %v4085
    %v4090 = vld [vmem:[%s3815 + $0x1] sm:$0xff]
    %v4091 = vld [vmem:[%s3815 + $0x9] sm:$0xff]
    %s4092 = sld [smem:[#allocation4 + $0x7c]]
    %v4093 = vstv %s4092
    %v4094 = vmul.f32 %v4093, %v4090
    %v4095 = vmul.f32 %v4093, %v4091
    %v4096 = vadd.f32 %v3990, %v4094
    %v4097 = vadd.f32 %v3991, %v4095
    %s4098 = sld [smem:[#allocation4 + $0x81]]
    %v4099 = vstv %s4098
    %v4100 = vmul.f32 %v4099, %v4090
    %v4101 = vmul.f32 %v4099, %v4091
    %v4102 = vadd.f32 %v4004, %v4100
    %v4103 = vadd.f32 %v4005, %v4101
    %s4104 = sld [smem:[#allocation4 + $0x86]]
    %v4105 = vstv %s4104
    %v4106 = vmul.f32 %v4105, %v4090
    %v4107 = vmul.f32 %v4105, %v4091
    %v4108 = vadd.f32 %v4018, %v4106
    %v4109 = vadd.f32 %v4019, %v4107
    %s4110 = sld [smem:[#allocation4 + $0x8b]]
    %v4111 = vstv %s4110
    %v4112 = vmul.f32 %v4111, %v4090
    %v4113 = vmul.f32 %v4111, %v4091
    %v4114 = vadd.f32 %v4032, %v4112
    %v4115 = vadd.f32 %v4033, %v4113
    %s4116 = sld [smem:[#allocation4 + $0x90]]
    %v4117 = vstv %s4116
    %v4118 = vmul.f32 %v4117, %v4090
    %v4119 = vmul.f32 %v4117, %v4091
    %v4120 = vadd.f32 %v4046, %v4118
    %v4121 = vadd.f32 %v4047, %v4119
    %s4122 = sld [smem:[#allocation4 + $0x95]]
    %v4123 = vstv %s4122
    %v4124 = vmul.f32 %v4123, %v4090
    %v4125 = vmul.f32 %v4123, %v4091
    %v4126 = vadd.f32 %v4060, %v4124
    %v4127 = vadd.f32 %v4061, %v4125
    %s4128 = sld [smem:[#allocation4 + $0x9a]]
    %v4129 = vstv %s4128
    %v4130 = vmul.f32 %v4129, %v4090
    %v4131 = vmul.f32 %v4129, %v4091
    %v4132 = vadd.f32 %v4074, %v4130
    %v4133 = vadd.f32 %v4075, %v4131
    %s4134 = sld [smem:[#allocation4 + $0x9f]]
    %v4135 = vstv %s4134
    %v4136 = vmul.f32 %v4135, %v4090
    %v4137 = vmul.f32 %v4135, %v4091
    %v4138 = vadd.f32 %v4088, %v4136
    %v4139 = vadd.f32 %v4089, %v4137
    %s4140 = sld [smem:[#allocation4 + $0xa4]]
    %v4141 = vstv %s4140
    %v4142 = vmul.f32 %v4141, %v4090
    %v4143 = vmul.f32 %v4141, %v4091
    %4146 = vrot.lane.b32.xlu0 %v4142, 127
    %v4147 = vpop.permute.xlu0 %4146
    %4148 = vrot.lane.b32.xlu0 %v4143, 127
    %v4149 = vpop.permute.xlu0 %4148
    %v4152 = vadd.f32 %v4096, %v4147
    %v4153 = vadd.f32 %v4097, %v4149
    %s4154 = sld [smem:[#allocation4 + $0xa9]]
    %v4155 = vstv %s4154
    %v4156 = vmul.f32 %v4155, %v4090
    %v4157 = vmul.f32 %v4155, %v4091
    %4160 = vrot.lane.b32.xlu0 %v4156, 127
    %v4161 = vpop.permute.xlu0 %4160
    %4162 = vrot.lane.b32.xlu0 %v4157, 127
    %v4163 = vpop.permute.xlu0 %4162
    %v4166 = vadd.f32 %v4102, %v4161
    %v4167 = vadd.f32 %v4103, %v4163
    %s4168 = sld [smem:[#allocation4 + $0xae]]
    %v4169 = vstv %s4168
    %v4170 = vmul.f32 %v4169, %v4090
    %v4171 = vmul.f32 %v4169, %v4091
    %4174 = vrot.lane.b32.xlu0 %v4170, 127
    %v4175 = vpop.permute.xlu0 %4174
    %4176 = vrot.lane.b32.xlu0 %v4171, 127
    %v4177 = vpop.permute.xlu0 %4176
    %v4180 = vadd.f32 %v4108, %v4175
    %v4181 = vadd.f32 %v4109, %v4177
    %s4182 = sld [smem:[#allocation4 + $0xb3]]
    %v4183 = vstv %s4182
    %v4184 = vmul.f32 %v4183, %v4090
    %v4185 = vmul.f32 %v4183, %v4091
    %4188 = vrot.lane.b32.xlu0 %v4184, 127
    %v4189 = vpop.permute.xlu0 %4188
    %4190 = vrot.lane.b32.xlu0 %v4185, 127
    %v4191 = vpop.permute.xlu0 %4190
    %v4194 = vadd.f32 %v4114, %v4189
    %v4195 = vadd.f32 %v4115, %v4191
    %s4196 = sld [smem:[#allocation4 + $0xb8]]
    %v4197 = vstv %s4196
    %v4198 = vmul.f32 %v4197, %v4090
    %v4199 = vmul.f32 %v4197, %v4091
    %4202 = vrot.lane.b32.xlu0 %v4198, 127
    %v4203 = vpop.permute.xlu0 %4202
    %4204 = vrot.lane.b32.xlu0 %v4199, 127
    %v4205 = vpop.permute.xlu0 %4204
    %v4208 = vadd.f32 %v4120, %v4203
    %v4209 = vadd.f32 %v4121, %v4205
    %s4210 = sld [smem:[#allocation4 + $0xbd]]
    %v4211 = vstv %s4210
    %v4212 = vmul.f32 %v4211, %v4090
    %v4213 = vmul.f32 %v4211, %v4091
    %4216 = vrot.lane.b32.xlu0 %v4212, 127
    %v4217 = vpop.permute.xlu0 %4216
    %4218 = vrot.lane.b32.xlu0 %v4213, 127
    %v4219 = vpop.permute.xlu0 %4218
    %v4222 = vadd.f32 %v4126, %v4217
    %v4223 = vadd.f32 %v4127, %v4219
    %s4224 = sld [smem:[#allocation4 + $0xc2]]
    %v4225 = vstv %s4224
    %v4226 = vmul.f32 %v4225, %v4090
    %v4227 = vmul.f32 %v4225, %v4091
    %4230 = vrot.lane.b32.xlu0 %v4226, 127
    %v4231 = vpop.permute.xlu0 %4230
    %4232 = vrot.lane.b32.xlu0 %v4227, 127
    %v4233 = vpop.permute.xlu0 %4232
    %v4236 = vadd.f32 %v4132, %v4231
    %v4237 = vadd.f32 %v4133, %v4233
    %s4238 = sld [smem:[#allocation4 + $0xc7]]
    %v4239 = vstv %s4238
    %v4240 = vmul.f32 %v4239, %v4090
    %v4241 = vmul.f32 %v4239, %v4091
    %4244 = vrot.lane.b32.xlu0 %v4240, 127
    %v4245 = vpop.permute.xlu0 %4244
    %4246 = vrot.lane.b32.xlu0 %v4241, 127
    %v4247 = vpop.permute.xlu0 %4246
    %v4250 = vadd.f32 %v4138, %v4245
    %v4251 = vadd.f32 %v4139, %v4247
    %s4252 = sld [smem:[#allocation4 + $0xcc]]
    %v4253 = vstv %s4252
    %v4254 = vmul.f32 %v4253, %v4090
    %v4255 = vmul.f32 %v4253, %v4091
    %4258 = vrot.lane.b32.xlu0 %v4254, 126
    %v4259 = vpop.permute.xlu0 %4258
    %4260 = vrot.lane.b32.xlu0 %v4255, 126
    %v4261 = vpop.permute.xlu0 %4260
    %v4264 = vadd.f32 %v4152, %v4259
    %v4265 = vadd.f32 %v4153, %v4261
    %s4266 = sld [smem:[#allocation4 + $0xd1]]
    %v4267 = vstv %s4266
    %v4268 = vmul.f32 %v4267, %v4090
    %v4269 = vmul.f32 %v4267, %v4091
    %4272 = vrot.lane.b32.xlu0 %v4268, 126
    %v4273 = vpop.permute.xlu0 %4272
    %4274 = vrot.lane.b32.xlu0 %v4269, 126
    %v4275 = vpop.permute.xlu0 %4274
    %v4278 = vadd.f32 %v4166, %v4273
    %v4279 = vadd.f32 %v4167, %v4275
    %s4280 = sld [smem:[#allocation4 + $0xd6]]
    %v4281 = vstv %s4280
    %v4282 = vmul.f32 %v4281, %v4090
    %v4283 = vmul.f32 %v4281, %v4091
    %4286 = vrot.lane.b32.xlu0 %v4282, 126
    %v4287 = vpop.permute.xlu0 %4286
    %4288 = vrot.lane.b32.xlu0 %v4283, 126
    %v4289 = vpop.permute.xlu0 %4288
    %v4292 = vadd.f32 %v4180, %v4287
    %v4293 = vadd.f32 %v4181, %v4289
    %s4294 = sld [smem:[#allocation4 + $0xdb]]
    %v4295 = vstv %s4294
    %v4296 = vmul.f32 %v4295, %v4090
    %v4297 = vmul.f32 %v4295, %v4091
    %4300 = vrot.lane.b32.xlu0 %v4296, 126
    %v4301 = vpop.permute.xlu0 %4300
    %4302 = vrot.lane.b32.xlu0 %v4297, 126
    %v4303 = vpop.permute.xlu0 %4302
    %v4306 = vadd.f32 %v4194, %v4301
    %v4307 = vadd.f32 %v4195, %v4303
    %s4308 = sld [smem:[#allocation4 + $0xe0]]
    %v4309 = vstv %s4308
    %v4310 = vmul.f32 %v4309, %v4090
    %v4311 = vmul.f32 %v4309, %v4091
    %4314 = vrot.lane.b32.xlu0 %v4310, 126
    %v4315 = vpop.permute.xlu0 %4314
    %4316 = vrot.lane.b32.xlu0 %v4311, 126
    %v4317 = vpop.permute.xlu0 %4316
    %v4320 = vadd.f32 %v4208, %v4315
    %v4321 = vadd.f32 %v4209, %v4317
    %s4322 = sld [smem:[#allocation4 + $0xe5]]
    %v4323 = vstv %s4322
    %v4324 = vmul.f32 %v4323, %v4090
    %v4325 = vmul.f32 %v4323, %v4091
    %4328 = vrot.lane.b32.xlu0 %v4324, 126
    %v4329 = vpop.permute.xlu0 %4328
    %4330 = vrot.lane.b32.xlu0 %v4325, 126
    %v4331 = vpop.permute.xlu0 %4330
    %v4334 = vadd.f32 %v4222, %v4329
    %v4335 = vadd.f32 %v4223, %v4331
    %s4336 = sld [smem:[#allocation4 + $0xea]]
    %v4337 = vstv %s4336
    %v4338 = vmul.f32 %v4337, %v4090
    %v4339 = vmul.f32 %v4337, %v4091
    %4342 = vrot.lane.b32.xlu0 %v4338, 126
    %v4343 = vpop.permute.xlu0 %4342
    %4344 = vrot.lane.b32.xlu0 %v4339, 126
    %v4345 = vpop.permute.xlu0 %4344
    %v4348 = vadd.f32 %v4236, %v4343
    %v4349 = vadd.f32 %v4237, %v4345
    %s4350 = sld [smem:[#allocation4 + $0xef]]
    %v4351 = vstv %s4350
    %v4352 = vmul.f32 %v4351, %v4090
    %v4353 = vmul.f32 %v4351, %v4091
    %4356 = vrot.lane.b32.xlu0 %v4352, 126
    %v4357 = vpop.permute.xlu0 %4356
    %4358 = vrot.lane.b32.xlu0 %v4353, 126
    %v4359 = vpop.permute.xlu0 %4358
    %v4362 = vadd.f32 %v4250, %v4357
    %v4363 = vadd.f32 %v4251, %v4359
    %v4364 = vld [vmem:[%s3815 + $0x2] sm:$0xff]
    %v4365 = vld [vmem:[%s3815 + $0xa] sm:$0xff]
    %s4366 = sld [smem:[#allocation4 + $0xf4]]
    %v4367 = vstv %s4366
    %v4368 = vmul.f32 %v4367, %v4364
    %v4369 = vmul.f32 %v4367, %v4365
    %v4370 = vadd.f32 %v4264, %v4368
    %v4371 = vadd.f32 %v4265, %v4369
    %s4372 = sld [smem:[#allocation4 + $0xf9]]
    %v4373 = vstv %s4372
    %v4374 = vmul.f32 %v4373, %v4364
    %v4375 = vmul.f32 %v4373, %v4365
    %v4376 = vadd.f32 %v4278, %v4374
    %v4377 = vadd.f32 %v4279, %v4375
    %s4378 = sld [smem:[#allocation4 + $0xfe]]
    %v4379 = vstv %s4378
    %v4380 = vmul.f32 %v4379, %v4364
    %v4381 = vmul.f32 %v4379, %v4365
    %v4382 = vadd.f32 %v4292, %v4380
    %v4383 = vadd.f32 %v4293, %v4381
    %s4384 = sld [smem:[#allocation4 + $0x103]]
    %v4385 = vstv %s4384
    %v4386 = vmul.f32 %v4385, %v4364
    %v4387 = vmul.f32 %v4385, %v4365
    %v4388 = vadd.f32 %v4306, %v4386
    %v4389 = vadd.f32 %v4307, %v4387
    %s4390 = sld [smem:[#allocation4 + $0x108]]
    %v4391 = vstv %s4390
    %v4392 = vmul.f32 %v4391, %v4364
    %v4393 = vmul.f32 %v4391, %v4365
    %v4394 = vadd.f32 %v4320, %v4392
    %v4395 = vadd.f32 %v4321, %v4393
    %s4396 = sld [smem:[#allocation4 + $0x10d]]
    %v4397 = vstv %s4396
    %v4398 = vmul.f32 %v4397, %v4364
    %v4399 = vmul.f32 %v4397, %v4365
    %v4400 = vadd.f32 %v4334, %v4398
    %v4401 = vadd.f32 %v4335, %v4399
    %s4402 = sld [smem:[#allocation4 + $0x112]]
    %v4403 = vstv %s4402
    %v4404 = vmul.f32 %v4403, %v4364
    %v4405 = vmul.f32 %v4403, %v4365
    %v4406 = vadd.f32 %v4348, %v4404
    %v4407 = vadd.f32 %v4349, %v4405
    %s4408 = sld [smem:[#allocation4 + $0x117]]
    %v4409 = vstv %s4408
    %v4410 = vmul.f32 %v4409, %v4364
    %v4411 = vmul.f32 %v4409, %v4365
    %v4412 = vadd.f32 %v4362, %v4410
    %v4413 = vadd.f32 %v4363, %v4411
    %s4414 = sld [smem:[#allocation4 + $0x11c]]
    %v4415 = vstv %s4414
    %v4416 = vmul.f32 %v4415, %v4364
    %v4417 = vmul.f32 %v4415, %v4365
    %4420 = vrot.lane.b32.xlu0 %v4416, 127
    %v4421 = vpop.permute.xlu0 %4420
    %4422 = vrot.lane.b32.xlu0 %v4417, 127
    %v4423 = vpop.permute.xlu0 %4422
    %v4426 = vadd.f32 %v4370, %v4421
    %v4427 = vadd.f32 %v4371, %v4423
    %s4428 = sld [smem:[#allocation4 + $0x121]]
    %v4429 = vstv %s4428
    %v4430 = vmul.f32 %v4429, %v4364
    %v4431 = vmul.f32 %v4429, %v4365
    %4434 = vrot.lane.b32.xlu0 %v4430, 127
    %v4435 = vpop.permute.xlu0 %4434
    %4436 = vrot.lane.b32.xlu0 %v4431, 127
    %v4437 = vpop.permute.xlu0 %4436
    %v4440 = vadd.f32 %v4376, %v4435
    %v4441 = vadd.f32 %v4377, %v4437
    %s4442 = sld [smem:[#allocation4 + $0x126]]
    %v4443 = vstv %s4442
    %v4444 = vmul.f32 %v4443, %v4364
    %v4445 = vmul.f32 %v4443, %v4365
    %4448 = vrot.lane.b32.xlu0 %v4444, 127
    %v4449 = vpop.permute.xlu0 %4448
    %4450 = vrot.lane.b32.xlu0 %v4445, 127
    %v4451 = vpop.permute.xlu0 %4450
    %v4454 = vadd.f32 %v4382, %v4449
    %v4455 = vadd.f32 %v4383, %v4451
    %s4456 = sld [smem:[#allocation4 + $0x12b]]
    %v4457 = vstv %s4456
    %v4458 = vmul.f32 %v4457, %v4364
    %v4459 = vmul.f32 %v4457, %v4365
    %4462 = vrot.lane.b32.xlu0 %v4458, 127
    %v4463 = vpop.permute.xlu0 %4462
    %4464 = vrot.lane.b32.xlu0 %v4459, 127
    %v4465 = vpop.permute.xlu0 %4464
    %v4468 = vadd.f32 %v4388, %v4463
    %v4469 = vadd.f32 %v4389, %v4465
    %s4470 = sld [smem:[#allocation4 + $0x130]]
    %v4471 = vstv %s4470
    %v4472 = vmul.f32 %v4471, %v4364
    %v4473 = vmul.f32 %v4471, %v4365
    %4476 = vrot.lane.b32.xlu0 %v4472, 127
    %v4477 = vpop.permute.xlu0 %4476
    %4478 = vrot.lane.b32.xlu0 %v4473, 127
    %v4479 = vpop.permute.xlu0 %4478
    %v4482 = vadd.f32 %v4394, %v4477
    %v4483 = vadd.f32 %v4395, %v4479
    %s4484 = sld [smem:[#allocation4 + $0x135]]
    %v4485 = vstv %s4484
    %v4486 = vmul.f32 %v4485, %v4364
    %v4487 = vmul.f32 %v4485, %v4365
    %4490 = vrot.lane.b32.xlu0 %v4486, 127
    %v4491 = vpop.permute.xlu0 %4490
    %4492 = vrot.lane.b32.xlu0 %v4487, 127
    %v4493 = vpop.permute.xlu0 %4492
    %v4496 = vadd.f32 %v4400, %v4491
    %v4497 = vadd.f32 %v4401, %v4493
    %s4498 = sld [smem:[#allocation4 + $0x13a]]
    %v4499 = vstv %s4498
    %v4500 = vmul.f32 %v4499, %v4364
    %v4501 = vmul.f32 %v4499, %v4365
    %4504 = vrot.lane.b32.xlu0 %v4500, 127
    %v4505 = vpop.permute.xlu0 %4504
    %4506 = vrot.lane.b32.xlu0 %v4501, 127
    %v4507 = vpop.permute.xlu0 %4506
    %v4510 = vadd.f32 %v4406, %v4505
    %v4511 = vadd.f32 %v4407, %v4507
    %s4512 = sld [smem:[#allocation4 + $0x13f]]
    %v4513 = vstv %s4512
    %v4514 = vmul.f32 %v4513, %v4364
    %v4515 = vmul.f32 %v4513, %v4365
    %4518 = vrot.lane.b32.xlu0 %v4514, 127
    %v4519 = vpop.permute.xlu0 %4518
    %4520 = vrot.lane.b32.xlu0 %v4515, 127
    %v4521 = vpop.permute.xlu0 %4520
    %v4524 = vadd.f32 %v4412, %v4519
    %v4525 = vadd.f32 %v4413, %v4521
    %s4526 = sld [smem:[#allocation4 + $0x144]]
    %v4527 = vstv %s4526
    %v4528 = vmul.f32 %v4527, %v4364
    %v4529 = vmul.f32 %v4527, %v4365
    %4532 = vrot.lane.b32.xlu0 %v4528, 126
    %v4533 = vpop.permute.xlu0 %4532
    %4534 = vrot.lane.b32.xlu0 %v4529, 126
    %v4535 = vpop.permute.xlu0 %4534
    %v4538 = vadd.f32 %v4426, %v4533
    %v4539 = vadd.f32 %v4427, %v4535
    %s4540 = sld [smem:[#allocation4 + $0x149]]
    %v4541 = vstv %s4540
    %v4542 = vmul.f32 %v4541, %v4364
    %v4543 = vmul.f32 %v4541, %v4365
    %4546 = vrot.lane.b32.xlu0 %v4542, 126
    %v4547 = vpop.permute.xlu0 %4546
    %4548 = vrot.lane.b32.xlu0 %v4543, 126
    %v4549 = vpop.permute.xlu0 %4548
    %v4552 = vadd.f32 %v4440, %v4547
    %v4553 = vadd.f32 %v4441, %v4549
    %s4554 = sld [smem:[#allocation4 + $0x14e]]
    %v4555 = vstv %s4554
    %v4556 = vmul.f32 %v4555, %v4364
    %v4557 = vmul.f32 %v4555, %v4365
    %4560 = vrot.lane.b32.xlu0 %v4556, 126
    %v4561 = vpop.permute.xlu0 %4560
    %4562 = vrot.lane.b32.xlu0 %v4557, 126
    %v4563 = vpop.permute.xlu0 %4562
    %v4566 = vadd.f32 %v4454, %v4561
    %v4567 = vadd.f32 %v4455, %v4563
    %s4568 = sld [smem:[#allocation4 + $0x153]]
    %v4569 = vstv %s4568
    %v4570 = vmul.f32 %v4569, %v4364
    %v4571 = vmul.f32 %v4569, %v4365
    %4574 = vrot.lane.b32.xlu0 %v4570, 126
    %v4575 = vpop.permute.xlu0 %4574
    %4576 = vrot.lane.b32.xlu0 %v4571, 126
    %v4577 = vpop.permute.xlu0 %4576
    %v4580 = vadd.f32 %v4468, %v4575
    %v4581 = vadd.f32 %v4469, %v4577
    %s4582 = sld [smem:[#allocation4 + $0x158]]
    %v4583 = vstv %s4582
    %v4584 = vmul.f32 %v4583, %v4364
    %v4585 = vmul.f32 %v4583, %v4365
    %4588 = vrot.lane.b32.xlu0 %v4584, 126
    %v4589 = vpop.permute.xlu0 %4588
    %4590 = vrot.lane.b32.xlu0 %v4585, 126
    %v4591 = vpop.permute.xlu0 %4590
    %v4594 = vadd.f32 %v4482, %v4589
    %v4595 = vadd.f32 %v4483, %v4591
    %s4596 = sld [smem:[#allocation4 + $0x15d]]
    %v4597 = vstv %s4596
    %v4598 = vmul.f32 %v4597, %v4364
    %v4599 = vmul.f32 %v4597, %v4365
    %4602 = vrot.lane.b32.xlu0 %v4598, 126
    %v4603 = vpop.permute.xlu0 %4602
    %4604 = vrot.lane.b32.xlu0 %v4599, 126
    %v4605 = vpop.permute.xlu0 %4604
    %v4608 = vadd.f32 %v4496, %v4603
    %v4609 = vadd.f32 %v4497, %v4605
    %s4610 = sld [smem:[#allocation4 + $0x162]]
    %v4611 = vstv %s4610
    %v4612 = vmul.f32 %v4611, %v4364
    %v4613 = vmul.f32 %v4611, %v4365
    %4616 = vrot.lane.b32.xlu0 %v4612, 126
    %v4617 = vpop.permute.xlu0 %4616
    %4618 = vrot.lane.b32.xlu0 %v4613, 126
    %v4619 = vpop.permute.xlu0 %4618
    %v4622 = vadd.f32 %v4510, %v4617
    %v4623 = vadd.f32 %v4511, %v4619
    %s4624 = sld [smem:[#allocation4 + $0x167]]
    %v4625 = vstv %s4624
    %v4626 = vmul.f32 %v4625, %v4364
    %v4627 = vmul.f32 %v4625, %v4365
    %4630 = vrot.lane.b32.xlu0 %v4626, 126
    %v4631 = vpop.permute.xlu0 %4630
    %4632 = vrot.lane.b32.xlu0 %v4627, 126
    %v4633 = vpop.permute.xlu0 %4632
    %v4636 = vadd.f32 %v4524, %v4631
    %v4637 = vadd.f32 %v4525, %v4633
    %v4638 = vxor.u32 %v4538, 2147483648
    %v4639 = vxor.u32 %v4539, 2147483648
    %v4640 = vmul.f32 %v4638, 1.442695
    %v4641 = vpow.pop %v4640
    %v4642 = vmul.f32 %v4639, 1.442695
    %v4643 = vpow.pop %v4642
    %v4644 = vadd.f32 %v4641, 1.0
    %v4645 = vadd.f32 %v4643, 1.0
    %v4646 = vrcp.pop %v4644
    %v4647 = vmul.f32 1.0, %v4646
    %v4648 = vrcp.pop %v4645
    %v4649 = vmul.f32 1.0, %v4648
    %v4650 = vxor.u32 %v4552, 2147483648
    %v4651 = vxor.u32 %v4553, 2147483648
    %v4652 = vmul.f32 %v4650, 1.442695
    %v4653 = vpow.pop %v4652
    %v4654 = vmul.f32 %v4651, 1.442695
    %v4655 = vpow.pop %v4654
    %v4656 = vadd.f32 %v4653, 1.0
    %v4657 = vadd.f32 %v4655, 1.0
    %v4658 = vrcp.pop %v4656
    %v4659 = vmul.f32 1.0, %v4658
    %v4660 = vrcp.pop %v4657
    %v4661 = vmul.f32 1.0, %v4660
    %v4662 = vxor.u32 %v4566, 2147483648
    %v4663 = vxor.u32 %v4567, 2147483648
    %v4664 = vmul.f32 %v4662, 1.442695
    %v4665 = vpow.pop %v4664
    %v4666 = vmul.f32 %v4663, 1.442695
    %v4667 = vpow.pop %v4666
    %v4668 = vadd.f32 %v4665, 1.0
    %v4669 = vadd.f32 %v4667, 1.0
    %v4670 = vrcp.pop %v4668
    %v4671 = vmul.f32 1.0, %v4670
    %v4672 = vrcp.pop %v4669
    %v4673 = vmul.f32 1.0, %v4672
    %v4674 = vxor.u32 %v4580, 2147483648
    %v4675 = vxor.u32 %v4581, 2147483648
    %v4676 = vmul.f32 %v4674, 1.442695
    %v4677 = vpow.pop %v4676
    %v4678 = vmul.f32 %v4675, 1.442695
    %v4679 = vpow.pop %v4678
    %v4680 = vadd.f32 %v4677, 1.0
    %v4681 = vadd.f32 %v4679, 1.0
    %v4682 = vrcp.pop %v4680
    %v4683 = vmul.f32 1.0, %v4682
    %v4684 = vrcp.pop %v4681
    %v4685 = vmul.f32 1.0, %v4684
    %v4686 = vxor.u32 %v4594, 2147483648
    %v4687 = vxor.u32 %v4595, 2147483648
    %v4688 = vmul.f32 %v4686, 1.442695
    %v4689 = vpow.pop %v4688
    %v4690 = vmul.f32 %v4687, 1.442695
    %v4691 = vpow.pop %v4690
    %v4692 = vadd.f32 %v4689, 1.0
    %v4693 = vadd.f32 %v4691, 1.0
    %v4694 = vrcp.pop %v4692
    %v4695 = vmul.f32 1.0, %v4694
    %v4696 = vrcp.pop %v4693
    %v4697 = vmul.f32 1.0, %v4696
    %v4698 = vxor.u32 %v4608, 2147483648
    %v4699 = vxor.u32 %v4609, 2147483648
    %v4700 = vmul.f32 %v4698, 1.442695
    %v4701 = vpow.pop %v4700
    %v4702 = vmul.f32 %v4699, 1.442695
    %v4703 = vpow.pop %v4702
    %v4704 = vadd.f32 %v4701, 1.0
    %v4705 = vadd.f32 %v4703, 1.0
    %v4706 = vrcp.pop %v4704
    %v4707 = vmul.f32 1.0, %v4706
    %v4708 = vrcp.pop %v4705
    %v4709 = vmul.f32 1.0, %v4708
    %v4710 = vxor.u32 %v4622, 2147483648
    %v4711 = vxor.u32 %v4623, 2147483648
    %v4712 = vmul.f32 %v4710, 1.442695
    %v4713 = vpow.pop %v4712
    %v4714 = vmul.f32 %v4711, 1.442695
    %v4715 = vpow.pop %v4714
    %v4716 = vadd.f32 %v4713, 1.0
    %v4717 = vadd.f32 %v4715, 1.0
    %v4718 = vrcp.pop %v4716
    %v4719 = vmul.f32 1.0, %v4718
    %v4720 = vrcp.pop %v4717
    %v4721 = vmul.f32 1.0, %v4720
    %v4722 = vxor.u32 %v4636, 2147483648
    %v4723 = vxor.u32 %v4637, 2147483648
    %v4724 = vmul.f32 %v4722, 1.442695
    %v4725 = vpow.pop %v4724
    %v4726 = vmul.f32 %v4723, 1.442695
    %v4727 = vpow.pop %v4726
    %v4728 = vadd.f32 %v4725, 1.0
    %v4729 = vadd.f32 %v4727, 1.0
    %v4730 = vrcp.pop %v4728
    %v4731 = vmul.f32 1.0, %v4730
    %v4732 = vrcp.pop %v4729
    %v4733 = vmul.f32 1.0, %v4732
    %vm4734 = vcmask 310272
    %4735 = vst.msk [vmem:[#allocation2] sm:$0xff] %vm4734, 0.0
    %4736 = vst.msk [vmem:[#allocation2 + $0x8] sm:$0xff] %vm4734, 0.0
    %vm4737 = vcmask 304128
    %4738 = vst.msk [vmem:[#allocation2 + $0x10] sm:$0x3] %vm4737, 0.0
    %4739 = vst.msk [vmem:[#allocation2 + $0x18] sm:$0xff] %vm4734, 0.0
    %4740 = vst.msk [vmem:[#allocation2 + $0x20] sm:$0xff] %vm4734, 0.0
    %4741 = vst.msk [vmem:[#allocation2 + $0x28] sm:$0x3] %vm4737, 0.0
    %4742 = vst.msk [vmem:[#allocation2 + $0x30] sm:$0xff] %vm4734, 0.0
    %4743 = vst.msk [vmem:[#allocation2 + $0x38] sm:$0xff] %vm4734, 0.0
    %4744 = vst.msk [vmem:[#allocation2 + $0x40] sm:$0x3] %vm4737, 0.0
    %4745 = vst.msk [vmem:[#allocation2 + $0x48] sm:$0xff] %vm4734, 0.0
    %4746 = vst.msk [vmem:[#allocation2 + $0x50] sm:$0xff] %vm4734, 0.0
    %4747 = vst.msk [vmem:[#allocation2 + $0x58] sm:$0x3] %vm4737, 0.0
    %v4748 = vld [vmem:[%s1 + $0x1] sm:$0xff]
    %v4749 = vld [vmem:[%s1 + $0x9] sm:$0xff]
    %4752 = vrot.lane.b32.xlu0 %v4748, 127
    %v4753 = vpop.permute.xlu0 %4752
    %4754 = vrot.lane.b32.xlu0 %v4749, 127
    %v4755 = vpop.permute.xlu0 %4754
    %v4758 = vmul.f32 %v4647, %v4753
    %v4759 = vmul.f32 %v4649, %v4755
    %4762 = vrot.lane.b32.xlu0 %v4758, 1
    %v4763 = vpop.permute.xlu0 %4762
    %4764 = vrot.lane.b32.xlu0 %v4759, 1
    %v4765 = vpop.permute.xlu0 %4764
    %vm4768 = vcmask 302088
    %4769 = vst.msk [vmem:[#allocation2 + $0x1] sm:$0xff] %vm4768, %v4763
    %4770 = vst.msk [vmem:[#allocation2 + $0x9] sm:$0xff] %vm4768, %v4765
    %v4771 = vld [vmem:[%s2169 + $0x1] sm:$0xff]
    %v4772 = vld [vmem:[%s2169 + $0x9] sm:$0xff]
    %4775 = vrot.lane.b32.xlu0 %v4771, 127
    %v4776 = vpop.permute.xlu0 %4775
    %4777 = vrot.lane.b32.xlu0 %v4772, 127
    %v4778 = vpop.permute.xlu0 %4777
    %v4781 = vmul.f32 %v4659, %v4776
    %v4782 = vmul.f32 %v4661, %v4778
    %4785 = vrot.lane.b32.xlu0 %v4781, 1
    %v4786 = vpop.permute.xlu0 %4785
    %4787 = vrot.lane.b32.xlu0 %v4782, 1
    %v4788 = vpop.permute.xlu0 %4787
    %s4791 = scalar_lea.vmem [#allocation2], 24
    %4792 = vst.msk [vmem:[%s4791 + $0x1] sm:$0xff] %vm4768, %v4786
    %4793 = vst.msk [vmem:[%s4791 + $0x9] sm:$0xff] %vm4768, %v4788
    %v4794 = vld [vmem:[%s2992 + $0x1] sm:$0xff]
    %v4795 = vld [vmem:[%s2992 + $0x9] sm:$0xff]
    %4798 = vrot.lane.b32.xlu0 %v4794, 127
    %v4799 = vpop.permute.xlu0 %4798
    %4800 = vrot.lane.b32.xlu0 %v4795, 127
    %v4801 = vpop.permute.xlu0 %4800
    %v4804 = vmul.f32 %v4671, %v4799
    %v4805 = vmul.f32 %v4673, %v4801
    %4808 = vrot.lane.b32.xlu0 %v4804, 1
    %v4809 = vpop.permute.xlu0 %4808
    %4810 = vrot.lane.b32.xlu0 %v4805, 1
    %v4811 = vpop.permute.xlu0 %4810
    %s4814 = scalar_lea.vmem [#allocation2], 48
    %4815 = vst.msk [vmem:[%s4814 + $0x1] sm:$0xff] %vm4768, %v4809
    %4816 = vst.msk [vmem:[%s4814 + $0x9] sm:$0xff] %vm4768, %v4811
    %v4817 = vld [vmem:[%s3815 + $0x1] sm:$0xff]
    %v4818 = vld [vmem:[%s3815 + $0x9] sm:$0xff]
    %4821 = vrot.lane.b32.xlu0 %v4817, 127
    %v4822 = vpop.permute.xlu0 %4821
    %4823 = vrot.lane.b32.xlu0 %v4818, 127
    %v4824 = vpop.permute.xlu0 %4823
    %v4827 = vmul.f32 %v4683, %v4822
    %v4828 = vmul.f32 %v4685, %v4824
    %4831 = vrot.lane.b32.xlu0 %v4827, 1
    %v4832 = vpop.permute.xlu0 %4831
    %4833 = vrot.lane.b32.xlu0 %v4828, 1
    %v4834 = vpop.permute.xlu0 %4833
    %s4837 = scalar_lea.vmem [#allocation2], 72
    %4838 = vst.msk [vmem:[%s4837 + $0x1] sm:$0xff] %vm4768, %v4832
    %4839 = vst.msk [vmem:[%s4837 + $0x9] sm:$0xff] %vm4768, %v4834
    %v4840 = vld [vmem:[#allocation2] sm:$0xff]
    %v4841 = vld [vmem:[#allocation2 + $0x8] sm:$0xff]
    %s4842 = sld [smem:[#allocation9 + $0x1]]
    %v4843 = vstv %s4842
    %v4844 = vmul.f32 %v4843, %v4840
    %v4845 = vmul.f32 %v4843, %v4841
    %v4846 = vadd.f32 %v1303, %v4844
    %v4847 = vadd.f32 %v1304, %v4845
    %s4848 = sld [smem:[#allocation9 + $0x6]]
    %v4849 = vstv %s4848
    %v4850 = vmul.f32 %v4849, %v4840
    %v4851 = vmul.f32 %v4849, %v4841
    %v4852 = vadd.f32 %v1317, %v4850
    %v4853 = vadd.f32 %v1318, %v4851
    %s4854 = sld [smem:[#allocation9 + $0xb]]
    %v4855 = vstv %s4854
    %v4856 = vmul.f32 %v4855, %v4840
    %v4857 = vmul.f32 %v4855, %v4841
    %v4858 = vadd.f32 %v1331, %v4856
    %v4859 = vadd.f32 %v1332, %v4857
    %s4860 = sld [smem:[#allocation9 + $0x10]]
    %v4861 = vstv %s4860
    %v4862 = vmul.f32 %v4861, %v4840
    %v4863 = vmul.f32 %v4861, %v4841
    %v4864 = vadd.f32 %v1345, %v4862
    %v4865 = vadd.f32 %v1346, %v4863
    %s4866 = sld [smem:[#allocation9 + $0x15]]
    %v4867 = vstv %s4866
    %v4868 = vmul.f32 %v4867, %v4840
    %v4869 = vmul.f32 %v4867, %v4841
    %4872 = vrot.lane.b32.xlu0 %v4868, 127
    %v4873 = vpop.permute.xlu0 %4872
    %4874 = vrot.lane.b32.xlu0 %v4869, 127
    %v4875 = vpop.permute.xlu0 %4874
    %v4878 = vadd.f32 %v4846, %v4873
    %v4879 = vadd.f32 %v4847, %v4875
    %s4880 = sld [smem:[#allocation9 + $0x1a]]
    %v4881 = vstv %s4880
    %v4882 = vmul.f32 %v4881, %v4840
    %v4883 = vmul.f32 %v4881, %v4841
    %4886 = vrot.lane.b32.xlu0 %v4882, 127
    %v4887 = vpop.permute.xlu0 %4886
    %4888 = vrot.lane.b32.xlu0 %v4883, 127
    %v4889 = vpop.permute.xlu0 %4888
    %v4892 = vadd.f32 %v4852, %v4887
    %v4893 = vadd.f32 %v4853, %v4889
    %s4894 = sld [smem:[#allocation9 + $0x1f]]
    %v4895 = vstv %s4894
    %v4896 = vmul.f32 %v4895, %v4840
    %v4897 = vmul.f32 %v4895, %v4841
    %4900 = vrot.lane.b32.xlu0 %v4896, 127
    %v4901 = vpop.permute.xlu0 %4900
    %4902 = vrot.lane.b32.xlu0 %v4897, 127
    %v4903 = vpop.permute.xlu0 %4902
    %v4906 = vadd.f32 %v4858, %v4901
    %v4907 = vadd.f32 %v4859, %v4903
    %s4908 = sld [smem:[#allocation9 + $0x24]]
    %v4909 = vstv %s4908
    %v4910 = vmul.f32 %v4909, %v4840
    %v4911 = vmul.f32 %v4909, %v4841
    %4914 = vrot.lane.b32.xlu0 %v4910, 127
    %v4915 = vpop.permute.xlu0 %4914
    %4916 = vrot.lane.b32.xlu0 %v4911, 127
    %v4917 = vpop.permute.xlu0 %4916
    %v4920 = vadd.f32 %v4864, %v4915
    %v4921 = vadd.f32 %v4865, %v4917
    %s4922 = sld [smem:[#allocation9 + $0x29]]
    %v4923 = vstv %s4922
    %v4924 = vmul.f32 %v4923, %v4840
    %v4925 = vmul.f32 %v4923, %v4841
    %4928 = vrot.lane.b32.xlu0 %v4924, 126
    %v4929 = vpop.permute.xlu0 %4928
    %4930 = vrot.lane.b32.xlu0 %v4925, 126
    %v4931 = vpop.permute.xlu0 %4930
    %v4934 = vadd.f32 %v4878, %v4929
    %v4935 = vadd.f32 %v4879, %v4931
    %s4936 = sld [smem:[#allocation9 + $0x2e]]
    %v4937 = vstv %s4936
    %v4938 = vmul.f32 %v4937, %v4840
    %v4939 = vmul.f32 %v4937, %v4841
    %4942 = vrot.lane.b32.xlu0 %v4938, 126
    %v4943 = vpop.permute.xlu0 %4942
    %4944 = vrot.lane.b32.xlu0 %v4939, 126
    %v4945 = vpop.permute.xlu0 %4944
    %v4948 = vadd.f32 %v4892, %v4943
    %v4949 = vadd.f32 %v4893, %v4945
    %s4950 = sld [smem:[#allocation9 + $0x33]]
    %v4951 = vstv %s4950
    %v4952 = vmul.f32 %v4951, %v4840
    %v4953 = vmul.f32 %v4951, %v4841
    %4956 = vrot.lane.b32.xlu0 %v4952, 126
    %v4957 = vpop.permute.xlu0 %4956
    %4958 = vrot.lane.b32.xlu0 %v4953, 126
    %v4959 = vpop.permute.xlu0 %4958
    %v4962 = vadd.f32 %v4906, %v4957
    %v4963 = vadd.f32 %v4907, %v4959
    %s4964 = sld [smem:[#allocation9 + $0x38]]
    %v4965 = vstv %s4964
    %v4966 = vmul.f32 %v4965, %v4840
    %v4967 = vmul.f32 %v4965, %v4841
    %4970 = vrot.lane.b32.xlu0 %v4966, 126
    %v4971 = vpop.permute.xlu0 %4970
    %4972 = vrot.lane.b32.xlu0 %v4967, 126
    %v4973 = vpop.permute.xlu0 %4972
    %v4976 = vadd.f32 %v4920, %v4971
    %v4977 = vadd.f32 %v4921, %v4973
    %v4978 = vld [vmem:[#allocation2 + $0x1] sm:$0xff]
    %v4979 = vld [vmem:[#allocation2 + $0x9] sm:$0xff]
    %s4980 = sld [smem:[#allocation9 + $0x3d]]
    %v4981 = vstv %s4980
    %v4982 = vmul.f32 %v4981, %v4978
    %v4983 = vmul.f32 %v4981, %v4979
    %v4984 = vadd.f32 %v4934, %v4982
    %v4985 = vadd.f32 %v4935, %v4983
    %s4986 = sld [smem:[#allocation9 + $0x42]]
    %v4987 = vstv %s4986
    %v4988 = vmul.f32 %v4987, %v4978
    %v4989 = vmul.f32 %v4987, %v4979
    %v4990 = vadd.f32 %v4948, %v4988
    %v4991 = vadd.f32 %v4949, %v4989
    %s4992 = sld [smem:[#allocation9 + $0x47]]
    %v4993 = vstv %s4992
    %v4994 = vmul.f32 %v4993, %v4978
    %v4995 = vmul.f32 %v4993, %v4979
    %v4996 = vadd.f32 %v4962, %v4994
    %v4997 = vadd.f32 %v4963, %v4995
    %s4998 = sld [smem:[#allocation9 + $0x4c]]
    %v4999 = vstv %s4998
    %v5000 = vmul.f32 %v4999, %v4978
    %v5001 = vmul.f32 %v4999, %v4979
    %v5002 = vadd.f32 %v4976, %v5000
    %v5003 = vadd.f32 %v4977, %v5001
    %s5004 = sld [smem:[#allocation9 + $0x51]]
    %v5005 = vstv %s5004
    %v5006 = vmul.f32 %v5005, %v4978
    %v5007 = vmul.f32 %v5005, %v4979
    %5010 = vrot.lane.b32.xlu0 %v5006, 127
    %v5011 = vpop.permute.xlu0 %5010
    %5012 = vrot.lane.b32.xlu0 %v5007, 127
    %v5013 = vpop.permute.xlu0 %5012
    %v5016 = vadd.f32 %v4984, %v5011
    %v5017 = vadd.f32 %v4985, %v5013
    %s5018 = sld [smem:[#allocation9 + $0x56]]
    %v5019 = vstv %s5018
    %v5020 = vmul.f32 %v5019, %v4978
    %v5021 = vmul.f32 %v5019, %v4979
    %5024 = vrot.lane.b32.xlu0 %v5020, 127
    %v5025 = vpop.permute.xlu0 %5024
    %5026 = vrot.lane.b32.xlu0 %v5021, 127
    %v5027 = vpop.permute.xlu0 %5026
    %v5030 = vadd.f32 %v4990, %v5025
    %v5031 = vadd.f32 %v4991, %v5027
    %s5032 = sld [smem:[#allocation9 + $0x5b]]
    %v5033 = vstv %s5032
    %v5034 = vmul.f32 %v5033, %v4978
    %v5035 = vmul.f32 %v5033, %v4979
    %5038 = vrot.lane.b32.xlu0 %v5034, 127
    %v5039 = vpop.permute.xlu0 %5038
    %5040 = vrot.lane.b32.xlu0 %v5035, 127
    %v5041 = vpop.permute.xlu0 %5040
    %v5044 = vadd.f32 %v4996, %v5039
    %v5045 = vadd.f32 %v4997, %v5041
    %s5046 = sld [smem:[#allocation9 + $0x60]]
    %v5047 = vstv %s5046
    %v5048 = vmul.f32 %v5047, %v4978
    %v5049 = vmul.f32 %v5047, %v4979
    %5052 = vrot.lane.b32.xlu0 %v5048, 127
    %v5053 = vpop.permute.xlu0 %5052
    %5054 = vrot.lane.b32.xlu0 %v5049, 127
    %v5055 = vpop.permute.xlu0 %5054
    %v5058 = vadd.f32 %v5002, %v5053
    %v5059 = vadd.f32 %v5003, %v5055
    %s5060 = sld [smem:[#allocation9 + $0x65]]
    %v5061 = vstv %s5060
    %v5062 = vmul.f32 %v5061, %v4978
    %v5063 = vmul.f32 %v5061, %v4979
    %5066 = vrot.lane.b32.xlu0 %v5062, 126
    %v5067 = vpop.permute.xlu0 %5066
    %5068 = vrot.lane.b32.xlu0 %v5063, 126
    %v5069 = vpop.permute.xlu0 %5068
    %v5072 = vadd.f32 %v5016, %v5067
    %v5073 = vadd.f32 %v5017, %v5069
    %s5074 = sld [smem:[#allocation9 + $0x6a]]
    %v5075 = vstv %s5074
    %v5076 = vmul.f32 %v5075, %v4978
    %v5077 = vmul.f32 %v5075, %v4979
    %5080 = vrot.lane.b32.xlu0 %v5076, 126
    %v5081 = vpop.permute.xlu0 %5080
    %5082 = vrot.lane.b32.xlu0 %v5077, 126
    %v5083 = vpop.permute.xlu0 %5082
    %v5086 = vadd.f32 %v5030, %v5081
    %v5087 = vadd.f32 %v5031, %v5083
    %s5088 = sld [smem:[#allocation9 + $0x6f]]
    %v5089 = vstv %s5088
    %v5090 = vmul.f32 %v5089, %v4978
    %v5091 = vmul.f32 %v5089, %v4979
    %5094 = vrot.lane.b32.xlu0 %v5090, 126
    %v5095 = vpop.permute.xlu0 %5094
    %5096 = vrot.lane.b32.xlu0 %v5091, 126
    %v5097 = vpop.permute.xlu0 %5096
    %v5100 = vadd.f32 %v5044, %v5095
    %v5101 = vadd.f32 %v5045, %v5097
    %s5102 = sld [smem:[#allocation9 + $0x74]]
    %v5103 = vstv %s5102
    %v5104 = vmul.f32 %v5103, %v4978
    %v5105 = vmul.f32 %v5103, %v4979
    %5108 = vrot.lane.b32.xlu0 %v5104, 126
    %v5109 = vpop.permute.xlu0 %5108
    %5110 = vrot.lane.b32.xlu0 %v5105, 126
    %v5111 = vpop.permute.xlu0 %5110
    %v5114 = vadd.f32 %v5058, %v5109
    %v5115 = vadd.f32 %v5059, %v5111
    %v5116 = vld [vmem:[#allocation2 + $0x2] sm:$0xff]
    %v5117 = vld [vmem:[#allocation2 + $0xa] sm:$0xff]
    %s5118 = sld [smem:[#allocation9 + $0x79]]
    %v5119 = vstv %s5118
    %v5120 = vmul.f32 %v5119, %v5116
    %v5121 = vmul.f32 %v5119, %v5117
    %v5122 = vadd.f32 %v5072, %v5120
    %v5123 = vadd.f32 %v5073, %v5121
    %s5124 = sld [smem:[#allocation9 + $0x7e]]
    %v5125 = vstv %s5124
    %v5126 = vmul.f32 %v5125, %v5116
    %v5127 = vmul.f32 %v5125, %v5117
    %v5128 = vadd.f32 %v5086, %v5126
    %v5129 = vadd.f32 %v5087, %v5127
    %s5130 = sld [smem:[#allocation9 + $0x83]]
    %v5131 = vstv %s5130
    %v5132 = vmul.f32 %v5131, %v5116
    %v5133 = vmul.f32 %v5131, %v5117
    %v5134 = vadd.f32 %v5100, %v5132
    %v5135 = vadd.f32 %v5101, %v5133
    %s5136 = sld [smem:[#allocation9 + $0x88]]
    %v5137 = vstv %s5136
    %v5138 = vmul.f32 %v5137, %v5116
    %v5139 = vmul.f32 %v5137, %v5117
    %v5140 = vadd.f32 %v5114, %v5138
    %v5141 = vadd.f32 %v5115, %v5139
    %s5142 = sld [smem:[#allocation9 + $0x8d]]
    %v5143 = vstv %s5142
    %v5144 = vmul.f32 %v5143, %v5116
    %v5145 = vmul.f32 %v5143, %v5117
    %5148 = vrot.lane.b32.xlu0 %v5144, 127
    %v5149 = vpop.permute.xlu0 %5148
    %5150 = vrot.lane.b32.xlu0 %v5145, 127
    %v5151 = vpop.permute.xlu0 %5150
    %v5154 = vadd.f32 %v5122, %v5149
    %v5155 = vadd.f32 %v5123, %v5151
    %s5156 = sld [smem:[#allocation9 + $0x92]]
    %v5157 = vstv %s5156
    %v5158 = vmul.f32 %v5157, %v5116
    %v5159 = vmul.f32 %v5157, %v5117
    %5162 = vrot.lane.b32.xlu0 %v5158, 127
    %v5163 = vpop.permute.xlu0 %5162
    %5164 = vrot.lane.b32.xlu0 %v5159, 127
    %v5165 = vpop.permute.xlu0 %5164
    %v5168 = vadd.f32 %v5128, %v5163
    %v5169 = vadd.f32 %v5129, %v5165
    %s5170 = sld [smem:[#allocation9 + $0x97]]
    %v5171 = vstv %s5170
    %v5172 = vmul.f32 %v5171, %v5116
    %v5173 = vmul.f32 %v5171, %v5117
    %5176 = vrot.lane.b32.xlu0 %v5172, 127
    %v5177 = vpop.permute.xlu0 %5176
    %5178 = vrot.lane.b32.xlu0 %v5173, 127
    %v5179 = vpop.permute.xlu0 %5178
    %v5182 = vadd.f32 %v5134, %v5177
    %v5183 = vadd.f32 %v5135, %v5179
    %s5184 = sld [smem:[#allocation9 + $0x9c]]
    %v5185 = vstv %s5184
    %v5186 = vmul.f32 %v5185, %v5116
    %v5187 = vmul.f32 %v5185, %v5117
    %5190 = vrot.lane.b32.xlu0 %v5186, 127
    %v5191 = vpop.permute.xlu0 %5190
    %5192 = vrot.lane.b32.xlu0 %v5187, 127
    %v5193 = vpop.permute.xlu0 %5192
    %v5196 = vadd.f32 %v5140, %v5191
    %v5197 = vadd.f32 %v5141, %v5193
    %s5198 = sld [smem:[#allocation9 + $0xa1]]
    %v5199 = vstv %s5198
    %v5200 = vmul.f32 %v5199, %v5116
    %v5201 = vmul.f32 %v5199, %v5117
    %5204 = vrot.lane.b32.xlu0 %v5200, 126
    %v5205 = vpop.permute.xlu0 %5204
    %5206 = vrot.lane.b32.xlu0 %v5201, 126
    %v5207 = vpop.permute.xlu0 %5206
    %v5210 = vadd.f32 %v5154, %v5205
    %v5211 = vadd.f32 %v5155, %v5207
    %s5212 = sld [smem:[#allocation9 + $0xa6]]
    %v5213 = vstv %s5212
    %v5214 = vmul.f32 %v5213, %v5116
    %v5215 = vmul.f32 %v5213, %v5117
    %5218 = vrot.lane.b32.xlu0 %v5214, 126
    %v5219 = vpop.permute.xlu0 %5218
    %5220 = vrot.lane.b32.xlu0 %v5215, 126
    %v5221 = vpop.permute.xlu0 %5220
    %v5224 = vadd.f32 %v5168, %v5219
    %v5225 = vadd.f32 %v5169, %v5221
    %s5226 = sld [smem:[#allocation9 + $0xab]]
    %v5227 = vstv %s5226
    %v5228 = vmul.f32 %v5227, %v5116
    %v5229 = vmul.f32 %v5227, %v5117
    %5232 = vrot.lane.b32.xlu0 %v5228, 126
    %v5233 = vpop.permute.xlu0 %5232
    %5234 = vrot.lane.b32.xlu0 %v5229, 126
    %v5235 = vpop.permute.xlu0 %5234
    %v5238 = vadd.f32 %v5182, %v5233
    %v5239 = vadd.f32 %v5183, %v5235
    %s5240 = sld [smem:[#allocation9 + $0xb0]]
    %v5241 = vstv %s5240
    %v5242 = vmul.f32 %v5241, %v5116
    %v5243 = vmul.f32 %v5241, %v5117
    %5246 = vrot.lane.b32.xlu0 %v5242, 126
    %v5247 = vpop.permute.xlu0 %5246
    %5248 = vrot.lane.b32.xlu0 %v5243, 126
    %v5249 = vpop.permute.xlu0 %5248
    %v5252 = vadd.f32 %v5196, %v5247
    %v5253 = vadd.f32 %v5197, %v5249
    %v5254 = vld [vmem:[%s4791] sm:$0xff]
    %v5255 = vld [vmem:[%s4791 + $0x8] sm:$0xff]
    %s5256 = sld [smem:[#allocation9 + $0x2]]
    %v5257 = vstv %s5256
    %v5258 = vmul.f32 %v5257, %v5254
    %v5259 = vmul.f32 %v5257, %v5255
    %v5260 = vadd.f32 %v5210, %v5258
    %v5261 = vadd.f32 %v5211, %v5259
    %s5262 = sld [smem:[#allocation9 + $0x7]]
    %v5263 = vstv %s5262
    %v5264 = vmul.f32 %v5263, %v5254
    %v5265 = vmul.f32 %v5263, %v5255
    %v5266 = vadd.f32 %v5224, %v5264
    %v5267 = vadd.f32 %v5225, %v5265
    %s5268 = sld [smem:[#allocation9 + $0xc]]
    %v5269 = vstv %s5268
    %v5270 = vmul.f32 %v5269, %v5254
    %v5271 = vmul.f32 %v5269, %v5255
    %v5272 = vadd.f32 %v5238, %v5270
    %v5273 = vadd.f32 %v5239, %v5271
    %s5274 = sld [smem:[#allocation9 + $0x11]]
    %v5275 = vstv %s5274
    %v5276 = vmul.f32 %v5275, %v5254
    %v5277 = vmul.f32 %v5275, %v5255
    %v5278 = vadd.f32 %v5252, %v5276
    %v5279 = vadd.f32 %v5253, %v5277
    %s5280 = sld [smem:[#allocation9 + $0x16]]
    %v5281 = vstv %s5280
    %v5282 = vmul.f32 %v5281, %v5254
    %v5283 = vmul.f32 %v5281, %v5255
    %5286 = vrot.lane.b32.xlu0 %v5282, 127
    %v5287 = vpop.permute.xlu0 %5286
    %5288 = vrot.lane.b32.xlu0 %v5283, 127
    %v5289 = vpop.permute.xlu0 %5288
    %v5292 = vadd.f32 %v5260, %v5287
    %v5293 = vadd.f32 %v5261, %v5289
    %s5294 = sld [smem:[#allocation9 + $0x1b]]
    %v5295 = vstv %s5294
    %v5296 = vmul.f32 %v5295, %v5254
    %v5297 = vmul.f32 %v5295, %v5255
    %5300 = vrot.lane.b32.xlu0 %v5296, 127
    %v5301 = vpop.permute.xlu0 %5300
    %5302 = vrot.lane.b32.xlu0 %v5297, 127
    %v5303 = vpop.permute.xlu0 %5302
    %v5306 = vadd.f32 %v5266, %v5301
    %v5307 = vadd.f32 %v5267, %v5303
    %s5308 = sld [smem:[#allocation9 + $0x20]]
    %v5309 = vstv %s5308
    %v5310 = vmul.f32 %v5309, %v5254
    %v5311 = vmul.f32 %v5309, %v5255
    %5314 = vrot.lane.b32.xlu0 %v5310, 127
    %v5315 = vpop.permute.xlu0 %5314
    %5316 = vrot.lane.b32.xlu0 %v5311, 127
    %v5317 = vpop.permute.xlu0 %5316
    %v5320 = vadd.f32 %v5272, %v5315
    %v5321 = vadd.f32 %v5273, %v5317
    %s5322 = sld [smem:[#allocation9 + $0x25]]
    %v5323 = vstv %s5322
    %v5324 = vmul.f32 %v5323, %v5254
    %v5325 = vmul.f32 %v5323, %v5255
    %5328 = vrot.lane.b32.xlu0 %v5324, 127
    %v5329 = vpop.permute.xlu0 %5328
    %5330 = vrot.lane.b32.xlu0 %v5325, 127
    %v5331 = vpop.permute.xlu0 %5330
    %v5334 = vadd.f32 %v5278, %v5329
    %v5335 = vadd.f32 %v5279, %v5331
    %s5336 = sld [smem:[#allocation9 + $0x2a]]
    %v5337 = vstv %s5336
    %v5338 = vmul.f32 %v5337, %v5254
    %v5339 = vmul.f32 %v5337, %v5255
    %5342 = vrot.lane.b32.xlu0 %v5338, 126
    %v5343 = vpop.permute.xlu0 %5342
    %5344 = vrot.lane.b32.xlu0 %v5339, 126
    %v5345 = vpop.permute.xlu0 %5344
    %v5348 = vadd.f32 %v5292, %v5343
    %v5349 = vadd.f32 %v5293, %v5345
    %s5350 = sld [smem:[#allocation9 + $0x2f]]
    %v5351 = vstv %s5350
    %v5352 = vmul.f32 %v5351, %v5254
    %v5353 = vmul.f32 %v5351, %v5255
    %5356 = vrot.lane.b32.xlu0 %v5352, 126
    %v5357 = vpop.permute.xlu0 %5356
    %5358 = vrot.lane.b32.xlu0 %v5353, 126
    %v5359 = vpop.permute.xlu0 %5358
    %v5362 = vadd.f32 %v5306, %v5357
    %v5363 = vadd.f32 %v5307, %v5359
    %s5364 = sld [smem:[#allocation9 + $0x34]]
    %v5365 = vstv %s5364
    %v5366 = vmul.f32 %v5365, %v5254
    %v5367 = vmul.f32 %v5365, %v5255
    %5370 = vrot.lane.b32.xlu0 %v5366, 126
    %v5371 = vpop.permute.xlu0 %5370
    %5372 = vrot.lane.b32.xlu0 %v5367, 126
    %v5373 = vpop.permute.xlu0 %5372
    %v5376 = vadd.f32 %v5320, %v5371
    %v5377 = vadd.f32 %v5321, %v5373
    %s5378 = sld [smem:[#allocation9 + $0x39]]
    %v5379 = vstv %s5378
    %v5380 = vmul.f32 %v5379, %v5254
    %v5381 = vmul.f32 %v5379, %v5255
    %5384 = vrot.lane.b32.xlu0 %v5380, 126
    %v5385 = vpop.permute.xlu0 %5384
    %5386 = vrot.lane.b32.xlu0 %v5381, 126
    %v5387 = vpop.permute.xlu0 %5386
    %v5390 = vadd.f32 %v5334, %v5385
    %v5391 = vadd.f32 %v5335, %v5387
    %v5392 = vld [vmem:[%s4791 + $0x1] sm:$0xff]
    %v5393 = vld [vmem:[%s4791 + $0x9] sm:$0xff]
    %s5394 = sld [smem:[#allocation9 + $0x3e]]
    %v5395 = vstv %s5394
    %v5396 = vmul.f32 %v5395, %v5392
    %v5397 = vmul.f32 %v5395, %v5393
    %v5398 = vadd.f32 %v5348, %v5396
    %v5399 = vadd.f32 %v5349, %v5397
    %s5400 = sld [smem:[#allocation9 + $0x43]]
    %v5401 = vstv %s5400
    %v5402 = vmul.f32 %v5401, %v5392
    %v5403 = vmul.f32 %v5401, %v5393
    %v5404 = vadd.f32 %v5362, %v5402
    %v5405 = vadd.f32 %v5363, %v5403
    %s5406 = sld [smem:[#allocation9 + $0x48]]
    %v5407 = vstv %s5406
    %v5408 = vmul.f32 %v5407, %v5392
    %v5409 = vmul.f32 %v5407, %v5393
    %v5410 = vadd.f32 %v5376, %v5408
    %v5411 = vadd.f32 %v5377, %v5409
    %s5412 = sld [smem:[#allocation9 + $0x4d]]
    %v5413 = vstv %s5412
    %v5414 = vmul.f32 %v5413, %v5392
    %v5415 = vmul.f32 %v5413, %v5393
    %v5416 = vadd.f32 %v5390, %v5414
    %v5417 = vadd.f32 %v5391, %v5415
    %s5418 = sld [smem:[#allocation9 + $0x52]]
    %v5419 = vstv %s5418
    %v5420 = vmul.f32 %v5419, %v5392
    %v5421 = vmul.f32 %v5419, %v5393
    %5424 = vrot.lane.b32.xlu0 %v5420, 127
    %v5425 = vpop.permute.xlu0 %5424
    %5426 = vrot.lane.b32.xlu0 %v5421, 127
    %v5427 = vpop.permute.xlu0 %5426
    %v5430 = vadd.f32 %v5398, %v5425
    %v5431 = vadd.f32 %v5399, %v5427
    %s5432 = sld [smem:[#allocation9 + $0x57]]
    %v5433 = vstv %s5432
    %v5434 = vmul.f32 %v5433, %v5392
    %v5435 = vmul.f32 %v5433, %v5393
    %5438 = vrot.lane.b32.xlu0 %v5434, 127
    %v5439 = vpop.permute.xlu0 %5438
    %5440 = vrot.lane.b32.xlu0 %v5435, 127
    %v5441 = vpop.permute.xlu0 %5440
    %v5444 = vadd.f32 %v5404, %v5439
    %v5445 = vadd.f32 %v5405, %v5441
    %s5446 = sld [smem:[#allocation9 + $0x5c]]
    %v5447 = vstv %s5446
    %v5448 = vmul.f32 %v5447, %v5392
    %v5449 = vmul.f32 %v5447, %v5393
    %5452 = vrot.lane.b32.xlu0 %v5448, 127
    %v5453 = vpop.permute.xlu0 %5452
    %5454 = vrot.lane.b32.xlu0 %v5449, 127
    %v5455 = vpop.permute.xlu0 %5454
    %v5458 = vadd.f32 %v5410, %v5453
    %v5459 = vadd.f32 %v5411, %v5455
    %s5460 = sld [smem:[#allocation9 + $0x61]]
    %v5461 = vstv %s5460
    %v5462 = vmul.f32 %v5461, %v5392
    %v5463 = vmul.f32 %v5461, %v5393
    %5466 = vrot.lane.b32.xlu0 %v5462, 127
    %v5467 = vpop.permute.xlu0 %5466
    %5468 = vrot.lane.b32.xlu0 %v5463, 127
    %v5469 = vpop.permute.xlu0 %5468
    %v5472 = vadd.f32 %v5416, %v5467
    %v5473 = vadd.f32 %v5417, %v5469
    %s5474 = sld [smem:[#allocation9 + $0x66]]
    %v5475 = vstv %s5474
    %v5476 = vmul.f32 %v5475, %v5392
    %v5477 = vmul.f32 %v5475, %v5393
    %5480 = vrot.lane.b32.xlu0 %v5476, 126
    %v5481 = vpop.permute.xlu0 %5480
    %5482 = vrot.lane.b32.xlu0 %v5477, 126
    %v5483 = vpop.permute.xlu0 %5482
    %v5486 = vadd.f32 %v5430, %v5481
    %v5487 = vadd.f32 %v5431, %v5483
    %s5488 = sld [smem:[#allocation9 + $0x6b]]
    %v5489 = vstv %s5488
    %v5490 = vmul.f32 %v5489, %v5392
    %v5491 = vmul.f32 %v5489, %v5393
    %5494 = vrot.lane.b32.xlu0 %v5490, 126
    %v5495 = vpop.permute.xlu0 %5494
    %5496 = vrot.lane.b32.xlu0 %v5491, 126
    %v5497 = vpop.permute.xlu0 %5496
    %v5500 = vadd.f32 %v5444, %v5495
    %v5501 = vadd.f32 %v5445, %v5497
    %s5502 = sld [smem:[#allocation9 + $0x70]]
    %v5503 = vstv %s5502
    %v5504 = vmul.f32 %v5503, %v5392
    %v5505 = vmul.f32 %v5503, %v5393
    %5508 = vrot.lane.b32.xlu0 %v5504, 126
    %v5509 = vpop.permute.xlu0 %5508
    %5510 = vrot.lane.b32.xlu0 %v5505, 126
    %v5511 = vpop.permute.xlu0 %5510
    %v5514 = vadd.f32 %v5458, %v5509
    %v5515 = vadd.f32 %v5459, %v5511
    %s5516 = sld [smem:[#allocation9 + $0x75]]
    %v5517 = vstv %s5516
    %v5518 = vmul.f32 %v5517, %v5392
    %v5519 = vmul.f32 %v5517, %v5393
    %5522 = vrot.lane.b32.xlu0 %v5518, 126
    %v5523 = vpop.permute.xlu0 %5522
    %5524 = vrot.lane.b32.xlu0 %v5519, 126
    %v5525 = vpop.permute.xlu0 %5524
    %v5528 = vadd.f32 %v5472, %v5523
    %v5529 = vadd.f32 %v5473, %v5525
    %v5530 = vld [vmem:[%s4791 + $0x2] sm:$0xff]
    %v5531 = vld [vmem:[%s4791 + $0xa] sm:$0xff]
    %s5532 = sld [smem:[#allocation9 + $0x7a]]
    %v5533 = vstv %s5532
    %v5534 = vmul.f32 %v5533, %v5530
    %v5535 = vmul.f32 %v5533, %v5531
    %v5536 = vadd.f32 %v5486, %v5534
    %v5537 = vadd.f32 %v5487, %v5535
    %s5538 = sld [smem:[#allocation9 + $0x7f]]
    %v5539 = vstv %s5538
    %v5540 = vmul.f32 %v5539, %v5530
    %v5541 = vmul.f32 %v5539, %v5531
    %v5542 = vadd.f32 %v5500, %v5540
    %v5543 = vadd.f32 %v5501, %v5541
    %s5544 = sld [smem:[#allocation9 + $0x84]]
    %v5545 = vstv %s5544
    %v5546 = vmul.f32 %v5545, %v5530
    %v5547 = vmul.f32 %v5545, %v5531
    %v5548 = vadd.f32 %v5514, %v5546
    %v5549 = vadd.f32 %v5515, %v5547
    %s5550 = sld [smem:[#allocation9 + $0x89]]
    %v5551 = vstv %s5550
    %v5552 = vmul.f32 %v5551, %v5530
    %v5553 = vmul.f32 %v5551, %v5531
    %v5554 = vadd.f32 %v5528, %v5552
    %v5555 = vadd.f32 %v5529, %v5553
    %s5556 = sld [smem:[#allocation9 + $0x8e]]
    %v5557 = vstv %s5556
    %v5558 = vmul.f32 %v5557, %v5530
    %v5559 = vmul.f32 %v5557, %v5531
    %5562 = vrot.lane.b32.xlu0 %v5558, 127
    %v5563 = vpop.permute.xlu0 %5562
    %5564 = vrot.lane.b32.xlu0 %v5559, 127
    %v5565 = vpop.permute.xlu0 %5564
    %v5568 = vadd.f32 %v5536, %v5563
    %v5569 = vadd.f32 %v5537, %v5565
    %s5570 = sld [smem:[#allocation9 + $0x93]]
    %v5571 = vstv %s5570
    %v5572 = vmul.f32 %v5571, %v5530
    %v5573 = vmul.f32 %v5571, %v5531
    %5576 = vrot.lane.b32.xlu0 %v5572, 127
    %v5577 = vpop.permute.xlu0 %5576
    %5578 = vrot.lane.b32.xlu0 %v5573, 127
    %v5579 = vpop.permute.xlu0 %5578
    %v5582 = vadd.f32 %v5542, %v5577
    %v5583 = vadd.f32 %v5543, %v5579
    %s5584 = sld [smem:[#allocation9 + $0x98]]
    %v5585 = vstv %s5584
    %v5586 = vmul.f32 %v5585, %v5530
    %v5587 = vmul.f32 %v5585, %v5531
    %5590 = vrot.lane.b32.xlu0 %v5586, 127
    %v5591 = vpop.permute.xlu0 %5590
    %5592 = vrot.lane.b32.xlu0 %v5587, 127
    %v5593 = vpop.permute.xlu0 %5592
    %v5596 = vadd.f32 %v5548, %v5591
    %v5597 = vadd.f32 %v5549, %v5593
    %s5598 = sld [smem:[#allocation9 + $0x9d]]
    %v5599 = vstv %s5598
    %v5600 = vmul.f32 %v5599, %v5530
    %v5601 = vmul.f32 %v5599, %v5531
    %5604 = vrot.lane.b32.xlu0 %v5600, 127
    %v5605 = vpop.permute.xlu0 %5604
    %5606 = vrot.lane.b32.xlu0 %v5601, 127
    %v5607 = vpop.permute.xlu0 %5606
    %v5610 = vadd.f32 %v5554, %v5605
    %v5611 = vadd.f32 %v5555, %v5607
    %s5612 = sld [smem:[#allocation9 + $0xa2]]
    %v5613 = vstv %s5612
    %v5614 = vmul.f32 %v5613, %v5530
    %v5615 = vmul.f32 %v5613, %v5531
    %5618 = vrot.lane.b32.xlu0 %v5614, 126
    %v5619 = vpop.permute.xlu0 %5618
    %5620 = vrot.lane.b32.xlu0 %v5615, 126
    %v5621 = vpop.permute.xlu0 %5620
    %v5624 = vadd.f32 %v5568, %v5619
    %v5625 = vadd.f32 %v5569, %v5621
    %s5626 = sld [smem:[#allocation9 + $0xa7]]
    %v5627 = vstv %s5626
    %v5628 = vmul.f32 %v5627, %v5530
    %v5629 = vmul.f32 %v5627, %v5531
    %5632 = vrot.lane.b32.xlu0 %v5628, 126
    %v5633 = vpop.permute.xlu0 %5632
    %5634 = vrot.lane.b32.xlu0 %v5629, 126
    %v5635 = vpop.permute.xlu0 %5634
    %v5638 = vadd.f32 %v5582, %v5633
    %v5639 = vadd.f32 %v5583, %v5635
    %s5640 = sld [smem:[#allocation9 + $0xac]]
    %v5641 = vstv %s5640
    %v5642 = vmul.f32 %v5641, %v5530
    %v5643 = vmul.f32 %v5641, %v5531
    %5646 = vrot.lane.b32.xlu0 %v5642, 126
    %v5647 = vpop.permute.xlu0 %5646
    %5648 = vrot.lane.b32.xlu0 %v5643, 126
    %v5649 = vpop.permute.xlu0 %5648
    %v5652 = vadd.f32 %v5596, %v5647
    %v5653 = vadd.f32 %v5597, %v5649
    %s5654 = sld [smem:[#allocation9 + $0xb1]]
    %v5655 = vstv %s5654
    %v5656 = vmul.f32 %v5655, %v5530
    %v5657 = vmul.f32 %v5655, %v5531
    %5660 = vrot.lane.b32.xlu0 %v5656, 126
    %v5661 = vpop.permute.xlu0 %5660
    %5662 = vrot.lane.b32.xlu0 %v5657, 126
    %v5663 = vpop.permute.xlu0 %5662
    %v5666 = vadd.f32 %v5610, %v5661
    %v5667 = vadd.f32 %v5611, %v5663
    %v5668 = vld [vmem:[%s4814] sm:$0xff]
    %v5669 = vld [vmem:[%s4814 + $0x8] sm:$0xff]
    %s5670 = sld [smem:[#allocation9 + $0x3]]
    %v5671 = vstv %s5670
    %v5672 = vmul.f32 %v5671, %v5668
    %v5673 = vmul.f32 %v5671, %v5669
    %v5674 = vadd.f32 %v5624, %v5672
    %v5675 = vadd.f32 %v5625, %v5673
    %s5676 = sld [smem:[#allocation9 + $0x8]]
    %v5677 = vstv %s5676
    %v5678 = vmul.f32 %v5677, %v5668
    %v5679 = vmul.f32 %v5677, %v5669
    %v5680 = vadd.f32 %v5638, %v5678
    %v5681 = vadd.f32 %v5639, %v5679
    %s5682 = sld [smem:[#allocation9 + $0xd]]
    %v5683 = vstv %s5682
    %v5684 = vmul.f32 %v5683, %v5668
    %v5685 = vmul.f32 %v5683, %v5669
    %v5686 = vadd.f32 %v5652, %v5684
    %v5687 = vadd.f32 %v5653, %v5685
    %s5688 = sld [smem:[#allocation9 + $0x12]]
    %v5689 = vstv %s5688
    %v5690 = vmul.f32 %v5689, %v5668
    %v5691 = vmul.f32 %v5689, %v5669
    %v5692 = vadd.f32 %v5666, %v5690
    %v5693 = vadd.f32 %v5667, %v5691
    %s5694 = sld [smem:[#allocation9 + $0x17]]
    %v5695 = vstv %s5694
    %v5696 = vmul.f32 %v5695, %v5668
    %v5697 = vmul.f32 %v5695, %v5669
    %5700 = vrot.lane.b32.xlu0 %v5696, 127
    %v5701 = vpop.permute.xlu0 %5700
    %5702 = vrot.lane.b32.xlu0 %v5697, 127
    %v5703 = vpop.permute.xlu0 %5702
    %v5706 = vadd.f32 %v5674, %v5701
    %v5707 = vadd.f32 %v5675, %v5703
    %s5708 = sld [smem:[#allocation9 + $0x1c]]
    %v5709 = vstv %s5708
    %v5710 = vmul.f32 %v5709, %v5668
    %v5711 = vmul.f32 %v5709, %v5669
    %5714 = vrot.lane.b32.xlu0 %v5710, 127
    %v5715 = vpop.permute.xlu0 %5714
    %5716 = vrot.lane.b32.xlu0 %v5711, 127
    %v5717 = vpop.permute.xlu0 %5716
    %v5720 = vadd.f32 %v5680, %v5715
    %v5721 = vadd.f32 %v5681, %v5717
    %s5722 = sld [smem:[#allocation9 + $0x21]]
    %v5723 = vstv %s5722
    %v5724 = vmul.f32 %v5723, %v5668
    %v5725 = vmul.f32 %v5723, %v5669
    %5728 = vrot.lane.b32.xlu0 %v5724, 127
    %v5729 = vpop.permute.xlu0 %5728
    %5730 = vrot.lane.b32.xlu0 %v5725, 127
    %v5731 = vpop.permute.xlu0 %5730
    %v5734 = vadd.f32 %v5686, %v5729
    %v5735 = vadd.f32 %v5687, %v5731
    %s5736 = sld [smem:[#allocation9 + $0x26]]
    %v5737 = vstv %s5736
    %v5738 = vmul.f32 %v5737, %v5668
    %v5739 = vmul.f32 %v5737, %v5669
    %5742 = vrot.lane.b32.xlu0 %v5738, 127
    %v5743 = vpop.permute.xlu0 %5742
    %5744 = vrot.lane.b32.xlu0 %v5739, 127
    %v5745 = vpop.permute.xlu0 %5744
    %v5748 = vadd.f32 %v5692, %v5743
    %v5749 = vadd.f32 %v5693, %v5745
    %s5750 = sld [smem:[#allocation9 + $0x2b]]
    %v5751 = vstv %s5750
    %v5752 = vmul.f32 %v5751, %v5668
    %v5753 = vmul.f32 %v5751, %v5669
    %5756 = vrot.lane.b32.xlu0 %v5752, 126
    %v5757 = vpop.permute.xlu0 %5756
    %5758 = vrot.lane.b32.xlu0 %v5753, 126
    %v5759 = vpop.permute.xlu0 %5758
    %v5762 = vadd.f32 %v5706, %v5757
    %v5763 = vadd.f32 %v5707, %v5759
    %s5764 = sld [smem:[#allocation9 + $0x30]]
    %v5765 = vstv %s5764
    %v5766 = vmul.f32 %v5765, %v5668
    %v5767 = vmul.f32 %v5765, %v5669
    %5770 = vrot.lane.b32.xlu0 %v5766, 126
    %v5771 = vpop.permute.xlu0 %5770
    %5772 = vrot.lane.b32.xlu0 %v5767, 126
    %v5773 = vpop.permute.xlu0 %5772
    %v5776 = vadd.f32 %v5720, %v5771
    %v5777 = vadd.f32 %v5721, %v5773
    %s5778 = sld [smem:[#allocation9 + $0x35]]
    %v5779 = vstv %s5778
    %v5780 = vmul.f32 %v5779, %v5668
    %v5781 = vmul.f32 %v5779, %v5669
    %5784 = vrot.lane.b32.xlu0 %v5780, 126
    %v5785 = vpop.permute.xlu0 %5784
    %5786 = vrot.lane.b32.xlu0 %v5781, 126
    %v5787 = vpop.permute.xlu0 %5786
    %v5790 = vadd.f32 %v5734, %v5785
    %v5791 = vadd.f32 %v5735, %v5787
    %s5792 = sld [smem:[#allocation9 + $0x3a]]
    %v5793 = vstv %s5792
    %v5794 = vmul.f32 %v5793, %v5668
    %v5795 = vmul.f32 %v5793, %v5669
    %5798 = vrot.lane.b32.xlu0 %v5794, 126
    %v5799 = vpop.permute.xlu0 %5798
    %5800 = vrot.lane.b32.xlu0 %v5795, 126
    %v5801 = vpop.permute.xlu0 %5800
    %v5804 = vadd.f32 %v5748, %v5799
    %v5805 = vadd.f32 %v5749, %v5801
    %v5806 = vld [vmem:[%s4814 + $0x1] sm:$0xff]
    %v5807 = vld [vmem:[%s4814 + $0x9] sm:$0xff]
    %s5808 = sld [smem:[#allocation9 + $0x3f]]
    %v5809 = vstv %s5808
    %v5810 = vmul.f32 %v5809, %v5806
    %v5811 = vmul.f32 %v5809, %v5807
    %v5812 = vadd.f32 %v5762, %v5810
    %v5813 = vadd.f32 %v5763, %v5811
    %s5814 = sld [smem:[#allocation9 + $0x44]]
    %v5815 = vstv %s5814
    %v5816 = vmul.f32 %v5815, %v5806
    %v5817 = vmul.f32 %v5815, %v5807
    %v5818 = vadd.f32 %v5776, %v5816
    %v5819 = vadd.f32 %v5777, %v5817
    %s5820 = sld [smem:[#allocation9 + $0x49]]
    %v5821 = vstv %s5820
    %v5822 = vmul.f32 %v5821, %v5806
    %v5823 = vmul.f32 %v5821, %v5807
    %v5824 = vadd.f32 %v5790, %v5822
    %v5825 = vadd.f32 %v5791, %v5823
    %s5826 = sld [smem:[#allocation9 + $0x4e]]
    %v5827 = vstv %s5826
    %v5828 = vmul.f32 %v5827, %v5806
    %v5829 = vmul.f32 %v5827, %v5807
    %v5830 = vadd.f32 %v5804, %v5828
    %v5831 = vadd.f32 %v5805, %v5829
    %s5832 = sld [smem:[#allocation9 + $0x53]]
    %v5833 = vstv %s5832
    %v5834 = vmul.f32 %v5833, %v5806
    %v5835 = vmul.f32 %v5833, %v5807
    %5838 = vrot.lane.b32.xlu0 %v5834, 127
    %v5839 = vpop.permute.xlu0 %5838
    %5840 = vrot.lane.b32.xlu0 %v5835, 127
    %v5841 = vpop.permute.xlu0 %5840
    %v5844 = vadd.f32 %v5812, %v5839
    %v5845 = vadd.f32 %v5813, %v5841
    %s5846 = sld [smem:[#allocation9 + $0x58]]
    %v5847 = vstv %s5846
    %v5848 = vmul.f32 %v5847, %v5806
    %v5849 = vmul.f32 %v5847, %v5807
    %5852 = vrot.lane.b32.xlu0 %v5848, 127
    %v5853 = vpop.permute.xlu0 %5852
    %5854 = vrot.lane.b32.xlu0 %v5849, 127
    %v5855 = vpop.permute.xlu0 %5854
    %v5858 = vadd.f32 %v5818, %v5853
    %v5859 = vadd.f32 %v5819, %v5855
    %s5860 = sld [smem:[#allocation9 + $0x5d]]
    %v5861 = vstv %s5860
    %v5862 = vmul.f32 %v5861, %v5806
    %v5863 = vmul.f32 %v5861, %v5807
    %5866 = vrot.lane.b32.xlu0 %v5862, 127
    %v5867 = vpop.permute.xlu0 %5866
    %5868 = vrot.lane.b32.xlu0 %v5863, 127
    %v5869 = vpop.permute.xlu0 %5868
    %v5872 = vadd.f32 %v5824, %v5867
    %v5873 = vadd.f32 %v5825, %v5869
    %s5874 = sld [smem:[#allocation9 + $0x62]]
    %v5875 = vstv %s5874
    %v5876 = vmul.f32 %v5875, %v5806
    %v5877 = vmul.f32 %v5875, %v5807
    %5880 = vrot.lane.b32.xlu0 %v5876, 127
    %v5881 = vpop.permute.xlu0 %5880
    %5882 = vrot.lane.b32.xlu0 %v5877, 127
    %v5883 = vpop.permute.xlu0 %5882
    %v5886 = vadd.f32 %v5830, %v5881
    %v5887 = vadd.f32 %v5831, %v5883
    %s5888 = sld [smem:[#allocation9 + $0x67]]
    %v5889 = vstv %s5888
    %v5890 = vmul.f32 %v5889, %v5806
    %v5891 = vmul.f32 %v5889, %v5807
    %5894 = vrot.lane.b32.xlu0 %v5890, 126
    %v5895 = vpop.permute.xlu0 %5894
    %5896 = vrot.lane.b32.xlu0 %v5891, 126
    %v5897 = vpop.permute.xlu0 %5896
    %v5900 = vadd.f32 %v5844, %v5895
    %v5901 = vadd.f32 %v5845, %v5897
    %s5902 = sld [smem:[#allocation9 + $0x6c]]
    %v5903 = vstv %s5902
    %v5904 = vmul.f32 %v5903, %v5806
    %v5905 = vmul.f32 %v5903, %v5807
    %5908 = vrot.lane.b32.xlu0 %v5904, 126
    %v5909 = vpop.permute.xlu0 %5908
    %5910 = vrot.lane.b32.xlu0 %v5905, 126
    %v5911 = vpop.permute.xlu0 %5910
    %v5914 = vadd.f32 %v5858, %v5909
    %v5915 = vadd.f32 %v5859, %v5911
    %s5916 = sld [smem:[#allocation9 + $0x71]]
    %v5917 = vstv %s5916
    %v5918 = vmul.f32 %v5917, %v5806
    %v5919 = vmul.f32 %v5917, %v5807
    %5922 = vrot.lane.b32.xlu0 %v5918, 126
    %v5923 = vpop.permute.xlu0 %5922
    %5924 = vrot.lane.b32.xlu0 %v5919, 126
    %v5925 = vpop.permute.xlu0 %5924
    %v5928 = vadd.f32 %v5872, %v5923
    %v5929 = vadd.f32 %v5873, %v5925
    %s5930 = sld [smem:[#allocation9 + $0x76]]
    %v5931 = vstv %s5930
    %v5932 = vmul.f32 %v5931, %v5806
    %v5933 = vmul.f32 %v5931, %v5807
    %5936 = vrot.lane.b32.xlu0 %v5932, 126
    %v5937 = vpop.permute.xlu0 %5936
    %5938 = vrot.lane.b32.xlu0 %v5933, 126
    %v5939 = vpop.permute.xlu0 %5938
    %v5942 = vadd.f32 %v5886, %v5937
    %v5943 = vadd.f32 %v5887, %v5939
    %v5944 = vld [vmem:[%s4814 + $0x2] sm:$0xff]
    %v5945 = vld [vmem:[%s4814 + $0xa] sm:$0xff]
    %s5946 = sld [smem:[#allocation9 + $0x7b]]
    %v5947 = vstv %s5946
    %v5948 = vmul.f32 %v5947, %v5944
    %v5949 = vmul.f32 %v5947, %v5945
    %v5950 = vadd.f32 %v5900, %v5948
    %v5951 = vadd.f32 %v5901, %v5949
    %s5952 = sld [smem:[#allocation9 + $0x80]]
    %v5953 = vstv %s5952
    %v5954 = vmul.f32 %v5953, %v5944
    %v5955 = vmul.f32 %v5953, %v5945
    %v5956 = vadd.f32 %v5914, %v5954
    %v5957 = vadd.f32 %v5915, %v5955
    %s5958 = sld [smem:[#allocation9 + $0x85]]
    %v5959 = vstv %s5958
    %v5960 = vmul.f32 %v5959, %v5944
    %v5961 = vmul.f32 %v5959, %v5945
    %v5962 = vadd.f32 %v5928, %v5960
    %v5963 = vadd.f32 %v5929, %v5961
    %s5964 = sld [smem:[#allocation9 + $0x8a]]
    %v5965 = vstv %s5964
    %v5966 = vmul.f32 %v5965, %v5944
    %v5967 = vmul.f32 %v5965, %v5945
    %v5968 = vadd.f32 %v5942, %v5966
    %v5969 = vadd.f32 %v5943, %v5967
    %s5970 = sld [smem:[#allocation9 + $0x8f]]
    %v5971 = vstv %s5970
    %v5972 = vmul.f32 %v5971, %v5944
    %v5973 = vmul.f32 %v5971, %v5945
    %5976 = vrot.lane.b32.xlu0 %v5972, 127
    %v5977 = vpop.permute.xlu0 %5976
    %5978 = vrot.lane.b32.xlu0 %v5973, 127
    %v5979 = vpop.permute.xlu0 %5978
    %v5982 = vadd.f32 %v5950, %v5977
    %v5983 = vadd.f32 %v5951, %v5979
    %s5984 = sld [smem:[#allocation9 + $0x94]]
    %v5985 = vstv %s5984
    %v5986 = vmul.f32 %v5985, %v5944
    %v5987 = vmul.f32 %v5985, %v5945
    %5990 = vrot.lane.b32.xlu0 %v5986, 127
    %v5991 = vpop.permute.xlu0 %5990
    %5992 = vrot.lane.b32.xlu0 %v5987, 127
    %v5993 = vpop.permute.xlu0 %5992
    %v5996 = vadd.f32 %v5956, %v5991
    %v5997 = vadd.f32 %v5957, %v5993
    %s5998 = sld [smem:[#allocation9 + $0x99]]
    %v5999 = vstv %s5998
    %v6000 = vmul.f32 %v5999, %v5944
    %v6001 = vmul.f32 %v5999, %v5945
    %6004 = vrot.lane.b32.xlu0 %v6000, 127
    %v6005 = vpop.permute.xlu0 %6004
    %6006 = vrot.lane.b32.xlu0 %v6001, 127
    %v6007 = vpop.permute.xlu0 %6006
    %v6010 = vadd.f32 %v5962, %v6005
    %v6011 = vadd.f32 %v5963, %v6007
    %s6012 = sld [smem:[#allocation9 + $0x9e]]
    %v6013 = vstv %s6012
    %v6014 = vmul.f32 %v6013, %v5944
    %v6015 = vmul.f32 %v6013, %v5945
    %6018 = vrot.lane.b32.xlu0 %v6014, 127
    %v6019 = vpop.permute.xlu0 %6018
    %6020 = vrot.lane.b32.xlu0 %v6015, 127
    %v6021 = vpop.permute.xlu0 %6020
    %v6024 = vadd.f32 %v5968, %v6019
    %v6025 = vadd.f32 %v5969, %v6021
    %s6026 = sld [smem:[#allocation9 + $0xa3]]
    %v6027 = vstv %s6026
    %v6028 = vmul.f32 %v6027, %v5944
    %v6029 = vmul.f32 %v6027, %v5945
    %6032 = vrot.lane.b32.xlu0 %v6028, 126
    %v6033 = vpop.permute.xlu0 %6032
    %6034 = vrot.lane.b32.xlu0 %v6029, 126
    %v6035 = vpop.permute.xlu0 %6034
    %v6038 = vadd.f32 %v5982, %v6033
    %v6039 = vadd.f32 %v5983, %v6035
    %s6040 = sld [smem:[#allocation9 + $0xa8]]
    %v6041 = vstv %s6040
    %v6042 = vmul.f32 %v6041, %v5944
    %v6043 = vmul.f32 %v6041, %v5945
    %6046 = vrot.lane.b32.xlu0 %v6042, 126
    %v6047 = vpop.permute.xlu0 %6046
    %6048 = vrot.lane.b32.xlu0 %v6043, 126
    %v6049 = vpop.permute.xlu0 %6048
    %v6052 = vadd.f32 %v5996, %v6047
    %v6053 = vadd.f32 %v5997, %v6049
    %s6054 = sld [smem:[#allocation9 + $0xad]]
    %v6055 = vstv %s6054
    %v6056 = vmul.f32 %v6055, %v5944
    %v6057 = vmul.f32 %v6055, %v5945
    %6060 = vrot.lane.b32.xlu0 %v6056, 126
    %v6061 = vpop.permute.xlu0 %6060
    %6062 = vrot.lane.b32.xlu0 %v6057, 126
    %v6063 = vpop.permute.xlu0 %6062
    %v6066 = vadd.f32 %v6010, %v6061
    %v6067 = vadd.f32 %v6011, %v6063
    %s6068 = sld [smem:[#allocation9 + $0xb2]]
    %v6069 = vstv %s6068
    %v6070 = vmul.f32 %v6069, %v5944
    %v6071 = vmul.f32 %v6069, %v5945
    %6074 = vrot.lane.b32.xlu0 %v6070, 126
    %v6075 = vpop.permute.xlu0 %6074
    %6076 = vrot.lane.b32.xlu0 %v6071, 126
    %v6077 = vpop.permute.xlu0 %6076
    %v6080 = vadd.f32 %v6024, %v6075
    %v6081 = vadd.f32 %v6025, %v6077
    %v6082 = vld [vmem:[%s4837] sm:$0xff]
    %v6083 = vld [vmem:[%s4837 + $0x8] sm:$0xff]
    %s6084 = sld [smem:[#allocation9 + $0x4]]
    %v6085 = vstv %s6084
    %v6086 = vmul.f32 %v6085, %v6082
    %v6087 = vmul.f32 %v6085, %v6083
    %v6088 = vadd.f32 %v6038, %v6086
    %v6089 = vadd.f32 %v6039, %v6087
    %s6090 = sld [smem:[#allocation9 + $0x9]]
    %v6091 = vstv %s6090
    %v6092 = vmul.f32 %v6091, %v6082
    %v6093 = vmul.f32 %v6091, %v6083
    %v6094 = vadd.f32 %v6052, %v6092
    %v6095 = vadd.f32 %v6053, %v6093
    %s6096 = sld [smem:[#allocation9 + $0xe]]
    %v6097 = vstv %s6096
    %v6098 = vmul.f32 %v6097, %v6082
    %v6099 = vmul.f32 %v6097, %v6083
    %v6100 = vadd.f32 %v6066, %v6098
    %v6101 = vadd.f32 %v6067, %v6099
    %s6102 = sld [smem:[#allocation9 + $0x13]]
    %v6103 = vstv %s6102
    %v6104 = vmul.f32 %v6103, %v6082
    %v6105 = vmul.f32 %v6103, %v6083
    %v6106 = vadd.f32 %v6080, %v6104
    %v6107 = vadd.f32 %v6081, %v6105
    %s6108 = sld [smem:[#allocation9 + $0x18]]
    %v6109 = vstv %s6108
    %v6110 = vmul.f32 %v6109, %v6082
    %v6111 = vmul.f32 %v6109, %v6083
    %6114 = vrot.lane.b32.xlu0 %v6110, 127
    %v6115 = vpop.permute.xlu0 %6114
    %6116 = vrot.lane.b32.xlu0 %v6111, 127
    %v6117 = vpop.permute.xlu0 %6116
    %v6120 = vadd.f32 %v6088, %v6115
    %v6121 = vadd.f32 %v6089, %v6117
    %s6122 = sld [smem:[#allocation9 + $0x1d]]
    %v6123 = vstv %s6122
    %v6124 = vmul.f32 %v6123, %v6082
    %v6125 = vmul.f32 %v6123, %v6083
    %6128 = vrot.lane.b32.xlu0 %v6124, 127
    %v6129 = vpop.permute.xlu0 %6128
    %6130 = vrot.lane.b32.xlu0 %v6125, 127
    %v6131 = vpop.permute.xlu0 %6130
    %v6134 = vadd.f32 %v6094, %v6129
    %v6135 = vadd.f32 %v6095, %v6131
    %s6136 = sld [smem:[#allocation9 + $0x22]]
    %v6137 = vstv %s6136
    %v6138 = vmul.f32 %v6137, %v6082
    %v6139 = vmul.f32 %v6137, %v6083
    %6142 = vrot.lane.b32.xlu0 %v6138, 127
    %v6143 = vpop.permute.xlu0 %6142
    %6144 = vrot.lane.b32.xlu0 %v6139, 127
    %v6145 = vpop.permute.xlu0 %6144
    %v6148 = vadd.f32 %v6100, %v6143
    %v6149 = vadd.f32 %v6101, %v6145
    %s6150 = sld [smem:[#allocation9 + $0x27]]
    %v6151 = vstv %s6150
    %v6152 = vmul.f32 %v6151, %v6082
    %v6153 = vmul.f32 %v6151, %v6083
    %6156 = vrot.lane.b32.xlu0 %v6152, 127
    %v6157 = vpop.permute.xlu0 %6156
    %6158 = vrot.lane.b32.xlu0 %v6153, 127
    %v6159 = vpop.permute.xlu0 %6158
    %v6162 = vadd.f32 %v6106, %v6157
    %v6163 = vadd.f32 %v6107, %v6159
    %s6164 = sld [smem:[#allocation9 + $0x2c]]
    %v6165 = vstv %s6164
    %v6166 = vmul.f32 %v6165, %v6082
    %v6167 = vmul.f32 %v6165, %v6083
    %6170 = vrot.lane.b32.xlu0 %v6166, 126
    %v6171 = vpop.permute.xlu0 %6170
    %6172 = vrot.lane.b32.xlu0 %v6167, 126
    %v6173 = vpop.permute.xlu0 %6172
    %v6176 = vadd.f32 %v6120, %v6171
    %v6177 = vadd.f32 %v6121, %v6173
    %s6178 = sld [smem:[#allocation9 + $0x31]]
    %v6179 = vstv %s6178
    %v6180 = vmul.f32 %v6179, %v6082
    %v6181 = vmul.f32 %v6179, %v6083
    %6184 = vrot.lane.b32.xlu0 %v6180, 126
    %v6185 = vpop.permute.xlu0 %6184
    %6186 = vrot.lane.b32.xlu0 %v6181, 126
    %v6187 = vpop.permute.xlu0 %6186
    %v6190 = vadd.f32 %v6134, %v6185
    %v6191 = vadd.f32 %v6135, %v6187
    %s6192 = sld [smem:[#allocation9 + $0x36]]
    %v6193 = vstv %s6192
    %v6194 = vmul.f32 %v6193, %v6082
    %v6195 = vmul.f32 %v6193, %v6083
    %6198 = vrot.lane.b32.xlu0 %v6194, 126
    %v6199 = vpop.permute.xlu0 %6198
    %6200 = vrot.lane.b32.xlu0 %v6195, 126
    %v6201 = vpop.permute.xlu0 %6200
    %v6204 = vadd.f32 %v6148, %v6199
    %v6205 = vadd.f32 %v6149, %v6201
    %s6206 = sld [smem:[#allocation9 + $0x3b]]
    %v6207 = vstv %s6206
    %v6208 = vmul.f32 %v6207, %v6082
    %v6209 = vmul.f32 %v6207, %v6083
    %6212 = vrot.lane.b32.xlu0 %v6208, 126
    %v6213 = vpop.permute.xlu0 %6212
    %6214 = vrot.lane.b32.xlu0 %v6209, 126
    %v6215 = vpop.permute.xlu0 %6214
    %v6218 = vadd.f32 %v6162, %v6213
    %v6219 = vadd.f32 %v6163, %v6215
    %v6220 = vld [vmem:[%s4837 + $0x1] sm:$0xff]
    %v6221 = vld [vmem:[%s4837 + $0x9] sm:$0xff]
    %s6222 = sld [smem:[#allocation9 + $0x40]]
    %v6223 = vstv %s6222
    %v6224 = vmul.f32 %v6223, %v6220
    %v6225 = vmul.f32 %v6223, %v6221
    %v6226 = vadd.f32 %v6176, %v6224
    %v6227 = vadd.f32 %v6177, %v6225
    %s6228 = sld [smem:[#allocation9 + $0x45]]
    %v6229 = vstv %s6228
    %v6230 = vmul.f32 %v6229, %v6220
    %v6231 = vmul.f32 %v6229, %v6221
    %v6232 = vadd.f32 %v6190, %v6230
    %v6233 = vadd.f32 %v6191, %v6231
    %s6234 = sld [smem:[#allocation9 + $0x4a]]
    %v6235 = vstv %s6234
    %v6236 = vmul.f32 %v6235, %v6220
    %v6237 = vmul.f32 %v6235, %v6221
    %v6238 = vadd.f32 %v6204, %v6236
    %v6239 = vadd.f32 %v6205, %v6237
    %s6240 = sld [smem:[#allocation9 + $0x4f]]
    %v6241 = vstv %s6240
    %v6242 = vmul.f32 %v6241, %v6220
    %v6243 = vmul.f32 %v6241, %v6221
    %v6244 = vadd.f32 %v6218, %v6242
    %v6245 = vadd.f32 %v6219, %v6243
    %s6246 = sld [smem:[#allocation9 + $0x54]]
    %v6247 = vstv %s6246
    %v6248 = vmul.f32 %v6247, %v6220
    %v6249 = vmul.f32 %v6247, %v6221
    %6252 = vrot.lane.b32.xlu0 %v6248, 127
    %v6253 = vpop.permute.xlu0 %6252
    %6254 = vrot.lane.b32.xlu0 %v6249, 127
    %v6255 = vpop.permute.xlu0 %6254
    %v6258 = vadd.f32 %v6226, %v6253
    %v6259 = vadd.f32 %v6227, %v6255
    %s6260 = sld [smem:[#allocation9 + $0x59]]
    %v6261 = vstv %s6260
    %v6262 = vmul.f32 %v6261, %v6220
    %v6263 = vmul.f32 %v6261, %v6221
    %6266 = vrot.lane.b32.xlu0 %v6262, 127
    %v6267 = vpop.permute.xlu0 %6266
    %6268 = vrot.lane.b32.xlu0 %v6263, 127
    %v6269 = vpop.permute.xlu0 %6268
    %v6272 = vadd.f32 %v6232, %v6267
    %v6273 = vadd.f32 %v6233, %v6269
    %s6274 = sld [smem:[#allocation9 + $0x5e]]
    %v6275 = vstv %s6274
    %v6276 = vmul.f32 %v6275, %v6220
    %v6277 = vmul.f32 %v6275, %v6221
    %6280 = vrot.lane.b32.xlu0 %v6276, 127
    %v6281 = vpop.permute.xlu0 %6280
    %6282 = vrot.lane.b32.xlu0 %v6277, 127
    %v6283 = vpop.permute.xlu0 %6282
    %v6286 = vadd.f32 %v6238, %v6281
    %v6287 = vadd.f32 %v6239, %v6283
    %s6288 = sld [smem:[#allocation9 + $0x63]]
    %v6289 = vstv %s6288
    %v6290 = vmul.f32 %v6289, %v6220
    %v6291 = vmul.f32 %v6289, %v6221
    %6294 = vrot.lane.b32.xlu0 %v6290, 127
    %v6295 = vpop.permute.xlu0 %6294
    %6296 = vrot.lane.b32.xlu0 %v6291, 127
    %v6297 = vpop.permute.xlu0 %6296
    %v6300 = vadd.f32 %v6244, %v6295
    %v6301 = vadd.f32 %v6245, %v6297
    %s6302 = sld [smem:[#allocation9 + $0x68]]
    %v6303 = vstv %s6302
    %v6304 = vmul.f32 %v6303, %v6220
    %v6305 = vmul.f32 %v6303, %v6221
    %6308 = vrot.lane.b32.xlu0 %v6304, 126
    %v6309 = vpop.permute.xlu0 %6308
    %6310 = vrot.lane.b32.xlu0 %v6305, 126
    %v6311 = vpop.permute.xlu0 %6310
    %v6314 = vadd.f32 %v6258, %v6309
    %v6315 = vadd.f32 %v6259, %v6311
    %s6316 = sld [smem:[#allocation9 + $0x6d]]
    %v6317 = vstv %s6316
    %v6318 = vmul.f32 %v6317, %v6220
    %v6319 = vmul.f32 %v6317, %v6221
    %6322 = vrot.lane.b32.xlu0 %v6318, 126
    %v6323 = vpop.permute.xlu0 %6322
    %6324 = vrot.lane.b32.xlu0 %v6319, 126
    %v6325 = vpop.permute.xlu0 %6324
    %v6328 = vadd.f32 %v6272, %v6323
    %v6329 = vadd.f32 %v6273, %v6325
    %s6330 = sld [smem:[#allocation9 + $0x72]]
    %v6331 = vstv %s6330
    %v6332 = vmul.f32 %v6331, %v6220
    %v6333 = vmul.f32 %v6331, %v6221
    %6336 = vrot.lane.b32.xlu0 %v6332, 126
    %v6337 = vpop.permute.xlu0 %6336
    %6338 = vrot.lane.b32.xlu0 %v6333, 126
    %v6339 = vpop.permute.xlu0 %6338
    %v6342 = vadd.f32 %v6286, %v6337
    %v6343 = vadd.f32 %v6287, %v6339
    %s6344 = sld [smem:[#allocation9 + $0x77]]
    %v6345 = vstv %s6344
    %v6346 = vmul.f32 %v6345, %v6220
    %v6347 = vmul.f32 %v6345, %v6221
    %6350 = vrot.lane.b32.xlu0 %v6346, 126
    %v6351 = vpop.permute.xlu0 %6350
    %6352 = vrot.lane.b32.xlu0 %v6347, 126
    %v6353 = vpop.permute.xlu0 %6352
    %v6356 = vadd.f32 %v6300, %v6351
    %v6357 = vadd.f32 %v6301, %v6353
    %v6358 = vld [vmem:[%s4837 + $0x2] sm:$0xff]
    %v6359 = vld [vmem:[%s4837 + $0xa] sm:$0xff]
    %s6360 = sld [smem:[#allocation9 + $0x7c]]
    %v6361 = vstv %s6360
    %v6362 = vmul.f32 %v6361, %v6358
    %v6363 = vmul.f32 %v6361, %v6359
    %v6364 = vadd.f32 %v6314, %v6362
    %v6365 = vadd.f32 %v6315, %v6363
    %s6366 = sld [smem:[#allocation9 + $0x81]]
    %v6367 = vstv %s6366
    %v6368 = vmul.f32 %v6367, %v6358
    %v6369 = vmul.f32 %v6367, %v6359
    %v6370 = vadd.f32 %v6328, %v6368
    %v6371 = vadd.f32 %v6329, %v6369
    %s6372 = sld [smem:[#allocation9 + $0x86]]
    %v6373 = vstv %s6372
    %v6374 = vmul.f32 %v6373, %v6358
    %v6375 = vmul.f32 %v6373, %v6359
    %v6376 = vadd.f32 %v6342, %v6374
    %v6377 = vadd.f32 %v6343, %v6375
    %s6378 = sld [smem:[#allocation9 + $0x8b]]
    %v6379 = vstv %s6378
    %v6380 = vmul.f32 %v6379, %v6358
    %v6381 = vmul.f32 %v6379, %v6359
    %v6382 = vadd.f32 %v6356, %v6380
    %v6383 = vadd.f32 %v6357, %v6381
    %s6384 = sld [smem:[#allocation9 + $0x90]]
    %v6385 = vstv %s6384
    %v6386 = vmul.f32 %v6385, %v6358
    %v6387 = vmul.f32 %v6385, %v6359
    %6390 = vrot.lane.b32.xlu0 %v6386, 127
    %v6391 = vpop.permute.xlu0 %6390
    %6392 = vrot.lane.b32.xlu0 %v6387, 127
    %v6393 = vpop.permute.xlu0 %6392
    %v6396 = vadd.f32 %v6364, %v6391
    %v6397 = vadd.f32 %v6365, %v6393
    %s6398 = sld [smem:[#allocation9 + $0x95]]
    %v6399 = vstv %s6398
    %v6400 = vmul.f32 %v6399, %v6358
    %v6401 = vmul.f32 %v6399, %v6359
    %6404 = vrot.lane.b32.xlu0 %v6400, 127
    %v6405 = vpop.permute.xlu0 %6404
    %6406 = vrot.lane.b32.xlu0 %v6401, 127
    %v6407 = vpop.permute.xlu0 %6406
    %v6410 = vadd.f32 %v6370, %v6405
    %v6411 = vadd.f32 %v6371, %v6407
    %s6412 = sld [smem:[#allocation9 + $0x9a]]
    %v6413 = vstv %s6412
    %v6414 = vmul.f32 %v6413, %v6358
    %v6415 = vmul.f32 %v6413, %v6359
    %6418 = vrot.lane.b32.xlu0 %v6414, 127
    %v6419 = vpop.permute.xlu0 %6418
    %6420 = vrot.lane.b32.xlu0 %v6415, 127
    %v6421 = vpop.permute.xlu0 %6420
    %v6424 = vadd.f32 %v6376, %v6419
    %v6425 = vadd.f32 %v6377, %v6421
    %s6426 = sld [smem:[#allocation9 + $0x9f]]
    %v6427 = vstv %s6426
    %v6428 = vmul.f32 %v6427, %v6358
    %v6429 = vmul.f32 %v6427, %v6359
    %6432 = vrot.lane.b32.xlu0 %v6428, 127
    %v6433 = vpop.permute.xlu0 %6432
    %6434 = vrot.lane.b32.xlu0 %v6429, 127
    %v6435 = vpop.permute.xlu0 %6434
    %v6438 = vadd.f32 %v6382, %v6433
    %v6439 = vadd.f32 %v6383, %v6435
    %s6440 = sld [smem:[#allocation9 + $0xa4]]
    %v6441 = vstv %s6440
    %v6442 = vmul.f32 %v6441, %v6358
    %v6443 = vmul.f32 %v6441, %v6359
    %6446 = vrot.lane.b32.xlu0 %v6442, 126
    %v6447 = vpop.permute.xlu0 %6446
    %6448 = vrot.lane.b32.xlu0 %v6443, 126
    %v6449 = vpop.permute.xlu0 %6448
    %v6452 = vadd.f32 %v6396, %v6447
    %v6453 = vadd.f32 %v6397, %v6449
    %s6454 = sld [smem:[#allocation9 + $0xa9]]
    %v6455 = vstv %s6454
    %v6456 = vmul.f32 %v6455, %v6358
    %v6457 = vmul.f32 %v6455, %v6359
    %6460 = vrot.lane.b32.xlu0 %v6456, 126
    %v6461 = vpop.permute.xlu0 %6460
    %6462 = vrot.lane.b32.xlu0 %v6457, 126
    %v6463 = vpop.permute.xlu0 %6462
    %v6466 = vadd.f32 %v6410, %v6461
    %v6467 = vadd.f32 %v6411, %v6463
    %s6468 = sld [smem:[#allocation9 + $0xae]]
    %v6469 = vstv %s6468
    %v6470 = vmul.f32 %v6469, %v6358
    %v6471 = vmul.f32 %v6469, %v6359
    %6474 = vrot.lane.b32.xlu0 %v6470, 126
    %v6475 = vpop.permute.xlu0 %6474
    %6476 = vrot.lane.b32.xlu0 %v6471, 126
    %v6477 = vpop.permute.xlu0 %6476
    %v6480 = vadd.f32 %v6424, %v6475
    %v6481 = vadd.f32 %v6425, %v6477
    %s6482 = sld [smem:[#allocation9 + $0xb3]]
    %v6483 = vstv %s6482
    %v6484 = vmul.f32 %v6483, %v6358
    %v6485 = vmul.f32 %v6483, %v6359
    %6488 = vrot.lane.b32.xlu0 %v6484, 126
    %v6489 = vpop.permute.xlu0 %6488
    %6490 = vrot.lane.b32.xlu0 %v6485, 126
    %v6491 = vpop.permute.xlu0 %6490
    %v6494 = vadd.f32 %v6438, %v6489
    %v6495 = vadd.f32 %v6439, %v6491
    %v6496 = vtanh.pop %v6452
    %v6497 = vtanh.pop %v6453
    %v6498 = vld [vmem:[%s1 + $0x1] sm:$0xff]
    %v6499 = vld [vmem:[%s1 + $0x9] sm:$0xff]
    %v6500 = vsub.f32 1.0, %v4695
    %v6501 = vsub.f32 1.0, %v4697
    %6504 = vrot.lane.b32.xlu0 %v6498, 127
    %v6505 = vpop.permute.xlu0 %6504
    %6506 = vrot.lane.b32.xlu0 %v6499, 127
    %v6507 = vpop.permute.xlu0 %6506
    %v6510 = vmul.f32 %v6500, %v6505
    %v6511 = vmul.f32 %v6501, %v6507
    %v6512 = vmul.f32 %v4695, %v6496
    %v6513 = vmul.f32 %v4697, %v6497
    %v6514 = vadd.f32 %v6510, %v6512
    %v6515 = vadd.f32 %v6511, %v6513
    %vm6516 = vcmask 293888
    %6517 = vst.msk [vmem:[#allocation14] sm:$0xff] %vm6516, %v6514
    %6518 = vst.msk [vmem:[#allocation14 + $0x8] sm:$0xff] %vm6516, %v6515
    %v6519 = vtanh.pop %v6466
    %v6520 = vtanh.pop %v6467
    %v6521 = vld [vmem:[%s2169 + $0x1] sm:$0xff]
    %v6522 = vld [vmem:[%s2169 + $0x9] sm:$0xff]
    %v6523 = vsub.f32 1.0, %v4707
    %v6524 = vsub.f32 1.0, %v4709
    %6527 = vrot.lane.b32.xlu0 %v6521, 127
    %v6528 = vpop.permute.xlu0 %6527
    %6529 = vrot.lane.b32.xlu0 %v6522, 127
    %v6530 = vpop.permute.xlu0 %6529
    %v6533 = vmul.f32 %v6523, %v6528
    %v6534 = vmul.f32 %v6524, %v6530
    %v6535 = vmul.f32 %v4707, %v6519
    %v6536 = vmul.f32 %v4709, %v6520
    %v6537 = vadd.f32 %v6533, %v6535
    %v6538 = vadd.f32 %v6534, %v6536
    %s6539 = scalar_lea.vmem [#allocation14], 16
    %6540 = vst.msk [vmem:[%s6539] sm:$0xff] %vm6516, %v6537
    %6541 = vst.msk [vmem:[%s6539 + $0x8] sm:$0xff] %vm6516, %v6538
    %v6542 = vtanh.pop %v6480
    %v6543 = vtanh.pop %v6481
    %v6544 = vld [vmem:[%s2992 + $0x1] sm:$0xff]
    %v6545 = vld [vmem:[%s2992 + $0x9] sm:$0xff]
    %v6546 = vsub.f32 1.0, %v4719
    %v6547 = vsub.f32 1.0, %v4721
    %6550 = vrot.lane.b32.xlu0 %v6544, 127
    %v6551 = vpop.permute.xlu0 %6550
    %6552 = vrot.lane.b32.xlu0 %v6545, 127
    %v6553 = vpop.permute.xlu0 %6552
    %v6556 = vmul.f32 %v6546, %v6551
    %v6557 = vmul.f32 %v6547, %v6553
    %v6558 = vmul.f32 %v4719, %v6542
    %v6559 = vmul.f32 %v4721, %v6543
    %v6560 = vadd.f32 %v6556, %v6558
    %v6561 = vadd.f32 %v6557, %v6559
    %s6562 = scalar_lea.vmem [#allocation14], 32
    %6563 = vst.msk [vmem:[%s6562] sm:$0xff] %vm6516, %v6560
    %6564 = vst.msk [vmem:[%s6562 + $0x8] sm:$0xff] %vm6516, %v6561
    %v6565 = vtanh.pop %v6494
    %v6566 = vtanh.pop %v6495
    %v6567 = vld [vmem:[%s3815 + $0x1] sm:$0xff]
    %v6568 = vld [vmem:[%s3815 + $0x9] sm:$0xff]
    %v6569 = vsub.f32 1.0, %v4731
    %v6570 = vsub.f32 1.0, %v4733
    %6573 = vrot.lane.b32.xlu0 %v6567, 127
    %v6574 = vpop.permute.xlu0 %6573
    %6575 = vrot.lane.b32.xlu0 %v6568, 127
    %v6576 = vpop.permute.xlu0 %6575
    %v6579 = vmul.f32 %v6569, %v6574
    %v6580 = vmul.f32 %v6570, %v6576
    %v6581 = vmul.f32 %v4731, %v6565
    %v6582 = vmul.f32 %v4733, %v6566
    %v6583 = vadd.f32 %v6579, %v6581
    %v6584 = vadd.f32 %v6580, %v6582
    %s6585 = scalar_lea.vmem [#allocation14], 48
    %6586 = vst.msk [vmem:[%s6585] sm:$0xff] %vm6516, %v6583
    %6587 = vst.msk [vmem:[%s6585 + $0x8] sm:$0xff] %vm6516, %v6584
    %s6588 = sld [smem:[#allocation3]]
    %v6589 = vstv %s6588
    %s6590 = sld [smem:[#allocation12]]
    %v6591 = vstv %s6590
    %v6592 = vmul.f32 %v6591, %v6514
    %v6593 = vmul.f32 %v6591, %v6515
    %v6594 = vadd.f32 %v6589, %v6592
    %v6595 = vadd.f32 %v6589, %v6593
    %s6596 = sld [smem:[#allocation12 + $0x1]]
    %v6597 = vstv %s6596
    %v6598 = vmul.f32 %v6597, %v6537
    %v6599 = vmul.f32 %v6597, %v6538
    %v6600 = vadd.f32 %v6594, %v6598
    %v6601 = vadd.f32 %v6595, %v6599
    %s6602 = sld [smem:[#allocation12 + $0x2]]
    %v6603 = vstv %s6602
    %v6604 = vmul.f32 %v6603, %v6560
    %v6605 = vmul.f32 %v6603, %v6561
    %v6606 = vadd.f32 %v6600, %v6604
    %v6607 = vadd.f32 %v6601, %v6605
    %s6608 = sld [smem:[#allocation12 + $0x3]]
    %v6609 = vstv %s6608
    %v6610 = vmul.f32 %v6609, %v6583
    %v6611 = vmul.f32 %v6609, %v6584
    %v6612 = vadd.f32 %v6606, %v6610
    %v6613 = vadd.f32 %v6607, %v6611
    %v6614 = vmax.f32 %v6612, 0.0
    %v6615 = vmax.f32 %v6613, 0.0
    %6616 = vst.msk [vmem:[#allocation13] sm:$0xff] %vm6516, %v6614
    %6617 = vst.msk [vmem:[#allocation13 + $0x8] sm:$0xff] %vm6516, %v6615
    // Predicated region
    $region54: #{tpu_custom_call.1} parent=1 // pred_check
      _
    $region55: #{tpu_custom_call.1} parent=1 // pred_check_branch
      %6619 = sbr.rel (0) target = $region57
    $region56: #{tpu_custom_call.1} parent=1 // pred_region
      %s6621 = ssub.s32 256, 256
      %6622 = vsyncadd [#allocation5], %s6621
      %s6623 = sshll.u32 [#allocation13], 4
      %s6624 = int_to_ptr.vmem [resolvable:$true] %s6623
      %6629 = dma.vmem_to_hbm [thread:$0]  %s6624, 256, %s8, [#allocation5], 128, 128, 8
    $region57: #{tpu_custom_call.1} parent=1 // pred_fallthru
      _
    // Predicated region
    $region58: #{tpu_custom_call.1} parent=1 // pred_check
      _
    $region59: #{tpu_custom_call.1} parent=1 // pred_check_branch
      %6631 = sbr.rel (0) target = $region61
    $region60: #{tpu_custom_call.1} parent=1 // pred_region
      %s6633 = ssub.s32 1024, 1024
      %6634 = vsyncadd [#allocation15], %s6633
      %s6635 = sshll.u32 [#allocation14], 4
      %s6636 = int_to_ptr.vmem [resolvable:$true] %s6635
      %6641 = dma.vmem_to_hbm [thread:$0]  %s6636, 1024, %s9, [#allocation15], 128, 128, 8
    $region61: #{tpu_custom_call.1} parent=1 // pred_fallthru
      _
    // Predicated region
    $region62: #{tpu_custom_call.1} parent=1 // pred_check
      _
    $region63: #{tpu_custom_call.1} parent=1 // pred_check_branch
      %6643 = sbr.rel (0) target = $region65
    $region64: #{tpu_custom_call.1} parent=1 // pred_region
      %6644 = dma.done [#allocation5], 256
    $region65: #{tpu_custom_call.1} parent=1 // pred_fallthru
      _
    // Predicated region
    $region66: #{tpu_custom_call.1} parent=1 // pred_check
      _
    $region67: #{tpu_custom_call.1} parent=1 // pred_check_branch
      %6646 = sbr.rel (0) target = $region69
    $region68: #{tpu_custom_call.1} parent=1 // pred_region
      %6647 = dma.done [#allocation15], 1024
    $region69: #{tpu_custom_call.1} parent=1 // pred_fallthru
      _
    %6648 = vsyncpa [#allocation5], 1
    %6649 = vsyncpa [#allocation15], 1
    %6650 = vsyncpa [#allocation6], 1
    %6651 = vsyncpa [#allocation8], 1
    %6652 = vsyncpa [#allocation11], 1

</llo_original>
